<compile_context>
chip_gen: v7x
topology: tpu7x:2x2x1
jax: 0.10.0
libtpu: 0.0.40
codegen_flags: <defaults>
</compile_context>

<pallas_src>
from functools import partial

import jax
import jax.numpy as jnp
from jax.experimental import pallas as pl
from jax.experimental.pallas import tpu as pltpu

LANE = 128                      # channels / contraction dims padded to this
MAX_TILE_M = 512                # max GEMM rows per grid step (tiled path)
FUSED_VMEM_BUDGET = 8 << 20     # single-block fused-BN layer byte budget
BN_EPS = 1e-5


def _round_up(x, m):
    return (x + m - 1) // m * m


def _tile_m(m):
    """Balanced M tiling: tile is a multiple of 16 (bf16 sublane pack), <= MAX_TILE_M."""
    nt = -(-m // MAX_TILE_M)
    tm = _round_up(-(-m // nt), 16)
    return tm, tm * nt


# ---------------------------------------------------------------------------
# Pallas kernels
# ---------------------------------------------------------------------------
def _gemm_bn_act_fused_kernel(p_ref, w_ref, g_ref, beta_ref, o_ref, *, m, act):
    """Fully fused conv layer: y = patches @ W, training-mode BN over the m
    valid rows (padded rows are exactly zero so they add nothing to the sums),
    then activation.  Whole layer is one VMEM-resident block."""
    y = jnp.dot(p_ref[...], w_ref[...], preferred_element_type=jnp.float32)
    inv_m = 1.0 / m
    mu = jnp.sum(y, axis=0, keepdims=True) * inv_m
    var = jnp.maximum(jnp.sum(y * y, axis=0, keepdims=True) * inv_m - mu * mu, 0.0)
    scale = g_ref[...] * jax.lax.rsqrt(var + BN_EPS)
    shift = beta_ref[...] - mu * scale
    y = y * scale + shift
    if act == "relu":
        y = jnp.maximum(y, 0.0)
    o_ref[...] = y


def _gemm_bias_act_kernel(*refs, use_bias, act):
    """out = act(patches @ W [+ bias]); one M-tile per grid step (non-BN layers)."""
    if use_bias:
        p_ref, w_ref, b_ref, o_ref = refs
    else:
        p_ref, w_ref, o_ref = refs
    y = jnp.dot(p_ref[...], w_ref[...], preferred_element_type=jnp.float32)
    if use_bias:
        y = y + b_ref[...]
    if act == "relu":
        y = jnp.maximum(y, 0.0)
    elif act == "sigmoid":
        y = jax.nn.sigmoid(y)
    elif act == "tanh":
        y = jnp.tanh(y)
    o_ref[...] = y


def _gemm_stats_kernel(p_ref, w_ref, y_ref, s_ref, sq_ref):
    """BN fallback pass 1: y = patches @ W plus per-channel sum / sum-of-squares
    accumulated across the M grid (stat outputs map to the same block every
    step -> resident accumulators; grid axis is 'arbitrary')."""
    y = jnp.dot(p_ref[...], w_ref[...], preferred_element_type=jnp.float32)
    y_ref[...] = y

    @pl.when(pl.program_id(0) == 0)
    def _():
        s_ref[...] = jnp.zeros_like(s_ref)
        sq_ref[...] = jnp.zeros_like(sq_ref)

    s_ref[...] += jnp.sum(y, axis=0, keepdims=True)
    sq_ref[...] += jnp.sum(y * y, axis=0, keepdims=True)


def _bn_act_kernel(y_ref, sc_ref, sh_ref, o_ref, *, act):
    """BN fallback pass 2: out = act(y * scale + shift)."""
    y = y_ref[...] * sc_ref[...] + sh_ref[...]
    if act == "relu":
        y = jnp.maximum(y, 0.0)
    o_ref[...] = y


# ---------------------------------------------------------------------------
# pallas_call wrappers
# ---------------------------------------------------------------------------
def _gemm_bn_act_fused(patches, wmat, gamma, beta, m, act):
    m_pad = patches.shape[0]
    c_pad = wmat.shape[1]
    # Single block: default BlockSpecs (whole arrays resident in VMEM).
    return pl.pallas_call(
        partial(_gemm_bn_act_fused_kernel, m=m, act=act),
        out_shape=jax.ShapeDtypeStruct((m_pad, c_pad), jnp.float32),
    )(patches, wmat, gamma, beta)


def _gemm_bias_act(patches, wmat, bias, act, tm):
    m_pad, k_pad = patches.shape
    c_pad = wmat.shape[1]
    in_specs = [pl.BlockSpec((tm, k_pad), lambda i: (i, 0)),
                pl.BlockSpec((k_pad, c_pad), lambda i: (0, 0))]
    args = [patches, wmat]
    if bias is not None:
        in_specs.append(pl.BlockSpec((1, c_pad), lambda i: (0, 0)))
        args.append(bias)
    return pl.pallas_call(
        partial(_gemm_bias_act_kernel, use_bias=bias is not None, act=act),
        out_shape=jax.ShapeDtypeStruct((m_pad, c_pad), jnp.float32),
        grid=(m_pad // tm,),
        in_specs=in_specs,
        out_specs=pl.BlockSpec((tm, c_pad), lambda i: (i, 0)),
        compiler_params=pltpu.CompilerParams(dimension_semantics=("parallel",)),
    )(*args)


def _gemm_stats(patches, wmat, tm):
    m_pad, k_pad = patches.shape
    c_pad = wmat.shape[1]
    return pl.pallas_call(
        _gemm_stats_kernel,
        out_shape=(jax.ShapeDtypeStruct((m_pad, c_pad), jnp.float32),
                   jax.ShapeDtypeStruct((1, c_pad), jnp.float32),
                   jax.ShapeDtypeStruct((1, c_pad), jnp.float32)),
        grid=(m_pad // tm,),
        in_specs=[pl.BlockSpec((tm, k_pad), lambda i: (i, 0)),
                  pl.BlockSpec((k_pad, c_pad), lambda i: (0, 0))],
        out_specs=(pl.BlockSpec((tm, c_pad), lambda i: (i, 0)),
                   pl.BlockSpec((1, c_pad), lambda i: (0, 0)),
                   pl.BlockSpec((1, c_pad), lambda i: (0, 0))),
        compiler_params=pltpu.CompilerParams(dimension_semantics=("arbitrary",)),
    )(patches, wmat)


def _bn_act(y, scale, shift, act, tm):
    m_pad, c_pad = y.shape
    return pl.pallas_call(
        partial(_bn_act_kernel, act=act),
        out_shape=jax.ShapeDtypeStruct((m_pad, c_pad), jnp.float32),
        grid=(m_pad // tm,),
        in_specs=[pl.BlockSpec((tm, c_pad), lambda i: (i, 0)),
                  pl.BlockSpec((1, c_pad), lambda i: (0, 0)),
                  pl.BlockSpec((1, c_pad), lambda i: (0, 0))],
        out_specs=pl.BlockSpec((tm, c_pad), lambda i: (i, 0)),
        compiler_params=pltpu.CompilerParams(dimension_semantics=("parallel",)),
    )(y, scale, shift)


# ---------------------------------------------------------------------------
# Plain-JAX layout glue (NHWC im2col, zero-dilation for transposed convs)
# ---------------------------------------------------------------------------
def _dilate_nhwc(x, s):
    if s == 1:
        return x
    n, h, w, c = x.shape
    out = jnp.zeros((n, (h - 1) * s + 1, (w - 1) * s + 1, c), x.dtype)
    return out.at[:, ::s, ::s, :].set(x)


def _im2col_nhwc(x, kh, kw, stride, pad):
    """NHWC x -> im2col rows (N*OH*OW, KH*KW*C); columns ordered (kh, kw, c)."""
    if pad:
        x = jnp.pad(x, ((0, 0), (pad, pad), (pad, pad), (0, 0)))
    n, h, w, c = x.shape
    oh = (h - kh) // stride + 1
    ow = (w - kw) // stride + 1
    cols = []
    for i in range(kh):
        for j in range(kw):
            cols.append(x[:, i:i + stride * oh:stride, j:j + stride * ow:stride, :])
    p = jnp.concatenate(cols, axis=-1)            # lane-axis concat, no relayout
    return p.reshape(n * oh * ow, kh * kw * c), oh, ow


def _conv_gemm_layer(x, lp, *, cout, kh, kw, stride, pad, dilate, use_bn, act):
    """One (transposed-)conv layer as an im2col GEMM with a fused epilogue.
    x is NHWC; the result is NHWC (row-slice + reshape of the GEMM output)."""
    n = x.shape[0]
    if dilate > 1:
        x = _dilate_nhwc(x, dilate)
    patches, oh, ow = _im2col_nhwc(x, kh, kw, stride, pad)
    m, k = patches.shape
    k_pad, c_pad = lp["w"].shape

    m_fused = _round_up(m, 16)
    fused_bytes = m_fused * k_pad * 2 + k_pad * c_pad * 2 + m_fused * c_pad * 4

    if use_bn and fused_bytes <= FUSED_VMEM_BUDGET:
        # Fully fused single-block layer (GEMM + batch stats + BN + act).
        patches = jnp.pad(patches, ((0, m_fused - m), (0, k_pad - k))).astype(jnp.bfloat16)
        y = _gemm_bn_act_fused(patches, lp["w"], lp["g"], lp["beta"], m, act)
    else:
        tm, m_pad = _tile_m(m)
        # Zero-pad rows (M) and the contraction dim (K) to aligned sizes (zeros
        # add nothing to the dot product); MXU operands go in as bf16.
        patches = jnp.pad(patches, ((0, m_pad - m), (0, k_pad - k))).astype(jnp.bfloat16)
        if use_bn:
            # Two-pass fallback for large M: accumulate per-channel stats across
            # the M grid, then apply act(y*scale + shift) in a tiny second kernel.
            y, s1, s2 = _gemm_stats(patches, lp["w"], tm)
            mu = s1[0] / m
            var = jnp.maximum(s2[0] / m - mu * mu, 0.0)   # biased batch variance
            scale = lp["g"][0] * jax.lax.rsqrt(var + BN_EPS)
            shift = lp["beta"][0] - mu * scale
            y = _bn_act(y, scale.reshape(1, -1), shift.reshape(1, -1), act, tm)
        else:
            y = _gemm_bias_act(patches, lp["w"], lp.get("b"), act, tm)

    return y[:m, :cout].reshape(n, oh, ow, cout)


# ---------------------------------------------------------------------------
# Parameters (deterministic init; mirrors the PyTorch module layers)
# ---------------------------------------------------------------------------
# (cin, cout, k, stride, pad, use_bn, act)
ENC_SPECS = [
    (1, 32, 2, 2, 1, True, "relu"),
    (32, 64, 2, 2, 1, True, "relu"),
    (64, 128, 2, 2, 1, True, "relu"),
    (128, 2, 4, 2, 0, False, "sigmoid"),
]
DEC_SPECS = [
    (2, 128, 4, 1, 0, True, "relu"),
    (128, 64, 4, 1, 0, True, "relu"),
    (64, 32, 4, 2, 1, True, "relu"),
    (32, 1, 4, 2, 1, False, "tanh"),
]


def _pad_wmat(wmat):
    k, c = wmat.shape
    w = jnp.pad(wmat, ((0, _round_up(k, LANE) - k), (0, _round_up(c, LANE) - c)))
    return w.astype(jnp.bfloat16)


def _pad_chan(v):
    c = v.shape[0]
    return jnp.pad(v, (0, _round_up(c, LANE) - c)).reshape(1, -1)


def init_params(key):
    """Weights are pre-reshaped / pre-flipped into the (KH*KW*Cin, Cout) GEMM
    layout, zero-padded to aligned shapes and pre-cast to bf16 at init, so the
    jitted forward never relayouts weights."""
    params = []
    for cin, cout, k, s, p, use_bn, act in ENC_SPECS:
        key, k1, k2, k3, k4 = jax.random.split(key, 5)
        w = 0.1 * jax.random.normal(k1, (cout, cin, k, k), jnp.float32)
        b = 0.1 * jax.random.normal(k2, (cout,), jnp.float32)
        lp = {"w": _pad_wmat(w.transpose(2, 3, 1, 0).reshape(k * k * cin, cout))}
        if use_bn:
            # bias exists in the module but cancels under training-mode BN.
            lp["g"] = _pad_chan(1.0 + 0.1 * jax.random.normal(k3, (cout,), jnp.float32))
            lp["beta"] = _pad_chan(0.1 * jax.random.normal(k4, (cout,), jnp.float32))
        else:
            lp["b"] = _pad_chan(b)
        params.append(lp)
    for cin, cout, k, s, p, use_bn, act in DEC_SPECS:
        key, k1, k3, k4 = jax.random.split(key, 4)
        w = 0.1 * jax.random.normal(k1, (cin, cout, k, k), jnp.float32)
        # ConvTranspose == zero-dilate by stride, pad k-1-p, stride-1 conv with
        # the spatially flipped, channel-transposed kernel (pre-done here once).
        wconv = w[:, :, ::-1, ::-1].transpose(2, 3, 0, 1).reshape(k * k * cin, cout)
        lp = {"w": _pad_wmat(wconv)}
        if use_bn:
            lp["g"] = _pad_chan(1.0 + 0.1 * jax.random.normal(k3, (cout,), jnp.float32))
            lp["beta"] = _pad_chan(0.1 * jax.random.normal(k4, (cout,), jnp.float32))
        params.append(lp)
    return params


# ---------------------------------------------------------------------------
# Full forward pass (encoder -> decoder)
# ---------------------------------------------------------------------------
def conv_forward(params, x_nchw):
    # NCHW <-> NHWC only at the module boundary; layers stay in NHWC so the
    # im2col rows / GEMM outputs never need per-layer relayouts.
    h = jnp.transpose(x_nchw, (0, 2, 3, 1))
    for (cin, cout, k, s, p, use_bn, act), lp in zip(ENC_SPECS, params[:len(ENC_SPECS)]):
        h = _conv_gemm_layer(h, lp, cout=cout, kh=k, kw=k, stride=s, pad=p,
                             dilate=1, use_bn=use_bn, act=act)
    for (cin, cout, k, s, p, use_bn, act), lp in zip(DEC_SPECS, params[len(ENC_SPECS):]):
        h = _conv_gemm_layer(h, lp, cout=cout, kh=k, kw=k, stride=1,
                             pad=k - 1 - p, dilate=s, use_bn=use_bn, act=act)
    return jnp.transpose(h, (0, 3, 1, 2))


if __name__ == "__main__":
    key = jax.random.PRNGKey(0)
    pkey, xkey = jax.random.split(key)
    params = init_params(pkey)

    # NCHW input, 1 channel, 32x32 (encoder: 32->17->9->5->1, decoder: 1->4->7->14->28).
    x = jax.random.normal(xkey, (2, 1, 32, 32), jnp.float32)

    fwd = jax.jit(conv_forward)
    out = jax.block_until_ready(fwd(params, x))

    assert out.shape == (2, 1, 28, 28), out.shape
    assert bool(jnp.all(jnp.isfinite(out)))
    assert bool(jnp.all(jnp.abs(out) <= 1.0 + 1e-6))  # tanh output range
    print("KERNEL_OK")
</pallas_src>

<mosaic_0001>
module attributes {stable_mosaic.version = 11 : i64} {
  func.func @_gemm_bn_act_fused_kernel(%arg0: memref<592x128xbf16, #tpu.memory_space<vmem>>, %arg1: memref<128x128xbf16, #tpu.memory_space<vmem>>, %arg2: memref<1x128xf32, #tpu.memory_space<vmem>>, %arg3: memref<1x128xf32, #tpu.memory_space<vmem>>, %arg4: memref<592x128xf32, #tpu.memory_space<vmem>>) attributes {dimension_semantics = [], scalar_prefetch = 0 : i64, scratch_operands = 0 : i64, tpu.core_type = #tpu.core_type<tc>} {
    %c0 = arith.constant 0 : index
    %c0_0 = arith.constant 0 : index
    %0 = vector.load %arg0[%c0, %c0_0] : memref<592x128xbf16, #tpu.memory_space<vmem>>, vector<592x128xbf16>
    %c0_1 = arith.constant 0 : index
    %c0_2 = arith.constant 0 : index
    %1 = vector.load %arg1[%c0_1, %c0_2] : memref<128x128xbf16, #tpu.memory_space<vmem>>, vector<128x128xbf16>
    %cst = arith.constant dense<0.000000e+00> : vector<592x128xf32>
    %2 = tpu.matmul %0, %1, %cst {dimension_numbers = #tpu.dot_dimension_numbers<[1], [0], [0], [1], [0, 0, 1, 1], [], []>} : vector<592x128xbf16>, vector<128x128xbf16>, vector<592x128xf32> -> vector<592x128xf32>
    %cst_3 = arith.constant dense<0.000000e+00> : vector<128xf32>
    %3 = vector.multi_reduction <add>, %2, %cst_3 [0] : vector<592x128xf32> to vector<128xf32>
    %4 = vector.shape_cast %3 : vector<128xf32> to vector<1x128xf32>
    %cst_4 = arith.constant 0.00173010386 : f32
    %5 = vector.broadcast %cst_4 : f32 to vector<1x128xf32>
    %6 = arith.mulf %4, %5 : vector<1x128xf32>
    %7 = arith.mulf %2, %2 : vector<592x128xf32>
    %cst_5 = arith.constant dense<0.000000e+00> : vector<128xf32>
    %8 = vector.multi_reduction <add>, %7, %cst_5 [0] : vector<592x128xf32> to vector<128xf32>
    %9 = vector.shape_cast %8 : vector<128xf32> to vector<1x128xf32>
    %cst_6 = arith.constant 0.00173010386 : f32
    %10 = vector.broadcast %cst_6 : f32 to vector<1x128xf32>
    %11 = arith.mulf %9, %10 : vector<1x128xf32>
    %12 = arith.mulf %6, %6 : vector<1x128xf32>
    %13 = arith.subf %11, %12 : vector<1x128xf32>
    %cst_7 = arith.constant 0.000000e+00 : f32
    %14 = vector.broadcast %cst_7 : f32 to vector<1x128xf32>
    %15 = arith.maximumf %13, %14 : vector<1x128xf32>
    %c0_8 = arith.constant 0 : index
    %c0_9 = arith.constant 0 : index
    %16 = vector.load %arg2[%c0_8, %c0_9] : memref<1x128xf32, #tpu.memory_space<vmem>>, vector<1x128xf32>
    %cst_10 = arith.constant 9.99999974E-6 : f32
    %17 = vector.broadcast %cst_10 : f32 to vector<1x128xf32>
    %18 = arith.addf %15, %17 : vector<1x128xf32>
    %19 = math.rsqrt %18 : vector<1x128xf32>
    %20 = arith.mulf %16, %19 : vector<1x128xf32>
    %c0_11 = arith.constant 0 : index
    %c0_12 = arith.constant 0 : index
    %21 = vector.load %arg3[%c0_11, %c0_12] : memref<1x128xf32, #tpu.memory_space<vmem>>, vector<1x128xf32>
    %22 = arith.mulf %6, %20 : vector<1x128xf32>
    %23 = arith.subf %21, %22 : vector<1x128xf32>
    %24 = vector.broadcast %20 : vector<1x128xf32> to vector<592x128xf32>
    %25 = arith.mulf %2, %24 : vector<592x128xf32>
    %26 = vector.broadcast %23 : vector<1x128xf32> to vector<592x128xf32>
    %27 = arith.addf %25, %26 : vector<592x128xf32>
    %cst_13 = arith.constant 0.000000e+00 : f32
    %28 = vector.broadcast %cst_13 : f32 to vector<592x128xf32>
    %29 = arith.maximumf %27, %28 : vector<592x128xf32>
    %c0_14 = arith.constant 0 : index
    %c0_15 = arith.constant 0 : index
    %30 = vector.load %arg4[%c0_14, %c0_15] : memref<592x128xf32, #tpu.memory_space<vmem>>, vector<592x128xf32>
    tpu.vector_store %arg4[%c0_14, %c0_15], %29 {strides = array<i32>} : memref<592x128xf32, #tpu.memory_space<vmem>>, vector<592x128xf32>,
    return
  }
}

module attributes {stable_mosaic.version = 11 : i64} {
  func.func @_gemm_bn_act_fused_kernel(%arg0: memref<176x128xbf16, #tpu.memory_space<vmem>>, %arg1: memref<128x128xbf16, #tpu.memory_space<vmem>>, %arg2: memref<1x128xf32, #tpu.memory_space<vmem>>, %arg3: memref<1x128xf32, #tpu.memory_space<vmem>>, %arg4: memref<176x128xf32, #tpu.memory_space<vmem>>) attributes {dimension_semantics = [], scalar_prefetch = 0 : i64, scratch_operands = 0 : i64, tpu.core_type = #tpu.core_type<tc>} {
    %c0 = arith.constant 0 : index
    %c0_0 = arith.constant 0 : index
    %0 = vector.load %arg0[%c0, %c0_0] : memref<176x128xbf16, #tpu.memory_space<vmem>>, vector<176x128xbf16>
    %c0_1 = arith.constant 0 : index
    %c0_2 = arith.constant 0 : index
    %1 = vector.load %arg1[%c0_1, %c0_2] : memref<128x128xbf16, #tpu.memory_space<vmem>>, vector<128x128xbf16>
    %cst = arith.constant dense<0.000000e+00> : vector<176x128xf32>
    %2 = tpu.matmul %0, %1, %cst {dimension_numbers = #tpu.dot_dimension_numbers<[1], [0], [0], [1], [0, 0, 1, 1], [], []>} : vector<176x128xbf16>, vector<128x128xbf16>, vector<176x128xf32> -> vector<176x128xf32>
    %cst_3 = arith.constant dense<0.000000e+00> : vector<128xf32>
    %3 = vector.multi_reduction <add>, %2, %cst_3 [0] : vector<176x128xf32> to vector<128xf32>
    %4 = vector.shape_cast %3 : vector<128xf32> to vector<1x128xf32>
    %cst_4 = arith.constant 0.00617283955 : f32
    %5 = vector.broadcast %cst_4 : f32 to vector<1x128xf32>
    %6 = arith.mulf %4, %5 : vector<1x128xf32>
    %7 = arith.mulf %2, %2 : vector<176x128xf32>
    %cst_5 = arith.constant dense<0.000000e+00> : vector<128xf32>
    %8 = vector.multi_reduction <add>, %7, %cst_5 [0] : vector<176x128xf32> to vector<128xf32>
    %9 = vector.shape_cast %8 : vector<128xf32> to vector<1x128xf32>
    %cst_6 = arith.constant 0.00617283955 : f32
    %10 = vector.broadcast %cst_6 : f32 to vector<1x128xf32>
    %11 = arith.mulf %9, %10 : vector<1x128xf32>
    %12 = arith.mulf %6, %6 : vector<1x128xf32>
    %13 = arith.subf %11, %12 : vector<1x128xf32>
    %cst_7 = arith.constant 0.000000e+00 : f32
    %14 = vector.broadcast %cst_7 : f32 to vector<1x128xf32>
    %15 = arith.maximumf %13, %14 : vector<1x128xf32>
    %c0_8 = arith.constant 0 : index
    %c0_9 = arith.constant 0 : index
    %16 = vector.load %arg2[%c0_8, %c0_9] : memref<1x128xf32, #tpu.memory_space<vmem>>, vector<1x128xf32>
    %cst_10 = arith.constant 9.99999974E-6 : f32
    %17 = vector.broadcast %cst_10 : f32 to vector<1x128xf32>
    %18 = arith.addf %15, %17 : vector<1x128xf32>
    %19 = math.rsqrt %18 : vector<1x128xf32>
    %20 = arith.mulf %16, %19 : vector<1x128xf32>
    %c0_11 = arith.constant 0 : index
    %c0_12 = arith.constant 0 : index
    %21 = vector.load %arg3[%c0_11, %c0_12] : memref<1x128xf32, #tpu.memory_space<vmem>>, vector<1x128xf32>
    %22 = arith.mulf %6, %20 : vector<1x128xf32>
    %23 = arith.subf %21, %22 : vector<1x128xf32>
    %24 = vector.broadcast %20 : vector<1x128xf32> to vector<176x128xf32>
    %25 = arith.mulf %2, %24 : vector<176x128xf32>
    %26 = vector.broadcast %23 : vector<1x128xf32> to vector<176x128xf32>
    %27 = arith.addf %25, %26 : vector<176x128xf32>
    %cst_13 = arith.constant 0.000000e+00 : f32
    %28 = vector.broadcast %cst_13 : f32 to vector<176x128xf32>
    %29 = arith.maximumf %27, %28 : vector<176x128xf32>
    %c0_14 = arith.constant 0 : index
    %c0_15 = arith.constant 0 : index
    %30 = vector.load %arg4[%c0_14, %c0_15] : memref<176x128xf32, #tpu.memory_space<vmem>>, vector<176x128xf32>
    tpu.vector_store %arg4[%c0_14, %c0_15], %29 {strides = array<i32>} : memref<176x128xf32, #tpu.memory_space<vmem>>, vector<176x128xf32>,
    return
  }
}

module attributes {stable_mosaic.version = 11 : i64} {
  func.func @_gemm_bn_act_fused_kernel(%arg0: memref<64x256xbf16, #tpu.memory_space<vmem>>, %arg1: memref<256x128xbf16, #tpu.memory_space<vmem>>, %arg2: memref<1x128xf32, #tpu.memory_space<vmem>>, %arg3: memref<1x128xf32, #tpu.memory_space<vmem>>, %arg4: memref<64x128xf32, #tpu.memory_space<vmem>>) attributes {dimension_semantics = [], scalar_prefetch = 0 : i64, scratch_operands = 0 : i64, tpu.core_type = #tpu.core_type<tc>} {
    %c0 = arith.constant 0 : index
    %c0_0 = arith.constant 0 : index
    %0 = vector.load %arg0[%c0, %c0_0] : memref<64x256xbf16, #tpu.memory_space<vmem>>, vector<64x256xbf16>
    %c0_1 = arith.constant 0 : index
    %c0_2 = arith.constant 0 : index
    %1 = vector.load %arg1[%c0_1, %c0_2] : memref<256x128xbf16, #tpu.memory_space<vmem>>, vector<256x128xbf16>
    %cst = arith.constant dense<0.000000e+00> : vector<64x128xf32>
    %2 = tpu.matmul %0, %1, %cst {dimension_numbers = #tpu.dot_dimension_numbers<[1], [0], [0], [1], [0, 0, 1, 1], [], []>} : vector<64x256xbf16>, vector<256x128xbf16>, vector<64x128xf32> -> vector<64x128xf32>
    %cst_3 = arith.constant dense<0.000000e+00> : vector<128xf32>
    %3 = vector.multi_reduction <add>, %2, %cst_3 [0] : vector<64x128xf32> to vector<128xf32>
    %4 = vector.shape_cast %3 : vector<128xf32> to vector<1x128xf32>
    %cst_4 = arith.constant 2.000000e-02 : f32
    %5 = vector.broadcast %cst_4 : f32 to vector<1x128xf32>
    %6 = arith.mulf %4, %5 : vector<1x128xf32>
    %7 = arith.mulf %2, %2 : vector<64x128xf32>
    %cst_5 = arith.constant dense<0.000000e+00> : vector<128xf32>
    %8 = vector.multi_reduction <add>, %7, %cst_5 [0] : vector<64x128xf32> to vector<128xf32>
    %9 = vector.shape_cast %8 : vector<128xf32> to vector<1x128xf32>
    %cst_6 = arith.constant 2.000000e-02 : f32
    %10 = vector.broadcast %cst_6 : f32 to vector<1x128xf32>
    %11 = arith.mulf %9, %10 : vector<1x128xf32>
    %12 = arith.mulf %6, %6 : vector<1x128xf32>
    %13 = arith.subf %11, %12 : vector<1x128xf32>
    %cst_7 = arith.constant 0.000000e+00 : f32
    %14 = vector.broadcast %cst_7 : f32 to vector<1x128xf32>
    %15 = arith.maximumf %13, %14 : vector<1x128xf32>
    %c0_8 = arith.constant 0 : index
    %c0_9 = arith.constant 0 : index
    %16 = vector.load %arg2[%c0_8, %c0_9] : memref<1x128xf32, #tpu.memory_space<vmem>>, vector<1x128xf32>
    %cst_10 = arith.constant 9.99999974E-6 : f32
    %17 = vector.broadcast %cst_10 : f32 to vector<1x128xf32>
    %18 = arith.addf %15, %17 : vector<1x128xf32>
    %19 = math.rsqrt %18 : vector<1x128xf32>
    %20 = arith.mulf %16, %19 : vector<1x128xf32>
    %c0_11 = arith.constant 0 : index
    %c0_12 = arith.constant 0 : index
    %21 = vector.load %arg3[%c0_11, %c0_12] : memref<1x128xf32, #tpu.memory_space<vmem>>, vector<1x128xf32>
    %22 = arith.mulf %6, %20 : vector<1x128xf32>
    %23 = arith.subf %21, %22 : vector<1x128xf32>
    %24 = vector.broadcast %20 : vector<1x128xf32> to vector<64x128xf32>
    %25 = arith.mulf %2, %24 : vector<64x128xf32>
    %26 = vector.broadcast %23 : vector<1x128xf32> to vector<64x128xf32>
    %27 = arith.addf %25, %26 : vector<64x128xf32>
    %cst_13 = arith.constant 0.000000e+00 : f32
    %28 = vector.broadcast %cst_13 : f32 to vector<64x128xf32>
    %29 = arith.maximumf %27, %28 : vector<64x128xf32>
    %c0_14 = arith.constant 0 : index
    %c0_15 = arith.constant 0 : index
    %30 = vector.load %arg4[%c0_14, %c0_15] : memref<64x128xf32, #tpu.memory_space<vmem>>, vector<64x128xf32>
    tpu.vector_store %arg4[%c0_14, %c0_15], %29 {strides = array<i32>} : memref<64x128xf32, #tpu.memory_space<vmem>>, vector<64x128xf32>,
    return
  }
}

module attributes {stable_mosaic.version = 11 : i64} {
  func.func @_gemm_bias_act_kernel(%arg0: i32, %arg1: memref<16x2048xbf16, #tpu.memory_space<vmem>>, %arg2: memref<2048x128xbf16, #tpu.memory_space<vmem>>, %arg3: memref<1x128xf32, #tpu.memory_space<vmem>>, %arg4: memref<16x128xf32, #tpu.memory_space<vmem>>) attributes {dimension_semantics = [#tpu.dimension_semantics<parallel>], iteration_bounds = array<i64: 1>, scalar_prefetch = 0 : i64, scratch_operands = 0 : i64, tpu.core_type = #tpu.core_type<tc>, window_params = [{transform_indices = @transform_0, window_bounds = array<i64: 16, 2048>}, {pipeline_mode = #tpu.pipeline_mode<synchronous>, transform_indices = @transform_1, window_bounds = array<i64: 2048, 128>}, {pipeline_mode = #tpu.pipeline_mode<synchronous>, transform_indices = @transform_2, window_bounds = array<i64: 1, 128>}, {transform_indices = @transform_3, window_bounds = array<i64: 16, 128>}]} {
    %c0 = arith.constant 0 : index
    %c0_0 = arith.constant 0 : index
    %0 = vector.load %arg1[%c0, %c0_0] : memref<16x2048xbf16, #tpu.memory_space<vmem>>, vector<16x2048xbf16>
    %c0_1 = arith.constant 0 : index
    %c0_2 = arith.constant 0 : index
    %1 = vector.load %arg2[%c0_1, %c0_2] : memref<2048x128xbf16, #tpu.memory_space<vmem>>, vector<2048x128xbf16>
    %cst = arith.constant dense<0.000000e+00> : vector<16x128xf32>
    %2 = tpu.matmul %0, %1, %cst {dimension_numbers = #tpu.dot_dimension_numbers<[1], [0], [0], [1], [0, 0, 1, 1], [], []>} : vector<16x2048xbf16>, vector<2048x128xbf16>, vector<16x128xf32> -> vector<16x128xf32>
    %c0_3 = arith.constant 0 : index
    %c0_4 = arith.constant 0 : index
    %3 = vector.load %arg3[%c0_3, %c0_4] : memref<1x128xf32, #tpu.memory_space<vmem>>, vector<1x128xf32>
    %4 = vector.broadcast %3 : vector<1x128xf32> to vector<16x128xf32>
    %5 = arith.addf %2, %4 : vector<16x128xf32>
    %6 = arith.negf %5 : vector<16x128xf32>
    %7 = math.exp %6 : vector<16x128xf32>
    %cst_5 = arith.constant 1.000000e+00 : f32
    %8 = vector.broadcast %cst_5 : f32 to vector<16x128xf32>
    %9 = arith.addf %8, %7 : vector<16x128xf32>
    %10 = arith.divf %8, %9 : vector<16x128xf32>
    %c0_6 = arith.constant 0 : index
    %c0_7 = arith.constant 0 : index
    %11 = vector.load %arg4[%c0_6, %c0_7] : memref<16x128xf32, #tpu.memory_space<vmem>>, vector<16x128xf32>
    tpu.vector_store %arg4[%c0_6, %c0_7], %10 {strides = array<i32>} : memref<16x128xf32, #tpu.memory_space<vmem>>, vector<16x128xf32>,
    return
  }
  func.func @transform_0(%arg0: i32) -> (i32, i32) {
    %c0_i32 = arith.constant 0 : i32
    %c0_i32_0 = arith.constant 0 : i32
    return %arg0, %c0_i32 : i32, i32
  }
  func.func @transform_1(%arg0: i32) -> (i32, i32) {
    %c0_i32 = arith.constant 0 : i32
    %c0_i32_0 = arith.constant 0 : i32
    %c0_i32_1 = arith.constant 0 : i32
    return %c0_i32, %c0_i32_0 : i32, i32
  }
  func.func @transform_2(%arg0: i32) -> (i32, i32) {
    %c0_i32 = arith.constant 0 : i32
    %c0_i32_0 = arith.constant 0 : i32
    %c0_i32_1 = arith.constant 0 : i32
    return %c0_i32, %c0_i32_0 : i32, i32
  }
  func.func @transform_3(%arg0: i32) -> (i32, i32) {
    %c0_i32 = arith.constant 0 : i32
    %c0_i32_0 = arith.constant 0 : i32
    return %arg0, %c0_i32 : i32, i32
  }
}

module attributes {stable_mosaic.version = 11 : i64} {
  func.func @_gemm_bn_act_fused_kernel(%arg0: memref<32x128xbf16, #tpu.memory_space<vmem>>, %arg1: memref<128x128xbf16, #tpu.memory_space<vmem>>, %arg2: memref<1x128xf32, #tpu.memory_space<vmem>>, %arg3: memref<1x128xf32, #tpu.memory_space<vmem>>, %arg4: memref<32x128xf32, #tpu.memory_space<vmem>>) attributes {dimension_semantics = [], scalar_prefetch = 0 : i64, scratch_operands = 0 : i64, tpu.core_type = #tpu.core_type<tc>} {
    %c0 = arith.constant 0 : index
    %c0_0 = arith.constant 0 : index
    %0 = vector.load %arg0[%c0, %c0_0] : memref<32x128xbf16, #tpu.memory_space<vmem>>, vector<32x128xbf16>
    %c0_1 = arith.constant 0 : index
    %c0_2 = arith.constant 0 : index
    %1 = vector.load %arg1[%c0_1, %c0_2] : memref<128x128xbf16, #tpu.memory_space<vmem>>, vector<128x128xbf16>
    %cst = arith.constant dense<0.000000e+00> : vector<32x128xf32>
    %2 = tpu.matmul %0, %1, %cst {dimension_numbers = #tpu.dot_dimension_numbers<[1], [0], [0], [1], [0, 0, 1, 1], [], []>} : vector<32x128xbf16>, vector<128x128xbf16>, vector<32x128xf32> -> vector<32x128xf32>
    %cst_3 = arith.constant dense<0.000000e+00> : vector<128xf32>
    %3 = vector.multi_reduction <add>, %2, %cst_3 [0] : vector<32x128xf32> to vector<128xf32>
    %4 = vector.shape_cast %3 : vector<128xf32> to vector<1x128xf32>
    %cst_4 = arith.constant 3.125000e-02 : f32
    %5 = vector.broadcast %cst_4 : f32 to vector<1x128xf32>
    %6 = arith.mulf %4, %5 : vector<1x128xf32>
    %7 = arith.mulf %2, %2 : vector<32x128xf32>
    %cst_5 = arith.constant dense<0.000000e+00> : vector<128xf32>
    %8 = vector.multi_reduction <add>, %7, %cst_5 [0] : vector<32x128xf32> to vector<128xf32>
    %9 = vector.shape_cast %8 : vector<128xf32> to vector<1x128xf32>
    %cst_6 = arith.constant 3.125000e-02 : f32
    %10 = vector.broadcast %cst_6 : f32 to vector<1x128xf32>
    %11 = arith.mulf %9, %10 : vector<1x128xf32>
    %12 = arith.mulf %6, %6 : vector<1x128xf32>
    %13 = arith.subf %11, %12 : vector<1x128xf32>
    %cst_7 = arith.constant 0.000000e+00 : f32
    %14 = vector.broadcast %cst_7 : f32 to vector<1x128xf32>
    %15 = arith.maximumf %13, %14 : vector<1x128xf32>
    %c0_8 = arith.constant 0 : index
    %c0_9 = arith.constant 0 : index
    %16 = vector.load %arg2[%c0_8, %c0_9] : memref<1x128xf32, #tpu.memory_space<vmem>>, vector<1x128xf32>
    %cst_10 = arith.constant 9.99999974E-6 : f32
    %17 = vector.broadcast %cst_10 : f32 to vector<1x128xf32>
    %18 = arith.addf %15, %17 : vector<1x128xf32>
    %19 = math.rsqrt %18 : vector<1x128xf32>
    %20 = arith.mulf %16, %19 : vector<1x128xf32>
    %c0_11 = arith.constant 0 : index
    %c0_12 = arith.constant 0 : index
    %21 = vector.load %arg3[%c0_11, %c0_12] : memref<1x128xf32, #tpu.memory_space<vmem>>, vector<1x128xf32>
    %22 = arith.mulf %6, %20 : vector<1x128xf32>
    %23 = arith.subf %21, %22 : vector<1x128xf32>
    %24 = vector.broadcast %20 : vector<1x128xf32> to vector<32x128xf32>
    %25 = arith.mulf %2, %24 : vector<32x128xf32>
    %26 = vector.broadcast %23 : vector<1x128xf32> to vector<32x128xf32>
    %27 = arith.addf %25, %26 : vector<32x128xf32>
    %cst_13 = arith.constant 0.000000e+00 : f32
    %28 = vector.broadcast %cst_13 : f32 to vector<32x128xf32>
    %29 = arith.maximumf %27, %28 : vector<32x128xf32>
    %c0_14 = arith.constant 0 : index
    %c0_15 = arith.constant 0 : index
    %30 = vector.load %arg4[%c0_14, %c0_15] : memref<32x128xf32, #tpu.memory_space<vmem>>, vector<32x128xf32>
    tpu.vector_store %arg4[%c0_14, %c0_15], %29 {strides = array<i32>} : memref<32x128xf32, #tpu.memory_space<vmem>>, vector<32x128xf32>,
    return
  }
}

module attributes {stable_mosaic.version = 11 : i64} {
  func.func @_gemm_bn_act_fused_kernel(%arg0: memref<112x2048xbf16, #tpu.memory_space<vmem>>, %arg1: memref<2048x128xbf16, #tpu.memory_space<vmem>>, %arg2: memref<1x128xf32, #tpu.memory_space<vmem>>, %arg3: memref<1x128xf32, #tpu.memory_space<vmem>>, %arg4: memref<112x128xf32, #tpu.memory_space<vmem>>) attributes {dimension_semantics = [], scalar_prefetch = 0 : i64, scratch_operands = 0 : i64, tpu.core_type = #tpu.core_type<tc>} {
    %c0 = arith.constant 0 : index
    %c0_0 = arith.constant 0 : index
    %0 = vector.load %arg0[%c0, %c0_0] : memref<112x2048xbf16, #tpu.memory_space<vmem>>, vector<112x2048xbf16>
    %c0_1 = arith.constant 0 : index
    %c0_2 = arith.constant 0 : index
    %1 = vector.load %arg1[%c0_1, %c0_2] : memref<2048x128xbf16, #tpu.memory_space<vmem>>, vector<2048x128xbf16>
    %cst = arith.constant dense<0.000000e+00> : vector<112x128xf32>
    %2 = tpu.matmul %0, %1, %cst {dimension_numbers = #tpu.dot_dimension_numbers<[1], [0], [0], [1], [0, 0, 1, 1], [], []>} : vector<112x2048xbf16>, vector<2048x128xbf16>, vector<112x128xf32> -> vector<112x128xf32>
    %cst_3 = arith.constant dense<0.000000e+00> : vector<128xf32>
    %3 = vector.multi_reduction <add>, %2, %cst_3 [0] : vector<112x128xf32> to vector<128xf32>
    %4 = vector.shape_cast %3 : vector<128xf32> to vector<1x128xf32>
    %cst_4 = arith.constant 0.0102040814 : f32
    %5 = vector.broadcast %cst_4 : f32 to vector<1x128xf32>
    %6 = arith.mulf %4, %5 : vector<1x128xf32>
    %7 = arith.mulf %2, %2 : vector<112x128xf32>
    %cst_5 = arith.constant dense<0.000000e+00> : vector<128xf32>
    %8 = vector.multi_reduction <add>, %7, %cst_5 [0] : vector<112x128xf32> to vector<128xf32>
    %9 = vector.shape_cast %8 : vector<128xf32> to vector<1x128xf32>
    %cst_6 = arith.constant 0.0102040814 : f32
    %10 = vector.broadcast %cst_6 : f32 to vector<1x128xf32>
    %11 = arith.mulf %9, %10 : vector<1x128xf32>
    %12 = arith.mulf %6, %6 : vector<1x128xf32>
    %13 = arith.subf %11, %12 : vector<1x128xf32>
    %cst_7 = arith.constant 0.000000e+00 : f32
    %14 = vector.broadcast %cst_7 : f32 to vector<1x128xf32>
    %15 = arith.maximumf %13, %14 : vector<1x128xf32>
    %c0_8 = arith.constant 0 : index
    %c0_9 = arith.constant 0 : index
    %16 = vector.load %arg2[%c0_8, %c0_9] : memref<1x128xf32, #tpu.memory_space<vmem>>, vector<1x128xf32>
    %cst_10 = arith.constant 9.99999974E-6 : f32
    %17 = vector.broadcast %cst_10 : f32 to vector<1x128xf32>
    %18 = arith.addf %15, %17 : vector<1x128xf32>
    %19 = math.rsqrt %18 : vector<1x128xf32>
    %20 = arith.mulf %16, %19 : vector<1x128xf32>
    %c0_11 = arith.constant 0 : index
    %c0_12 = arith.constant 0 : index
    %21 = vector.load %arg3[%c0_11, %c0_12] : memref<1x128xf32, #tpu.memory_space<vmem>>, vector<1x128xf32>
    %22 = arith.mulf %6, %20 : vector<1x128xf32>
    %23 = arith.subf %21, %22 : vector<1x128xf32>
    %24 = vector.broadcast %20 : vector<1x128xf32> to vector<112x128xf32>
    %25 = arith.mulf %2, %24 : vector<112x128xf32>
    %26 = vector.broadcast %23 : vector<1x128xf32> to vector<112x128xf32>
    %27 = arith.addf %25, %26 : vector<112x128xf32>
    %cst_13 = arith.constant 0.000000e+00 : f32
    %28 = vector.broadcast %cst_13 : f32 to vector<112x128xf32>
    %29 = arith.maximumf %27, %28 : vector<112x128xf32>
    %c0_14 = arith.constant 0 : index
    %c0_15 = arith.constant 0 : index
    %30 = vector.load %arg4[%c0_14, %c0_15] : memref<112x128xf32, #tpu.memory_space<vmem>>, vector<112x128xf32>
    tpu.vector_store %arg4[%c0_14, %c0_15], %29 {strides = array<i32>} : memref<112x128xf32, #tpu.memory_space<vmem>>, vector<112x128xf32>,
    return
  }
}

module attributes {stable_mosaic.version = 11 : i64} {
  func.func @_gemm_bn_act_fused_kernel(%arg0: memref<400x1024xbf16, #tpu.memory_space<vmem>>, %arg1: memref<1024x128xbf16, #tpu.memory_space<vmem>>, %arg2: memref<1x128xf32, #tpu.memory_space<vmem>>, %arg3: memref<1x128xf32, #tpu.memory_space<vmem>>, %arg4: memref<400x128xf32, #tpu.memory_space<vmem>>) attributes {dimension_semantics = [], scalar_prefetch = 0 : i64, scratch_operands = 0 : i64, tpu.core_type = #tpu.core_type<tc>} {
    %c0 = arith.constant 0 : index
    %c0_0 = arith.constant 0 : index
    %0 = vector.load %arg0[%c0, %c0_0] : memref<400x1024xbf16, #tpu.memory_space<vmem>>, vector<400x1024xbf16>
    %c0_1 = arith.constant 0 : index
    %c0_2 = arith.constant 0 : index
    %1 = vector.load %arg1[%c0_1, %c0_2] : memref<1024x128xbf16, #tpu.memory_space<vmem>>, vector<1024x128xbf16>
    %cst = arith.constant dense<0.000000e+00> : vector<400x128xf32>
    %2 = tpu.matmul %0, %1, %cst {dimension_numbers = #tpu.dot_dimension_numbers<[1], [0], [0], [1], [0, 0, 1, 1], [], []>} : vector<400x1024xbf16>, vector<1024x128xbf16>, vector<400x128xf32> -> vector<400x128xf32>
    %cst_3 = arith.constant dense<0.000000e+00> : vector<128xf32>
    %3 = vector.multi_reduction <add>, %2, %cst_3 [0] : vector<400x128xf32> to vector<128xf32>
    %4 = vector.shape_cast %3 : vector<128xf32> to vector<1x128xf32>
    %cst_4 = arith.constant 0.00255102036 : f32
    %5 = vector.broadcast %cst_4 : f32 to vector<1x128xf32>
    %6 = arith.mulf %4, %5 : vector<1x128xf32>
    %7 = arith.mulf %2, %2 : vector<400x128xf32>
    %cst_5 = arith.constant dense<0.000000e+00> : vector<128xf32>
    %8 = vector.multi_reduction <add>, %7, %cst_5 [0] : vector<400x128xf32> to vector<128xf32>
    %9 = vector.shape_cast %8 : vector<128xf32> to vector<1x128xf32>
    %cst_6 = arith.constant 0.00255102036 : f32
    %10 = vector.broadcast %cst_6 : f32 to vector<1x128xf32>
    %11 = arith.mulf %9, %10 : vector<1x128xf32>
    %12 = arith.mulf %6, %6 : vector<1x128xf32>
    %13 = arith.subf %11, %12 : vector<1x128xf32>
    %cst_7 = arith.constant 0.000000e+00 : f32
    %14 = vector.broadcast %cst_7 : f32 to vector<1x128xf32>
    %15 = arith.maximumf %13, %14 : vector<1x128xf32>
    %c0_8 = arith.constant 0 : index
    %c0_9 = arith.constant 0 : index
    %16 = vector.load %arg2[%c0_8, %c0_9] : memref<1x128xf32, #tpu.memory_space<vmem>>, vector<1x128xf32>
    %cst_10 = arith.constant 9.99999974E-6 : f32
    %17 = vector.broadcast %cst_10 : f32 to vector<1x128xf32>
    %18 = arith.addf %15, %17 : vector<1x128xf32>
    %19 = math.rsqrt %18 : vector<1x128xf32>
    %20 = arith.mulf %16, %19 : vector<1x128xf32>
    %c0_11 = arith.constant 0 : index
    %c0_12 = arith.constant 0 : index
    %21 = vector.load %arg3[%c0_11, %c0_12] : memref<1x128xf32, #tpu.memory_space<vmem>>, vector<1x128xf32>
    %22 = arith.mulf %6, %20 : vector<1x128xf32>
    %23 = arith.subf %21, %22 : vector<1x128xf32>
    %24 = vector.broadcast %20 : vector<1x128xf32> to vector<400x128xf32>
    %25 = arith.mulf %2, %24 : vector<400x128xf32>
    %26 = vector.broadcast %23 : vector<1x128xf32> to vector<400x128xf32>
    %27 = arith.addf %25, %26 : vector<400x128xf32>
    %cst_13 = arith.constant 0.000000e+00 : f32
    %28 = vector.broadcast %cst_13 : f32 to vector<400x128xf32>
    %29 = arith.maximumf %27, %28 : vector<400x128xf32>
    %c0_14 = arith.constant 0 : index
    %c0_15 = arith.constant 0 : index
    %30 = vector.load %arg4[%c0_14, %c0_15] : memref<400x128xf32, #tpu.memory_space<vmem>>, vector<400x128xf32>
    tpu.vector_store %arg4[%c0_14, %c0_15], %29 {strides = array<i32>} : memref<400x128xf32, #tpu.memory_space<vmem>>, vector<400x128xf32>,
    return
  }
}

module attributes {stable_mosaic.version = 11 : i64} {
  func.func @_gemm_bias_act_kernel(%arg0: i32, %arg1: memref<400x512xbf16, #tpu.memory_space<vmem>>, %arg2: memref<512x128xbf16, #tpu.memory_space<vmem>>, %arg3: memref<400x128xf32, #tpu.memory_space<vmem>>) attributes {dimension_semantics = [#tpu.dimension_semantics<parallel>], iteration_bounds = array<i64: 4>, scalar_prefetch = 0 : i64, scratch_operands = 0 : i64, tpu.core_type = #tpu.core_type<tc>, window_params = [{transform_indices = @transform_0, window_bounds = array<i64: 400, 512>}, {pipeline_mode = #tpu.pipeline_mode<synchronous>, transform_indices = @transform_1, window_bounds = array<i64: 512, 128>}, {transform_indices = @transform_2, window_bounds = array<i64: 400, 128>}]} {
    %c0 = arith.constant 0 : index
    %c0_0 = arith.constant 0 : index
    %0 = vector.load %arg1[%c0, %c0_0] : memref<400x512xbf16, #tpu.memory_space<vmem>>, vector<400x512xbf16>
    %c0_1 = arith.constant 0 : index
    %c0_2 = arith.constant 0 : index
    %1 = vector.load %arg2[%c0_1, %c0_2] : memref<512x128xbf16, #tpu.memory_space<vmem>>, vector<512x128xbf16>
    %cst = arith.constant dense<0.000000e+00> : vector<400x128xf32>
    %2 = tpu.matmul %0, %1, %cst {dimension_numbers = #tpu.dot_dimension_numbers<[1], [0], [0], [1], [0, 0, 1, 1], [], []>} : vector<400x512xbf16>, vector<512x128xbf16>, vector<400x128xf32> -> vector<400x128xf32>
    %3 = math.tanh %2 : vector<400x128xf32>
    %c0_3 = arith.constant 0 : index
    %c0_4 = arith.constant 0 : index
    %4 = vector.load %arg3[%c0_3, %c0_4] : memref<400x128xf32, #tpu.memory_space<vmem>>, vector<400x128xf32>
    tpu.vector_store %arg3[%c0_3, %c0_4], %3 {strides = array<i32>} : memref<400x128xf32, #tpu.memory_space<vmem>>, vector<400x128xf32>,
    return
  }
  func.func @transform_0(%arg0: i32) -> (i32, i32) {
    %c0_i32 = arith.constant 0 : i32
    %c0_i32_0 = arith.constant 0 : i32
    return %arg0, %c0_i32 : i32, i32
  }
  func.func @transform_1(%arg0: i32) -> (i32, i32) {
    %c0_i32 = arith.constant 0 : i32
    %c0_i32_0 = arith.constant 0 : i32
    %c0_i32_1 = arith.constant 0 : i32
    return %c0_i32, %c0_i32_0 : i32, i32
  }
  func.func @transform_2(%arg0: i32) -> (i32, i32) {
    %c0_i32 = arith.constant 0 : i32
    %c0_i32_0 = arith.constant 0 : i32
    return %arg0, %c0_i32 : i32, i32
  }
}

</mosaic_0001>

<llo_original>
// kernel: conv_forward.8
$region0: #{conv_forward.8}
  #allocation0 [shape = 'u32[]', space=smem, size = 0x4, offset = 0x4, fixed_abs, tag = 'smem constant byte address 0x4 - core index']
  #allocation1 [shape = 'u32[144,128]{1,0:T(1,128)}', space=vmem, size = 0x12000, scoped, tag = 'internal scratch']
  %s0 = inlined_call_operand.vmem [shape: bf16[592,128], index: 0, kind: input, shape index: {}]
  %s1 = inlined_call_operand.hbm [shape: bf16[128,128], index: 1, kind: input, shape index: {}]
  %s2 = inlined_call_operand.hbm [shape: f32[1,128], index: 2, kind: input, shape index: {}]
  %s3 = inlined_call_operand.hbm [shape: f32[1,128], index: 3, kind: input, shape index: {}]
  %s4 = inlined_call_operand.vmem [shape: f32[592,128], index: 4, kind: output, shape index: {}]
  %s5 = sld [smem:[#allocation0]]
  $region38: #{conv_forward.8} parent=0
    _
  %s7 = ssub.s32 1, %s5
  %s8 = scalar_select 0, %s7, %s5
  $region1: #{conv_forward.8} parent=0
    #allocation2 [shape = 'u8[32768]{0}', space=vmem, size = 0x8000, scoped, tag = 'input window, operand 1, single buffered']
    #allocation3 [shape = 's32[1]{0}', space=sflag, size = 0x4, scoped, tag = 'scoped memory for conv_forward.8']
    #allocation4 [shape = 'u8[512]{0}', space=vmem, size = 0x400, scoped, tag = 'input window, operand 2, single buffered']
    #allocation5 [shape = 's32[1]{0}', space=sflag, size = 0x4, scoped, tag = 'scoped memory for conv_forward.8']
    #allocation6 [shape = 'u8[512]{0}', space=vmem, size = 0x400, scoped, tag = 'input window, operand 3, single buffered']
    %9 = vsyncpa [#allocation3], 0
    %10 = vsyncpa [#allocation5], 0
    // Predicated region
    $region2: #{conv_forward.8} parent=1 // pred_check
      _
    $region3: #{conv_forward.8} parent=1 // pred_check_branch
      %12 = sbr.rel (0) target = $region5
    $region4: #{conv_forward.8} parent=1 // pred_region
      _
    $region5: #{conv_forward.8} parent=1 // pred_fallthru
      _
    // Predicated region
    $region6: #{conv_forward.8} parent=1 // pred_check
      _
    $region7: #{conv_forward.8} parent=1 // pred_check_branch
      %14 = sbr.rel (0) target = $region9
    $region8: #{conv_forward.8} parent=1 // pred_region
      %s16 = ssub.s32 1024, 1024
      %17 = vsyncadd [#allocation3], %s16
      %s18 = sshll.u32 [#allocation2], 4
      %s19 = int_to_ptr.vmem [resolvable:$true] %s18
      %24 = dma.hbm_to_vmem [thread:$0]  %s1, 1024, %s19, [#allocation3], 64, 64, 4
    $region9: #{conv_forward.8} parent=1 // pred_fallthru
      _
    // Predicated region
    $region10: #{conv_forward.8} parent=1 // pred_check
      _
    $region11: #{conv_forward.8} parent=1 // pred_check_branch
      %26 = sbr.rel (0) target = $region13
    $region12: #{conv_forward.8} parent=1 // pred_region
      %s28 = ssub.s32 16, 16
      %29 = vsyncadd [#allocation5], %s28
      %s31 = sshll.u32 [#allocation4], 4
      %s32 = int_to_ptr.vmem [resolvable:$true] %s31
      %34 = dma.hbm_to_vmem [thread:$0]  %s2, 16, %s32, [#allocation5]
    $region13: #{conv_forward.8} parent=1 // pred_fallthru
      _
    // Predicated region
    $region14: #{conv_forward.8} parent=1 // pred_check
      _
    $region15: #{conv_forward.8} parent=1 // pred_check_branch
      %36 = sbr.rel (0) target = $region17
    $region16: #{conv_forward.8} parent=1 // pred_region
      %s38 = ssub.s32 16, 16
      %39 = vsyncadd [#allocation5], %s38
      %s41 = sshll.u32 [#allocation6], 4
      %s42 = int_to_ptr.vmem [resolvable:$true] %s41
      %44 = dma.hbm_to_vmem [thread:$0]  %s3, 16, %s42, [#allocation5]
    $region17: #{conv_forward.8} parent=1 // pred_fallthru
      _
    // Predicated region
    $region18: #{conv_forward.8} parent=1 // pred_check
      _
    $region19: #{conv_forward.8} parent=1 // pred_check_branch
      %46 = sbr.rel (0) target = $region21
    $region20: #{conv_forward.8} parent=1 // pred_region
      %47 = dma.done [#allocation3], 1024
    $region21: #{conv_forward.8} parent=1 // pred_fallthru
      _
    // Predicated region
    $region22: #{conv_forward.8} parent=1 // pred_check
      _
    $region23: #{conv_forward.8} parent=1 // pred_check_branch
      %49 = sbr.rel (0) target = $region25
    $region24: #{conv_forward.8} parent=1 // pred_region
      %50 = dma.done [#allocation5], 16
    $region25: #{conv_forward.8} parent=1 // pred_fallthru
      _
    // Predicated region
    $region26: #{conv_forward.8} parent=1 // pred_check
      _
    $region27: #{conv_forward.8} parent=1 // pred_check_branch
      %52 = sbr.rel (0) target = $region29
    $region28: #{conv_forward.8} parent=1 // pred_region
      %53 = dma.done [#allocation5], 16
    $region29: #{conv_forward.8} parent=1 // pred_fallthru
      _
    %v55 = vld [vmem:[%s0] sm:$0xf]
    %v56 = vld [vmem:[%s0 + $0x4] sm:$0xf]
    %v57 = vld [vmem:[%s0 + $0x8] sm:$0xf]
    %v58 = vld [vmem:[%s0 + $0xc] sm:$0xf]
    %v59 = vld [vmem:[%s0 + $0x10] sm:$0xf]
    %v60 = vld [vmem:[%s0 + $0x14] sm:$0xf]
    %v61 = vld [vmem:[%s0 + $0x18] sm:$0xf]
    %v62 = vld [vmem:[%s0 + $0x1c] sm:$0xf]
    %v63 = vld [vmem:[%s0 + $0x20] sm:$0xf]
    %v64 = vld [vmem:[%s0 + $0x24] sm:$0xf]
    %v65 = vld [vmem:[%s0 + $0x28] sm:$0xf]
    %v66 = vld [vmem:[%s0 + $0x2c] sm:$0xf]
    %v67 = vld [vmem:[%s0 + $0x30] sm:$0xf]
    %v68 = vld [vmem:[%s0 + $0x34] sm:$0xf]
    %v69 = vld [vmem:[%s0 + $0x38] sm:$0xf]
    %v70 = vld [vmem:[%s0 + $0x3c] sm:$0xf]
    %v71 = vld [vmem:[%s0 + $0x40] sm:$0xf]
    %v72 = vld [vmem:[%s0 + $0x44] sm:$0xf]
    %v73 = vld [vmem:[%s0 + $0x48] sm:$0xf]
    %v74 = vld [vmem:[%s0 + $0x4c] sm:$0xf]
    %v75 = vld [vmem:[%s0 + $0x50] sm:$0xf]
    %v76 = vld [vmem:[%s0 + $0x54] sm:$0xf]
    %v77 = vld [vmem:[%s0 + $0x58] sm:$0xf]
    %v78 = vld [vmem:[%s0 + $0x5c] sm:$0xf]
    %v79 = vld [vmem:[%s0 + $0x60] sm:$0xf]
    %v80 = vld [vmem:[%s0 + $0x64] sm:$0xf]
    %v81 = vld [vmem:[%s0 + $0x68] sm:$0xf]
    %v82 = vld [vmem:[%s0 + $0x6c] sm:$0xf]
    %v83 = vld [vmem:[%s0 + $0x70] sm:$0xf]
    %v84 = vld [vmem:[%s0 + $0x74] sm:$0xf]
    %v85 = vld [vmem:[%s0 + $0x78] sm:$0xf]
    %v86 = vld [vmem:[%s0 + $0x7c] sm:$0xf]
    %v87 = vld [vmem:[%s0 + $0x80] sm:$0xf]
    %v88 = vld [vmem:[%s0 + $0x84] sm:$0xf]
    %v89 = vld [vmem:[%s0 + $0x88] sm:$0xf]
    %v90 = vld [vmem:[%s0 + $0x8c] sm:$0xf]
    %v91 = vld [vmem:[%s0 + $0x90] sm:$0xf]
    %v92 = vld [vmem:[%s0 + $0x94] sm:$0xf]
    %v93 = vld [vmem:[%s0 + $0x98] sm:$0xf]
    %v94 = vld [vmem:[%s0 + $0x9c] sm:$0xf]
    %v95 = vld [vmem:[%s0 + $0xa0] sm:$0xf]
    %v96 = vld [vmem:[%s0 + $0xa4] sm:$0xf]
    %v97 = vld [vmem:[%s0 + $0xa8] sm:$0xf]
    %v98 = vld [vmem:[%s0 + $0xac] sm:$0xf]
    %v99 = vld [vmem:[%s0 + $0xb0] sm:$0xf]
    %v100 = vld [vmem:[%s0 + $0xb4] sm:$0xf]
    %v101 = vld [vmem:[%s0 + $0xb8] sm:$0xf]
    %v102 = vld [vmem:[%s0 + $0xbc] sm:$0xf]
    %v103 = vld [vmem:[%s0 + $0xc0] sm:$0xf]
    %v104 = vld [vmem:[%s0 + $0xc4] sm:$0xf]
    %v105 = vld [vmem:[%s0 + $0xc8] sm:$0xf]
    %v106 = vld [vmem:[%s0 + $0xcc] sm:$0xf]
    %v107 = vld [vmem:[%s0 + $0xd0] sm:$0xf]
    %v108 = vld [vmem:[%s0 + $0xd4] sm:$0xf]
    %v109 = vld [vmem:[%s0 + $0xd8] sm:$0xf]
    %v110 = vld [vmem:[%s0 + $0xdc] sm:$0xf]
    %v111 = vld [vmem:[%s0 + $0xe0] sm:$0xf]
    %v112 = vld [vmem:[%s0 + $0xe4] sm:$0xf]
    %v113 = vld [vmem:[%s0 + $0xe8] sm:$0xf]
    %v114 = vld [vmem:[%s0 + $0xec] sm:$0xf]
    %v115 = vld [vmem:[%s0 + $0xf0] sm:$0xf]
    %v116 = vld [vmem:[%s0 + $0xf4] sm:$0xf]
    %v117 = vld [vmem:[%s0 + $0xf8] sm:$0xf]
    %v118 = vld [vmem:[%s0 + $0xfc] sm:$0xf]
    %v119 = vld [vmem:[%s0 + $0x100] sm:$0xf]
    %v120 = vld [vmem:[%s0 + $0x104] sm:$0xf]
    %v121 = vld [vmem:[%s0 + $0x108] sm:$0xf]
    %v122 = vld [vmem:[%s0 + $0x10c] sm:$0xf]
    %v123 = vld [vmem:[%s0 + $0x110] sm:$0xf]
    %v124 = vld [vmem:[%s0 + $0x114] sm:$0xf]
    %v125 = vld [vmem:[%s0 + $0x118] sm:$0xf]
    %v126 = vld [vmem:[%s0 + $0x11c] sm:$0xf]
    %v127 = vld [vmem:[%s0 + $0x120] sm:$0xf]
    %v128 = vld [vmem:[%s0 + $0x124] sm:$0xf]
    %v129 = vld [vmem:[#allocation2] sm:$0xf]
    %v130 = vld [vmem:[#allocation2 + $0x4] sm:$0xf]
    %v131 = vld [vmem:[#allocation2 + $0x8] sm:$0xf]
    %v132 = vld [vmem:[#allocation2 + $0xc] sm:$0xf]
    %v133 = vld [vmem:[#allocation2 + $0x10] sm:$0xf]
    %v134 = vld [vmem:[#allocation2 + $0x14] sm:$0xf]
    %v135 = vld [vmem:[#allocation2 + $0x18] sm:$0xf]
    %v136 = vld [vmem:[#allocation2 + $0x1c] sm:$0xf]
    %v137 = vld [vmem:[#allocation2 + $0x20] sm:$0xf]
    %v138 = vld [vmem:[#allocation2 + $0x24] sm:$0xf]
    %v139 = vld [vmem:[#allocation2 + $0x28] sm:$0xf]
    %v140 = vld [vmem:[#allocation2 + $0x2c] sm:$0xf]
    %v141 = vld [vmem:[#allocation2 + $0x30] sm:$0xf]
    %v142 = vld [vmem:[#allocation2 + $0x34] sm:$0xf]
    %v143 = vld [vmem:[#allocation2 + $0x38] sm:$0xf]
    %v144 = vld [vmem:[#allocation2 + $0x3c] sm:$0xf]
    %v219 = vunpack.c.l.b16 %v55
    %v220 = vunpack.c.l.b16 %v56
    %v221 = vunpack.c.l.b16 %v57
    %v222 = vunpack.c.l.b16 %v58
    %v223 = vunpack.c.l.b16 %v59
    %v224 = vunpack.c.l.b16 %v60
    %v225 = vunpack.c.l.b16 %v61
    %v226 = vunpack.c.l.b16 %v62
    %v227 = vunpack.c.l.b16 %v63
    %v228 = vunpack.c.l.b16 %v64
    %v229 = vunpack.c.l.b16 %v65
    %v230 = vunpack.c.l.b16 %v66
    %v231 = vunpack.c.l.b16 %v67
    %v232 = vunpack.c.l.b16 %v68
    %v233 = vunpack.c.l.b16 %v69
    %v234 = vunpack.c.l.b16 %v70
    %v235 = vunpack.c.l.b16 %v71
    %v236 = vunpack.c.l.b16 %v72
    %v237 = vunpack.c.l.b16 %v73
    %v238 = vunpack.c.l.b16 %v74
    %v239 = vunpack.c.l.b16 %v75
    %v240 = vunpack.c.l.b16 %v76
    %v241 = vunpack.c.l.b16 %v77
    %v242 = vunpack.c.l.b16 %v78
    %v243 = vunpack.c.l.b16 %v79
    %v244 = vunpack.c.l.b16 %v80
    %v245 = vunpack.c.l.b16 %v81
    %v246 = vunpack.c.l.b16 %v82
    %v247 = vunpack.c.l.b16 %v83
    %v248 = vunpack.c.l.b16 %v84
    %v249 = vunpack.c.l.b16 %v85
    %v250 = vunpack.c.l.b16 %v86
    %v251 = vunpack.c.l.b16 %v87
    %v252 = vunpack.c.l.b16 %v88
    %v253 = vunpack.c.l.b16 %v89
    %v254 = vunpack.c.l.b16 %v90
    %v255 = vunpack.c.l.b16 %v91
    %v256 = vunpack.c.l.b16 %v92
    %v257 = vunpack.c.l.b16 %v93
    %v258 = vunpack.c.l.b16 %v94
    %v259 = vunpack.c.l.b16 %v95
    %v260 = vunpack.c.l.b16 %v96
    %v261 = vunpack.c.l.b16 %v97
    %v262 = vunpack.c.l.b16 %v98
    %v263 = vunpack.c.l.b16 %v99
    %v264 = vunpack.c.l.b16 %v100
    %v265 = vunpack.c.l.b16 %v101
    %v266 = vunpack.c.l.b16 %v102
    %v267 = vunpack.c.l.b16 %v103
    %v268 = vunpack.c.l.b16 %v104
    %v269 = vunpack.c.l.b16 %v105
    %v270 = vunpack.c.l.b16 %v106
    %v271 = vunpack.c.l.b16 %v107
    %v272 = vunpack.c.l.b16 %v108
    %v273 = vunpack.c.l.b16 %v109
    %v274 = vunpack.c.l.b16 %v110
    %v275 = vunpack.c.l.b16 %v111
    %v276 = vunpack.c.l.b16 %v112
    %v277 = vunpack.c.l.b16 %v113
    %v278 = vunpack.c.l.b16 %v114
    %v279 = vunpack.c.l.b16 %v115
    %v280 = vunpack.c.l.b16 %v116
    %v281 = vunpack.c.l.b16 %v117
    %v282 = vunpack.c.l.b16 %v118
    %v283 = vunpack.c.l.b16 %v119
    %v284 = vunpack.c.l.b16 %v120
    %v285 = vunpack.c.l.b16 %v121
    %v286 = vunpack.c.l.b16 %v122
    %v287 = vunpack.c.l.b16 %v123
    %v288 = vunpack.c.l.b16 %v124
    %v289 = vunpack.c.l.b16 %v125
    %v290 = vunpack.c.l.b16 %v126
    %v291 = vunpack.c.l.b16 %v127
    %v292 = vunpack.c.l.b16 %v128
    %v293 = vpack.c.b16 %v220, %v219
    %v294 = vpack.c.b16 %v222, %v221
    %v295 = vpack.c.b16 %v224, %v223
    %v296 = vpack.c.b16 %v226, %v225
    %v297 = vpack.c.b16 %v228, %v227
    %v298 = vpack.c.b16 %v230, %v229
    %v299 = vpack.c.b16 %v232, %v231
    %v300 = vpack.c.b16 %v234, %v233
    %v301 = vpack.c.b16 %v236, %v235
    %v302 = vpack.c.b16 %v238, %v237
    %v303 = vpack.c.b16 %v240, %v239
    %v304 = vpack.c.b16 %v242, %v241
    %v305 = vpack.c.b16 %v244, %v243
    %v306 = vpack.c.b16 %v246, %v245
    %v307 = vpack.c.b16 %v248, %v247
    %v308 = vpack.c.b16 %v250, %v249
    %v309 = vpack.c.b16 %v252, %v251
    %v310 = vpack.c.b16 %v254, %v253
    %v311 = vpack.c.b16 %v256, %v255
    %v312 = vpack.c.b16 %v258, %v257
    %v313 = vpack.c.b16 %v260, %v259
    %v314 = vpack.c.b16 %v262, %v261
    %v315 = vpack.c.b16 %v264, %v263
    %v316 = vpack.c.b16 %v266, %v265
    %v317 = vpack.c.b16 %v268, %v267
    %v318 = vpack.c.b16 %v270, %v269
    %v319 = vpack.c.b16 %v272, %v271
    %v320 = vpack.c.b16 %v274, %v273
    %v321 = vpack.c.b16 %v276, %v275
    %v322 = vpack.c.b16 %v278, %v277
    %v323 = vpack.c.b16 %v280, %v279
    %v324 = vpack.c.b16 %v282, %v281
    %v325 = vpack.c.b16 %v284, %v283
    %v326 = vpack.c.b16 %v286, %v285
    %v327 = vpack.c.b16 %v288, %v287
    %v328 = vpack.c.b16 %v290, %v289
    %v329 = vpack.c.b16 %v292, %v291
    %v383 = vunpack.c.l.b16 %v129
    %v384 = vunpack.c.l.b16 %v130
    %v385 = vunpack.c.l.b16 %v131
    %v386 = vunpack.c.l.b16 %v132
    %v387 = vunpack.c.l.b16 %v133
    %v388 = vunpack.c.l.b16 %v134
    %v389 = vunpack.c.l.b16 %v135
    %v390 = vunpack.c.l.b16 %v136
    %v391 = vunpack.c.l.b16 %v137
    %v392 = vunpack.c.l.b16 %v138
    %v393 = vunpack.c.l.b16 %v139
    %v394 = vunpack.c.l.b16 %v140
    %v395 = vunpack.c.l.b16 %v141
    %v396 = vunpack.c.l.b16 %v142
    %v397 = vunpack.c.l.b16 %v143
    %v398 = vunpack.c.l.b16 %v144
    %v399 = vpack.c.b16 %v384, %v383
    %v400 = vpack.c.b16 %v386, %v385
    %v401 = vpack.c.b16 %v388, %v387
    %v402 = vpack.c.b16 %v390, %v389
    %v403 = vpack.c.b16 %v392, %v391
    %v404 = vpack.c.b16 %v394, %v393
    %v405 = vpack.c.b16 %v396, %v395
    %v406 = vpack.c.b16 %v398, %v397
    %415 = vmatprep.subr.bf16.mxu0 0
    %416 = vmatpush1.bf16.msra.mxu0 %v399
    %417 = vmatprep.subr.bf16.mxu0 0
    %418 = vmatpush1.bf16.msra.mxu0 %v400
    %419 = vmatprep.subr.bf16.mxu0 0
    %420 = vmatpush1.bf16.msra.mxu0 %v401
    %421 = vmatprep.subr.bf16.mxu0 0
    %422 = vmatpush1.bf16.msra.mxu0 %v402
    %423 = vmatprep.subr.bf16.mxu0 0
    %424 = vmatpush1.bf16.msra.mxu0 %v403
    %425 = vmatprep.subr.bf16.mxu0 0
    %426 = vmatpush1.bf16.msra.mxu0 %v404
    %427 = vmatprep.subr.bf16.mxu0 0
    %428 = vmatpush1.bf16.msra.mxu0 %v405
    %429 = vmatprep.subr.bf16.mxu0 0
    %430 = vmatpush1.bf16.msra.mxu0 %v406
    %431 = vmatprep.subr.bf16.mxu0 0
    %432 = vmatpush1.bf16.msra.mxu0 0
    %433 = vmatprep.subr.bf16.mxu0 0
    %434 = vmatpush1.bf16.msra.mxu0 0
    %435 = vmatprep.subr.bf16.mxu0 0
    %436 = vmatpush1.bf16.msra.mxu0 0
    %437 = vmatprep.subr.bf16.mxu0 0
    %438 = vmatpush1.bf16.msra.mxu0 0
    %439 = vmatprep.subr.bf16.mxu0 0
    %440 = vmatpush1.bf16.msra.mxu0 0
    %441 = vmatprep.subr.bf16.mxu0 0
    %442 = vmatpush1.bf16.msra.mxu0 0
    %443 = vmatprep.subr.bf16.mxu0 0
    %444 = vmatpush1.bf16.msra.mxu0 0
    %445 = vmatprep.subr.bf16.mxu0 0
    %446 = vmatpush1.bf16.msra.mxu0 0
    %447 = vmatprep.mubr.bf16.mxu0 0
    %448 = vmatmul.mubr.bf16.gmra.mrb[0].mxu0 %v293
    %v449 = vpop.f32.mrb[0].mxu0
    %v450 = vadd.f32 0.0, %v449
    %v451 = vpop.f32.mrb[0].mxu0
    %v452 = vpop.f32.mrb[0].mxu0
    %v453 = vadd.f32 0.0, %v452
    %v454 = vpop.f32.mrb[0].mxu0
    %455 = vmatprep.mubr.bf16.mxu0 0
    %456 = vmatmul.mubr.bf16.gmra.mrb[0].mxu0 %v294
    %v457 = vpop.f32.mrb[0].mxu0
    %v458 = vadd.f32 0.0, %v457
    %v459 = vpop.f32.mrb[0].mxu0
    %v460 = vpop.f32.mrb[0].mxu0
    %v461 = vadd.f32 0.0, %v460
    %v462 = vpop.f32.mrb[0].mxu0
    %463 = vmatprep.mubr.bf16.mxu0 0
    %464 = vmatmul.mubr.bf16.gmra.mrb[0].mxu0 %v295
    %v465 = vpop.f32.mrb[0].mxu0
    %v466 = vadd.f32 0.0, %v465
    %v467 = vpop.f32.mrb[0].mxu0
    %v468 = vpop.f32.mrb[0].mxu0
    %v469 = vadd.f32 0.0, %v468
    %v470 = vpop.f32.mrb[0].mxu0
    %471 = vmatprep.mubr.bf16.mxu0 0
    %472 = vmatmul.mubr.bf16.gmra.mrb[0].mxu0 %v296
    %v473 = vpop.f32.mrb[0].mxu0
    %v474 = vadd.f32 0.0, %v473
    %v475 = vpop.f32.mrb[0].mxu0
    %v476 = vpop.f32.mrb[0].mxu0
    %v477 = vadd.f32 0.0, %v476
    %v478 = vpop.f32.mrb[0].mxu0
    %479 = vmatprep.mubr.bf16.mxu0 0
    %480 = vmatmul.mubr.bf16.gmra.mrb[0].mxu0 %v297
    %v481 = vpop.f32.mrb[0].mxu0
    %v482 = vadd.f32 0.0, %v481
    %v483 = vpop.f32.mrb[0].mxu0
    %v484 = vpop.f32.mrb[0].mxu0
    %v485 = vadd.f32 0.0, %v484
    %v486 = vpop.f32.mrb[0].mxu0
    %487 = vmatprep.mubr.bf16.mxu0 0
    %488 = vmatmul.mubr.bf16.gmra.mrb[0].mxu0 %v298
    %v489 = vpop.f32.mrb[0].mxu0
    %v490 = vadd.f32 0.0, %v489
    %v491 = vpop.f32.mrb[0].mxu0
    %v492 = vpop.f32.mrb[0].mxu0
    %v493 = vadd.f32 0.0, %v492
    %v494 = vpop.f32.mrb[0].mxu0
    %495 = vmatprep.mubr.bf16.mxu0 0
    %496 = vmatmul.mubr.bf16.gmra.mrb[0].mxu0 %v299
    %v497 = vpop.f32.mrb[0].mxu0
    %v498 = vadd.f32 0.0, %v497
    %v499 = vpop.f32.mrb[0].mxu0
    %v500 = vpop.f32.mrb[0].mxu0
    %v501 = vadd.f32 0.0, %v500
    %v502 = vpop.f32.mrb[0].mxu0
    %503 = vmatprep.mubr.bf16.mxu0 0
    %504 = vmatmul.mubr.bf16.gmra.mrb[0].mxu0 %v300
    %v505 = vpop.f32.mrb[0].mxu0
    %v506 = vadd.f32 0.0, %v505
    %v507 = vpop.f32.mrb[0].mxu0
    %v508 = vpop.f32.mrb[0].mxu0
    %v509 = vadd.f32 0.0, %v508
    %v510 = vpop.f32.mrb[0].mxu0
    %511 = vmatprep.mubr.bf16.mxu0 0
    %512 = vmatmul.mubr.bf16.gmra.mrb[0].mxu0 %v301
    %v513 = vpop.f32.mrb[0].mxu0
    %v514 = vadd.f32 0.0, %v513
    %v515 = vpop.f32.mrb[0].mxu0
    %v516 = vpop.f32.mrb[0].mxu0
    %v517 = vadd.f32 0.0, %v516
    %v518 = vpop.f32.mrb[0].mxu0
    %519 = vmatprep.mubr.bf16.mxu0 0
    %520 = vmatmul.mubr.bf16.gmra.mrb[0].mxu0 %v302
    %v521 = vpop.f32.mrb[0].mxu0
    %v522 = vadd.f32 0.0, %v521
    %v523 = vpop.f32.mrb[0].mxu0
    %v524 = vpop.f32.mrb[0].mxu0
    %v525 = vadd.f32 0.0, %v524
    %v526 = vpop.f32.mrb[0].mxu0
    %527 = vmatprep.mubr.bf16.mxu0 0
    %528 = vmatmul.mubr.bf16.gmra.mrb[0].mxu0 %v303
    %v529 = vpop.f32.mrb[0].mxu0
    %v530 = vadd.f32 0.0, %v529
    %v531 = vpop.f32.mrb[0].mxu0
    %v532 = vpop.f32.mrb[0].mxu0
    %v533 = vadd.f32 0.0, %v532
    %v534 = vpop.f32.mrb[0].mxu0
    %535 = vmatprep.mubr.bf16.mxu0 0
    %536 = vmatmul.mubr.bf16.gmra.mrb[0].mxu0 %v304
    %v537 = vpop.f32.mrb[0].mxu0
    %v538 = vadd.f32 0.0, %v537
    %v539 = vpop.f32.mrb[0].mxu0
    %v540 = vpop.f32.mrb[0].mxu0
    %v541 = vadd.f32 0.0, %v540
    %v542 = vpop.f32.mrb[0].mxu0
    %543 = vmatprep.mubr.bf16.mxu0 0
    %544 = vmatmul.mubr.bf16.gmra.mrb[0].mxu0 %v305
    %v545 = vpop.f32.mrb[0].mxu0
    %v546 = vadd.f32 0.0, %v545
    %v547 = vpop.f32.mrb[0].mxu0
    %v548 = vpop.f32.mrb[0].mxu0
    %v549 = vadd.f32 0.0, %v548
    %v550 = vpop.f32.mrb[0].mxu0
    %551 = vmatprep.mubr.bf16.mxu0 0
    %552 = vmatmul.mubr.bf16.gmra.mrb[0].mxu0 %v306
    %v553 = vpop.f32.mrb[0].mxu0
    %v554 = vadd.f32 0.0, %v553
    %v555 = vpop.f32.mrb[0].mxu0
    %v556 = vpop.f32.mrb[0].mxu0
    %v557 = vadd.f32 0.0, %v556
    %v558 = vpop.f32.mrb[0].mxu0
    %559 = vmatprep.mubr.bf16.mxu0 0
    %560 = vmatmul.mubr.bf16.gmra.mrb[0].mxu0 %v307
    %v561 = vpop.f32.mrb[0].mxu0
    %v562 = vadd.f32 0.0, %v561
    %v563 = vpop.f32.mrb[0].mxu0
    %v564 = vpop.f32.mrb[0].mxu0
    %v565 = vadd.f32 0.0, %v564
    %v566 = vpop.f32.mrb[0].mxu0
    %567 = vmatprep.mubr.bf16.mxu0 0
    %568 = vmatmul.mubr.bf16.gmra.mrb[0].mxu0 %v308
    %v569 = vpop.f32.mrb[0].mxu0
    %v570 = vadd.f32 0.0, %v569
    %v571 = vpop.f32.mrb[0].mxu0
    %v572 = vpop.f32.mrb[0].mxu0
    %v573 = vadd.f32 0.0, %v572
    %v574 = vpop.f32.mrb[0].mxu0
    %575 = vmatprep.mubr.bf16.mxu0 0
    %576 = vmatmul.mubr.bf16.gmra.mrb[0].mxu0 %v309
    %v577 = vpop.f32.mrb[0].mxu0
    %v578 = vadd.f32 0.0, %v577
    %v579 = vpop.f32.mrb[0].mxu0
    %v580 = vpop.f32.mrb[0].mxu0
    %v581 = vadd.f32 0.0, %v580
    %v582 = vpop.f32.mrb[0].mxu0
    %583 = vmatprep.mubr.bf16.mxu0 0
    %584 = vmatmul.mubr.bf16.gmra.mrb[0].mxu0 %v310
    %v585 = vpop.f32.mrb[0].mxu0
    %v586 = vadd.f32 0.0, %v585
    %v587 = vpop.f32.mrb[0].mxu0
    %v588 = vpop.f32.mrb[0].mxu0
    %v589 = vadd.f32 0.0, %v588
    %v590 = vpop.f32.mrb[0].mxu0
    %591 = vmatprep.mubr.bf16.mxu0 0
    %592 = vmatmul.mubr.bf16.gmra.mrb[0].mxu0 %v311
    %v593 = vpop.f32.mrb[0].mxu0
    %v594 = vadd.f32 0.0, %v593
    %v595 = vpop.f32.mrb[0].mxu0
    %v596 = vpop.f32.mrb[0].mxu0
    %v597 = vadd.f32 0.0, %v596
    %v598 = vpop.f32.mrb[0].mxu0
    %599 = vmatprep.mubr.bf16.mxu0 0
    %600 = vmatmul.mubr.bf16.gmra.mrb[0].mxu0 %v312
    %v601 = vpop.f32.mrb[0].mxu0
    %v602 = vadd.f32 0.0, %v601
    %v603 = vpop.f32.mrb[0].mxu0
    %v604 = vpop.f32.mrb[0].mxu0
    %v605 = vadd.f32 0.0, %v604
    %v606 = vpop.f32.mrb[0].mxu0
    %607 = vmatprep.mubr.bf16.mxu0 0
    %608 = vmatmul.mubr.bf16.gmra.mrb[0].mxu0 %v313
    %v609 = vpop.f32.mrb[0].mxu0
    %v610 = vadd.f32 0.0, %v609
    %v611 = vpop.f32.mrb[0].mxu0
    %v612 = vpop.f32.mrb[0].mxu0
    %v613 = vadd.f32 0.0, %v612
    %v614 = vpop.f32.mrb[0].mxu0
    %615 = vmatprep.mubr.bf16.mxu0 0
    %616 = vmatmul.mubr.bf16.gmra.mrb[0].mxu0 %v314
    %v617 = vpop.f32.mrb[0].mxu0
    %v618 = vadd.f32 0.0, %v617
    %v619 = vpop.f32.mrb[0].mxu0
    %v620 = vpop.f32.mrb[0].mxu0
    %v621 = vadd.f32 0.0, %v620
    %v622 = vpop.f32.mrb[0].mxu0
    %623 = vmatprep.mubr.bf16.mxu0 0
    %624 = vmatmul.mubr.bf16.gmra.mrb[0].mxu0 %v315
    %v625 = vpop.f32.mrb[0].mxu0
    %v626 = vadd.f32 0.0, %v625
    %v627 = vpop.f32.mrb[0].mxu0
    %v628 = vpop.f32.mrb[0].mxu0
    %v629 = vadd.f32 0.0, %v628
    %v630 = vpop.f32.mrb[0].mxu0
    %631 = vmatprep.mubr.bf16.mxu0 0
    %632 = vmatmul.mubr.bf16.gmra.mrb[0].mxu0 %v316
    %v633 = vpop.f32.mrb[0].mxu0
    %v634 = vadd.f32 0.0, %v633
    %v635 = vpop.f32.mrb[0].mxu0
    %v636 = vpop.f32.mrb[0].mxu0
    %v637 = vadd.f32 0.0, %v636
    %v638 = vpop.f32.mrb[0].mxu0
    %639 = vmatprep.mubr.bf16.mxu0 0
    %640 = vmatmul.mubr.bf16.gmra.mrb[0].mxu0 %v317
    %v641 = vpop.f32.mrb[0].mxu0
    %v642 = vadd.f32 0.0, %v641
    %v643 = vpop.f32.mrb[0].mxu0
    %v644 = vpop.f32.mrb[0].mxu0
    %v645 = vadd.f32 0.0, %v644
    %v646 = vpop.f32.mrb[0].mxu0
    %647 = vmatprep.mubr.bf16.mxu0 0
    %648 = vmatmul.mubr.bf16.gmra.mrb[0].mxu0 %v318
    %v649 = vpop.f32.mrb[0].mxu0
    %v650 = vadd.f32 0.0, %v649
    %v651 = vpop.f32.mrb[0].mxu0
    %v652 = vpop.f32.mrb[0].mxu0
    %v653 = vadd.f32 0.0, %v652
    %v654 = vpop.f32.mrb[0].mxu0
    %655 = vmatprep.mubr.bf16.mxu0 0
    %656 = vmatmul.mubr.bf16.gmra.mrb[0].mxu0 %v319
    %v657 = vpop.f32.mrb[0].mxu0
    %v658 = vadd.f32 0.0, %v657
    %v659 = vpop.f32.mrb[0].mxu0
    %v660 = vpop.f32.mrb[0].mxu0
    %v661 = vadd.f32 0.0, %v660
    %v662 = vpop.f32.mrb[0].mxu0
    %663 = vmatprep.mubr.bf16.mxu0 0
    %664 = vmatmul.mubr.bf16.gmra.mrb[0].mxu0 %v320
    %v665 = vpop.f32.mrb[0].mxu0
    %v666 = vadd.f32 0.0, %v665
    %v667 = vpop.f32.mrb[0].mxu0
    %v668 = vpop.f32.mrb[0].mxu0
    %v669 = vadd.f32 0.0, %v668
    %v670 = vpop.f32.mrb[0].mxu0
    %671 = vmatprep.mubr.bf16.mxu0 0
    %672 = vmatmul.mubr.bf16.gmra.mrb[0].mxu0 %v321
    %v673 = vpop.f32.mrb[0].mxu0
    %v674 = vadd.f32 0.0, %v673
    %v675 = vpop.f32.mrb[0].mxu0
    %v676 = vpop.f32.mrb[0].mxu0
    %v677 = vadd.f32 0.0, %v676
    %v678 = vpop.f32.mrb[0].mxu0
    %679 = vmatprep.mubr.bf16.mxu0 0
    %680 = vmatmul.mubr.bf16.gmra.mrb[0].mxu0 %v322
    %v681 = vpop.f32.mrb[0].mxu0
    %v682 = vadd.f32 0.0, %v681
    %v683 = vpop.f32.mrb[0].mxu0
    %v684 = vpop.f32.mrb[0].mxu0
    %v685 = vadd.f32 0.0, %v684
    %v686 = vpop.f32.mrb[0].mxu0
    %687 = vmatprep.mubr.bf16.mxu0 0
    %688 = vmatmul.mubr.bf16.gmra.mrb[0].mxu0 %v323
    %v689 = vpop.f32.mrb[0].mxu0
    %v690 = vadd.f32 0.0, %v689
    %v691 = vpop.f32.mrb[0].mxu0
    %v692 = vpop.f32.mrb[0].mxu0
    %v693 = vadd.f32 0.0, %v692
    %v694 = vpop.f32.mrb[0].mxu0
    %695 = vmatprep.mubr.bf16.mxu0 0
    %696 = vmatmul.mubr.bf16.gmra.mrb[0].mxu0 %v324
    %v697 = vpop.f32.mrb[0].mxu0
    %v698 = vadd.f32 0.0, %v697
    %v699 = vpop.f32.mrb[0].mxu0
    %v700 = vpop.f32.mrb[0].mxu0
    %v701 = vadd.f32 0.0, %v700
    %v702 = vpop.f32.mrb[0].mxu0
    %703 = vmatprep.mubr.bf16.mxu0 0
    %704 = vmatmul.mubr.bf16.gmra.mrb[0].mxu0 %v325
    %v705 = vpop.f32.mrb[0].mxu0
    %v706 = vadd.f32 0.0, %v705
    %v707 = vpop.f32.mrb[0].mxu0
    %v708 = vpop.f32.mrb[0].mxu0
    %v709 = vadd.f32 0.0, %v708
    %v710 = vpop.f32.mrb[0].mxu0
    %711 = vmatprep.mubr.bf16.mxu0 0
    %712 = vmatmul.mubr.bf16.gmra.mrb[0].mxu0 %v326
    %v713 = vpop.f32.mrb[0].mxu0
    %v714 = vadd.f32 0.0, %v713
    %v715 = vpop.f32.mrb[0].mxu0
    %v716 = vpop.f32.mrb[0].mxu0
    %v717 = vadd.f32 0.0, %v716
    %v718 = vpop.f32.mrb[0].mxu0
    %719 = vmatprep.mubr.bf16.mxu0 0
    %720 = vmatmul.mubr.bf16.gmra.mrb[0].mxu0 %v327
    %v721 = vpop.f32.mrb[0].mxu0
    %v722 = vadd.f32 0.0, %v721
    %v723 = vpop.f32.mrb[0].mxu0
    %v724 = vpop.f32.mrb[0].mxu0
    %v725 = vadd.f32 0.0, %v724
    %v726 = vpop.f32.mrb[0].mxu0
    %727 = vmatprep.mubr.bf16.mxu0 0
    %728 = vmatmul.mubr.bf16.gmra.mrb[0].mxu0 %v328
    %v729 = vpop.f32.mrb[0].mxu0
    %v730 = vadd.f32 0.0, %v729
    %v731 = vpop.f32.mrb[0].mxu0
    %v732 = vpop.f32.mrb[0].mxu0
    %v733 = vadd.f32 0.0, %v732
    %v734 = vpop.f32.mrb[0].mxu0
    %735 = vmatprep.mubr.bf16.mxu0 0
    %736 = vmatmul.mubr.bf16.gmra.mrb[0].mxu0 %v329
    %v737 = vpop.f32.mrb[0].mxu0
    %v738 = vadd.f32 0.0, %v737
    %v739 = vpop.f32.mrb[0].mxu0
    %v740 = vpop.f32.mrb[0].mxu0
    %v741 = vadd.f32 0.0, %v740
    %v742 = vpop.f32.mrb[0].mxu0
    %743 = vdwg.mxu0
    %v744 = vadd.f32 %v450, %v453
    %v745 = vadd.f32 %v744, %v458
    %v746 = vadd.f32 %v745, %v461
    %v747 = vadd.f32 %v746, %v466
    %v748 = vadd.f32 %v747, %v469
    %v749 = vadd.f32 %v748, %v474
    %v750 = vadd.f32 %v749, %v477
    %v751 = vadd.f32 %v750, %v482
    %v752 = vadd.f32 %v751, %v485
    %v753 = vadd.f32 %v752, %v490
    %v754 = vadd.f32 %v753, %v493
    %v755 = vadd.f32 %v754, %v498
    %v756 = vadd.f32 %v755, %v501
    %v757 = vadd.f32 %v756, %v506
    %v758 = vadd.f32 %v757, %v509
    %v759 = vadd.f32 %v758, %v514
    %v760 = vadd.f32 %v759, %v517
    %v761 = vadd.f32 %v760, %v522
    %v762 = vadd.f32 %v761, %v525
    %v763 = vadd.f32 %v762, %v530
    %v764 = vadd.f32 %v763, %v533
    %v765 = vadd.f32 %v764, %v538
    %v766 = vadd.f32 %v765, %v541
    %v767 = vadd.f32 %v766, %v546
    %v768 = vadd.f32 %v767, %v549
    %v769 = vadd.f32 %v768, %v554
    %v770 = vadd.f32 %v769, %v557
    %v771 = vadd.f32 %v770, %v562
    %v772 = vadd.f32 %v771, %v565
    %v773 = vadd.f32 %v772, %v570
    %v774 = vadd.f32 %v773, %v573
    %v775 = vadd.f32 %v774, %v578
    %v776 = vadd.f32 %v775, %v581
    %v777 = vadd.f32 %v776, %v586
    %v778 = vadd.f32 %v777, %v589
    %v779 = vadd.f32 %v778, %v594
    %v780 = vadd.f32 %v779, %v597
    %v781 = vadd.f32 %v780, %v602
    %v782 = vadd.f32 %v781, %v605
    %v783 = vadd.f32 %v782, %v610
    %v784 = vadd.f32 %v783, %v613
    %v785 = vadd.f32 %v784, %v618
    %v786 = vadd.f32 %v785, %v621
    %v787 = vadd.f32 %v786, %v626
    %v788 = vadd.f32 %v787, %v629
    %v789 = vadd.f32 %v788, %v634
    %v790 = vadd.f32 %v789, %v637
    %v791 = vadd.f32 %v790, %v642
    %v792 = vadd.f32 %v791, %v645
    %v793 = vadd.f32 %v792, %v650
    %v794 = vadd.f32 %v793, %v653
    %v795 = vadd.f32 %v794, %v658
    %v796 = vadd.f32 %v795, %v661
    %v797 = vadd.f32 %v796, %v666
    %v798 = vadd.f32 %v797, %v669
    %v799 = vadd.f32 %v798, %v674
    %v800 = vadd.f32 %v799, %v677
    %v801 = vadd.f32 %v800, %v682
    %v802 = vadd.f32 %v801, %v685
    %v803 = vadd.f32 %v802, %v690
    %v804 = vadd.f32 %v803, %v693
    %v805 = vadd.f32 %v804, %v698
    %v806 = vadd.f32 %v805, %v701
    %v807 = vadd.f32 %v806, %v706
    %v808 = vadd.f32 %v807, %v709
    %v809 = vadd.f32 %v808, %v714
    %v810 = vadd.f32 %v809, %v717
    %v811 = vadd.f32 %v810, %v722
    %v812 = vadd.f32 %v811, %v725
    %v813 = vadd.f32 %v812, %v730
    %v814 = vadd.f32 %v813, %v733
    %v815 = vadd.f32 %v814, %v738
    %v816 = vadd.f32 %v815, %v741
    %v817 = vrot.slane %v816, 4
    %v818 = vadd.f32 %v816, %v817
    %v819 = vrot.slane %v818, 2
    %v820 = vadd.f32 %v818, %v819
    %v821 = vrot.slane %v820, 1
    %v822 = vadd.f32 %v820, %v821
    %v823 = vmul.f32 %v822, 0.0017301039
    %v824 = vmul.f32 %v450, %v450
    %v825 = vmul.f32 %v453, %v453
    %v826 = vmul.f32 %v458, %v458
    %v827 = vmul.f32 %v461, %v461
    %v828 = vmul.f32 %v466, %v466
    %v829 = vmul.f32 %v469, %v469
    %v830 = vmul.f32 %v474, %v474
    %v831 = vmul.f32 %v477, %v477
    %v832 = vmul.f32 %v482, %v482
    %v833 = vmul.f32 %v485, %v485
    %v834 = vmul.f32 %v490, %v490
    %v835 = vmul.f32 %v493, %v493
    %v836 = vmul.f32 %v498, %v498
    %v837 = vmul.f32 %v501, %v501
    %v838 = vmul.f32 %v506, %v506
    %v839 = vmul.f32 %v509, %v509
    %v840 = vmul.f32 %v514, %v514
    %v841 = vmul.f32 %v517, %v517
    %v842 = vmul.f32 %v522, %v522
    %v843 = vmul.f32 %v525, %v525
    %v844 = vmul.f32 %v530, %v530
    %v845 = vmul.f32 %v533, %v533
    %v846 = vmul.f32 %v538, %v538
    %v847 = vmul.f32 %v541, %v541
    %v848 = vmul.f32 %v546, %v546
    %v849 = vmul.f32 %v549, %v549
    %v850 = vmul.f32 %v554, %v554
    %v851 = vmul.f32 %v557, %v557
    %v852 = vmul.f32 %v562, %v562
    %v853 = vmul.f32 %v565, %v565
    %v854 = vmul.f32 %v570, %v570
    %v855 = vmul.f32 %v573, %v573
    %v856 = vmul.f32 %v578, %v578
    %v857 = vmul.f32 %v581, %v581
    %v858 = vmul.f32 %v586, %v586
    %v859 = vmul.f32 %v589, %v589
    %v860 = vmul.f32 %v594, %v594
    %v861 = vmul.f32 %v597, %v597
    %v862 = vmul.f32 %v602, %v602
    %v863 = vmul.f32 %v605, %v605
    %v864 = vmul.f32 %v610, %v610
    %v865 = vmul.f32 %v613, %v613
    %v866 = vmul.f32 %v618, %v618
    %v867 = vmul.f32 %v621, %v621
    %v868 = vmul.f32 %v626, %v626
    %v869 = vmul.f32 %v629, %v629
    %v870 = vmul.f32 %v634, %v634
    %v871 = vmul.f32 %v637, %v637
    %v872 = vmul.f32 %v642, %v642
    %v873 = vmul.f32 %v645, %v645
    %v874 = vmul.f32 %v650, %v650
    %v875 = vmul.f32 %v653, %v653
    %v876 = vmul.f32 %v658, %v658
    %v877 = vmul.f32 %v661, %v661
    %v878 = vmul.f32 %v666, %v666
    %v879 = vmul.f32 %v669, %v669
    %v880 = vmul.f32 %v674, %v674
    %v881 = vmul.f32 %v677, %v677
    %v882 = vmul.f32 %v682, %v682
    %v883 = vmul.f32 %v685, %v685
    %v884 = vmul.f32 %v690, %v690
    %v885 = vmul.f32 %v693, %v693
    %v886 = vmul.f32 %v698, %v698
    %v887 = vmul.f32 %v701, %v701
    %v888 = vmul.f32 %v706, %v706
    %v889 = vmul.f32 %v709, %v709
    %v890 = vmul.f32 %v714, %v714
    %v891 = vmul.f32 %v717, %v717
    %v892 = vmul.f32 %v722, %v722
    %v893 = vmul.f32 %v725, %v725
    %v894 = vmul.f32 %v730, %v730
    %v895 = vmul.f32 %v733, %v733
    %v896 = vmul.f32 %v738, %v738
    %v897 = vmul.f32 %v741, %v741
    %v898 = vadd.f32 %v824, %v825
    %v899 = vadd.f32 %v898, %v826
    %v900 = vadd.f32 %v899, %v827
    %v901 = vadd.f32 %v900, %v828
    %v902 = vadd.f32 %v901, %v829
    %v903 = vadd.f32 %v902, %v830
    %v904 = vadd.f32 %v903, %v831
    %v905 = vadd.f32 %v904, %v832
    %v906 = vadd.f32 %v905, %v833
    %v907 = vadd.f32 %v906, %v834
    %v908 = vadd.f32 %v907, %v835
    %v909 = vadd.f32 %v908, %v836
    %v910 = vadd.f32 %v909, %v837
    %v911 = vadd.f32 %v910, %v838
    %v912 = vadd.f32 %v911, %v839
    %v913 = vadd.f32 %v912, %v840
    %v914 = vadd.f32 %v913, %v841
    %v915 = vadd.f32 %v914, %v842
    %v916 = vadd.f32 %v915, %v843
    %v917 = vadd.f32 %v916, %v844
    %v918 = vadd.f32 %v917, %v845
    %v919 = vadd.f32 %v918, %v846
    %v920 = vadd.f32 %v919, %v847
    %v921 = vadd.f32 %v920, %v848
    %v922 = vadd.f32 %v921, %v849
    %v923 = vadd.f32 %v922, %v850
    %v924 = vadd.f32 %v923, %v851
    %v925 = vadd.f32 %v924, %v852
    %v926 = vadd.f32 %v925, %v853
    %v927 = vadd.f32 %v926, %v854
    %v928 = vadd.f32 %v927, %v855
    %v929 = vadd.f32 %v928, %v856
    %v930 = vadd.f32 %v929, %v857
    %v931 = vadd.f32 %v930, %v858
    %v932 = vadd.f32 %v931, %v859
    %v933 = vadd.f32 %v932, %v860
    %v934 = vadd.f32 %v933, %v861
    %v935 = vadd.f32 %v934, %v862
    %v936 = vadd.f32 %v935, %v863
    %v937 = vadd.f32 %v936, %v864
    %v938 = vadd.f32 %v937, %v865
    %v939 = vadd.f32 %v938, %v866
    %v940 = vadd.f32 %v939, %v867
    %v941 = vadd.f32 %v940, %v868
    %v942 = vadd.f32 %v941, %v869
    %v943 = vadd.f32 %v942, %v870
    %v944 = vadd.f32 %v943, %v871
    %v945 = vadd.f32 %v944, %v872
    %v946 = vadd.f32 %v945, %v873
    %v947 = vadd.f32 %v946, %v874
    %v948 = vadd.f32 %v947, %v875
    %v949 = vadd.f32 %v948, %v876
    %v950 = vadd.f32 %v949, %v877
    %v951 = vadd.f32 %v950, %v878
    %v952 = vadd.f32 %v951, %v879
    %v953 = vadd.f32 %v952, %v880
    %v954 = vadd.f32 %v953, %v881
    %v955 = vadd.f32 %v954, %v882
    %v956 = vadd.f32 %v955, %v883
    %v957 = vadd.f32 %v956, %v884
    %v958 = vadd.f32 %v957, %v885
    %v959 = vadd.f32 %v958, %v886
    %v960 = vadd.f32 %v959, %v887
    %v961 = vadd.f32 %v960, %v888
    %v962 = vadd.f32 %v961, %v889
    %v963 = vadd.f32 %v962, %v890
    %v964 = vadd.f32 %v963, %v891
    %v965 = vadd.f32 %v964, %v892
    %v966 = vadd.f32 %v965, %v893
    %v967 = vadd.f32 %v966, %v894
    %v968 = vadd.f32 %v967, %v895
    %v969 = vadd.f32 %v968, %v896
    %v970 = vadd.f32 %v969, %v897
    %v971 = vrot.slane %v970, 4
    %v972 = vadd.f32 %v970, %v971
    %v973 = vrot.slane %v972, 2
    %v974 = vadd.f32 %v972, %v973
    %v975 = vrot.slane %v974, 1
    %v976 = vadd.f32 %v974, %v975
    %v977 = vmul.f32 %v976, 0.0017301039
    %v978 = vmul.f32 %v823, %v823
    %v979 = vsub.f32 %v977, %v978
    %v980 = vmax.f32 %v979, 0.0
    %v981 = vld [vmem:[#allocation4] sm:$0x1]
    %v982 = vadd.f32 %v980, 1e-05
    %v983 = vrsqrt.pop %v982
    %v984 = vmul.f32 %v981, %v983
    %v985 = vld [vmem:[#allocation6] sm:$0x1]
    %v986 = vmul.f32 %v823, %v984
    %v987 = vsub.f32 %v985, %v986
    %v989 = vlaneseq
    %v990 = vshrl.u32 %v989, 7
    %v991 = vsub.s32 0, %v990
    %v992 = vrot.slane %v984, %v991
    %v994 = vmul.f32 %v450, %v992
    %v995 = vmul.f32 %v453, %v992
    %v996 = vmul.f32 %v458, %v992
    %v997 = vmul.f32 %v461, %v992
    %v998 = vmul.f32 %v466, %v992
    %v999 = vmul.f32 %v469, %v992
    %v1000 = vmul.f32 %v474, %v992
    %v1001 = vmul.f32 %v477, %v992
    %v1002 = vmul.f32 %v482, %v992
    %v1003 = vmul.f32 %v485, %v992
    %v1004 = vmul.f32 %v490, %v992
    %v1005 = vmul.f32 %v493, %v992
    %v1006 = vmul.f32 %v498, %v992
    %v1007 = vmul.f32 %v501, %v992
    %v1008 = vmul.f32 %v506, %v992
    %v1009 = vmul.f32 %v509, %v992
    %v1010 = vmul.f32 %v514, %v992
    %v1011 = vmul.f32 %v517, %v992
    %v1012 = vmul.f32 %v522, %v992
    %v1013 = vmul.f32 %v525, %v992
    %v1014 = vmul.f32 %v530, %v992
    %v1015 = vmul.f32 %v533, %v992
    %v1016 = vmul.f32 %v538, %v992
    %v1017 = vmul.f32 %v541, %v992
    %v1018 = vmul.f32 %v546, %v992
    %v1019 = vmul.f32 %v549, %v992
    %v1020 = vmul.f32 %v554, %v992
    %v1021 = vmul.f32 %v557, %v992
    %v1022 = vmul.f32 %v562, %v992
    %v1023 = vmul.f32 %v565, %v992
    %v1024 = vmul.f32 %v570, %v992
    %v1025 = vmul.f32 %v573, %v992
    %v1026 = vmul.f32 %v578, %v992
    %v1027 = vmul.f32 %v581, %v992
    %v1028 = vmul.f32 %v586, %v992
    %v1029 = vmul.f32 %v589, %v992
    %v1030 = vmul.f32 %v594, %v992
    %v1031 = vmul.f32 %v597, %v992
    %v1032 = vmul.f32 %v602, %v992
    %v1033 = vmul.f32 %v605, %v992
    %v1034 = vmul.f32 %v610, %v992
    %v1035 = vmul.f32 %v613, %v992
    %v1036 = vmul.f32 %v618, %v992
    %v1037 = vmul.f32 %v621, %v992
    %v1038 = vmul.f32 %v626, %v992
    %v1039 = vmul.f32 %v629, %v992
    %v1040 = vmul.f32 %v634, %v992
    %v1041 = vmul.f32 %v637, %v992
    %v1042 = vmul.f32 %v642, %v992
    %v1043 = vmul.f32 %v645, %v992
    %v1044 = vmul.f32 %v650, %v992
    %v1045 = vmul.f32 %v653, %v992
    %v1046 = vmul.f32 %v658, %v992
    %v1047 = vmul.f32 %v661, %v992
    %v1048 = vmul.f32 %v666, %v992
    %v1049 = vmul.f32 %v669, %v992
    %v1050 = vmul.f32 %v674, %v992
    %v1051 = vmul.f32 %v677, %v992
    %v1052 = vmul.f32 %v682, %v992
    %v1053 = vmul.f32 %v685, %v992
    %v1054 = vmul.f32 %v690, %v992
    %v1055 = vmul.f32 %v693, %v992
    %v1056 = vmul.f32 %v698, %v992
    %v1057 = vmul.f32 %v701, %v992
    %v1058 = vmul.f32 %v706, %v992
    %v1059 = vmul.f32 %v709, %v992
    %v1060 = vmul.f32 %v714, %v992
    %v1061 = vmul.f32 %v717, %v992
    %v1062 = vmul.f32 %v722, %v992
    %v1063 = vmul.f32 %v725, %v992
    %v1064 = vmul.f32 %v730, %v992
    %v1065 = vmul.f32 %v733, %v992
    %v1066 = vmul.f32 %v738, %v992
    %v1067 = vmul.f32 %v741, %v992
    %v1069 = vlaneseq
    %v1070 = vshrl.u32 %v1069, 7
    %v1071 = vsub.s32 0, %v1070
    %v1072 = vrot.slane %v987, %v1071
    %v1074 = vadd.f32 %v994, %v1072
    %v1075 = vadd.f32 %v995, %v1072
    %v1076 = vadd.f32 %v996, %v1072
    %v1077 = vadd.f32 %v997, %v1072
    %v1078 = vadd.f32 %v998, %v1072
    %v1079 = vadd.f32 %v999, %v1072
    %v1080 = vadd.f32 %v1000, %v1072
    %v1081 = vadd.f32 %v1001, %v1072
    %v1082 = vadd.f32 %v1002, %v1072
    %v1083 = vadd.f32 %v1003, %v1072
    %v1084 = vadd.f32 %v1004, %v1072
    %v1085 = vadd.f32 %v1005, %v1072
    %v1086 = vadd.f32 %v1006, %v1072
    %v1087 = vadd.f32 %v1007, %v1072
    %v1088 = vadd.f32 %v1008, %v1072
    %v1089 = vadd.f32 %v1009, %v1072
    %v1090 = vadd.f32 %v1010, %v1072
    %v1091 = vadd.f32 %v1011, %v1072
    %v1092 = vadd.f32 %v1012, %v1072
    %v1093 = vadd.f32 %v1013, %v1072
    %v1094 = vadd.f32 %v1014, %v1072
    %v1095 = vadd.f32 %v1015, %v1072
    %v1096 = vadd.f32 %v1016, %v1072
    %v1097 = vadd.f32 %v1017, %v1072
    %v1098 = vadd.f32 %v1018, %v1072
    %v1099 = vadd.f32 %v1019, %v1072
    %v1100 = vadd.f32 %v1020, %v1072
    %v1101 = vadd.f32 %v1021, %v1072
    %v1102 = vadd.f32 %v1022, %v1072
    %v1103 = vadd.f32 %v1023, %v1072
    %v1104 = vadd.f32 %v1024, %v1072
    %v1105 = vadd.f32 %v1025, %v1072
    %v1106 = vadd.f32 %v1026, %v1072
    %v1107 = vadd.f32 %v1027, %v1072
    %v1108 = vadd.f32 %v1028, %v1072
    %v1109 = vadd.f32 %v1029, %v1072
    %v1110 = vadd.f32 %v1030, %v1072
    %v1111 = vadd.f32 %v1031, %v1072
    %v1112 = vadd.f32 %v1032, %v1072
    %v1113 = vadd.f32 %v1033, %v1072
    %v1114 = vadd.f32 %v1034, %v1072
    %v1115 = vadd.f32 %v1035, %v1072
    %v1116 = vadd.f32 %v1036, %v1072
    %v1117 = vadd.f32 %v1037, %v1072
    %v1118 = vadd.f32 %v1038, %v1072
    %v1119 = vadd.f32 %v1039, %v1072
    %v1120 = vadd.f32 %v1040, %v1072
    %v1121 = vadd.f32 %v1041, %v1072
    %v1122 = vadd.f32 %v1042, %v1072
    %v1123 = vadd.f32 %v1043, %v1072
    %v1124 = vadd.f32 %v1044, %v1072
    %v1125 = vadd.f32 %v1045, %v1072
    %v1126 = vadd.f32 %v1046, %v1072
    %v1127 = vadd.f32 %v1047, %v1072
    %v1128 = vadd.f32 %v1048, %v1072
    %v1129 = vadd.f32 %v1049, %v1072
    %v1130 = vadd.f32 %v1050, %v1072
    %v1131 = vadd.f32 %v1051, %v1072
    %v1132 = vadd.f32 %v1052, %v1072
    %v1133 = vadd.f32 %v1053, %v1072
    %v1134 = vadd.f32 %v1054, %v1072
    %v1135 = vadd.f32 %v1055, %v1072
    %v1136 = vadd.f32 %v1056, %v1072
    %v1137 = vadd.f32 %v1057, %v1072
    %v1138 = vadd.f32 %v1058, %v1072
    %v1139 = vadd.f32 %v1059, %v1072
    %v1140 = vadd.f32 %v1060, %v1072
    %v1141 = vadd.f32 %v1061, %v1072
    %v1142 = vadd.f32 %v1062, %v1072
    %v1143 = vadd.f32 %v1063, %v1072
    %v1144 = vadd.f32 %v1064, %v1072
    %v1145 = vadd.f32 %v1065, %v1072
    %v1146 = vadd.f32 %v1066, %v1072
    %v1147 = vadd.f32 %v1067, %v1072
    %v1148 = vmax.f32 %v1074, 0.0
    %v1149 = vmax.f32 %v1075, 0.0
    %v1150 = vmax.f32 %v1076, 0.0
    %v1151 = vmax.f32 %v1077, 0.0
    %v1152 = vmax.f32 %v1078, 0.0
    %v1153 = vmax.f32 %v1079, 0.0
    %v1154 = vmax.f32 %v1080, 0.0
    %v1155 = vmax.f32 %v1081, 0.0
    %v1156 = vmax.f32 %v1082, 0.0
    %v1157 = vmax.f32 %v1083, 0.0
    %v1158 = vmax.f32 %v1084, 0.0
    %v1159 = vmax.f32 %v1085, 0.0
    %v1160 = vmax.f32 %v1086, 0.0
    %v1161 = vmax.f32 %v1087, 0.0
    %v1162 = vmax.f32 %v1088, 0.0
    %v1163 = vmax.f32 %v1089, 0.0
    %v1164 = vmax.f32 %v1090, 0.0
    %v1165 = vmax.f32 %v1091, 0.0
    %v1166 = vmax.f32 %v1092, 0.0
    %v1167 = vmax.f32 %v1093, 0.0
    %v1168 = vmax.f32 %v1094, 0.0
    %v1169 = vmax.f32 %v1095, 0.0
    %v1170 = vmax.f32 %v1096, 0.0
    %v1171 = vmax.f32 %v1097, 0.0
    %v1172 = vmax.f32 %v1098, 0.0
    %v1173 = vmax.f32 %v1099, 0.0
    %v1174 = vmax.f32 %v1100, 0.0
    %v1175 = vmax.f32 %v1101, 0.0
    %v1176 = vmax.f32 %v1102, 0.0
    %v1177 = vmax.f32 %v1103, 0.0
    %v1178 = vmax.f32 %v1104, 0.0
    %v1179 = vmax.f32 %v1105, 0.0
    %v1180 = vmax.f32 %v1106, 0.0
    %v1181 = vmax.f32 %v1107, 0.0
    %v1182 = vmax.f32 %v1108, 0.0
    %v1183 = vmax.f32 %v1109, 0.0
    %v1184 = vmax.f32 %v1110, 0.0
    %v1185 = vmax.f32 %v1111, 0.0
    %v1186 = vmax.f32 %v1112, 0.0
    %v1187 = vmax.f32 %v1113, 0.0
    %v1188 = vmax.f32 %v1114, 0.0
    %v1189 = vmax.f32 %v1115, 0.0
    %v1190 = vmax.f32 %v1116, 0.0
    %v1191 = vmax.f32 %v1117, 0.0
    %v1192 = vmax.f32 %v1118, 0.0
    %v1193 = vmax.f32 %v1119, 0.0
    %v1194 = vmax.f32 %v1120, 0.0
    %v1195 = vmax.f32 %v1121, 0.0
    %v1196 = vmax.f32 %v1122, 0.0
    %v1197 = vmax.f32 %v1123, 0.0
    %v1198 = vmax.f32 %v1124, 0.0
    %v1199 = vmax.f32 %v1125, 0.0
    %v1200 = vmax.f32 %v1126, 0.0
    %v1201 = vmax.f32 %v1127, 0.0
    %v1202 = vmax.f32 %v1128, 0.0
    %v1203 = vmax.f32 %v1129, 0.0
    %v1204 = vmax.f32 %v1130, 0.0
    %v1205 = vmax.f32 %v1131, 0.0
    %v1206 = vmax.f32 %v1132, 0.0
    %v1207 = vmax.f32 %v1133, 0.0
    %v1208 = vmax.f32 %v1134, 0.0
    %v1209 = vmax.f32 %v1135, 0.0
    %v1210 = vmax.f32 %v1136, 0.0
    %v1211 = vmax.f32 %v1137, 0.0
    %v1212 = vmax.f32 %v1138, 0.0
    %v1213 = vmax.f32 %v1139, 0.0
    %v1214 = vmax.f32 %v1140, 0.0
    %v1215 = vmax.f32 %v1141, 0.0
    %v1216 = vmax.f32 %v1142, 0.0
    %v1217 = vmax.f32 %v1143, 0.0
    %v1218 = vmax.f32 %v1144, 0.0
    %v1219 = vmax.f32 %v1145, 0.0
    %v1220 = vmax.f32 %v1146, 0.0
    %v1221 = vmax.f32 %v1147, 0.0
    %1222 = vst [vmem:[%s4] sm:$0xff] %v1148
    %1223 = vst [vmem:[%s4 + $0x8] sm:$0xff] %v1149
    %1224 = vst [vmem:[%s4 + $0x10] sm:$0xff] %v1150
    %1225 = vst [vmem:[%s4 + $0x18] sm:$0xff] %v1151
    %1226 = vst [vmem:[%s4 + $0x20] sm:$0xff] %v1152
    %1227 = vst [vmem:[%s4 + $0x28] sm:$0xff] %v1153
    %1228 = vst [vmem:[%s4 + $0x30] sm:$0xff] %v1154
    %1229 = vst [vmem:[%s4 + $0x38] sm:$0xff] %v1155
    %1230 = vst [vmem:[%s4 + $0x40] sm:$0xff] %v1156
    %1231 = vst [vmem:[%s4 + $0x48] sm:$0xff] %v1157
    %1232 = vst [vmem:[%s4 + $0x50] sm:$0xff] %v1158
    %1233 = vst [vmem:[%s4 + $0x58] sm:$0xff] %v1159
    %1234 = vst [vmem:[%s4 + $0x60] sm:$0xff] %v1160
    %1235 = vst [vmem:[%s4 + $0x68] sm:$0xff] %v1161
    %1236 = vst [vmem:[%s4 + $0x70] sm:$0xff] %v1162
    %1237 = vst [vmem:[%s4 + $0x78] sm:$0xff] %v1163
    %1238 = vst [vmem:[%s4 + $0x80] sm:$0xff] %v1164
    %1239 = vst [vmem:[%s4 + $0x88] sm:$0xff] %v1165
    %1240 = vst [vmem:[%s4 + $0x90] sm:$0xff] %v1166
    %1241 = vst [vmem:[%s4 + $0x98] sm:$0xff] %v1167
    %1242 = vst [vmem:[%s4 + $0xa0] sm:$0xff] %v1168
    %1243 = vst [vmem:[%s4 + $0xa8] sm:$0xff] %v1169
    %1244 = vst [vmem:[%s4 + $0xb0] sm:$0xff] %v1170
    %1245 = vst [vmem:[%s4 + $0xb8] sm:$0xff] %v1171
    %1246 = vst [vmem:[%s4 + $0xc0] sm:$0xff] %v1172
    %1247 = vst [vmem:[%s4 + $0xc8] sm:$0xff] %v1173
    %1248 = vst [vmem:[%s4 + $0xd0] sm:$0xff] %v1174
    %1249 = vst [vmem:[%s4 + $0xd8] sm:$0xff] %v1175
    %1250 = vst [vmem:[%s4 + $0xe0] sm:$0xff] %v1176
    %1251 = vst [vmem:[%s4 + $0xe8] sm:$0xff] %v1177
    %1252 = vst [vmem:[%s4 + $0xf0] sm:$0xff] %v1178
    %1253 = vst [vmem:[%s4 + $0xf8] sm:$0xff] %v1179
    %1254 = vst [vmem:[%s4 + $0x100] sm:$0xff] %v1180
    %1255 = vst [vmem:[%s4 + $0x108] sm:$0xff] %v1181
    %1256 = vst [vmem:[%s4 + $0x110] sm:$0xff] %v1182
    %1257 = vst [vmem:[%s4 + $0x118] sm:$0xff] %v1183
    %1258 = vst [vmem:[%s4 + $0x120] sm:$0xff] %v1184
    %1259 = vst [vmem:[%s4 + $0x128] sm:$0xff] %v1185
    %1260 = vst [vmem:[%s4 + $0x130] sm:$0xff] %v1186
    %1261 = vst [vmem:[%s4 + $0x138] sm:$0xff] %v1187
    %1262 = vst [vmem:[%s4 + $0x140] sm:$0xff] %v1188
    %1263 = vst [vmem:[%s4 + $0x148] sm:$0xff] %v1189
    %1264 = vst [vmem:[%s4 + $0x150] sm:$0xff] %v1190
    %1265 = vst [vmem:[%s4 + $0x158] sm:$0xff] %v1191
    %1266 = vst [vmem:[%s4 + $0x160] sm:$0xff] %v1192
    %1267 = vst [vmem:[%s4 + $0x168] sm:$0xff] %v1193
    %1268 = vst [vmem:[%s4 + $0x170] sm:$0xff] %v1194
    %1269 = vst [vmem:[%s4 + $0x178] sm:$0xff] %v1195
    %1270 = vst [vmem:[%s4 + $0x180] sm:$0xff] %v1196
    %1271 = vst [vmem:[%s4 + $0x188] sm:$0xff] %v1197
    %1272 = vst [vmem:[%s4 + $0x190] sm:$0xff] %v1198
    %1273 = vst [vmem:[%s4 + $0x198] sm:$0xff] %v1199
    %1274 = vst [vmem:[%s4 + $0x1a0] sm:$0xff] %v1200
    %1275 = vst [vmem:[%s4 + $0x1a8] sm:$0xff] %v1201
    %1276 = vst [vmem:[%s4 + $0x1b0] sm:$0xff] %v1202
    %1277 = vst [vmem:[%s4 + $0x1b8] sm:$0xff] %v1203
    %1278 = vst [vmem:[%s4 + $0x1c0] sm:$0xff] %v1204
    %1279 = vst [vmem:[%s4 + $0x1c8] sm:$0xff] %v1205
    %1280 = vst [vmem:[%s4 + $0x1d0] sm:$0xff] %v1206
    %1281 = vst [vmem:[%s4 + $0x1d8] sm:$0xff] %v1207
    %1282 = vst [vmem:[%s4 + $0x1e0] sm:$0xff] %v1208
    %1283 = vst [vmem:[%s4 + $0x1e8] sm:$0xff] %v1209
    %1284 = vst [vmem:[%s4 + $0x1f0] sm:$0xff] %v1210
    %1285 = vst [vmem:[%s4 + $0x1f8] sm:$0xff] %v1211
    %1286 = vst [vmem:[%s4 + $0x200] sm:$0xff] %v1212
    %1287 = vst [vmem:[%s4 + $0x208] sm:$0xff] %v1213
    %1288 = vst [vmem:[%s4 + $0x210] sm:$0xff] %v1214
    %1289 = vst [vmem:[%s4 + $0x218] sm:$0xff] %v1215
    %1290 = vst [vmem:[%s4 + $0x220] sm:$0xff] %v1216
    %1291 = vst [vmem:[%s4 + $0x228] sm:$0xff] %v1217
    %1292 = vst [vmem:[%s4 + $0x230] sm:$0xff] %v1218
    %1293 = vst [vmem:[%s4 + $0x238] sm:$0xff] %v1219
    %1294 = vst [vmem:[%s4 + $0x240] sm:$0xff] %v1220
    %1295 = vst [vmem:[%s4 + $0x248] sm:$0xff] %v1221
    // Predicated region
    $region30: #{conv_forward.8} parent=1 // pred_check
      _
    $region31: #{conv_forward.8} parent=1 // pred_check_branch
      %1297 = sbr.rel (0) target = $region33
    $region32: #{conv_forward.8} parent=1 // pred_region
      _
    $region33: #{conv_forward.8} parent=1 // pred_fallthru
      _
    // Predicated region
    $region34: #{conv_forward.8} parent=1 // pred_check
      _
    $region35: #{conv_forward.8} parent=1 // pred_check_branch
      %1299 = sbr.rel (0) target = $region37
    $region36: #{conv_forward.8} parent=1 // pred_region
      _
    $region37: #{conv_forward.8} parent=1 // pred_fallthru
      _
    %1300 = vsyncpa [#allocation3], 1
    %1301 = vsyncpa [#allocation5], 1

// kernel: conv_forward.9
$region0: #{conv_forward.9}
  #allocation0 [shape = 'u32[]', space=smem, size = 0x4, offset = 0x4, fixed_abs, tag = 'smem constant byte address 0x4 - core index']
  #allocation1 [shape = 'u32[144,128]{1,0:T(1,128)}', space=vmem, size = 0x12000, scoped, tag = 'internal scratch']
  %s0 = inlined_call_operand.vmem [shape: bf16[176,128], index: 0, kind: input, shape index: {}]
  %s1 = inlined_call_operand.vmem [shape: bf16[128,128], index: 1, kind: input, shape index: {}]
  %s2 = inlined_call_operand.vmem [shape: f32[1,128], index: 2, kind: input, shape index: {}]
  %s3 = inlined_call_operand.vmem [shape: f32[1,128], index: 3, kind: input, shape index: {}]
  %s4 = inlined_call_operand.vmem [shape: f32[176,128], index: 4, kind: output, shape index: {}]
  %s5 = sld [smem:[#allocation0]]
  $region26: #{conv_forward.9} parent=0
    _
  %s7 = ssub.s32 1, %s5
  %s8 = scalar_select 0, %s7, %s5
  // Predicated region
  $region2: #{conv_forward.9} parent=0 // pred_check
    _
  $region3: #{conv_forward.9} parent=0 // pred_check_branch
    %10 = sbr.rel (0) target = $region5
  $region4: #{conv_forward.9} parent=0 // pred_region
    _
  $region5: #{conv_forward.9} parent=0 // pred_fallthru
    _
  // Predicated region
  $region6: #{conv_forward.9} parent=0 // pred_check
    _
  $region7: #{conv_forward.9} parent=0 // pred_check_branch
    %12 = sbr.rel (0) target = $region9
  $region8: #{conv_forward.9} parent=0 // pred_region
    _
  $region9: #{conv_forward.9} parent=0 // pred_fallthru
    _
  // Predicated region
  $region10: #{conv_forward.9} parent=0 // pred_check
    _
  $region11: #{conv_forward.9} parent=0 // pred_check_branch
    %14 = sbr.rel (0) target = $region13
  $region12: #{conv_forward.9} parent=0 // pred_region
    _
  $region13: #{conv_forward.9} parent=0 // pred_fallthru
    _
  // Predicated region
  $region14: #{conv_forward.9} parent=0 // pred_check
    _
  $region15: #{conv_forward.9} parent=0 // pred_check_branch
    %16 = sbr.rel (0) target = $region17
  $region16: #{conv_forward.9} parent=0 // pred_region
    _
  $region17: #{conv_forward.9} parent=0 // pred_fallthru
    _
  %v18 = vld [vmem:[%s0] sm:$0xf]
  %v19 = vld [vmem:[%s0 + $0x4] sm:$0xf]
  %v20 = vld [vmem:[%s0 + $0x8] sm:$0xf]
  %v21 = vld [vmem:[%s0 + $0xc] sm:$0xf]
  %v22 = vld [vmem:[%s0 + $0x10] sm:$0xf]
  %v23 = vld [vmem:[%s0 + $0x14] sm:$0xf]
  %v24 = vld [vmem:[%s0 + $0x18] sm:$0xf]
  %v25 = vld [vmem:[%s0 + $0x1c] sm:$0xf]
  %v26 = vld [vmem:[%s0 + $0x20] sm:$0xf]
  %v27 = vld [vmem:[%s0 + $0x24] sm:$0xf]
  %v28 = vld [vmem:[%s0 + $0x28] sm:$0xf]
  %v29 = vld [vmem:[%s0 + $0x2c] sm:$0xf]
  %v30 = vld [vmem:[%s0 + $0x30] sm:$0xf]
  %v31 = vld [vmem:[%s0 + $0x34] sm:$0xf]
  %v32 = vld [vmem:[%s0 + $0x38] sm:$0xf]
  %v33 = vld [vmem:[%s0 + $0x3c] sm:$0xf]
  %v34 = vld [vmem:[%s0 + $0x40] sm:$0xf]
  %v35 = vld [vmem:[%s0 + $0x44] sm:$0xf]
  %v36 = vld [vmem:[%s0 + $0x48] sm:$0xf]
  %v37 = vld [vmem:[%s0 + $0x4c] sm:$0xf]
  %v38 = vld [vmem:[%s0 + $0x50] sm:$0xf]
  %v39 = vld [vmem:[%s0 + $0x54] sm:$0xf]
  %v40 = vld [vmem:[%s1] sm:$0xf]
  %v41 = vld [vmem:[%s1 + $0x4] sm:$0xf]
  %v42 = vld [vmem:[%s1 + $0x8] sm:$0xf]
  %v43 = vld [vmem:[%s1 + $0xc] sm:$0xf]
  %v44 = vld [vmem:[%s1 + $0x10] sm:$0xf]
  %v45 = vld [vmem:[%s1 + $0x14] sm:$0xf]
  %v46 = vld [vmem:[%s1 + $0x18] sm:$0xf]
  %v47 = vld [vmem:[%s1 + $0x1c] sm:$0xf]
  %v48 = vld [vmem:[%s1 + $0x20] sm:$0xf]
  %v49 = vld [vmem:[%s1 + $0x24] sm:$0xf]
  %v50 = vld [vmem:[%s1 + $0x28] sm:$0xf]
  %v51 = vld [vmem:[%s1 + $0x2c] sm:$0xf]
  %v52 = vld [vmem:[%s1 + $0x30] sm:$0xf]
  %v53 = vld [vmem:[%s1 + $0x34] sm:$0xf]
  %v54 = vld [vmem:[%s1 + $0x38] sm:$0xf]
  %v55 = vld [vmem:[%s1 + $0x3c] sm:$0xf]
  %v78 = vunpack.c.l.b16 %v18
  %v79 = vunpack.c.l.b16 %v19
  %v80 = vunpack.c.l.b16 %v20
  %v81 = vunpack.c.l.b16 %v21
  %v82 = vunpack.c.l.b16 %v22
  %v83 = vunpack.c.l.b16 %v23
  %v84 = vunpack.c.l.b16 %v24
  %v85 = vunpack.c.l.b16 %v25
  %v86 = vunpack.c.l.b16 %v26
  %v87 = vunpack.c.l.b16 %v27
  %v88 = vunpack.c.l.b16 %v28
  %v89 = vunpack.c.l.b16 %v29
  %v90 = vunpack.c.l.b16 %v30
  %v91 = vunpack.c.l.b16 %v31
  %v92 = vunpack.c.l.b16 %v32
  %v93 = vunpack.c.l.b16 %v33
  %v94 = vunpack.c.l.b16 %v34
  %v95 = vunpack.c.l.b16 %v35
  %v96 = vunpack.c.l.b16 %v36
  %v97 = vunpack.c.l.b16 %v37
  %v98 = vunpack.c.l.b16 %v38
  %v99 = vunpack.c.l.b16 %v39
  %v100 = vpack.c.b16 %v79, %v78
  %v101 = vpack.c.b16 %v81, %v80
  %v102 = vpack.c.b16 %v83, %v82
  %v103 = vpack.c.b16 %v85, %v84
  %v104 = vpack.c.b16 %v87, %v86
  %v105 = vpack.c.b16 %v89, %v88
  %v106 = vpack.c.b16 %v91, %v90
  %v107 = vpack.c.b16 %v93, %v92
  %v108 = vpack.c.b16 %v95, %v94
  %v109 = vpack.c.b16 %v97, %v96
  %v110 = vpack.c.b16 %v99, %v98
  %v138 = vunpack.c.l.b16 %v40
  %v139 = vunpack.c.l.b16 %v41
  %v140 = vunpack.c.l.b16 %v42
  %v141 = vunpack.c.l.b16 %v43
  %v142 = vunpack.c.l.b16 %v44
  %v143 = vunpack.c.l.b16 %v45
  %v144 = vunpack.c.l.b16 %v46
  %v145 = vunpack.c.l.b16 %v47
  %v146 = vunpack.c.l.b16 %v48
  %v147 = vunpack.c.l.b16 %v49
  %v148 = vunpack.c.l.b16 %v50
  %v149 = vunpack.c.l.b16 %v51
  %v150 = vunpack.c.l.b16 %v52
  %v151 = vunpack.c.l.b16 %v53
  %v152 = vunpack.c.l.b16 %v54
  %v153 = vunpack.c.l.b16 %v55
  %v154 = vpack.c.b16 %v139, %v138
  %v155 = vpack.c.b16 %v141, %v140
  %v156 = vpack.c.b16 %v143, %v142
  %v157 = vpack.c.b16 %v145, %v144
  %v158 = vpack.c.b16 %v147, %v146
  %v159 = vpack.c.b16 %v149, %v148
  %v160 = vpack.c.b16 %v151, %v150
  %v161 = vpack.c.b16 %v153, %v152
  %170 = vmatprep.subr.bf16.mxu0 0
  %171 = vmatpush1.bf16.msra.mxu0 %v154
  %172 = vmatprep.subr.bf16.mxu0 0
  %173 = vmatpush1.bf16.msra.mxu0 %v155
  %174 = vmatprep.subr.bf16.mxu0 0
  %175 = vmatpush1.bf16.msra.mxu0 %v156
  %176 = vmatprep.subr.bf16.mxu0 0
  %177 = vmatpush1.bf16.msra.mxu0 %v157
  %178 = vmatprep.subr.bf16.mxu0 0
  %179 = vmatpush1.bf16.msra.mxu0 %v158
  %180 = vmatprep.subr.bf16.mxu0 0
  %181 = vmatpush1.bf16.msra.mxu0 %v159
  %182 = vmatprep.subr.bf16.mxu0 0
  %183 = vmatpush1.bf16.msra.mxu0 %v160
  %184 = vmatprep.subr.bf16.mxu0 0
  %185 = vmatpush1.bf16.msra.mxu0 %v161
  %186 = vmatprep.subr.bf16.mxu0 0
  %187 = vmatpush1.bf16.msra.mxu0 0
  %188 = vmatprep.subr.bf16.mxu0 0
  %189 = vmatpush1.bf16.msra.mxu0 0
  %190 = vmatprep.subr.bf16.mxu0 0
  %191 = vmatpush1.bf16.msra.mxu0 0
  %192 = vmatprep.subr.bf16.mxu0 0
  %193 = vmatpush1.bf16.msra.mxu0 0
  %194 = vmatprep.subr.bf16.mxu0 0
  %195 = vmatpush1.bf16.msra.mxu0 0
  %196 = vmatprep.subr.bf16.mxu0 0
  %197 = vmatpush1.bf16.msra.mxu0 0
  %198 = vmatprep.subr.bf16.mxu0 0
  %199 = vmatpush1.bf16.msra.mxu0 0
  %200 = vmatprep.subr.bf16.mxu0 0
  %201 = vmatpush1.bf16.msra.mxu0 0
  %202 = vmatprep.mubr.bf16.mxu0 0
  %203 = vmatmul.mubr.bf16.gmra.mrb[0].mxu0 %v100
  %v204 = vpop.f32.mrb[0].mxu0
  %v205 = vadd.f32 0.0, %v204
  %v206 = vpop.f32.mrb[0].mxu0
  %v207 = vpop.f32.mrb[0].mxu0
  %v208 = vadd.f32 0.0, %v207
  %v209 = vpop.f32.mrb[0].mxu0
  %210 = vmatprep.mubr.bf16.mxu0 0
  %211 = vmatmul.mubr.bf16.gmra.mrb[0].mxu0 %v101
  %v212 = vpop.f32.mrb[0].mxu0
  %v213 = vadd.f32 0.0, %v212
  %v214 = vpop.f32.mrb[0].mxu0
  %v215 = vpop.f32.mrb[0].mxu0
  %v216 = vadd.f32 0.0, %v215
  %v217 = vpop.f32.mrb[0].mxu0
  %218 = vmatprep.mubr.bf16.mxu0 0
  %219 = vmatmul.mubr.bf16.gmra.mrb[0].mxu0 %v102
  %v220 = vpop.f32.mrb[0].mxu0
  %v221 = vadd.f32 0.0, %v220
  %v222 = vpop.f32.mrb[0].mxu0
  %v223 = vpop.f32.mrb[0].mxu0
  %v224 = vadd.f32 0.0, %v223
  %v225 = vpop.f32.mrb[0].mxu0
  %226 = vmatprep.mubr.bf16.mxu0 0
  %227 = vmatmul.mubr.bf16.gmra.mrb[0].mxu0 %v103
  %v228 = vpop.f32.mrb[0].mxu0
  %v229 = vadd.f32 0.0, %v228
  %v230 = vpop.f32.mrb[0].mxu0
  %v231 = vpop.f32.mrb[0].mxu0
  %v232 = vadd.f32 0.0, %v231
  %v233 = vpop.f32.mrb[0].mxu0
  %234 = vmatprep.mubr.bf16.mxu0 0
  %235 = vmatmul.mubr.bf16.gmra.mrb[0].mxu0 %v104
  %v236 = vpop.f32.mrb[0].mxu0
  %v237 = vadd.f32 0.0, %v236
  %v238 = vpop.f32.mrb[0].mxu0
  %v239 = vpop.f32.mrb[0].mxu0
  %v240 = vadd.f32 0.0, %v239
  %v241 = vpop.f32.mrb[0].mxu0
  %242 = vmatprep.mubr.bf16.mxu0 0
  %243 = vmatmul.mubr.bf16.gmra.mrb[0].mxu0 %v105
  %v244 = vpop.f32.mrb[0].mxu0
  %v245 = vadd.f32 0.0, %v244
  %v246 = vpop.f32.mrb[0].mxu0
  %v247 = vpop.f32.mrb[0].mxu0
  %v248 = vadd.f32 0.0, %v247
  %v249 = vpop.f32.mrb[0].mxu0
  %250 = vmatprep.mubr.bf16.mxu0 0
  %251 = vmatmul.mubr.bf16.gmra.mrb[0].mxu0 %v106
  %v252 = vpop.f32.mrb[0].mxu0
  %v253 = vadd.f32 0.0, %v252
  %v254 = vpop.f32.mrb[0].mxu0
  %v255 = vpop.f32.mrb[0].mxu0
  %v256 = vadd.f32 0.0, %v255
  %v257 = vpop.f32.mrb[0].mxu0
  %258 = vmatprep.mubr.bf16.mxu0 0
  %259 = vmatmul.mubr.bf16.gmra.mrb[0].mxu0 %v107
  %v260 = vpop.f32.mrb[0].mxu0
  %v261 = vadd.f32 0.0, %v260
  %v262 = vpop.f32.mrb[0].mxu0
  %v263 = vpop.f32.mrb[0].mxu0
  %v264 = vadd.f32 0.0, %v263
  %v265 = vpop.f32.mrb[0].mxu0
  %266 = vmatprep.mubr.bf16.mxu0 0
  %267 = vmatmul.mubr.bf16.gmra.mrb[0].mxu0 %v108
  %v268 = vpop.f32.mrb[0].mxu0
  %v269 = vadd.f32 0.0, %v268
  %v270 = vpop.f32.mrb[0].mxu0
  %v271 = vpop.f32.mrb[0].mxu0
  %v272 = vadd.f32 0.0, %v271
  %v273 = vpop.f32.mrb[0].mxu0
  %274 = vmatprep.mubr.bf16.mxu0 0
  %275 = vmatmul.mubr.bf16.gmra.mrb[0].mxu0 %v109
  %v276 = vpop.f32.mrb[0].mxu0
  %v277 = vadd.f32 0.0, %v276
  %v278 = vpop.f32.mrb[0].mxu0
  %v279 = vpop.f32.mrb[0].mxu0
  %v280 = vadd.f32 0.0, %v279
  %v281 = vpop.f32.mrb[0].mxu0
  %282 = vmatprep.mubr.bf16.mxu0 0
  %283 = vmatmul.mubr.bf16.gmra.mrb[0].mxu0 %v110
  %v284 = vpop.f32.mrb[0].mxu0
  %v285 = vadd.f32 0.0, %v284
  %v286 = vpop.f32.mrb[0].mxu0
  %v287 = vpop.f32.mrb[0].mxu0
  %v288 = vadd.f32 0.0, %v287
  %v289 = vpop.f32.mrb[0].mxu0
  %290 = vdwg.mxu0
  %v291 = vadd.f32 %v205, %v208
  %v292 = vadd.f32 %v291, %v213
  %v293 = vadd.f32 %v292, %v216
  %v294 = vadd.f32 %v293, %v221
  %v295 = vadd.f32 %v294, %v224
  %v296 = vadd.f32 %v295, %v229
  %v297 = vadd.f32 %v296, %v232
  %v298 = vadd.f32 %v297, %v237
  %v299 = vadd.f32 %v298, %v240
  %v300 = vadd.f32 %v299, %v245
  %v301 = vadd.f32 %v300, %v248
  %v302 = vadd.f32 %v301, %v253
  %v303 = vadd.f32 %v302, %v256
  %v304 = vadd.f32 %v303, %v261
  %v305 = vadd.f32 %v304, %v264
  %v306 = vadd.f32 %v305, %v269
  %v307 = vadd.f32 %v306, %v272
  %v308 = vadd.f32 %v307, %v277
  %v309 = vadd.f32 %v308, %v280
  %v310 = vadd.f32 %v309, %v285
  %v311 = vadd.f32 %v310, %v288
  %v312 = vrot.slane %v311, 4
  %v313 = vadd.f32 %v311, %v312
  %v314 = vrot.slane %v313, 2
  %v315 = vadd.f32 %v313, %v314
  %v316 = vrot.slane %v315, 1
  %v317 = vadd.f32 %v315, %v316
  %v318 = vmul.f32 %v317, 0.0061728396
  %v319 = vmul.f32 %v205, %v205
  %v320 = vmul.f32 %v208, %v208
  %v321 = vmul.f32 %v213, %v213
  %v322 = vmul.f32 %v216, %v216
  %v323 = vmul.f32 %v221, %v221
  %v324 = vmul.f32 %v224, %v224
  %v325 = vmul.f32 %v229, %v229
  %v326 = vmul.f32 %v232, %v232
  %v327 = vmul.f32 %v237, %v237
  %v328 = vmul.f32 %v240, %v240
  %v329 = vmul.f32 %v245, %v245
  %v330 = vmul.f32 %v248, %v248
  %v331 = vmul.f32 %v253, %v253
  %v332 = vmul.f32 %v256, %v256
  %v333 = vmul.f32 %v261, %v261
  %v334 = vmul.f32 %v264, %v264
  %v335 = vmul.f32 %v269, %v269
  %v336 = vmul.f32 %v272, %v272
  %v337 = vmul.f32 %v277, %v277
  %v338 = vmul.f32 %v280, %v280
  %v339 = vmul.f32 %v285, %v285
  %v340 = vmul.f32 %v288, %v288
  %v341 = vadd.f32 %v319, %v320
  %v342 = vadd.f32 %v341, %v321
  %v343 = vadd.f32 %v342, %v322
  %v344 = vadd.f32 %v343, %v323
  %v345 = vadd.f32 %v344, %v324
  %v346 = vadd.f32 %v345, %v325
  %v347 = vadd.f32 %v346, %v326
  %v348 = vadd.f32 %v347, %v327
  %v349 = vadd.f32 %v348, %v328
  %v350 = vadd.f32 %v349, %v329
  %v351 = vadd.f32 %v350, %v330
  %v352 = vadd.f32 %v351, %v331
  %v353 = vadd.f32 %v352, %v332
  %v354 = vadd.f32 %v353, %v333
  %v355 = vadd.f32 %v354, %v334
  %v356 = vadd.f32 %v355, %v335
  %v357 = vadd.f32 %v356, %v336
  %v358 = vadd.f32 %v357, %v337
  %v359 = vadd.f32 %v358, %v338
  %v360 = vadd.f32 %v359, %v339
  %v361 = vadd.f32 %v360, %v340
  %v362 = vrot.slane %v361, 4
  %v363 = vadd.f32 %v361, %v362
  %v364 = vrot.slane %v363, 2
  %v365 = vadd.f32 %v363, %v364
  %v366 = vrot.slane %v365, 1
  %v367 = vadd.f32 %v365, %v366
  %v368 = vmul.f32 %v367, 0.0061728396
  %v369 = vmul.f32 %v318, %v318
  %v370 = vsub.f32 %v368, %v369
  %v371 = vmax.f32 %v370, 0.0
  %v372 = vld [vmem:[%s2] sm:$0x1]
  %v373 = vadd.f32 %v371, 1e-05
  %v374 = vrsqrt.pop %v373
  %v375 = vmul.f32 %v372, %v374
  %v376 = vld [vmem:[%s3] sm:$0x1]
  %v377 = vmul.f32 %v318, %v375
  %v378 = vsub.f32 %v376, %v377
  %v380 = vlaneseq
  %v381 = vshrl.u32 %v380, 7
  %v382 = vsub.s32 0, %v381
  %v383 = vrot.slane %v375, %v382
  %v385 = vmul.f32 %v205, %v383
  %v386 = vmul.f32 %v208, %v383
  %v387 = vmul.f32 %v213, %v383
  %v388 = vmul.f32 %v216, %v383
  %v389 = vmul.f32 %v221, %v383
  %v390 = vmul.f32 %v224, %v383
  %v391 = vmul.f32 %v229, %v383
  %v392 = vmul.f32 %v232, %v383
  %v393 = vmul.f32 %v237, %v383
  %v394 = vmul.f32 %v240, %v383
  %v395 = vmul.f32 %v245, %v383
  %v396 = vmul.f32 %v248, %v383
  %v397 = vmul.f32 %v253, %v383
  %v398 = vmul.f32 %v256, %v383
  %v399 = vmul.f32 %v261, %v383
  %v400 = vmul.f32 %v264, %v383
  %v401 = vmul.f32 %v269, %v383
  %v402 = vmul.f32 %v272, %v383
  %v403 = vmul.f32 %v277, %v383
  %v404 = vmul.f32 %v280, %v383
  %v405 = vmul.f32 %v285, %v383
  %v406 = vmul.f32 %v288, %v383
  %v408 = vlaneseq
  %v409 = vshrl.u32 %v408, 7
  %v410 = vsub.s32 0, %v409
  %v411 = vrot.slane %v378, %v410
  %v413 = vadd.f32 %v385, %v411
  %v414 = vadd.f32 %v386, %v411
  %v415 = vadd.f32 %v387, %v411
  %v416 = vadd.f32 %v388, %v411
  %v417 = vadd.f32 %v389, %v411
  %v418 = vadd.f32 %v390, %v411
  %v419 = vadd.f32 %v391, %v411
  %v420 = vadd.f32 %v392, %v411
  %v421 = vadd.f32 %v393, %v411
  %v422 = vadd.f32 %v394, %v411
  %v423 = vadd.f32 %v395, %v411
  %v424 = vadd.f32 %v396, %v411
  %v425 = vadd.f32 %v397, %v411
  %v426 = vadd.f32 %v398, %v411
  %v427 = vadd.f32 %v399, %v411
  %v428 = vadd.f32 %v400, %v411
  %v429 = vadd.f32 %v401, %v411
  %v430 = vadd.f32 %v402, %v411
  %v431 = vadd.f32 %v403, %v411
  %v432 = vadd.f32 %v404, %v411
  %v433 = vadd.f32 %v405, %v411
  %v434 = vadd.f32 %v406, %v411
  %v435 = vmax.f32 %v413, 0.0
  %v436 = vmax.f32 %v414, 0.0
  %v437 = vmax.f32 %v415, 0.0
  %v438 = vmax.f32 %v416, 0.0
  %v439 = vmax.f32 %v417, 0.0
  %v440 = vmax.f32 %v418, 0.0
  %v441 = vmax.f32 %v419, 0.0
  %v442 = vmax.f32 %v420, 0.0
  %v443 = vmax.f32 %v421, 0.0
  %v444 = vmax.f32 %v422, 0.0
  %v445 = vmax.f32 %v423, 0.0
  %v446 = vmax.f32 %v424, 0.0
  %v447 = vmax.f32 %v425, 0.0
  %v448 = vmax.f32 %v426, 0.0
  %v449 = vmax.f32 %v427, 0.0
  %v450 = vmax.f32 %v428, 0.0
  %v451 = vmax.f32 %v429, 0.0
  %v452 = vmax.f32 %v430, 0.0
  %v453 = vmax.f32 %v431, 0.0
  %v454 = vmax.f32 %v432, 0.0
  %v455 = vmax.f32 %v433, 0.0
  %v456 = vmax.f32 %v434, 0.0
  %457 = vst [vmem:[%s4] sm:$0xff] %v435
  %458 = vst [vmem:[%s4 + $0x8] sm:$0xff] %v436
  %459 = vst [vmem:[%s4 + $0x10] sm:$0xff] %v437
  %460 = vst [vmem:[%s4 + $0x18] sm:$0xff] %v438
  %461 = vst [vmem:[%s4 + $0x20] sm:$0xff] %v439
  %462 = vst [vmem:[%s4 + $0x28] sm:$0xff] %v440
  %463 = vst [vmem:[%s4 + $0x30] sm:$0xff] %v441
  %464 = vst [vmem:[%s4 + $0x38] sm:$0xff] %v442
  %465 = vst [vmem:[%s4 + $0x40] sm:$0xff] %v443
  %466 = vst [vmem:[%s4 + $0x48] sm:$0xff] %v444
  %467 = vst [vmem:[%s4 + $0x50] sm:$0xff] %v445
  %468 = vst [vmem:[%s4 + $0x58] sm:$0xff] %v446
  %469 = vst [vmem:[%s4 + $0x60] sm:$0xff] %v447
  %470 = vst [vmem:[%s4 + $0x68] sm:$0xff] %v448
  %471 = vst [vmem:[%s4 + $0x70] sm:$0xff] %v449
  %472 = vst [vmem:[%s4 + $0x78] sm:$0xff] %v450
  %473 = vst [vmem:[%s4 + $0x80] sm:$0xff] %v451
  %474 = vst [vmem:[%s4 + $0x88] sm:$0xff] %v452
  %475 = vst [vmem:[%s4 + $0x90] sm:$0xff] %v453
  %476 = vst [vmem:[%s4 + $0x98] sm:$0xff] %v454
  %477 = vst [vmem:[%s4 + $0xa0] sm:$0xff] %v455
  %478 = vst [vmem:[%s4 + $0xa8] sm:$0xff] %v456
  // Predicated region
  $region18: #{conv_forward.9} parent=0 // pred_check
    _
  $region19: #{conv_forward.9} parent=0 // pred_check_branch
    %480 = sbr.rel (0) target = $region21
  $region20: #{conv_forward.9} parent=0 // pred_region
    _
  $region21: #{conv_forward.9} parent=0 // pred_fallthru
    _
  // Predicated region
  $region22: #{conv_forward.9} parent=0 // pred_check
    _
  $region23: #{conv_forward.9} parent=0 // pred_check_branch
    %482 = sbr.rel (0) target = $region25
  $region24: #{conv_forward.9} parent=0 // pred_region
    _
  $region25: #{conv_forward.9} parent=0 // pred_fallthru
    _

// kernel: conv_forward.10
$region0: #{conv_forward.10}
  #allocation0 [shape = 'u32[]', space=smem, size = 0x4, offset = 0x4, fixed_abs, tag = 'smem constant byte address 0x4 - core index']
  #allocation1 [shape = 'u32[144,128]{1,0:T(1,128)}', space=vmem, size = 0x12000, scoped, tag = 'internal scratch']
  %s0 = inlined_call_operand.vmem [shape: bf16[64,256], index: 0, kind: input, shape index: {}]
  %s1 = inlined_call_operand.vmem [shape: bf16[256,128], index: 1, kind: input, shape index: {}]
  %s2 = inlined_call_operand.vmem [shape: f32[1,128], index: 2, kind: input, shape index: {}]
  %s3 = inlined_call_operand.vmem [shape: f32[1,128], index: 3, kind: input, shape index: {}]
  %s4 = inlined_call_operand.vmem [shape: f32[64,128], index: 4, kind: output, shape index: {}]
  %s5 = sld [smem:[#allocation0]]
  $region26: #{conv_forward.10} parent=0
    _
  %s7 = ssub.s32 1, %s5
  %s8 = scalar_select 0, %s7, %s5
  // Predicated region
  $region2: #{conv_forward.10} parent=0 // pred_check
    _
  $region3: #{conv_forward.10} parent=0 // pred_check_branch
    %10 = sbr.rel (0) target = $region5
  $region4: #{conv_forward.10} parent=0 // pred_region
    _
  $region5: #{conv_forward.10} parent=0 // pred_fallthru
    _
  // Predicated region
  $region6: #{conv_forward.10} parent=0 // pred_check
    _
  $region7: #{conv_forward.10} parent=0 // pred_check_branch
    %12 = sbr.rel (0) target = $region9
  $region8: #{conv_forward.10} parent=0 // pred_region
    _
  $region9: #{conv_forward.10} parent=0 // pred_fallthru
    _
  // Predicated region
  $region10: #{conv_forward.10} parent=0 // pred_check
    _
  $region11: #{conv_forward.10} parent=0 // pred_check_branch
    %14 = sbr.rel (0) target = $region13
  $region12: #{conv_forward.10} parent=0 // pred_region
    _
  $region13: #{conv_forward.10} parent=0 // pred_fallthru
    _
  // Predicated region
  $region14: #{conv_forward.10} parent=0 // pred_check
    _
  $region15: #{conv_forward.10} parent=0 // pred_check_branch
    %16 = sbr.rel (0) target = $region17
  $region16: #{conv_forward.10} parent=0 // pred_region
    _
  $region17: #{conv_forward.10} parent=0 // pred_fallthru
    _
  %v18 = vld [vmem:[%s0] sm:$0xff]
  %v19 = vld [vmem:[%s0 + $0x8] sm:$0xff]
  %v20 = vld [vmem:[%s0 + $0x10] sm:$0xff]
  %v21 = vld [vmem:[%s0 + $0x18] sm:$0xff]
  %v22 = vld [vmem:[%s0 + $0x20] sm:$0xff]
  %v23 = vld [vmem:[%s0 + $0x28] sm:$0xff]
  %v24 = vld [vmem:[%s0 + $0x30] sm:$0xff]
  %v25 = vld [vmem:[%s0 + $0x38] sm:$0xff]
  %v26 = vld [vmem:[%s1] sm:$0xf]
  %v27 = vld [vmem:[%s1 + $0x4] sm:$0xf]
  %v28 = vld [vmem:[%s1 + $0x8] sm:$0xf]
  %v29 = vld [vmem:[%s1 + $0xc] sm:$0xf]
  %v30 = vld [vmem:[%s1 + $0x10] sm:$0xf]
  %v31 = vld [vmem:[%s1 + $0x14] sm:$0xf]
  %v32 = vld [vmem:[%s1 + $0x18] sm:$0xf]
  %v33 = vld [vmem:[%s1 + $0x1c] sm:$0xf]
  %v34 = vld [vmem:[%s1 + $0x20] sm:$0xf]
  %v35 = vld [vmem:[%s1 + $0x24] sm:$0xf]
  %v36 = vld [vmem:[%s1 + $0x28] sm:$0xf]
  %v37 = vld [vmem:[%s1 + $0x2c] sm:$0xf]
  %v38 = vld [vmem:[%s1 + $0x30] sm:$0xf]
  %v39 = vld [vmem:[%s1 + $0x34] sm:$0xf]
  %v40 = vld [vmem:[%s1 + $0x38] sm:$0xf]
  %v41 = vld [vmem:[%s1 + $0x3c] sm:$0xf]
  %v42 = vld [vmem:[%s1 + $0x40] sm:$0xf]
  %v43 = vld [vmem:[%s1 + $0x44] sm:$0xf]
  %v44 = vld [vmem:[%s1 + $0x48] sm:$0xf]
  %v45 = vld [vmem:[%s1 + $0x4c] sm:$0xf]
  %v46 = vld [vmem:[%s1 + $0x50] sm:$0xf]
  %v47 = vld [vmem:[%s1 + $0x54] sm:$0xf]
  %v48 = vld [vmem:[%s1 + $0x58] sm:$0xf]
  %v49 = vld [vmem:[%s1 + $0x5c] sm:$0xf]
  %v50 = vld [vmem:[%s1 + $0x60] sm:$0xf]
  %v51 = vld [vmem:[%s1 + $0x64] sm:$0xf]
  %v52 = vld [vmem:[%s1 + $0x68] sm:$0xf]
  %v53 = vld [vmem:[%s1 + $0x6c] sm:$0xf]
  %v54 = vld [vmem:[%s1 + $0x70] sm:$0xf]
  %v55 = vld [vmem:[%s1 + $0x74] sm:$0xf]
  %v56 = vld [vmem:[%s1 + $0x78] sm:$0xf]
  %v57 = vld [vmem:[%s1 + $0x7c] sm:$0xf]
  %v66 = vunpack.c.l.b16 %v18
  %v67 = vunpack.c.h.b16 %v18
  %v68 = vunpack.c.l.b16 %v19
  %v69 = vunpack.c.h.b16 %v19
  %v70 = vunpack.c.l.b16 %v20
  %v71 = vunpack.c.h.b16 %v20
  %v72 = vunpack.c.l.b16 %v21
  %v73 = vunpack.c.h.b16 %v21
  %v74 = vunpack.c.l.b16 %v22
  %v75 = vunpack.c.h.b16 %v22
  %v76 = vunpack.c.l.b16 %v23
  %v77 = vunpack.c.h.b16 %v23
  %v78 = vunpack.c.l.b16 %v24
  %v79 = vunpack.c.h.b16 %v24
  %v80 = vunpack.c.l.b16 %v25
  %v81 = vunpack.c.h.b16 %v25
  %v82 = vpack.c.b16 %v68, %v66
  %v83 = vpack.c.b16 %v69, %v67
  %v84 = vpack.c.b16 %v72, %v70
  %v85 = vpack.c.b16 %v73, %v71
  %v86 = vpack.c.b16 %v76, %v74
  %v87 = vpack.c.b16 %v77, %v75
  %v88 = vpack.c.b16 %v80, %v78
  %v89 = vpack.c.b16 %v81, %v79
  %v130 = vunpack.c.l.b16 %v26
  %v131 = vunpack.c.l.b16 %v27
  %v132 = vunpack.c.l.b16 %v28
  %v133 = vunpack.c.l.b16 %v29
  %v134 = vunpack.c.l.b16 %v30
  %v135 = vunpack.c.l.b16 %v31
  %v136 = vunpack.c.l.b16 %v32
  %v137 = vunpack.c.l.b16 %v33
  %v138 = vunpack.c.l.b16 %v34
  %v139 = vunpack.c.l.b16 %v35
  %v140 = vunpack.c.l.b16 %v36
  %v141 = vunpack.c.l.b16 %v37
  %v142 = vunpack.c.l.b16 %v38
  %v143 = vunpack.c.l.b16 %v39
  %v144 = vunpack.c.l.b16 %v40
  %v145 = vunpack.c.l.b16 %v41
  %v146 = vunpack.c.l.b16 %v42
  %v147 = vunpack.c.l.b16 %v43
  %v148 = vunpack.c.l.b16 %v44
  %v149 = vunpack.c.l.b16 %v45
  %v150 = vunpack.c.l.b16 %v46
  %v151 = vunpack.c.l.b16 %v47
  %v152 = vunpack.c.l.b16 %v48
  %v153 = vunpack.c.l.b16 %v49
  %v154 = vunpack.c.l.b16 %v50
  %v155 = vunpack.c.l.b16 %v51
  %v156 = vunpack.c.l.b16 %v52
  %v157 = vunpack.c.l.b16 %v53
  %v158 = vunpack.c.l.b16 %v54
  %v159 = vunpack.c.l.b16 %v55
  %v160 = vunpack.c.l.b16 %v56
  %v161 = vunpack.c.l.b16 %v57
  %v162 = vpack.c.b16 %v131, %v130
  %v163 = vpack.c.b16 %v133, %v132
  %v164 = vpack.c.b16 %v135, %v134
  %v165 = vpack.c.b16 %v137, %v136
  %v166 = vpack.c.b16 %v139, %v138
  %v167 = vpack.c.b16 %v141, %v140
  %v168 = vpack.c.b16 %v143, %v142
  %v169 = vpack.c.b16 %v145, %v144
  %v170 = vpack.c.b16 %v147, %v146
  %v171 = vpack.c.b16 %v149, %v148
  %v172 = vpack.c.b16 %v151, %v150
  %v173 = vpack.c.b16 %v153, %v152
  %v174 = vpack.c.b16 %v155, %v154
  %v175 = vpack.c.b16 %v157, %v156
  %v176 = vpack.c.b16 %v159, %v158
  %v177 = vpack.c.b16 %v161, %v160
  %194 = vmatprep.subr.bf16.mxu0 0
  %195 = vmatpush1.bf16.msra.mxu0 %v162
  %196 = vmatprep.subr.bf16.mxu0 0
  %197 = vmatpush1.bf16.msra.mxu0 %v163
  %198 = vmatprep.subr.bf16.mxu0 0
  %199 = vmatpush1.bf16.msra.mxu0 %v164
  %200 = vmatprep.subr.bf16.mxu0 0
  %201 = vmatpush1.bf16.msra.mxu0 %v165
  %202 = vmatprep.subr.bf16.mxu0 0
  %203 = vmatpush1.bf16.msra.mxu0 %v166
  %204 = vmatprep.subr.bf16.mxu0 0
  %205 = vmatpush1.bf16.msra.mxu0 %v167
  %206 = vmatprep.subr.bf16.mxu0 0
  %207 = vmatpush1.bf16.msra.mxu0 %v168
  %208 = vmatprep.subr.bf16.mxu0 0
  %209 = vmatpush1.bf16.msra.mxu0 %v169
  %210 = vmatprep.subr.bf16.mxu0 0
  %211 = vmatpush1.bf16.msra.mxu0 %v170
  %212 = vmatprep.subr.bf16.mxu0 0
  %213 = vmatpush1.bf16.msra.mxu0 %v171
  %214 = vmatprep.subr.bf16.mxu0 0
  %215 = vmatpush1.bf16.msra.mxu0 %v172
  %216 = vmatprep.subr.bf16.mxu0 0
  %217 = vmatpush1.bf16.msra.mxu0 %v173
  %218 = vmatprep.subr.bf16.mxu0 0
  %219 = vmatpush1.bf16.msra.mxu0 %v174
  %220 = vmatprep.subr.bf16.mxu0 0
  %221 = vmatpush1.bf16.msra.mxu0 %v175
  %222 = vmatprep.subr.bf16.mxu0 0
  %223 = vmatpush1.bf16.msra.mxu0 %v176
  %224 = vmatprep.subr.bf16.mxu0 0
  %225 = vmatpush1.bf16.msra.mxu0 %v177
  %226 = vmatprep.mubr.bf16.mxu0 %v83
  %227 = vmatmul.mubr.bf16.gmra.mrb[0].mxu0 %v82
  %v228 = vpop.f32.mrb[0].mxu0
  %v229 = vadd.f32 0.0, %v228
  %v230 = vpop.f32.mrb[0].mxu0
  %v231 = vpop.f32.mrb[0].mxu0
  %v232 = vadd.f32 0.0, %v231
  %v233 = vpop.f32.mrb[0].mxu0
  %234 = vmatprep.mubr.bf16.mxu0 %v85
  %235 = vmatmul.mubr.bf16.gmra.mrb[0].mxu0 %v84
  %v236 = vpop.f32.mrb[0].mxu0
  %v237 = vadd.f32 0.0, %v236
  %v238 = vpop.f32.mrb[0].mxu0
  %v239 = vpop.f32.mrb[0].mxu0
  %v240 = vadd.f32 0.0, %v239
  %v241 = vpop.f32.mrb[0].mxu0
  %242 = vmatprep.mubr.bf16.mxu0 %v87
  %243 = vmatmul.mubr.bf16.gmra.mrb[0].mxu0 %v86
  %v244 = vpop.f32.mrb[0].mxu0
  %v245 = vadd.f32 0.0, %v244
  %v246 = vpop.f32.mrb[0].mxu0
  %v247 = vpop.f32.mrb[0].mxu0
  %v248 = vadd.f32 0.0, %v247
  %v249 = vpop.f32.mrb[0].mxu0
  %250 = vmatprep.mubr.bf16.mxu0 %v89
  %251 = vmatmul.mubr.bf16.gmra.mrb[0].mxu0 %v88
  %v252 = vpop.f32.mrb[0].mxu0
  %v253 = vadd.f32 0.0, %v252
  %v254 = vpop.f32.mrb[0].mxu0
  %v255 = vpop.f32.mrb[0].mxu0
  %v256 = vadd.f32 0.0, %v255
  %v257 = vpop.f32.mrb[0].mxu0
  %258 = vdwg.mxu0
  %v259 = vadd.f32 %v229, %v232
  %v260 = vadd.f32 %v259, %v237
  %v261 = vadd.f32 %v260, %v240
  %v262 = vadd.f32 %v261, %v245
  %v263 = vadd.f32 %v262, %v248
  %v264 = vadd.f32 %v263, %v253
  %v265 = vadd.f32 %v264, %v256
  %v266 = vrot.slane %v265, 4
  %v267 = vadd.f32 %v265, %v266
  %v268 = vrot.slane %v267, 2
  %v269 = vadd.f32 %v267, %v268
  %v270 = vrot.slane %v269, 1
  %v271 = vadd.f32 %v269, %v270
  %v272 = vmul.f32 %v271, 0.02
  %v273 = vmul.f32 %v229, %v229
  %v274 = vmul.f32 %v232, %v232
  %v275 = vmul.f32 %v237, %v237
  %v276 = vmul.f32 %v240, %v240
  %v277 = vmul.f32 %v245, %v245
  %v278 = vmul.f32 %v248, %v248
  %v279 = vmul.f32 %v253, %v253
  %v280 = vmul.f32 %v256, %v256
  %v281 = vadd.f32 %v273, %v274
  %v282 = vadd.f32 %v281, %v275
  %v283 = vadd.f32 %v282, %v276
  %v284 = vadd.f32 %v283, %v277
  %v285 = vadd.f32 %v284, %v278
  %v286 = vadd.f32 %v285, %v279
  %v287 = vadd.f32 %v286, %v280
  %v288 = vrot.slane %v287, 4
  %v289 = vadd.f32 %v287, %v288
  %v290 = vrot.slane %v289, 2
  %v291 = vadd.f32 %v289, %v290
  %v292 = vrot.slane %v291, 1
  %v293 = vadd.f32 %v291, %v292
  %v294 = vmul.f32 %v293, 0.02
  %v295 = vmul.f32 %v272, %v272
  %v296 = vsub.f32 %v294, %v295
  %v297 = vmax.f32 %v296, 0.0
  %v298 = vld [vmem:[%s2] sm:$0x1]
  %v299 = vadd.f32 %v297, 1e-05
  %v300 = vrsqrt.pop %v299
  %v301 = vmul.f32 %v298, %v300
  %v302 = vld [vmem:[%s3] sm:$0x1]
  %v303 = vmul.f32 %v272, %v301
  %v304 = vsub.f32 %v302, %v303
  %v306 = vlaneseq
  %v307 = vshrl.u32 %v306, 7
  %v308 = vsub.s32 0, %v307
  %v309 = vrot.slane %v301, %v308
  %v311 = vmul.f32 %v229, %v309
  %v312 = vmul.f32 %v232, %v309
  %v313 = vmul.f32 %v237, %v309
  %v314 = vmul.f32 %v240, %v309
  %v315 = vmul.f32 %v245, %v309
  %v316 = vmul.f32 %v248, %v309
  %v317 = vmul.f32 %v253, %v309
  %v318 = vmul.f32 %v256, %v309
  %v320 = vlaneseq
  %v321 = vshrl.u32 %v320, 7
  %v322 = vsub.s32 0, %v321
  %v323 = vrot.slane %v304, %v322
  %v325 = vadd.f32 %v311, %v323
  %v326 = vadd.f32 %v312, %v323
  %v327 = vadd.f32 %v313, %v323
  %v328 = vadd.f32 %v314, %v323
  %v329 = vadd.f32 %v315, %v323
  %v330 = vadd.f32 %v316, %v323
  %v331 = vadd.f32 %v317, %v323
  %v332 = vadd.f32 %v318, %v323
  %v333 = vmax.f32 %v325, 0.0
  %v334 = vmax.f32 %v326, 0.0
  %v335 = vmax.f32 %v327, 0.0
  %v336 = vmax.f32 %v328, 0.0
  %v337 = vmax.f32 %v329, 0.0
  %v338 = vmax.f32 %v330, 0.0
  %v339 = vmax.f32 %v331, 0.0
  %v340 = vmax.f32 %v332, 0.0
  %341 = vst [vmem:[%s4] sm:$0xff] %v333
  %342 = vst [vmem:[%s4 + $0x8] sm:$0xff] %v334
  %343 = vst [vmem:[%s4 + $0x10] sm:$0xff] %v335
  %344 = vst [vmem:[%s4 + $0x18] sm:$0xff] %v336
  %345 = vst [vmem:[%s4 + $0x20] sm:$0xff] %v337
  %346 = vst [vmem:[%s4 + $0x28] sm:$0xff] %v338
  %347 = vst [vmem:[%s4 + $0x30] sm:$0xff] %v339
  %348 = vst [vmem:[%s4 + $0x38] sm:$0xff] %v340
  // Predicated region
  $region18: #{conv_forward.10} parent=0 // pred_check
    _
  $region19: #{conv_forward.10} parent=0 // pred_check_branch
    %350 = sbr.rel (0) target = $region21
  $region20: #{conv_forward.10} parent=0 // pred_region
    _
  $region21: #{conv_forward.10} parent=0 // pred_fallthru
    _
  // Predicated region
  $region22: #{conv_forward.10} parent=0 // pred_check
    _
  $region23: #{conv_forward.10} parent=0 // pred_check_branch
    %352 = sbr.rel (0) target = $region25
  $region24: #{conv_forward.10} parent=0 // pred_region
    _
  $region25: #{conv_forward.10} parent=0 // pred_fallthru
    _

// kernel: conv_forward.12
$region0: #{conv_forward.12}
  #allocation0 [shape = 'u32[]', space=smem, size = 0x4, offset = 0x4, fixed_abs, tag = 'smem constant byte address 0x4 - core index']
  #allocation1 [shape = 'u32[144,128]{1,0:T(1,128)}', space=vmem, size = 0x12000, scoped, tag = 'internal scratch']
  %s0 = inlined_call_operand.vmem [shape: bf16[32,128], index: 0, kind: input, shape index: {}]
  %s1 = inlined_call_operand.vmem [shape: bf16[128,128], index: 1, kind: input, shape index: {}]
  %s2 = inlined_call_operand.vmem [shape: f32[1,128], index: 2, kind: input, shape index: {}]
  %s3 = inlined_call_operand.vmem [shape: f32[1,128], index: 3, kind: input, shape index: {}]
  %s4 = inlined_call_operand.vmem [shape: f32[32,128], index: 4, kind: output, shape index: {}]
  %s5 = sld [smem:[#allocation0]]
  $region26: #{conv_forward.12} parent=0
    _
  %s7 = ssub.s32 1, %s5
  %s8 = scalar_select 0, %s7, %s5
  // Predicated region
  $region2: #{conv_forward.12} parent=0 // pred_check
    _
  $region3: #{conv_forward.12} parent=0 // pred_check_branch
    %10 = sbr.rel (0) target = $region5
  $region4: #{conv_forward.12} parent=0 // pred_region
    _
  $region5: #{conv_forward.12} parent=0 // pred_fallthru
    _
  // Predicated region
  $region6: #{conv_forward.12} parent=0 // pred_check
    _
  $region7: #{conv_forward.12} parent=0 // pred_check_branch
    %12 = sbr.rel (0) target = $region9
  $region8: #{conv_forward.12} parent=0 // pred_region
    _
  $region9: #{conv_forward.12} parent=0 // pred_fallthru
    _
  // Predicated region
  $region10: #{conv_forward.12} parent=0 // pred_check
    _
  $region11: #{conv_forward.12} parent=0 // pred_check_branch
    %14 = sbr.rel (0) target = $region13
  $region12: #{conv_forward.12} parent=0 // pred_region
    _
  $region13: #{conv_forward.12} parent=0 // pred_fallthru
    _
  // Predicated region
  $region14: #{conv_forward.12} parent=0 // pred_check
    _
  $region15: #{conv_forward.12} parent=0 // pred_check_branch
    %16 = sbr.rel (0) target = $region17
  $region16: #{conv_forward.12} parent=0 // pred_region
    _
  $region17: #{conv_forward.12} parent=0 // pred_fallthru
    _
  %v18 = vld [vmem:[%s0] sm:$0xf]
  %v19 = vld [vmem:[%s0 + $0x4] sm:$0xf]
  %v20 = vld [vmem:[%s0 + $0x8] sm:$0xf]
  %v21 = vld [vmem:[%s0 + $0xc] sm:$0xf]
  %v22 = vld [vmem:[%s1] sm:$0xf]
  %v23 = vld [vmem:[%s1 + $0x4] sm:$0xf]
  %v24 = vld [vmem:[%s1 + $0x8] sm:$0xf]
  %v25 = vld [vmem:[%s1 + $0xc] sm:$0xf]
  %v26 = vld [vmem:[%s1 + $0x10] sm:$0xf]
  %v27 = vld [vmem:[%s1 + $0x14] sm:$0xf]
  %v28 = vld [vmem:[%s1 + $0x18] sm:$0xf]
  %v29 = vld [vmem:[%s1 + $0x1c] sm:$0xf]
  %v30 = vld [vmem:[%s1 + $0x20] sm:$0xf]
  %v31 = vld [vmem:[%s1 + $0x24] sm:$0xf]
  %v32 = vld [vmem:[%s1 + $0x28] sm:$0xf]
  %v33 = vld [vmem:[%s1 + $0x2c] sm:$0xf]
  %v34 = vld [vmem:[%s1 + $0x30] sm:$0xf]
  %v35 = vld [vmem:[%s1 + $0x34] sm:$0xf]
  %v36 = vld [vmem:[%s1 + $0x38] sm:$0xf]
  %v37 = vld [vmem:[%s1 + $0x3c] sm:$0xf]
  %v42 = vunpack.c.l.b16 %v18
  %v43 = vunpack.c.l.b16 %v19
  %v44 = vunpack.c.l.b16 %v20
  %v45 = vunpack.c.l.b16 %v21
  %v46 = vpack.c.b16 %v43, %v42
  %v47 = vpack.c.b16 %v45, %v44
  %v66 = vunpack.c.l.b16 %v22
  %v67 = vunpack.c.l.b16 %v23
  %v68 = vunpack.c.l.b16 %v24
  %v69 = vunpack.c.l.b16 %v25
  %v70 = vunpack.c.l.b16 %v26
  %v71 = vunpack.c.l.b16 %v27
  %v72 = vunpack.c.l.b16 %v28
  %v73 = vunpack.c.l.b16 %v29
  %v74 = vunpack.c.l.b16 %v30
  %v75 = vunpack.c.l.b16 %v31
  %v76 = vunpack.c.l.b16 %v32
  %v77 = vunpack.c.l.b16 %v33
  %v78 = vunpack.c.l.b16 %v34
  %v79 = vunpack.c.l.b16 %v35
  %v80 = vunpack.c.l.b16 %v36
  %v81 = vunpack.c.l.b16 %v37
  %v82 = vpack.c.b16 %v67, %v66
  %v83 = vpack.c.b16 %v69, %v68
  %v84 = vpack.c.b16 %v71, %v70
  %v85 = vpack.c.b16 %v73, %v72
  %v86 = vpack.c.b16 %v75, %v74
  %v87 = vpack.c.b16 %v77, %v76
  %v88 = vpack.c.b16 %v79, %v78
  %v89 = vpack.c.b16 %v81, %v80
  %98 = vmatprep.subr.bf16.mxu0 0
  %99 = vmatpush1.bf16.msra.mxu0 %v82
  %100 = vmatprep.subr.bf16.mxu0 0
  %101 = vmatpush1.bf16.msra.mxu0 %v83
  %102 = vmatprep.subr.bf16.mxu0 0
  %103 = vmatpush1.bf16.msra.mxu0 %v84
  %104 = vmatprep.subr.bf16.mxu0 0
  %105 = vmatpush1.bf16.msra.mxu0 %v85
  %106 = vmatprep.subr.bf16.mxu0 0
  %107 = vmatpush1.bf16.msra.mxu0 %v86
  %108 = vmatprep.subr.bf16.mxu0 0
  %109 = vmatpush1.bf16.msra.mxu0 %v87
  %110 = vmatprep.subr.bf16.mxu0 0
  %111 = vmatpush1.bf16.msra.mxu0 %v88
  %112 = vmatprep.subr.bf16.mxu0 0
  %113 = vmatpush1.bf16.msra.mxu0 %v89
  %114 = vmatprep.subr.bf16.mxu0 0
  %115 = vmatpush1.bf16.msra.mxu0 0
  %116 = vmatprep.subr.bf16.mxu0 0
  %117 = vmatpush1.bf16.msra.mxu0 0
  %118 = vmatprep.subr.bf16.mxu0 0
  %119 = vmatpush1.bf16.msra.mxu0 0
  %120 = vmatprep.subr.bf16.mxu0 0
  %121 = vmatpush1.bf16.msra.mxu0 0
  %122 = vmatprep.subr.bf16.mxu0 0
  %123 = vmatpush1.bf16.msra.mxu0 0
  %124 = vmatprep.subr.bf16.mxu0 0
  %125 = vmatpush1.bf16.msra.mxu0 0
  %126 = vmatprep.subr.bf16.mxu0 0
  %127 = vmatpush1.bf16.msra.mxu0 0
  %128 = vmatprep.subr.bf16.mxu0 0
  %129 = vmatpush1.bf16.msra.mxu0 0
  %130 = vmatprep.mubr.bf16.mxu0 0
  %131 = vmatmul.mubr.bf16.gmra.mrb[0].mxu0 %v46
  %v132 = vpop.f32.mrb[0].mxu0
  %v133 = vadd.f32 0.0, %v132
  %v134 = vpop.f32.mrb[0].mxu0
  %v135 = vpop.f32.mrb[0].mxu0
  %v136 = vadd.f32 0.0, %v135
  %v137 = vpop.f32.mrb[0].mxu0
  %138 = vmatprep.mubr.bf16.mxu0 0
  %139 = vmatmul.mubr.bf16.gmra.mrb[0].mxu0 %v47
  %v140 = vpop.f32.mrb[0].mxu0
  %v141 = vadd.f32 0.0, %v140
  %v142 = vpop.f32.mrb[0].mxu0
  %v143 = vpop.f32.mrb[0].mxu0
  %v144 = vadd.f32 0.0, %v143
  %v145 = vpop.f32.mrb[0].mxu0
  %146 = vdwg.mxu0
  %v147 = vadd.f32 %v133, %v136
  %v148 = vadd.f32 %v147, %v141
  %v149 = vadd.f32 %v148, %v144
  %v150 = vrot.slane %v149, 4
  %v151 = vadd.f32 %v149, %v150
  %v152 = vrot.slane %v151, 2
  %v153 = vadd.f32 %v151, %v152
  %v154 = vrot.slane %v153, 1
  %v155 = vadd.f32 %v153, %v154
  %v156 = vmul.f32 %v155, 0.03125
  %v157 = vmul.f32 %v133, %v133
  %v158 = vmul.f32 %v136, %v136
  %v159 = vmul.f32 %v141, %v141
  %v160 = vmul.f32 %v144, %v144
  %v161 = vadd.f32 %v157, %v158
  %v162 = vadd.f32 %v161, %v159
  %v163 = vadd.f32 %v162, %v160
  %v164 = vrot.slane %v163, 4
  %v165 = vadd.f32 %v163, %v164
  %v166 = vrot.slane %v165, 2
  %v167 = vadd.f32 %v165, %v166
  %v168 = vrot.slane %v167, 1
  %v169 = vadd.f32 %v167, %v168
  %v170 = vmul.f32 %v169, 0.03125
  %v171 = vmul.f32 %v156, %v156
  %v172 = vsub.f32 %v170, %v171
  %v173 = vmax.f32 %v172, 0.0
  %v174 = vld [vmem:[%s2] sm:$0x1]
  %v175 = vadd.f32 %v173, 1e-05
  %v176 = vrsqrt.pop %v175
  %v177 = vmul.f32 %v174, %v176
  %v178 = vld [vmem:[%s3] sm:$0x1]
  %v179 = vmul.f32 %v156, %v177
  %v180 = vsub.f32 %v178, %v179
  %v182 = vlaneseq
  %v183 = vshrl.u32 %v182, 7
  %v184 = vsub.s32 0, %v183
  %v185 = vrot.slane %v177, %v184
  %v187 = vmul.f32 %v133, %v185
  %v188 = vmul.f32 %v136, %v185
  %v189 = vmul.f32 %v141, %v185
  %v190 = vmul.f32 %v144, %v185
  %v192 = vlaneseq
  %v193 = vshrl.u32 %v192, 7
  %v194 = vsub.s32 0, %v193
  %v195 = vrot.slane %v180, %v194
  %v197 = vadd.f32 %v187, %v195
  %v198 = vadd.f32 %v188, %v195
  %v199 = vadd.f32 %v189, %v195
  %v200 = vadd.f32 %v190, %v195
  %v201 = vmax.f32 %v197, 0.0
  %v202 = vmax.f32 %v198, 0.0
  %v203 = vmax.f32 %v199, 0.0
  %v204 = vmax.f32 %v200, 0.0
  %205 = vst [vmem:[%s4] sm:$0xff] %v201
  %206 = vst [vmem:[%s4 + $0x8] sm:$0xff] %v202
  %207 = vst [vmem:[%s4 + $0x10] sm:$0xff] %v203
  %208 = vst [vmem:[%s4 + $0x18] sm:$0xff] %v204
  // Predicated region
  $region18: #{conv_forward.12} parent=0 // pred_check
    _
  $region19: #{conv_forward.12} parent=0 // pred_check_branch
    %210 = sbr.rel (0) target = $region21
  $region20: #{conv_forward.12} parent=0 // pred_region
    _
  $region21: #{conv_forward.12} parent=0 // pred_fallthru
    _
  // Predicated region
  $region22: #{conv_forward.12} parent=0 // pred_check
    _
  $region23: #{conv_forward.12} parent=0 // pred_check_branch
    %212 = sbr.rel (0) target = $region25
  $region24: #{conv_forward.12} parent=0 // pred_region
    _
  $region25: #{conv_forward.12} parent=0 // pred_fallthru
    _

// kernel: conv_forward.11
$region0: #{conv_forward.11}
  #allocation0 [shape = 'u32[]', space=smem, size = 0x4, offset = 0x4, fixed_abs, tag = 'smem constant byte address 0x4 - core index']
  #allocation1 [shape = 'u32[144,128]{1,0:T(1,128)}', space=vmem, size = 0x12000, scoped, tag = 'internal scratch']
  %s0 = inlined_call_operand.vmem [shape: bf16[16,2048], index: 0, kind: input, shape index: {}]
  %s1 = inlined_call_operand.vmem [shape: bf16[2048,128], index: 1, kind: input, shape index: {}]
  %s2 = inlined_call_operand.vmem [shape: f32[1,128], index: 2, kind: input, shape index: {}]
  %s3 = inlined_call_operand.vmem [shape: f32[16,128], index: 3, kind: output, shape index: {}]
  %s4 = sld [smem:[#allocation0]]
  $region22: #{conv_forward.11} parent=0
    _
  %s6 = ssub.s32 1, %s4
  %s7 = scalar_select 0, %s6, %s4
  // Predicated region
  $region2: #{conv_forward.11} parent=0 // pred_check
    _
  $region3: #{conv_forward.11} parent=0 // pred_check_branch
    %9 = sbr.rel (0) target = $region5
  $region4: #{conv_forward.11} parent=0 // pred_region
    _
  $region5: #{conv_forward.11} parent=0 // pred_fallthru
    _
  // Predicated region
  $region6: #{conv_forward.11} parent=0 // pred_check
    _
  $region7: #{conv_forward.11} parent=0 // pred_check_branch
    %11 = sbr.rel (0) target = $region9
  $region8: #{conv_forward.11} parent=0 // pred_region
    _
  $region9: #{conv_forward.11} parent=0 // pred_fallthru
    _
  // Predicated region
  $region10: #{conv_forward.11} parent=0 // pred_check
    _
  $region11: #{conv_forward.11} parent=0 // pred_check_branch
    %13 = sbr.rel (0) target = $region13
  $region12: #{conv_forward.11} parent=0 // pred_region
    _
  $region13: #{conv_forward.11} parent=0 // pred_fallthru
    _
  %v15 = vld [vmem:[%s0] sm:$0xff]
  %v16 = vld [vmem:[%s0 + $0x8] sm:$0xff]
  %v17 = vld [vmem:[%s0 + $0x10] sm:$0xff]
  %v18 = vld [vmem:[%s0 + $0x18] sm:$0xff]
  %v19 = vld [vmem:[%s0 + $0x20] sm:$0xff]
  %v20 = vld [vmem:[%s0 + $0x28] sm:$0xff]
  %v21 = vld [vmem:[%s0 + $0x30] sm:$0xff]
  %v22 = vld [vmem:[%s0 + $0x38] sm:$0xff]
  %v23 = vld [vmem:[%s0 + $0x40] sm:$0xff]
  %v24 = vld [vmem:[%s0 + $0x48] sm:$0xff]
  %v25 = vld [vmem:[%s0 + $0x50] sm:$0xff]
  %v26 = vld [vmem:[%s0 + $0x58] sm:$0xff]
  %v27 = vld [vmem:[%s0 + $0x60] sm:$0xff]
  %v28 = vld [vmem:[%s0 + $0x68] sm:$0xff]
  %v29 = vld [vmem:[%s0 + $0x70] sm:$0xff]
  %v30 = vld [vmem:[%s0 + $0x78] sm:$0xff]
  %v31 = vld [vmem:[%s1] sm:$0xf]
  %v32 = vld [vmem:[%s1 + $0x4] sm:$0xf]
  %v33 = vld [vmem:[%s1 + $0x8] sm:$0xf]
  %v34 = vld [vmem:[%s1 + $0xc] sm:$0xf]
  %v35 = vld [vmem:[%s1 + $0x10] sm:$0xf]
  %v36 = vld [vmem:[%s1 + $0x14] sm:$0xf]
  %v37 = vld [vmem:[%s1 + $0x18] sm:$0xf]
  %v38 = vld [vmem:[%s1 + $0x1c] sm:$0xf]
  %v39 = vld [vmem:[%s1 + $0x20] sm:$0xf]
  %v40 = vld [vmem:[%s1 + $0x24] sm:$0xf]
  %v41 = vld [vmem:[%s1 + $0x28] sm:$0xf]
  %v42 = vld [vmem:[%s1 + $0x2c] sm:$0xf]
  %v43 = vld [vmem:[%s1 + $0x30] sm:$0xf]
  %v44 = vld [vmem:[%s1 + $0x34] sm:$0xf]
  %v45 = vld [vmem:[%s1 + $0x38] sm:$0xf]
  %v46 = vld [vmem:[%s1 + $0x3c] sm:$0xf]
  %v47 = vld [vmem:[%s1 + $0x40] sm:$0xf]
  %v48 = vld [vmem:[%s1 + $0x44] sm:$0xf]
  %v49 = vld [vmem:[%s1 + $0x48] sm:$0xf]
  %v50 = vld [vmem:[%s1 + $0x4c] sm:$0xf]
  %v51 = vld [vmem:[%s1 + $0x50] sm:$0xf]
  %v52 = vld [vmem:[%s1 + $0x54] sm:$0xf]
  %v53 = vld [vmem:[%s1 + $0x58] sm:$0xf]
  %v54 = vld [vmem:[%s1 + $0x5c] sm:$0xf]
  %v55 = vld [vmem:[%s1 + $0x60] sm:$0xf]
  %v56 = vld [vmem:[%s1 + $0x64] sm:$0xf]
  %v57 = vld [vmem:[%s1 + $0x68] sm:$0xf]
  %v58 = vld [vmem:[%s1 + $0x6c] sm:$0xf]
  %v59 = vld [vmem:[%s1 + $0x70] sm:$0xf]
  %v60 = vld [vmem:[%s1 + $0x74] sm:$0xf]
  %v61 = vld [vmem:[%s1 + $0x78] sm:$0xf]
  %v62 = vld [vmem:[%s1 + $0x7c] sm:$0xf]
  %v63 = vld [vmem:[%s1 + $0x80] sm:$0xf]
  %v64 = vld [vmem:[%s1 + $0x84] sm:$0xf]
  %v65 = vld [vmem:[%s1 + $0x88] sm:$0xf]
  %v66 = vld [vmem:[%s1 + $0x8c] sm:$0xf]
  %v67 = vld [vmem:[%s1 + $0x90] sm:$0xf]
  %v68 = vld [vmem:[%s1 + $0x94] sm:$0xf]
  %v69 = vld [vmem:[%s1 + $0x98] sm:$0xf]
  %v70 = vld [vmem:[%s1 + $0x9c] sm:$0xf]
  %v71 = vld [vmem:[%s1 + $0xa0] sm:$0xf]
  %v72 = vld [vmem:[%s1 + $0xa4] sm:$0xf]
  %v73 = vld [vmem:[%s1 + $0xa8] sm:$0xf]
  %v74 = vld [vmem:[%s1 + $0xac] sm:$0xf]
  %v75 = vld [vmem:[%s1 + $0xb0] sm:$0xf]
  %v76 = vld [vmem:[%s1 + $0xb4] sm:$0xf]
  %v77 = vld [vmem:[%s1 + $0xb8] sm:$0xf]
  %v78 = vld [vmem:[%s1 + $0xbc] sm:$0xf]
  %v79 = vld [vmem:[%s1 + $0xc0] sm:$0xf]
  %v80 = vld [vmem:[%s1 + $0xc4] sm:$0xf]
  %v81 = vld [vmem:[%s1 + $0xc8] sm:$0xf]
  %v82 = vld [vmem:[%s1 + $0xcc] sm:$0xf]
  %v83 = vld [vmem:[%s1 + $0xd0] sm:$0xf]
  %v84 = vld [vmem:[%s1 + $0xd4] sm:$0xf]
  %v85 = vld [vmem:[%s1 + $0xd8] sm:$0xf]
  %v86 = vld [vmem:[%s1 + $0xdc] sm:$0xf]
  %v87 = vld [vmem:[%s1 + $0xe0] sm:$0xf]
  %v88 = vld [vmem:[%s1 + $0xe4] sm:$0xf]
  %v89 = vld [vmem:[%s1 + $0xe8] sm:$0xf]
  %v90 = vld [vmem:[%s1 + $0xec] sm:$0xf]
  %v91 = vld [vmem:[%s1 + $0xf0] sm:$0xf]
  %v92 = vld [vmem:[%s1 + $0xf4] sm:$0xf]
  %v93 = vld [vmem:[%s1 + $0xf8] sm:$0xf]
  %v94 = vld [vmem:[%s1 + $0xfc] sm:$0xf]
  %v95 = vld [vmem:[%s1 + $0x100] sm:$0xf]
  %v96 = vld [vmem:[%s1 + $0x104] sm:$0xf]
  %v97 = vld [vmem:[%s1 + $0x108] sm:$0xf]
  %v98 = vld [vmem:[%s1 + $0x10c] sm:$0xf]
  %v99 = vld [vmem:[%s1 + $0x110] sm:$0xf]
  %v100 = vld [vmem:[%s1 + $0x114] sm:$0xf]
  %v101 = vld [vmem:[%s1 + $0x118] sm:$0xf]
  %v102 = vld [vmem:[%s1 + $0x11c] sm:$0xf]
  %v103 = vld [vmem:[%s1 + $0x120] sm:$0xf]
  %v104 = vld [vmem:[%s1 + $0x124] sm:$0xf]
  %v105 = vld [vmem:[%s1 + $0x128] sm:$0xf]
  %v106 = vld [vmem:[%s1 + $0x12c] sm:$0xf]
  %v107 = vld [vmem:[%s1 + $0x130] sm:$0xf]
  %v108 = vld [vmem:[%s1 + $0x134] sm:$0xf]
  %v109 = vld [vmem:[%s1 + $0x138] sm:$0xf]
  %v110 = vld [vmem:[%s1 + $0x13c] sm:$0xf]
  %v111 = vld [vmem:[%s1 + $0x140] sm:$0xf]
  %v112 = vld [vmem:[%s1 + $0x144] sm:$0xf]
  %v113 = vld [vmem:[%s1 + $0x148] sm:$0xf]
  %v114 = vld [vmem:[%s1 + $0x14c] sm:$0xf]
  %v115 = vld [vmem:[%s1 + $0x150] sm:$0xf]
  %v116 = vld [vmem:[%s1 + $0x154] sm:$0xf]
  %v117 = vld [vmem:[%s1 + $0x158] sm:$0xf]
  %v118 = vld [vmem:[%s1 + $0x15c] sm:$0xf]
  %v119 = vld [vmem:[%s1 + $0x160] sm:$0xf]
  %v120 = vld [vmem:[%s1 + $0x164] sm:$0xf]
  %v121 = vld [vmem:[%s1 + $0x168] sm:$0xf]
  %v122 = vld [vmem:[%s1 + $0x16c] sm:$0xf]
  %v123 = vld [vmem:[%s1 + $0x170] sm:$0xf]
  %v124 = vld [vmem:[%s1 + $0x174] sm:$0xf]
  %v125 = vld [vmem:[%s1 + $0x178] sm:$0xf]
  %v126 = vld [vmem:[%s1 + $0x17c] sm:$0xf]
  %v127 = vld [vmem:[%s1 + $0x180] sm:$0xf]
  %v128 = vld [vmem:[%s1 + $0x184] sm:$0xf]
  %v129 = vld [vmem:[%s1 + $0x188] sm:$0xf]
  %v130 = vld [vmem:[%s1 + $0x18c] sm:$0xf]
  %v131 = vld [vmem:[%s1 + $0x190] sm:$0xf]
  %v132 = vld [vmem:[%s1 + $0x194] sm:$0xf]
  %v133 = vld [vmem:[%s1 + $0x198] sm:$0xf]
  %v134 = vld [vmem:[%s1 + $0x19c] sm:$0xf]
  %v135 = vld [vmem:[%s1 + $0x1a0] sm:$0xf]
  %v136 = vld [vmem:[%s1 + $0x1a4] sm:$0xf]
  %v137 = vld [vmem:[%s1 + $0x1a8] sm:$0xf]
  %v138 = vld [vmem:[%s1 + $0x1ac] sm:$0xf]
  %v139 = vld [vmem:[%s1 + $0x1b0] sm:$0xf]
  %v140 = vld [vmem:[%s1 + $0x1b4] sm:$0xf]
  %v141 = vld [vmem:[%s1 + $0x1b8] sm:$0xf]
  %v142 = vld [vmem:[%s1 + $0x1bc] sm:$0xf]
  %v143 = vld [vmem:[%s1 + $0x1c0] sm:$0xf]
  %v144 = vld [vmem:[%s1 + $0x1c4] sm:$0xf]
  %v145 = vld [vmem:[%s1 + $0x1c8] sm:$0xf]
  %v146 = vld [vmem:[%s1 + $0x1cc] sm:$0xf]
  %v147 = vld [vmem:[%s1 + $0x1d0] sm:$0xf]
  %v148 = vld [vmem:[%s1 + $0x1d4] sm:$0xf]
  %v149 = vld [vmem:[%s1 + $0x1d8] sm:$0xf]
  %v150 = vld [vmem:[%s1 + $0x1dc] sm:$0xf]
  %v151 = vld [vmem:[%s1 + $0x1e0] sm:$0xf]
  %v152 = vld [vmem:[%s1 + $0x1e4] sm:$0xf]
  %v153 = vld [vmem:[%s1 + $0x1e8] sm:$0xf]
  %v154 = vld [vmem:[%s1 + $0x1ec] sm:$0xf]
  %v155 = vld [vmem:[%s1 + $0x1f0] sm:$0xf]
  %v156 = vld [vmem:[%s1 + $0x1f4] sm:$0xf]
  %v157 = vld [vmem:[%s1 + $0x1f8] sm:$0xf]
  %v158 = vld [vmem:[%s1 + $0x1fc] sm:$0xf]
  %v159 = vld [vmem:[%s1 + $0x200] sm:$0xf]
  %v160 = vld [vmem:[%s1 + $0x204] sm:$0xf]
  %v161 = vld [vmem:[%s1 + $0x208] sm:$0xf]
  %v162 = vld [vmem:[%s1 + $0x20c] sm:$0xf]
  %v163 = vld [vmem:[%s1 + $0x210] sm:$0xf]
  %v164 = vld [vmem:[%s1 + $0x214] sm:$0xf]
  %v165 = vld [vmem:[%s1 + $0x218] sm:$0xf]
  %v166 = vld [vmem:[%s1 + $0x21c] sm:$0xf]
  %v167 = vld [vmem:[%s1 + $0x220] sm:$0xf]
  %v168 = vld [vmem:[%s1 + $0x224] sm:$0xf]
  %v169 = vld [vmem:[%s1 + $0x228] sm:$0xf]
  %v170 = vld [vmem:[%s1 + $0x22c] sm:$0xf]
  %v171 = vld [vmem:[%s1 + $0x230] sm:$0xf]
  %v172 = vld [vmem:[%s1 + $0x234] sm:$0xf]
  %v173 = vld [vmem:[%s1 + $0x238] sm:$0xf]
  %v174 = vld [vmem:[%s1 + $0x23c] sm:$0xf]
  %v175 = vld [vmem:[%s1 + $0x240] sm:$0xf]
  %v176 = vld [vmem:[%s1 + $0x244] sm:$0xf]
  %v177 = vld [vmem:[%s1 + $0x248] sm:$0xf]
  %v178 = vld [vmem:[%s1 + $0x24c] sm:$0xf]
  %v179 = vld [vmem:[%s1 + $0x250] sm:$0xf]
  %v180 = vld [vmem:[%s1 + $0x254] sm:$0xf]
  %v181 = vld [vmem:[%s1 + $0x258] sm:$0xf]
  %v182 = vld [vmem:[%s1 + $0x25c] sm:$0xf]
  %v183 = vld [vmem:[%s1 + $0x260] sm:$0xf]
  %v184 = vld [vmem:[%s1 + $0x264] sm:$0xf]
  %v185 = vld [vmem:[%s1 + $0x268] sm:$0xf]
  %v186 = vld [vmem:[%s1 + $0x26c] sm:$0xf]
  %v187 = vld [vmem:[%s1 + $0x270] sm:$0xf]
  %v188 = vld [vmem:[%s1 + $0x274] sm:$0xf]
  %v189 = vld [vmem:[%s1 + $0x278] sm:$0xf]
  %v190 = vld [vmem:[%s1 + $0x27c] sm:$0xf]
  %v191 = vld [vmem:[%s1 + $0x280] sm:$0xf]
  %v192 = vld [vmem:[%s1 + $0x284] sm:$0xf]
  %v193 = vld [vmem:[%s1 + $0x288] sm:$0xf]
  %v194 = vld [vmem:[%s1 + $0x28c] sm:$0xf]
  %v195 = vld [vmem:[%s1 + $0x290] sm:$0xf]
  %v196 = vld [vmem:[%s1 + $0x294] sm:$0xf]
  %v197 = vld [vmem:[%s1 + $0x298] sm:$0xf]
  %v198 = vld [vmem:[%s1 + $0x29c] sm:$0xf]
  %v199 = vld [vmem:[%s1 + $0x2a0] sm:$0xf]
  %v200 = vld [vmem:[%s1 + $0x2a4] sm:$0xf]
  %v201 = vld [vmem:[%s1 + $0x2a8] sm:$0xf]
  %v202 = vld [vmem:[%s1 + $0x2ac] sm:$0xf]
  %v203 = vld [vmem:[%s1 + $0x2b0] sm:$0xf]
  %v204 = vld [vmem:[%s1 + $0x2b4] sm:$0xf]
  %v205 = vld [vmem:[%s1 + $0x2b8] sm:$0xf]
  %v206 = vld [vmem:[%s1 + $0x2bc] sm:$0xf]
  %v207 = vld [vmem:[%s1 + $0x2c0] sm:$0xf]
  %v208 = vld [vmem:[%s1 + $0x2c4] sm:$0xf]
  %v209 = vld [vmem:[%s1 + $0x2c8] sm:$0xf]
  %v210 = vld [vmem:[%s1 + $0x2cc] sm:$0xf]
  %v211 = vld [vmem:[%s1 + $0x2d0] sm:$0xf]
  %v212 = vld [vmem:[%s1 + $0x2d4] sm:$0xf]
  %v213 = vld [vmem:[%s1 + $0x2d8] sm:$0xf]
  %v214 = vld [vmem:[%s1 + $0x2dc] sm:$0xf]
  %v215 = vld [vmem:[%s1 + $0x2e0] sm:$0xf]
  %v216 = vld [vmem:[%s1 + $0x2e4] sm:$0xf]
  %v217 = vld [vmem:[%s1 + $0x2e8] sm:$0xf]
  %v218 = vld [vmem:[%s1 + $0x2ec] sm:$0xf]
  %v219 = vld [vmem:[%s1 + $0x2f0] sm:$0xf]
  %v220 = vld [vmem:[%s1 + $0x2f4] sm:$0xf]
  %v221 = vld [vmem:[%s1 + $0x2f8] sm:$0xf]
  %v222 = vld [vmem:[%s1 + $0x2fc] sm:$0xf]
  %v223 = vld [vmem:[%s1 + $0x300] sm:$0xf]
  %v224 = vld [vmem:[%s1 + $0x304] sm:$0xf]
  %v225 = vld [vmem:[%s1 + $0x308] sm:$0xf]
  %v226 = vld [vmem:[%s1 + $0x30c] sm:$0xf]
  %v227 = vld [vmem:[%s1 + $0x310] sm:$0xf]
  %v228 = vld [vmem:[%s1 + $0x314] sm:$0xf]
  %v229 = vld [vmem:[%s1 + $0x318] sm:$0xf]
  %v230 = vld [vmem:[%s1 + $0x31c] sm:$0xf]
  %v231 = vld [vmem:[%s1 + $0x320] sm:$0xf]
  %v232 = vld [vmem:[%s1 + $0x324] sm:$0xf]
  %v233 = vld [vmem:[%s1 + $0x328] sm:$0xf]
  %v234 = vld [vmem:[%s1 + $0x32c] sm:$0xf]
  %v235 = vld [vmem:[%s1 + $0x330] sm:$0xf]
  %v236 = vld [vmem:[%s1 + $0x334] sm:$0xf]
  %v237 = vld [vmem:[%s1 + $0x338] sm:$0xf]
  %v238 = vld [vmem:[%s1 + $0x33c] sm:$0xf]
  %v239 = vld [vmem:[%s1 + $0x340] sm:$0xf]
  %v240 = vld [vmem:[%s1 + $0x344] sm:$0xf]
  %v241 = vld [vmem:[%s1 + $0x348] sm:$0xf]
  %v242 = vld [vmem:[%s1 + $0x34c] sm:$0xf]
  %v243 = vld [vmem:[%s1 + $0x350] sm:$0xf]
  %v244 = vld [vmem:[%s1 + $0x354] sm:$0xf]
  %v245 = vld [vmem:[%s1 + $0x358] sm:$0xf]
  %v246 = vld [vmem:[%s1 + $0x35c] sm:$0xf]
  %v247 = vld [vmem:[%s1 + $0x360] sm:$0xf]
  %v248 = vld [vmem:[%s1 + $0x364] sm:$0xf]
  %v249 = vld [vmem:[%s1 + $0x368] sm:$0xf]
  %v250 = vld [vmem:[%s1 + $0x36c] sm:$0xf]
  %v251 = vld [vmem:[%s1 + $0x370] sm:$0xf]
  %v252 = vld [vmem:[%s1 + $0x374] sm:$0xf]
  %v253 = vld [vmem:[%s1 + $0x378] sm:$0xf]
  %v254 = vld [vmem:[%s1 + $0x37c] sm:$0xf]
  %v255 = vld [vmem:[%s1 + $0x380] sm:$0xf]
  %v256 = vld [vmem:[%s1 + $0x384] sm:$0xf]
  %v257 = vld [vmem:[%s1 + $0x388] sm:$0xf]
  %v258 = vld [vmem:[%s1 + $0x38c] sm:$0xf]
  %v259 = vld [vmem:[%s1 + $0x390] sm:$0xf]
  %v260 = vld [vmem:[%s1 + $0x394] sm:$0xf]
  %v261 = vld [vmem:[%s1 + $0x398] sm:$0xf]
  %v262 = vld [vmem:[%s1 + $0x39c] sm:$0xf]
  %v263 = vld [vmem:[%s1 + $0x3a0] sm:$0xf]
  %v264 = vld [vmem:[%s1 + $0x3a4] sm:$0xf]
  %v265 = vld [vmem:[%s1 + $0x3a8] sm:$0xf]
  %v266 = vld [vmem:[%s1 + $0x3ac] sm:$0xf]
  %v267 = vld [vmem:[%s1 + $0x3b0] sm:$0xf]
  %v268 = vld [vmem:[%s1 + $0x3b4] sm:$0xf]
  %v269 = vld [vmem:[%s1 + $0x3b8] sm:$0xf]
  %v270 = vld [vmem:[%s1 + $0x3bc] sm:$0xf]
  %v271 = vld [vmem:[%s1 + $0x3c0] sm:$0xf]
  %v272 = vld [vmem:[%s1 + $0x3c4] sm:$0xf]
  %v273 = vld [vmem:[%s1 + $0x3c8] sm:$0xf]
  %v274 = vld [vmem:[%s1 + $0x3cc] sm:$0xf]
  %v275 = vld [vmem:[%s1 + $0x3d0] sm:$0xf]
  %v276 = vld [vmem:[%s1 + $0x3d4] sm:$0xf]
  %v277 = vld [vmem:[%s1 + $0x3d8] sm:$0xf]
  %v278 = vld [vmem:[%s1 + $0x3dc] sm:$0xf]
  %v279 = vld [vmem:[%s1 + $0x3e0] sm:$0xf]
  %v280 = vld [vmem:[%s1 + $0x3e4] sm:$0xf]
  %v281 = vld [vmem:[%s1 + $0x3e8] sm:$0xf]
  %v282 = vld [vmem:[%s1 + $0x3ec] sm:$0xf]
  %v283 = vld [vmem:[%s1 + $0x3f0] sm:$0xf]
  %v284 = vld [vmem:[%s1 + $0x3f4] sm:$0xf]
  %v285 = vld [vmem:[%s1 + $0x3f8] sm:$0xf]
  %v286 = vld [vmem:[%s1 + $0x3fc] sm:$0xf]
  %v287 = vld [vmem:[%s2] sm:$0x1]
  %v289 = vlaneseq
  %v290 = vshrl.u32 %v289, 7
  %v291 = vsub.s32 0, %v290
  %v292 = vrot.slane %v287, %v291
  %v310 = vunpack.c.l.b16 %v15
  %v311 = vunpack.c.h.b16 %v15
  %v312 = vunpack.c.l.b16 %v16
  %v313 = vunpack.c.h.b16 %v16
  %v314 = vunpack.c.l.b16 %v17
  %v315 = vunpack.c.h.b16 %v17
  %v316 = vunpack.c.l.b16 %v18
  %v317 = vunpack.c.h.b16 %v18
  %v318 = vunpack.c.l.b16 %v19
  %v319 = vunpack.c.h.b16 %v19
  %v320 = vunpack.c.l.b16 %v20
  %v321 = vunpack.c.h.b16 %v20
  %v322 = vunpack.c.l.b16 %v21
  %v323 = vunpack.c.h.b16 %v21
  %v324 = vunpack.c.l.b16 %v22
  %v325 = vunpack.c.h.b16 %v22
  %v326 = vunpack.c.l.b16 %v23
  %v327 = vunpack.c.h.b16 %v23
  %v328 = vunpack.c.l.b16 %v24
  %v329 = vunpack.c.h.b16 %v24
  %v330 = vunpack.c.l.b16 %v25
  %v331 = vunpack.c.h.b16 %v25
  %v332 = vunpack.c.l.b16 %v26
  %v333 = vunpack.c.h.b16 %v26
  %v334 = vunpack.c.l.b16 %v27
  %v335 = vunpack.c.h.b16 %v27
  %v336 = vunpack.c.l.b16 %v28
  %v337 = vunpack.c.h.b16 %v28
  %v338 = vunpack.c.l.b16 %v29
  %v339 = vunpack.c.h.b16 %v29
  %v340 = vunpack.c.l.b16 %v30
  %v341 = vunpack.c.h.b16 %v30
  %v342 = vpack.c.b16 %v326, %v310
  %v343 = vpack.c.b16 %v327, %v311
  %v344 = vpack.c.b16 %v328, %v312
  %v345 = vpack.c.b16 %v329, %v313
  %v346 = vpack.c.b16 %v330, %v314
  %v347 = vpack.c.b16 %v331, %v315
  %v348 = vpack.c.b16 %v332, %v316
  %v349 = vpack.c.b16 %v333, %v317
  %v350 = vpack.c.b16 %v334, %v318
  %v351 = vpack.c.b16 %v335, %v319
  %v352 = vpack.c.b16 %v336, %v320
  %v353 = vpack.c.b16 %v337, %v321
  %v354 = vpack.c.b16 %v338, %v322
  %v355 = vpack.c.b16 %v339, %v323
  %v356 = vpack.c.b16 %v340, %v324
  %v357 = vpack.c.b16 %v341, %v325
  %v630 = vunpack.c.l.b16 %v31
  %v631 = vunpack.c.l.b16 %v32
  %v632 = vunpack.c.l.b16 %v33
  %v633 = vunpack.c.l.b16 %v34
  %v634 = vunpack.c.l.b16 %v35
  %v635 = vunpack.c.l.b16 %v36
  %v636 = vunpack.c.l.b16 %v37
  %v637 = vunpack.c.l.b16 %v38
  %v638 = vunpack.c.l.b16 %v39
  %v639 = vunpack.c.l.b16 %v40
  %v640 = vunpack.c.l.b16 %v41
  %v641 = vunpack.c.l.b16 %v42
  %v642 = vunpack.c.l.b16 %v43
  %v643 = vunpack.c.l.b16 %v44
  %v644 = vunpack.c.l.b16 %v45
  %v645 = vunpack.c.l.b16 %v46
  %v646 = vunpack.c.l.b16 %v47
  %v647 = vunpack.c.l.b16 %v48
  %v648 = vunpack.c.l.b16 %v49
  %v649 = vunpack.c.l.b16 %v50
  %v650 = vunpack.c.l.b16 %v51
  %v651 = vunpack.c.l.b16 %v52
  %v652 = vunpack.c.l.b16 %v53
  %v653 = vunpack.c.l.b16 %v54
  %v654 = vunpack.c.l.b16 %v55
  %v655 = vunpack.c.l.b16 %v56
  %v656 = vunpack.c.l.b16 %v57
  %v657 = vunpack.c.l.b16 %v58
  %v658 = vunpack.c.l.b16 %v59
  %v659 = vunpack.c.l.b16 %v60
  %v660 = vunpack.c.l.b16 %v61
  %v661 = vunpack.c.l.b16 %v62
  %v662 = vunpack.c.l.b16 %v63
  %v663 = vunpack.c.l.b16 %v64
  %v664 = vunpack.c.l.b16 %v65
  %v665 = vunpack.c.l.b16 %v66
  %v666 = vunpack.c.l.b16 %v67
  %v667 = vunpack.c.l.b16 %v68
  %v668 = vunpack.c.l.b16 %v69
  %v669 = vunpack.c.l.b16 %v70
  %v670 = vunpack.c.l.b16 %v71
  %v671 = vunpack.c.l.b16 %v72
  %v672 = vunpack.c.l.b16 %v73
  %v673 = vunpack.c.l.b16 %v74
  %v674 = vunpack.c.l.b16 %v75
  %v675 = vunpack.c.l.b16 %v76
  %v676 = vunpack.c.l.b16 %v77
  %v677 = vunpack.c.l.b16 %v78
  %v678 = vunpack.c.l.b16 %v79
  %v679 = vunpack.c.l.b16 %v80
  %v680 = vunpack.c.l.b16 %v81
  %v681 = vunpack.c.l.b16 %v82
  %v682 = vunpack.c.l.b16 %v83
  %v683 = vunpack.c.l.b16 %v84
  %v684 = vunpack.c.l.b16 %v85
  %v685 = vunpack.c.l.b16 %v86
  %v686 = vunpack.c.l.b16 %v87
  %v687 = vunpack.c.l.b16 %v88
  %v688 = vunpack.c.l.b16 %v89
  %v689 = vunpack.c.l.b16 %v90
  %v690 = vunpack.c.l.b16 %v91
  %v691 = vunpack.c.l.b16 %v92
  %v692 = vunpack.c.l.b16 %v93
  %v693 = vunpack.c.l.b16 %v94
  %v694 = vunpack.c.l.b16 %v95
  %v695 = vunpack.c.l.b16 %v96
  %v696 = vunpack.c.l.b16 %v97
  %v697 = vunpack.c.l.b16 %v98
  %v698 = vunpack.c.l.b16 %v99
  %v699 = vunpack.c.l.b16 %v100
  %v700 = vunpack.c.l.b16 %v101
  %v701 = vunpack.c.l.b16 %v102
  %v702 = vunpack.c.l.b16 %v103
  %v703 = vunpack.c.l.b16 %v104
  %v704 = vunpack.c.l.b16 %v105
  %v705 = vunpack.c.l.b16 %v106
  %v706 = vunpack.c.l.b16 %v107
  %v707 = vunpack.c.l.b16 %v108
  %v708 = vunpack.c.l.b16 %v109
  %v709 = vunpack.c.l.b16 %v110
  %v710 = vunpack.c.l.b16 %v111
  %v711 = vunpack.c.l.b16 %v112
  %v712 = vunpack.c.l.b16 %v113
  %v713 = vunpack.c.l.b16 %v114
  %v714 = vunpack.c.l.b16 %v115
  %v715 = vunpack.c.l.b16 %v116
  %v716 = vunpack.c.l.b16 %v117
  %v717 = vunpack.c.l.b16 %v118
  %v718 = vunpack.c.l.b16 %v119
  %v719 = vunpack.c.l.b16 %v120
  %v720 = vunpack.c.l.b16 %v121
  %v721 = vunpack.c.l.b16 %v122
  %v722 = vunpack.c.l.b16 %v123
  %v723 = vunpack.c.l.b16 %v124
  %v724 = vunpack.c.l.b16 %v125
  %v725 = vunpack.c.l.b16 %v126
  %v726 = vunpack.c.l.b16 %v127
  %v727 = vunpack.c.l.b16 %v128
  %v728 = vunpack.c.l.b16 %v129
  %v729 = vunpack.c.l.b16 %v130
  %v730 = vunpack.c.l.b16 %v131
  %v731 = vunpack.c.l.b16 %v132
  %v732 = vunpack.c.l.b16 %v133
  %v733 = vunpack.c.l.b16 %v134
  %v734 = vunpack.c.l.b16 %v135
  %v735 = vunpack.c.l.b16 %v136
  %v736 = vunpack.c.l.b16 %v137
  %v737 = vunpack.c.l.b16 %v138
  %v738 = vunpack.c.l.b16 %v139
  %v739 = vunpack.c.l.b16 %v140
  %v740 = vunpack.c.l.b16 %v141
  %v741 = vunpack.c.l.b16 %v142
  %v742 = vunpack.c.l.b16 %v143
  %v743 = vunpack.c.l.b16 %v144
  %v744 = vunpack.c.l.b16 %v145
  %v745 = vunpack.c.l.b16 %v146
  %v746 = vunpack.c.l.b16 %v147
  %v747 = vunpack.c.l.b16 %v148
  %v748 = vunpack.c.l.b16 %v149
  %v749 = vunpack.c.l.b16 %v150
  %v750 = vunpack.c.l.b16 %v151
  %v751 = vunpack.c.l.b16 %v152
  %v752 = vunpack.c.l.b16 %v153
  %v753 = vunpack.c.l.b16 %v154
  %v754 = vunpack.c.l.b16 %v155
  %v755 = vunpack.c.l.b16 %v156
  %v756 = vunpack.c.l.b16 %v157
  %v757 = vunpack.c.l.b16 %v158
  %v758 = vunpack.c.l.b16 %v159
  %v759 = vunpack.c.l.b16 %v160
  %v760 = vunpack.c.l.b16 %v161
  %v761 = vunpack.c.l.b16 %v162
  %v762 = vunpack.c.l.b16 %v163
  %v763 = vunpack.c.l.b16 %v164
  %v764 = vunpack.c.l.b16 %v165
  %v765 = vunpack.c.l.b16 %v166
  %v766 = vunpack.c.l.b16 %v167
  %v767 = vunpack.c.l.b16 %v168
  %v768 = vunpack.c.l.b16 %v169
  %v769 = vunpack.c.l.b16 %v170
  %v770 = vunpack.c.l.b16 %v171
  %v771 = vunpack.c.l.b16 %v172
  %v772 = vunpack.c.l.b16 %v173
  %v773 = vunpack.c.l.b16 %v174
  %v774 = vunpack.c.l.b16 %v175
  %v775 = vunpack.c.l.b16 %v176
  %v776 = vunpack.c.l.b16 %v177
  %v777 = vunpack.c.l.b16 %v178
  %v778 = vunpack.c.l.b16 %v179
  %v779 = vunpack.c.l.b16 %v180
  %v780 = vunpack.c.l.b16 %v181
  %v781 = vunpack.c.l.b16 %v182
  %v782 = vunpack.c.l.b16 %v183
  %v783 = vunpack.c.l.b16 %v184
  %v784 = vunpack.c.l.b16 %v185
  %v785 = vunpack.c.l.b16 %v186
  %v786 = vunpack.c.l.b16 %v187
  %v787 = vunpack.c.l.b16 %v188
  %v788 = vunpack.c.l.b16 %v189
  %v789 = vunpack.c.l.b16 %v190
  %v790 = vunpack.c.l.b16 %v191
  %v791 = vunpack.c.l.b16 %v192
  %v792 = vunpack.c.l.b16 %v193
  %v793 = vunpack.c.l.b16 %v194
  %v794 = vunpack.c.l.b16 %v195
  %v795 = vunpack.c.l.b16 %v196
  %v796 = vunpack.c.l.b16 %v197
  %v797 = vunpack.c.l.b16 %v198
  %v798 = vunpack.c.l.b16 %v199
  %v799 = vunpack.c.l.b16 %v200
  %v800 = vunpack.c.l.b16 %v201
  %v801 = vunpack.c.l.b16 %v202
  %v802 = vunpack.c.l.b16 %v203
  %v803 = vunpack.c.l.b16 %v204
  %v804 = vunpack.c.l.b16 %v205
  %v805 = vunpack.c.l.b16 %v206
  %v806 = vunpack.c.l.b16 %v207
  %v807 = vunpack.c.l.b16 %v208
  %v808 = vunpack.c.l.b16 %v209
  %v809 = vunpack.c.l.b16 %v210
  %v810 = vunpack.c.l.b16 %v211
  %v811 = vunpack.c.l.b16 %v212
  %v812 = vunpack.c.l.b16 %v213
  %v813 = vunpack.c.l.b16 %v214
  %v814 = vunpack.c.l.b16 %v215
  %v815 = vunpack.c.l.b16 %v216
  %v816 = vunpack.c.l.b16 %v217
  %v817 = vunpack.c.l.b16 %v218
  %v818 = vunpack.c.l.b16 %v219
  %v819 = vunpack.c.l.b16 %v220
  %v820 = vunpack.c.l.b16 %v221
  %v821 = vunpack.c.l.b16 %v222
  %v822 = vunpack.c.l.b16 %v223
  %v823 = vunpack.c.l.b16 %v224
  %v824 = vunpack.c.l.b16 %v225
  %v825 = vunpack.c.l.b16 %v226
  %v826 = vunpack.c.l.b16 %v227
  %v827 = vunpack.c.l.b16 %v228
  %v828 = vunpack.c.l.b16 %v229
  %v829 = vunpack.c.l.b16 %v230
  %v830 = vunpack.c.l.b16 %v231
  %v831 = vunpack.c.l.b16 %v232
  %v832 = vunpack.c.l.b16 %v233
  %v833 = vunpack.c.l.b16 %v234
  %v834 = vunpack.c.l.b16 %v235
  %v835 = vunpack.c.l.b16 %v236
  %v836 = vunpack.c.l.b16 %v237
  %v837 = vunpack.c.l.b16 %v238
  %v838 = vunpack.c.l.b16 %v239
  %v839 = vunpack.c.l.b16 %v240
  %v840 = vunpack.c.l.b16 %v241
  %v841 = vunpack.c.l.b16 %v242
  %v842 = vunpack.c.l.b16 %v243
  %v843 = vunpack.c.l.b16 %v244
  %v844 = vunpack.c.l.b16 %v245
  %v845 = vunpack.c.l.b16 %v246
  %v846 = vunpack.c.l.b16 %v247
  %v847 = vunpack.c.l.b16 %v248
  %v848 = vunpack.c.l.b16 %v249
  %v849 = vunpack.c.l.b16 %v250
  %v850 = vunpack.c.l.b16 %v251
  %v851 = vunpack.c.l.b16 %v252
  %v852 = vunpack.c.l.b16 %v253
  %v853 = vunpack.c.l.b16 %v254
  %v854 = vunpack.c.l.b16 %v255
  %v855 = vunpack.c.l.b16 %v256
  %v856 = vunpack.c.l.b16 %v257
  %v857 = vunpack.c.l.b16 %v258
  %v858 = vunpack.c.l.b16 %v259
  %v859 = vunpack.c.l.b16 %v260
  %v860 = vunpack.c.l.b16 %v261
  %v861 = vunpack.c.l.b16 %v262
  %v862 = vunpack.c.l.b16 %v263
  %v863 = vunpack.c.l.b16 %v264
  %v864 = vunpack.c.l.b16 %v265
  %v865 = vunpack.c.l.b16 %v266
  %v866 = vunpack.c.l.b16 %v267
  %v867 = vunpack.c.l.b16 %v268
  %v868 = vunpack.c.l.b16 %v269
  %v869 = vunpack.c.l.b16 %v270
  %v870 = vunpack.c.l.b16 %v271
  %v871 = vunpack.c.l.b16 %v272
  %v872 = vunpack.c.l.b16 %v273
  %v873 = vunpack.c.l.b16 %v274
  %v874 = vunpack.c.l.b16 %v275
  %v875 = vunpack.c.l.b16 %v276
  %v876 = vunpack.c.l.b16 %v277
  %v877 = vunpack.c.l.b16 %v278
  %v878 = vunpack.c.l.b16 %v279
  %v879 = vunpack.c.l.b16 %v280
  %v880 = vunpack.c.l.b16 %v281
  %v881 = vunpack.c.l.b16 %v282
  %v882 = vunpack.c.l.b16 %v283
  %v883 = vunpack.c.l.b16 %v284
  %v884 = vunpack.c.l.b16 %v285
  %v885 = vunpack.c.l.b16 %v286
  %v886 = vpack.c.b16 %v631, %v630
  %v887 = vpack.c.b16 %v633, %v632
  %v888 = vpack.c.b16 %v635, %v634
  %v889 = vpack.c.b16 %v637, %v636
  %v890 = vpack.c.b16 %v639, %v638
  %v891 = vpack.c.b16 %v641, %v640
  %v892 = vpack.c.b16 %v643, %v642
  %v893 = vpack.c.b16 %v645, %v644
  %v894 = vpack.c.b16 %v647, %v646
  %v895 = vpack.c.b16 %v649, %v648
  %v896 = vpack.c.b16 %v651, %v650
  %v897 = vpack.c.b16 %v653, %v652
  %v898 = vpack.c.b16 %v655, %v654
  %v899 = vpack.c.b16 %v657, %v656
  %v900 = vpack.c.b16 %v659, %v658
  %v901 = vpack.c.b16 %v661, %v660
  %v902 = vpack.c.b16 %v663, %v662
  %v903 = vpack.c.b16 %v665, %v664
  %v904 = vpack.c.b16 %v667, %v666
  %v905 = vpack.c.b16 %v669, %v668
  %v906 = vpack.c.b16 %v671, %v670
  %v907 = vpack.c.b16 %v673, %v672
  %v908 = vpack.c.b16 %v675, %v674
  %v909 = vpack.c.b16 %v677, %v676
  %v910 = vpack.c.b16 %v679, %v678
  %v911 = vpack.c.b16 %v681, %v680
  %v912 = vpack.c.b16 %v683, %v682
  %v913 = vpack.c.b16 %v685, %v684
  %v914 = vpack.c.b16 %v687, %v686
  %v915 = vpack.c.b16 %v689, %v688
  %v916 = vpack.c.b16 %v691, %v690
  %v917 = vpack.c.b16 %v693, %v692
  %v918 = vpack.c.b16 %v695, %v694
  %v919 = vpack.c.b16 %v697, %v696
  %v920 = vpack.c.b16 %v699, %v698
  %v921 = vpack.c.b16 %v701, %v700
  %v922 = vpack.c.b16 %v703, %v702
  %v923 = vpack.c.b16 %v705, %v704
  %v924 = vpack.c.b16 %v707, %v706
  %v925 = vpack.c.b16 %v709, %v708
  %v926 = vpack.c.b16 %v711, %v710
  %v927 = vpack.c.b16 %v713, %v712
  %v928 = vpack.c.b16 %v715, %v714
  %v929 = vpack.c.b16 %v717, %v716
  %v930 = vpack.c.b16 %v719, %v718
  %v931 = vpack.c.b16 %v721, %v720
  %v932 = vpack.c.b16 %v723, %v722
  %v933 = vpack.c.b16 %v725, %v724
  %v934 = vpack.c.b16 %v727, %v726
  %v935 = vpack.c.b16 %v729, %v728
  %v936 = vpack.c.b16 %v731, %v730
  %v937 = vpack.c.b16 %v733, %v732
  %v938 = vpack.c.b16 %v735, %v734
  %v939 = vpack.c.b16 %v737, %v736
  %v940 = vpack.c.b16 %v739, %v738
  %v941 = vpack.c.b16 %v741, %v740
  %v942 = vpack.c.b16 %v743, %v742
  %v943 = vpack.c.b16 %v745, %v744
  %v944 = vpack.c.b16 %v747, %v746
  %v945 = vpack.c.b16 %v749, %v748
  %v946 = vpack.c.b16 %v751, %v750
  %v947 = vpack.c.b16 %v753, %v752
  %v948 = vpack.c.b16 %v755, %v754
  %v949 = vpack.c.b16 %v757, %v756
  %v950 = vpack.c.b16 %v759, %v758
  %v951 = vpack.c.b16 %v761, %v760
  %v952 = vpack.c.b16 %v763, %v762
  %v953 = vpack.c.b16 %v765, %v764
  %v954 = vpack.c.b16 %v767, %v766
  %v955 = vpack.c.b16 %v769, %v768
  %v956 = vpack.c.b16 %v771, %v770
  %v957 = vpack.c.b16 %v773, %v772
  %v958 = vpack.c.b16 %v775, %v774
  %v959 = vpack.c.b16 %v777, %v776
  %v960 = vpack.c.b16 %v779, %v778
  %v961 = vpack.c.b16 %v781, %v780
  %v962 = vpack.c.b16 %v783, %v782
  %v963 = vpack.c.b16 %v785, %v784
  %v964 = vpack.c.b16 %v787, %v786
  %v965 = vpack.c.b16 %v789, %v788
  %v966 = vpack.c.b16 %v791, %v790
  %v967 = vpack.c.b16 %v793, %v792
  %v968 = vpack.c.b16 %v795, %v794
  %v969 = vpack.c.b16 %v797, %v796
  %v970 = vpack.c.b16 %v799, %v798
  %v971 = vpack.c.b16 %v801, %v800
  %v972 = vpack.c.b16 %v803, %v802
  %v973 = vpack.c.b16 %v805, %v804
  %v974 = vpack.c.b16 %v807, %v806
  %v975 = vpack.c.b16 %v809, %v808
  %v976 = vpack.c.b16 %v811, %v810
  %v977 = vpack.c.b16 %v813, %v812
  %v978 = vpack.c.b16 %v815, %v814
  %v979 = vpack.c.b16 %v817, %v816
  %v980 = vpack.c.b16 %v819, %v818
  %v981 = vpack.c.b16 %v821, %v820
  %v982 = vpack.c.b16 %v823, %v822
  %v983 = vpack.c.b16 %v825, %v824
  %v984 = vpack.c.b16 %v827, %v826
  %v985 = vpack.c.b16 %v829, %v828
  %v986 = vpack.c.b16 %v831, %v830
  %v987 = vpack.c.b16 %v833, %v832
  %v988 = vpack.c.b16 %v835, %v834
  %v989 = vpack.c.b16 %v837, %v836
  %v990 = vpack.c.b16 %v839, %v838
  %v991 = vpack.c.b16 %v841, %v840
  %v992 = vpack.c.b16 %v843, %v842
  %v993 = vpack.c.b16 %v845, %v844
  %v994 = vpack.c.b16 %v847, %v846
  %v995 = vpack.c.b16 %v849, %v848
  %v996 = vpack.c.b16 %v851, %v850
  %v997 = vpack.c.b16 %v853, %v852
  %v998 = vpack.c.b16 %v855, %v854
  %v999 = vpack.c.b16 %v857, %v856
  %v1000 = vpack.c.b16 %v859, %v858
  %v1001 = vpack.c.b16 %v861, %v860
  %v1002 = vpack.c.b16 %v863, %v862
  %v1003 = vpack.c.b16 %v865, %v864
  %v1004 = vpack.c.b16 %v867, %v866
  %v1005 = vpack.c.b16 %v869, %v868
  %v1006 = vpack.c.b16 %v871, %v870
  %v1007 = vpack.c.b16 %v873, %v872
  %v1008 = vpack.c.b16 %v875, %v874
  %v1009 = vpack.c.b16 %v877, %v876
  %v1010 = vpack.c.b16 %v879, %v878
  %v1011 = vpack.c.b16 %v881, %v880
  %v1012 = vpack.c.b16 %v883, %v882
  %v1013 = vpack.c.b16 %v885, %v884
  %1142 = vmatprep.subr.bf16.mxu0 0
  %1143 = vmatpush1.bf16.msra.mxu0 %v886
  %1144 = vmatprep.subr.bf16.mxu0 0
  %1145 = vmatpush1.bf16.msra.mxu0 %v887
  %1146 = vmatprep.subr.bf16.mxu0 0
  %1147 = vmatpush1.bf16.msra.mxu0 %v888
  %1148 = vmatprep.subr.bf16.mxu0 0
  %1149 = vmatpush1.bf16.msra.mxu0 %v889
  %1150 = vmatprep.subr.bf16.mxu0 0
  %1151 = vmatpush1.bf16.msra.mxu0 %v890
  %1152 = vmatprep.subr.bf16.mxu0 0
  %1153 = vmatpush1.bf16.msra.mxu0 %v891
  %1154 = vmatprep.subr.bf16.mxu0 0
  %1155 = vmatpush1.bf16.msra.mxu0 %v892
  %1156 = vmatprep.subr.bf16.mxu0 0
  %1157 = vmatpush1.bf16.msra.mxu0 %v893
  %1158 = vmatprep.subr.bf16.mxu0 0
  %1159 = vmatpush1.bf16.msra.mxu0 %v894
  %1160 = vmatprep.subr.bf16.mxu0 0
  %1161 = vmatpush1.bf16.msra.mxu0 %v895
  %1162 = vmatprep.subr.bf16.mxu0 0
  %1163 = vmatpush1.bf16.msra.mxu0 %v896
  %1164 = vmatprep.subr.bf16.mxu0 0
  %1165 = vmatpush1.bf16.msra.mxu0 %v897
  %1166 = vmatprep.subr.bf16.mxu0 0
  %1167 = vmatpush1.bf16.msra.mxu0 %v898
  %1168 = vmatprep.subr.bf16.mxu0 0
  %1169 = vmatpush1.bf16.msra.mxu0 %v899
  %1170 = vmatprep.subr.bf16.mxu0 0
  %1171 = vmatpush1.bf16.msra.mxu0 %v900
  %1172 = vmatprep.subr.bf16.mxu0 0
  %1173 = vmatpush1.bf16.msra.mxu0 %v901
  %1174 = vmatprep.mubr.bf16.mxu0 %v343
  %1175 = vmatmul.mubr.bf16.gmra.mrb[0].mxu0 %v342
  %v1176 = vpop.f32.mrb[0].mxu0
  %v1177 = vadd.f32 %v292, %v1176
  %v1178 = vpop.f32.mrb[0].mxu0
  %v1179 = vpop.f32.mrb[0].mxu0
  %v1180 = vadd.f32 %v292, %v1179
  %v1181 = vpop.f32.mrb[0].mxu0
  %1182 = vdwg.mxu0
  %1183 = vmatprep.subr.bf16.mxu0 0
  %1184 = vmatpush1.bf16.msra.mxu0 %v902
  %1185 = vmatprep.subr.bf16.mxu0 0
  %1186 = vmatpush1.bf16.msra.mxu0 %v903
  %1187 = vmatprep.subr.bf16.mxu0 0
  %1188 = vmatpush1.bf16.msra.mxu0 %v904
  %1189 = vmatprep.subr.bf16.mxu0 0
  %1190 = vmatpush1.bf16.msra.mxu0 %v905
  %1191 = vmatprep.subr.bf16.mxu0 0
  %1192 = vmatpush1.bf16.msra.mxu0 %v906
  %1193 = vmatprep.subr.bf16.mxu0 0
  %1194 = vmatpush1.bf16.msra.mxu0 %v907
  %1195 = vmatprep.subr.bf16.mxu0 0
  %1196 = vmatpush1.bf16.msra.mxu0 %v908
  %1197 = vmatprep.subr.bf16.mxu0 0
  %1198 = vmatpush1.bf16.msra.mxu0 %v909
  %1199 = vmatprep.subr.bf16.mxu0 0
  %1200 = vmatpush1.bf16.msra.mxu0 %v910
  %1201 = vmatprep.subr.bf16.mxu0 0
  %1202 = vmatpush1.bf16.msra.mxu0 %v911
  %1203 = vmatprep.subr.bf16.mxu0 0
  %1204 = vmatpush1.bf16.msra.mxu0 %v912
  %1205 = vmatprep.subr.bf16.mxu0 0
  %1206 = vmatpush1.bf16.msra.mxu0 %v913
  %1207 = vmatprep.subr.bf16.mxu0 0
  %1208 = vmatpush1.bf16.msra.mxu0 %v914
  %1209 = vmatprep.subr.bf16.mxu0 0
  %1210 = vmatpush1.bf16.msra.mxu0 %v915
  %1211 = vmatprep.subr.bf16.mxu0 0
  %1212 = vmatpush1.bf16.msra.mxu0 %v916
  %1213 = vmatprep.subr.bf16.mxu0 0
  %1214 = vmatpush1.bf16.msra.mxu0 %v917
  %1215 = vmatprep.mubr.bf16.mxu0 %v345
  %1216 = vmatmul.mubr.bf16.gmra.mrb[0].mxu0 %v344
  %v1217 = vpop.f32.mrb[0].mxu0
  %v1218 = vadd.f32 %v1177, %v1217
  %v1219 = vpop.f32.mrb[0].mxu0
  %v1220 = vpop.f32.mrb[0].mxu0
  %v1221 = vadd.f32 %v1180, %v1220
  %v1222 = vpop.f32.mrb[0].mxu0
  %1223 = vdwg.mxu0
  %1224 = vmatprep.subr.bf16.mxu0 0
  %1225 = vmatpush1.bf16.msra.mxu0 %v918
  %1226 = vmatprep.subr.bf16.mxu0 0
  %1227 = vmatpush1.bf16.msra.mxu0 %v919
  %1228 = vmatprep.subr.bf16.mxu0 0
  %1229 = vmatpush1.bf16.msra.mxu0 %v920
  %1230 = vmatprep.subr.bf16.mxu0 0
  %1231 = vmatpush1.bf16.msra.mxu0 %v921
  %1232 = vmatprep.subr.bf16.mxu0 0
  %1233 = vmatpush1.bf16.msra.mxu0 %v922
  %1234 = vmatprep.subr.bf16.mxu0 0
  %1235 = vmatpush1.bf16.msra.mxu0 %v923
  %1236 = vmatprep.subr.bf16.mxu0 0
  %1237 = vmatpush1.bf16.msra.mxu0 %v924
  %1238 = vmatprep.subr.bf16.mxu0 0
  %1239 = vmatpush1.bf16.msra.mxu0 %v925
  %1240 = vmatprep.subr.bf16.mxu0 0
  %1241 = vmatpush1.bf16.msra.mxu0 %v926
  %1242 = vmatprep.subr.bf16.mxu0 0
  %1243 = vmatpush1.bf16.msra.mxu0 %v927
  %1244 = vmatprep.subr.bf16.mxu0 0
  %1245 = vmatpush1.bf16.msra.mxu0 %v928
  %1246 = vmatprep.subr.bf16.mxu0 0
  %1247 = vmatpush1.bf16.msra.mxu0 %v929
  %1248 = vmatprep.subr.bf16.mxu0 0
  %1249 = vmatpush1.bf16.msra.mxu0 %v930
  %1250 = vmatprep.subr.bf16.mxu0 0
  %1251 = vmatpush1.bf16.msra.mxu0 %v931
  %1252 = vmatprep.subr.bf16.mxu0 0
  %1253 = vmatpush1.bf16.msra.mxu0 %v932
  %1254 = vmatprep.subr.bf16.mxu0 0
  %1255 = vmatpush1.bf16.msra.mxu0 %v933
  %1256 = vmatprep.mubr.bf16.mxu0 %v347
  %1257 = vmatmul.mubr.bf16.gmra.mrb[0].mxu0 %v346
  %v1258 = vpop.f32.mrb[0].mxu0
  %v1259 = vadd.f32 %v1218, %v1258
  %v1260 = vpop.f32.mrb[0].mxu0
  %v1261 = vpop.f32.mrb[0].mxu0
  %v1262 = vadd.f32 %v1221, %v1261
  %v1263 = vpop.f32.mrb[0].mxu0
  %1264 = vdwg.mxu0
  %1265 = vmatprep.subr.bf16.mxu0 0
  %1266 = vmatpush1.bf16.msra.mxu0 %v934
  %1267 = vmatprep.subr.bf16.mxu0 0
  %1268 = vmatpush1.bf16.msra.mxu0 %v935
  %1269 = vmatprep.subr.bf16.mxu0 0
  %1270 = vmatpush1.bf16.msra.mxu0 %v936
  %1271 = vmatprep.subr.bf16.mxu0 0
  %1272 = vmatpush1.bf16.msra.mxu0 %v937
  %1273 = vmatprep.subr.bf16.mxu0 0
  %1274 = vmatpush1.bf16.msra.mxu0 %v938
  %1275 = vmatprep.subr.bf16.mxu0 0
  %1276 = vmatpush1.bf16.msra.mxu0 %v939
  %1277 = vmatprep.subr.bf16.mxu0 0
  %1278 = vmatpush1.bf16.msra.mxu0 %v940
  %1279 = vmatprep.subr.bf16.mxu0 0
  %1280 = vmatpush1.bf16.msra.mxu0 %v941
  %1281 = vmatprep.subr.bf16.mxu0 0
  %1282 = vmatpush1.bf16.msra.mxu0 %v942
  %1283 = vmatprep.subr.bf16.mxu0 0
  %1284 = vmatpush1.bf16.msra.mxu0 %v943
  %1285 = vmatprep.subr.bf16.mxu0 0
  %1286 = vmatpush1.bf16.msra.mxu0 %v944
  %1287 = vmatprep.subr.bf16.mxu0 0
  %1288 = vmatpush1.bf16.msra.mxu0 %v945
  %1289 = vmatprep.subr.bf16.mxu0 0
  %1290 = vmatpush1.bf16.msra.mxu0 %v946
  %1291 = vmatprep.subr.bf16.mxu0 0
  %1292 = vmatpush1.bf16.msra.mxu0 %v947
  %1293 = vmatprep.subr.bf16.mxu0 0
  %1294 = vmatpush1.bf16.msra.mxu0 %v948
  %1295 = vmatprep.subr.bf16.mxu0 0
  %1296 = vmatpush1.bf16.msra.mxu0 %v949
  %1297 = vmatprep.mubr.bf16.mxu0 %v349
  %1298 = vmatmul.mubr.bf16.gmra.mrb[0].mxu0 %v348
  %v1299 = vpop.f32.mrb[0].mxu0
  %v1300 = vadd.f32 %v1259, %v1299
  %v1301 = vpop.f32.mrb[0].mxu0
  %v1302 = vpop.f32.mrb[0].mxu0
  %v1303 = vadd.f32 %v1262, %v1302
  %v1304 = vpop.f32.mrb[0].mxu0
  %1305 = vdwg.mxu0
  %1306 = vmatprep.subr.bf16.mxu0 0
  %1307 = vmatpush1.bf16.msra.mxu0 %v950
  %1308 = vmatprep.subr.bf16.mxu0 0
  %1309 = vmatpush1.bf16.msra.mxu0 %v951
  %1310 = vmatprep.subr.bf16.mxu0 0
  %1311 = vmatpush1.bf16.msra.mxu0 %v952
  %1312 = vmatprep.subr.bf16.mxu0 0
  %1313 = vmatpush1.bf16.msra.mxu0 %v953
  %1314 = vmatprep.subr.bf16.mxu0 0
  %1315 = vmatpush1.bf16.msra.mxu0 %v954
  %1316 = vmatprep.subr.bf16.mxu0 0
  %1317 = vmatpush1.bf16.msra.mxu0 %v955
  %1318 = vmatprep.subr.bf16.mxu0 0
  %1319 = vmatpush1.bf16.msra.mxu0 %v956
  %1320 = vmatprep.subr.bf16.mxu0 0
  %1321 = vmatpush1.bf16.msra.mxu0 %v957
  %1322 = vmatprep.subr.bf16.mxu0 0
  %1323 = vmatpush1.bf16.msra.mxu0 %v958
  %1324 = vmatprep.subr.bf16.mxu0 0
  %1325 = vmatpush1.bf16.msra.mxu0 %v959
  %1326 = vmatprep.subr.bf16.mxu0 0
  %1327 = vmatpush1.bf16.msra.mxu0 %v960
  %1328 = vmatprep.subr.bf16.mxu0 0
  %1329 = vmatpush1.bf16.msra.mxu0 %v961
  %1330 = vmatprep.subr.bf16.mxu0 0
  %1331 = vmatpush1.bf16.msra.mxu0 %v962
  %1332 = vmatprep.subr.bf16.mxu0 0
  %1333 = vmatpush1.bf16.msra.mxu0 %v963
  %1334 = vmatprep.subr.bf16.mxu0 0
  %1335 = vmatpush1.bf16.msra.mxu0 %v964
  %1336 = vmatprep.subr.bf16.mxu0 0
  %1337 = vmatpush1.bf16.msra.mxu0 %v965
  %1338 = vmatprep.mubr.bf16.mxu0 %v351
  %1339 = vmatmul.mubr.bf16.gmra.mrb[0].mxu0 %v350
  %v1340 = vpop.f32.mrb[0].mxu0
  %v1341 = vadd.f32 %v1300, %v1340
  %v1342 = vpop.f32.mrb[0].mxu0
  %v1343 = vpop.f32.mrb[0].mxu0
  %v1344 = vadd.f32 %v1303, %v1343
  %v1345 = vpop.f32.mrb[0].mxu0
  %1346 = vdwg.mxu0
  %1347 = vmatprep.subr.bf16.mxu0 0
  %1348 = vmatpush1.bf16.msra.mxu0 %v966
  %1349 = vmatprep.subr.bf16.mxu0 0
  %1350 = vmatpush1.bf16.msra.mxu0 %v967
  %1351 = vmatprep.subr.bf16.mxu0 0
  %1352 = vmatpush1.bf16.msra.mxu0 %v968
  %1353 = vmatprep.subr.bf16.mxu0 0
  %1354 = vmatpush1.bf16.msra.mxu0 %v969
  %1355 = vmatprep.subr.bf16.mxu0 0
  %1356 = vmatpush1.bf16.msra.mxu0 %v970
  %1357 = vmatprep.subr.bf16.mxu0 0
  %1358 = vmatpush1.bf16.msra.mxu0 %v971
  %1359 = vmatprep.subr.bf16.mxu0 0
  %1360 = vmatpush1.bf16.msra.mxu0 %v972
  %1361 = vmatprep.subr.bf16.mxu0 0
  %1362 = vmatpush1.bf16.msra.mxu0 %v973
  %1363 = vmatprep.subr.bf16.mxu0 0
  %1364 = vmatpush1.bf16.msra.mxu0 %v974
  %1365 = vmatprep.subr.bf16.mxu0 0
  %1366 = vmatpush1.bf16.msra.mxu0 %v975
  %1367 = vmatprep.subr.bf16.mxu0 0
  %1368 = vmatpush1.bf16.msra.mxu0 %v976
  %1369 = vmatprep.subr.bf16.mxu0 0
  %1370 = vmatpush1.bf16.msra.mxu0 %v977
  %1371 = vmatprep.subr.bf16.mxu0 0
  %1372 = vmatpush1.bf16.msra.mxu0 %v978
  %1373 = vmatprep.subr.bf16.mxu0 0
  %1374 = vmatpush1.bf16.msra.mxu0 %v979
  %1375 = vmatprep.subr.bf16.mxu0 0
  %1376 = vmatpush1.bf16.msra.mxu0 %v980
  %1377 = vmatprep.subr.bf16.mxu0 0
  %1378 = vmatpush1.bf16.msra.mxu0 %v981
  %1379 = vmatprep.mubr.bf16.mxu0 %v353
  %1380 = vmatmul.mubr.bf16.gmra.mrb[0].mxu0 %v352
  %v1381 = vpop.f32.mrb[0].mxu0
  %v1382 = vadd.f32 %v1341, %v1381
  %v1383 = vpop.f32.mrb[0].mxu0
  %v1384 = vpop.f32.mrb[0].mxu0
  %v1385 = vadd.f32 %v1344, %v1384
  %v1386 = vpop.f32.mrb[0].mxu0
  %1387 = vdwg.mxu0
  %1388 = vmatprep.subr.bf16.mxu0 0
  %1389 = vmatpush1.bf16.msra.mxu0 %v982
  %1390 = vmatprep.subr.bf16.mxu0 0
  %1391 = vmatpush1.bf16.msra.mxu0 %v983
  %1392 = vmatprep.subr.bf16.mxu0 0
  %1393 = vmatpush1.bf16.msra.mxu0 %v984
  %1394 = vmatprep.subr.bf16.mxu0 0
  %1395 = vmatpush1.bf16.msra.mxu0 %v985
  %1396 = vmatprep.subr.bf16.mxu0 0
  %1397 = vmatpush1.bf16.msra.mxu0 %v986
  %1398 = vmatprep.subr.bf16.mxu0 0
  %1399 = vmatpush1.bf16.msra.mxu0 %v987
  %1400 = vmatprep.subr.bf16.mxu0 0
  %1401 = vmatpush1.bf16.msra.mxu0 %v988
  %1402 = vmatprep.subr.bf16.mxu0 0
  %1403 = vmatpush1.bf16.msra.mxu0 %v989
  %1404 = vmatprep.subr.bf16.mxu0 0
  %1405 = vmatpush1.bf16.msra.mxu0 %v990
  %1406 = vmatprep.subr.bf16.mxu0 0
  %1407 = vmatpush1.bf16.msra.mxu0 %v991
  %1408 = vmatprep.subr.bf16.mxu0 0
  %1409 = vmatpush1.bf16.msra.mxu0 %v992
  %1410 = vmatprep.subr.bf16.mxu0 0
  %1411 = vmatpush1.bf16.msra.mxu0 %v993
  %1412 = vmatprep.subr.bf16.mxu0 0
  %1413 = vmatpush1.bf16.msra.mxu0 %v994
  %1414 = vmatprep.subr.bf16.mxu0 0
  %1415 = vmatpush1.bf16.msra.mxu0 %v995
  %1416 = vmatprep.subr.bf16.mxu0 0
  %1417 = vmatpush1.bf16.msra.mxu0 %v996
  %1418 = vmatprep.subr.bf16.mxu0 0
  %1419 = vmatpush1.bf16.msra.mxu0 %v997
  %1420 = vmatprep.mubr.bf16.mxu0 %v355
  %1421 = vmatmul.mubr.bf16.gmra.mrb[0].mxu0 %v354
  %v1422 = vpop.f32.mrb[0].mxu0
  %v1423 = vadd.f32 %v1382, %v1422
  %v1424 = vpop.f32.mrb[0].mxu0
  %v1425 = vpop.f32.mrb[0].mxu0
  %v1426 = vadd.f32 %v1385, %v1425
  %v1427 = vpop.f32.mrb[0].mxu0
  %1428 = vdwg.mxu0
  %1429 = vmatprep.subr.bf16.mxu0 0
  %1430 = vmatpush1.bf16.msra.mxu0 %v998
  %1431 = vmatprep.subr.bf16.mxu0 0
  %1432 = vmatpush1.bf16.msra.mxu0 %v999
  %1433 = vmatprep.subr.bf16.mxu0 0
  %1434 = vmatpush1.bf16.msra.mxu0 %v1000
  %1435 = vmatprep.subr.bf16.mxu0 0
  %1436 = vmatpush1.bf16.msra.mxu0 %v1001
  %1437 = vmatprep.subr.bf16.mxu0 0
  %1438 = vmatpush1.bf16.msra.mxu0 %v1002
  %1439 = vmatprep.subr.bf16.mxu0 0
  %1440 = vmatpush1.bf16.msra.mxu0 %v1003
  %1441 = vmatprep.subr.bf16.mxu0 0
  %1442 = vmatpush1.bf16.msra.mxu0 %v1004
  %1443 = vmatprep.subr.bf16.mxu0 0
  %1444 = vmatpush1.bf16.msra.mxu0 %v1005
  %1445 = vmatprep.subr.bf16.mxu0 0
  %1446 = vmatpush1.bf16.msra.mxu0 %v1006
  %1447 = vmatprep.subr.bf16.mxu0 0
  %1448 = vmatpush1.bf16.msra.mxu0 %v1007
  %1449 = vmatprep.subr.bf16.mxu0 0
  %1450 = vmatpush1.bf16.msra.mxu0 %v1008
  %1451 = vmatprep.subr.bf16.mxu0 0
  %1452 = vmatpush1.bf16.msra.mxu0 %v1009
  %1453 = vmatprep.subr.bf16.mxu0 0
  %1454 = vmatpush1.bf16.msra.mxu0 %v1010
  %1455 = vmatprep.subr.bf16.mxu0 0
  %1456 = vmatpush1.bf16.msra.mxu0 %v1011
  %1457 = vmatprep.subr.bf16.mxu0 0
  %1458 = vmatpush1.bf16.msra.mxu0 %v1012
  %1459 = vmatprep.subr.bf16.mxu0 0
  %1460 = vmatpush1.bf16.msra.mxu0 %v1013
  %1461 = vmatprep.mubr.bf16.mxu0 %v357
  %1462 = vmatmul.mubr.bf16.gmra.mrb[0].mxu0 %v356
  %v1463 = vpop.f32.mrb[0].mxu0
  %v1464 = vadd.f32 %v1423, %v1463
  %v1465 = vpop.f32.mrb[0].mxu0
  %v1466 = vpop.f32.mrb[0].mxu0
  %v1467 = vadd.f32 %v1426, %v1466
  %v1468 = vpop.f32.mrb[0].mxu0
  %1469 = vdwg.mxu0
  %v1470 = vxor.u32 %v1464, 2147483648
  %v1471 = vxor.u32 %v1467, 2147483648
  %v1472 = vmul.f32 %v1470, 1.442695
  %v1473 = vpow.pop %v1472
  %v1474 = vmul.f32 %v1471, 1.442695
  %v1475 = vpow.pop %v1474
  %v1476 = vadd.f32 %v1473, 1.0
  %v1477 = vadd.f32 %v1475, 1.0
  %v1478 = vrcp.pop %v1476
  %v1479 = vmul.f32 1.0, %v1478
  %v1480 = vrcp.pop %v1477
  %v1481 = vmul.f32 1.0, %v1480
  %1482 = vst [vmem:[%s3] sm:$0xff] %v1479
  %1483 = vst [vmem:[%s3 + $0x8] sm:$0xff] %v1481
  // Predicated region
  $region14: #{conv_forward.11} parent=0 // pred_check
    _
  $region15: #{conv_forward.11} parent=0 // pred_check_branch
    %1485 = sbr.rel (0) target = $region17
  $region16: #{conv_forward.11} parent=0 // pred_region
    _
  $region17: #{conv_forward.11} parent=0 // pred_fallthru
    _
  // Predicated region
  $region18: #{conv_forward.11} parent=0 // pred_check
    _
  $region19: #{conv_forward.11} parent=0 // pred_check_branch
    %1487 = sbr.rel (0) target = $region21
  $region20: #{conv_forward.11} parent=0 // pred_region
    _
  $region21: #{conv_forward.11} parent=0 // pred_fallthru
    _

// kernel: conv_forward.13
$region0: #{conv_forward.13}
  #allocation0 [shape = 'u32[]', space=smem, size = 0x4, offset = 0x4, fixed_abs, tag = 'smem constant byte address 0x4 - core index']
  #allocation1 [shape = 'u32[144,128]{1,0:T(1,128)}', space=vmem, size = 0x12000, scoped, tag = 'internal scratch']
  %s0 = inlined_call_operand.vmem [shape: bf16[112,2048], index: 0, kind: input, shape index: {}]
  %s1 = inlined_call_operand.vmem [shape: bf16[2048,128], index: 1, kind: input, shape index: {}]
  %s2 = inlined_call_operand.vmem [shape: f32[1,128], index: 2, kind: input, shape index: {}]
  %s3 = inlined_call_operand.vmem [shape: f32[1,128], index: 3, kind: input, shape index: {}]
  %s4 = inlined_call_operand.vmem [shape: f32[112,128], index: 4, kind: output, shape index: {}]
  %s5 = sld [smem:[#allocation0]]
  $region26: #{conv_forward.13} parent=0
    _
  %s7 = ssub.s32 1, %s5
  %s8 = scalar_select 0, %s7, %s5
  // Predicated region
  $region2: #{conv_forward.13} parent=0 // pred_check
    _
  $region3: #{conv_forward.13} parent=0 // pred_check_branch
    %10 = sbr.rel (0) target = $region5
  $region4: #{conv_forward.13} parent=0 // pred_region
    _
  $region5: #{conv_forward.13} parent=0 // pred_fallthru
    _
  // Predicated region
  $region6: #{conv_forward.13} parent=0 // pred_check
    _
  $region7: #{conv_forward.13} parent=0 // pred_check_branch
    %12 = sbr.rel (0) target = $region9
  $region8: #{conv_forward.13} parent=0 // pred_region
    _
  $region9: #{conv_forward.13} parent=0 // pred_fallthru
    _
  // Predicated region
  $region10: #{conv_forward.13} parent=0 // pred_check
    _
  $region11: #{conv_forward.13} parent=0 // pred_check_branch
    %14 = sbr.rel (0) target = $region13
  $region12: #{conv_forward.13} parent=0 // pred_region
    _
  $region13: #{conv_forward.13} parent=0 // pred_fallthru
    _
  // Predicated region
  $region14: #{conv_forward.13} parent=0 // pred_check
    _
  $region15: #{conv_forward.13} parent=0 // pred_check_branch
    %16 = sbr.rel (0) target = $region17
  $region16: #{conv_forward.13} parent=0 // pred_region
    _
  $region17: #{conv_forward.13} parent=0 // pred_fallthru
    _
  %v18 = vld [vmem:[%s0] sm:$0xff]
  %v19 = vld [vmem:[%s0 + $0x8] sm:$0xff]
  %v20 = vld [vmem:[%s0 + $0x10] sm:$0xff]
  %v21 = vld [vmem:[%s0 + $0x18] sm:$0xff]
  %v22 = vld [vmem:[%s0 + $0x20] sm:$0xff]
  %v23 = vld [vmem:[%s0 + $0x28] sm:$0xff]
  %v24 = vld [vmem:[%s0 + $0x30] sm:$0xff]
  %v25 = vld [vmem:[%s0 + $0x38] sm:$0xff]
  %v26 = vld [vmem:[%s0 + $0x40] sm:$0xff]
  %v27 = vld [vmem:[%s0 + $0x48] sm:$0xff]
  %v28 = vld [vmem:[%s0 + $0x50] sm:$0xff]
  %v29 = vld [vmem:[%s0 + $0x58] sm:$0xff]
  %v30 = vld [vmem:[%s0 + $0x60] sm:$0xff]
  %v31 = vld [vmem:[%s0 + $0x68] sm:$0xff]
  %v32 = vld [vmem:[%s0 + $0x70] sm:$0xff]
  %v33 = vld [vmem:[%s0 + $0x78] sm:$0xff]
  %v34 = vld [vmem:[%s0 + $0x80] sm:$0xff]
  %v35 = vld [vmem:[%s0 + $0x88] sm:$0xff]
  %v36 = vld [vmem:[%s0 + $0x90] sm:$0xff]
  %v37 = vld [vmem:[%s0 + $0x98] sm:$0xff]
  %v38 = vld [vmem:[%s0 + $0xa0] sm:$0xff]
  %v39 = vld [vmem:[%s0 + $0xa8] sm:$0xff]
  %v40 = vld [vmem:[%s0 + $0xb0] sm:$0xff]
  %v41 = vld [vmem:[%s0 + $0xb8] sm:$0xff]
  %v42 = vld [vmem:[%s0 + $0xc0] sm:$0xff]
  %v43 = vld [vmem:[%s0 + $0xc8] sm:$0xff]
  %v44 = vld [vmem:[%s0 + $0xd0] sm:$0xff]
  %v45 = vld [vmem:[%s0 + $0xd8] sm:$0xff]
  %v46 = vld [vmem:[%s0 + $0xe0] sm:$0xff]
  %v47 = vld [vmem:[%s0 + $0xe8] sm:$0xff]
  %v48 = vld [vmem:[%s0 + $0xf0] sm:$0xff]
  %v49 = vld [vmem:[%s0 + $0xf8] sm:$0xff]
  %v50 = vld [vmem:[%s0 + $0x100] sm:$0xff]
  %v51 = vld [vmem:[%s0 + $0x108] sm:$0xff]
  %v52 = vld [vmem:[%s0 + $0x110] sm:$0xff]
  %v53 = vld [vmem:[%s0 + $0x118] sm:$0xff]
  %v54 = vld [vmem:[%s0 + $0x120] sm:$0xff]
  %v55 = vld [vmem:[%s0 + $0x128] sm:$0xff]
  %v56 = vld [vmem:[%s0 + $0x130] sm:$0xff]
  %v57 = vld [vmem:[%s0 + $0x138] sm:$0xff]
  %v58 = vld [vmem:[%s0 + $0x140] sm:$0xff]
  %v59 = vld [vmem:[%s0 + $0x148] sm:$0xff]
  %v60 = vld [vmem:[%s0 + $0x150] sm:$0xff]
  %v61 = vld [vmem:[%s0 + $0x158] sm:$0xff]
  %v62 = vld [vmem:[%s0 + $0x160] sm:$0xff]
  %v63 = vld [vmem:[%s0 + $0x168] sm:$0xff]
  %v64 = vld [vmem:[%s0 + $0x170] sm:$0xff]
  %v65 = vld [vmem:[%s0 + $0x178] sm:$0xff]
  %v66 = vld [vmem:[%s0 + $0x180] sm:$0xff]
  %v67 = vld [vmem:[%s0 + $0x188] sm:$0xff]
  %v68 = vld [vmem:[%s0 + $0x190] sm:$0xff]
  %v69 = vld [vmem:[%s0 + $0x198] sm:$0xff]
  %v70 = vld [vmem:[%s0 + $0x1a0] sm:$0xff]
  %v71 = vld [vmem:[%s0 + $0x1a8] sm:$0xff]
  %v72 = vld [vmem:[%s0 + $0x1b0] sm:$0xff]
  %v73 = vld [vmem:[%s0 + $0x1b8] sm:$0xff]
  %v74 = vld [vmem:[%s0 + $0x1c0] sm:$0xff]
  %v75 = vld [vmem:[%s0 + $0x1c8] sm:$0xff]
  %v76 = vld [vmem:[%s0 + $0x1d0] sm:$0xff]
  %v77 = vld [vmem:[%s0 + $0x1d8] sm:$0xff]
  %v78 = vld [vmem:[%s0 + $0x1e0] sm:$0xff]
  %v79 = vld [vmem:[%s0 + $0x1e8] sm:$0xff]
  %v80 = vld [vmem:[%s0 + $0x1f0] sm:$0xff]
  %v81 = vld [vmem:[%s0 + $0x1f8] sm:$0xff]
  %v82 = vld [vmem:[%s0 + $0x200] sm:$0xff]
  %v83 = vld [vmem:[%s0 + $0x208] sm:$0xff]
  %v84 = vld [vmem:[%s0 + $0x210] sm:$0xff]
  %v85 = vld [vmem:[%s0 + $0x218] sm:$0xff]
  %v86 = vld [vmem:[%s0 + $0x220] sm:$0xff]
  %v87 = vld [vmem:[%s0 + $0x228] sm:$0xff]
  %v88 = vld [vmem:[%s0 + $0x230] sm:$0xff]
  %v89 = vld [vmem:[%s0 + $0x238] sm:$0xff]
  %v90 = vld [vmem:[%s0 + $0x240] sm:$0xff]
  %v91 = vld [vmem:[%s0 + $0x248] sm:$0xff]
  %v92 = vld [vmem:[%s0 + $0x250] sm:$0xff]
  %v93 = vld [vmem:[%s0 + $0x258] sm:$0xff]
  %v94 = vld [vmem:[%s0 + $0x260] sm:$0xff]
  %v95 = vld [vmem:[%s0 + $0x268] sm:$0xff]
  %v96 = vld [vmem:[%s0 + $0x270] sm:$0xff]
  %v97 = vld [vmem:[%s0 + $0x278] sm:$0xff]
  %v98 = vld [vmem:[%s0 + $0x280] sm:$0xff]
  %v99 = vld [vmem:[%s0 + $0x288] sm:$0xff]
  %v100 = vld [vmem:[%s0 + $0x290] sm:$0xff]
  %v101 = vld [vmem:[%s0 + $0x298] sm:$0xff]
  %v102 = vld [vmem:[%s0 + $0x2a0] sm:$0xff]
  %v103 = vld [vmem:[%s0 + $0x2a8] sm:$0xff]
  %v104 = vld [vmem:[%s0 + $0x2b0] sm:$0xff]
  %v105 = vld [vmem:[%s0 + $0x2b8] sm:$0xff]
  %v106 = vld [vmem:[%s0 + $0x2c0] sm:$0xff]
  %v107 = vld [vmem:[%s0 + $0x2c8] sm:$0xff]
  %v108 = vld [vmem:[%s0 + $0x2d0] sm:$0xff]
  %v109 = vld [vmem:[%s0 + $0x2d8] sm:$0xff]
  %v110 = vld [vmem:[%s0 + $0x2e0] sm:$0xff]
  %v111 = vld [vmem:[%s0 + $0x2e8] sm:$0xff]
  %v112 = vld [vmem:[%s0 + $0x2f0] sm:$0xff]
  %v113 = vld [vmem:[%s0 + $0x2f8] sm:$0xff]
  %v114 = vld [vmem:[%s0 + $0x300] sm:$0xff]
  %v115 = vld [vmem:[%s0 + $0x308] sm:$0xff]
  %v116 = vld [vmem:[%s0 + $0x310] sm:$0xff]
  %v117 = vld [vmem:[%s0 + $0x318] sm:$0xff]
  %v118 = vld [vmem:[%s0 + $0x320] sm:$0xff]
  %v119 = vld [vmem:[%s0 + $0x328] sm:$0xff]
  %v120 = vld [vmem:[%s0 + $0x330] sm:$0xff]
  %v121 = vld [vmem:[%s0 + $0x338] sm:$0xff]
  %v122 = vld [vmem:[%s0 + $0x340] sm:$0xff]
  %v123 = vld [vmem:[%s0 + $0x348] sm:$0xff]
  %v124 = vld [vmem:[%s0 + $0x350] sm:$0xff]
  %v125 = vld [vmem:[%s0 + $0x358] sm:$0xff]
  %v126 = vld [vmem:[%s0 + $0x360] sm:$0xff]
  %v127 = vld [vmem:[%s0 + $0x368] sm:$0xff]
  %v128 = vld [vmem:[%s0 + $0x370] sm:$0xff]
  %v129 = vld [vmem:[%s0 + $0x378] sm:$0xff]
  %v130 = vld [vmem:[%s1] sm:$0xf]
  %v131 = vld [vmem:[%s1 + $0x4] sm:$0xf]
  %v132 = vld [vmem:[%s1 + $0x8] sm:$0xf]
  %v133 = vld [vmem:[%s1 + $0xc] sm:$0xf]
  %v134 = vld [vmem:[%s1 + $0x10] sm:$0xf]
  %v135 = vld [vmem:[%s1 + $0x14] sm:$0xf]
  %v136 = vld [vmem:[%s1 + $0x18] sm:$0xf]
  %v137 = vld [vmem:[%s1 + $0x1c] sm:$0xf]
  %v138 = vld [vmem:[%s1 + $0x20] sm:$0xf]
  %v139 = vld [vmem:[%s1 + $0x24] sm:$0xf]
  %v140 = vld [vmem:[%s1 + $0x28] sm:$0xf]
  %v141 = vld [vmem:[%s1 + $0x2c] sm:$0xf]
  %v142 = vld [vmem:[%s1 + $0x30] sm:$0xf]
  %v143 = vld [vmem:[%s1 + $0x34] sm:$0xf]
  %v144 = vld [vmem:[%s1 + $0x38] sm:$0xf]
  %v145 = vld [vmem:[%s1 + $0x3c] sm:$0xf]
  %v146 = vld [vmem:[%s1 + $0x40] sm:$0xf]
  %v147 = vld [vmem:[%s1 + $0x44] sm:$0xf]
  %v148 = vld [vmem:[%s1 + $0x48] sm:$0xf]
  %v149 = vld [vmem:[%s1 + $0x4c] sm:$0xf]
  %v150 = vld [vmem:[%s1 + $0x50] sm:$0xf]
  %v151 = vld [vmem:[%s1 + $0x54] sm:$0xf]
  %v152 = vld [vmem:[%s1 + $0x58] sm:$0xf]
  %v153 = vld [vmem:[%s1 + $0x5c] sm:$0xf]
  %v154 = vld [vmem:[%s1 + $0x60] sm:$0xf]
  %v155 = vld [vmem:[%s1 + $0x64] sm:$0xf]
  %v156 = vld [vmem:[%s1 + $0x68] sm:$0xf]
  %v157 = vld [vmem:[%s1 + $0x6c] sm:$0xf]
  %v158 = vld [vmem:[%s1 + $0x70] sm:$0xf]
  %v159 = vld [vmem:[%s1 + $0x74] sm:$0xf]
  %v160 = vld [vmem:[%s1 + $0x78] sm:$0xf]
  %v161 = vld [vmem:[%s1 + $0x7c] sm:$0xf]
  %v162 = vld [vmem:[%s1 + $0x80] sm:$0xf]
  %v163 = vld [vmem:[%s1 + $0x84] sm:$0xf]
  %v164 = vld [vmem:[%s1 + $0x88] sm:$0xf]
  %v165 = vld [vmem:[%s1 + $0x8c] sm:$0xf]
  %v166 = vld [vmem:[%s1 + $0x90] sm:$0xf]
  %v167 = vld [vmem:[%s1 + $0x94] sm:$0xf]
  %v168 = vld [vmem:[%s1 + $0x98] sm:$0xf]
  %v169 = vld [vmem:[%s1 + $0x9c] sm:$0xf]
  %v170 = vld [vmem:[%s1 + $0xa0] sm:$0xf]
  %v171 = vld [vmem:[%s1 + $0xa4] sm:$0xf]
  %v172 = vld [vmem:[%s1 + $0xa8] sm:$0xf]
  %v173 = vld [vmem:[%s1 + $0xac] sm:$0xf]
  %v174 = vld [vmem:[%s1 + $0xb0] sm:$0xf]
  %v175 = vld [vmem:[%s1 + $0xb4] sm:$0xf]
  %v176 = vld [vmem:[%s1 + $0xb8] sm:$0xf]
  %v177 = vld [vmem:[%s1 + $0xbc] sm:$0xf]
  %v178 = vld [vmem:[%s1 + $0xc0] sm:$0xf]
  %v179 = vld [vmem:[%s1 + $0xc4] sm:$0xf]
  %v180 = vld [vmem:[%s1 + $0xc8] sm:$0xf]
  %v181 = vld [vmem:[%s1 + $0xcc] sm:$0xf]
  %v182 = vld [vmem:[%s1 + $0xd0] sm:$0xf]
  %v183 = vld [vmem:[%s1 + $0xd4] sm:$0xf]
  %v184 = vld [vmem:[%s1 + $0xd8] sm:$0xf]
  %v185 = vld [vmem:[%s1 + $0xdc] sm:$0xf]
  %v186 = vld [vmem:[%s1 + $0xe0] sm:$0xf]
  %v187 = vld [vmem:[%s1 + $0xe4] sm:$0xf]
  %v188 = vld [vmem:[%s1 + $0xe8] sm:$0xf]
  %v189 = vld [vmem:[%s1 + $0xec] sm:$0xf]
  %v190 = vld [vmem:[%s1 + $0xf0] sm:$0xf]
  %v191 = vld [vmem:[%s1 + $0xf4] sm:$0xf]
  %v192 = vld [vmem:[%s1 + $0xf8] sm:$0xf]
  %v193 = vld [vmem:[%s1 + $0xfc] sm:$0xf]
  %v194 = vld [vmem:[%s1 + $0x100] sm:$0xf]
  %v195 = vld [vmem:[%s1 + $0x104] sm:$0xf]
  %v196 = vld [vmem:[%s1 + $0x108] sm:$0xf]
  %v197 = vld [vmem:[%s1 + $0x10c] sm:$0xf]
  %v198 = vld [vmem:[%s1 + $0x110] sm:$0xf]
  %v199 = vld [vmem:[%s1 + $0x114] sm:$0xf]
  %v200 = vld [vmem:[%s1 + $0x118] sm:$0xf]
  %v201 = vld [vmem:[%s1 + $0x11c] sm:$0xf]
  %v202 = vld [vmem:[%s1 + $0x120] sm:$0xf]
  %v203 = vld [vmem:[%s1 + $0x124] sm:$0xf]
  %v204 = vld [vmem:[%s1 + $0x128] sm:$0xf]
  %v205 = vld [vmem:[%s1 + $0x12c] sm:$0xf]
  %v206 = vld [vmem:[%s1 + $0x130] sm:$0xf]
  %v207 = vld [vmem:[%s1 + $0x134] sm:$0xf]
  %v208 = vld [vmem:[%s1 + $0x138] sm:$0xf]
  %v209 = vld [vmem:[%s1 + $0x13c] sm:$0xf]
  %v210 = vld [vmem:[%s1 + $0x140] sm:$0xf]
  %v211 = vld [vmem:[%s1 + $0x144] sm:$0xf]
  %v212 = vld [vmem:[%s1 + $0x148] sm:$0xf]
  %v213 = vld [vmem:[%s1 + $0x14c] sm:$0xf]
  %v214 = vld [vmem:[%s1 + $0x150] sm:$0xf]
  %v215 = vld [vmem:[%s1 + $0x154] sm:$0xf]
  %v216 = vld [vmem:[%s1 + $0x158] sm:$0xf]
  %v217 = vld [vmem:[%s1 + $0x15c] sm:$0xf]
  %v218 = vld [vmem:[%s1 + $0x160] sm:$0xf]
  %v219 = vld [vmem:[%s1 + $0x164] sm:$0xf]
  %v220 = vld [vmem:[%s1 + $0x168] sm:$0xf]
  %v221 = vld [vmem:[%s1 + $0x16c] sm:$0xf]
  %v222 = vld [vmem:[%s1 + $0x170] sm:$0xf]
  %v223 = vld [vmem:[%s1 + $0x174] sm:$0xf]
  %v224 = vld [vmem:[%s1 + $0x178] sm:$0xf]
  %v225 = vld [vmem:[%s1 + $0x17c] sm:$0xf]
  %v226 = vld [vmem:[%s1 + $0x180] sm:$0xf]
  %v227 = vld [vmem:[%s1 + $0x184] sm:$0xf]
  %v228 = vld [vmem:[%s1 + $0x188] sm:$0xf]
  %v229 = vld [vmem:[%s1 + $0x18c] sm:$0xf]
  %v230 = vld [vmem:[%s1 + $0x190] sm:$0xf]
  %v231 = vld [vmem:[%s1 + $0x194] sm:$0xf]
  %v232 = vld [vmem:[%s1 + $0x198] sm:$0xf]
  %v233 = vld [vmem:[%s1 + $0x19c] sm:$0xf]
  %v234 = vld [vmem:[%s1 + $0x1a0] sm:$0xf]
  %v235 = vld [vmem:[%s1 + $0x1a4] sm:$0xf]
  %v236 = vld [vmem:[%s1 + $0x1a8] sm:$0xf]
  %v237 = vld [vmem:[%s1 + $0x1ac] sm:$0xf]
  %v238 = vld [vmem:[%s1 + $0x1b0] sm:$0xf]
  %v239 = vld [vmem:[%s1 + $0x1b4] sm:$0xf]
  %v240 = vld [vmem:[%s1 + $0x1b8] sm:$0xf]
  %v241 = vld [vmem:[%s1 + $0x1bc] sm:$0xf]
  %v242 = vld [vmem:[%s1 + $0x1c0] sm:$0xf]
  %v243 = vld [vmem:[%s1 + $0x1c4] sm:$0xf]
  %v244 = vld [vmem:[%s1 + $0x1c8] sm:$0xf]
  %v245 = vld [vmem:[%s1 + $0x1cc] sm:$0xf]
  %v246 = vld [vmem:[%s1 + $0x1d0] sm:$0xf]
  %v247 = vld [vmem:[%s1 + $0x1d4] sm:$0xf]
  %v248 = vld [vmem:[%s1 + $0x1d8] sm:$0xf]
  %v249 = vld [vmem:[%s1 + $0x1dc] sm:$0xf]
  %v250 = vld [vmem:[%s1 + $0x1e0] sm:$0xf]
  %v251 = vld [vmem:[%s1 + $0x1e4] sm:$0xf]
  %v252 = vld [vmem:[%s1 + $0x1e8] sm:$0xf]
  %v253 = vld [vmem:[%s1 + $0x1ec] sm:$0xf]
  %v254 = vld [vmem:[%s1 + $0x1f0] sm:$0xf]
  %v255 = vld [vmem:[%s1 + $0x1f4] sm:$0xf]
  %v256 = vld [vmem:[%s1 + $0x1f8] sm:$0xf]
  %v257 = vld [vmem:[%s1 + $0x1fc] sm:$0xf]
  %v258 = vld [vmem:[%s1 + $0x200] sm:$0xf]
  %v259 = vld [vmem:[%s1 + $0x204] sm:$0xf]
  %v260 = vld [vmem:[%s1 + $0x208] sm:$0xf]
  %v261 = vld [vmem:[%s1 + $0x20c] sm:$0xf]
  %v262 = vld [vmem:[%s1 + $0x210] sm:$0xf]
  %v263 = vld [vmem:[%s1 + $0x214] sm:$0xf]
  %v264 = vld [vmem:[%s1 + $0x218] sm:$0xf]
  %v265 = vld [vmem:[%s1 + $0x21c] sm:$0xf]
  %v266 = vld [vmem:[%s1 + $0x220] sm:$0xf]
  %v267 = vld [vmem:[%s1 + $0x224] sm:$0xf]
  %v268 = vld [vmem:[%s1 + $0x228] sm:$0xf]
  %v269 = vld [vmem:[%s1 + $0x22c] sm:$0xf]
  %v270 = vld [vmem:[%s1 + $0x230] sm:$0xf]
  %v271 = vld [vmem:[%s1 + $0x234] sm:$0xf]
  %v272 = vld [vmem:[%s1 + $0x238] sm:$0xf]
  %v273 = vld [vmem:[%s1 + $0x23c] sm:$0xf]
  %v274 = vld [vmem:[%s1 + $0x240] sm:$0xf]
  %v275 = vld [vmem:[%s1 + $0x244] sm:$0xf]
  %v276 = vld [vmem:[%s1 + $0x248] sm:$0xf]
  %v277 = vld [vmem:[%s1 + $0x24c] sm:$0xf]
  %v278 = vld [vmem:[%s1 + $0x250] sm:$0xf]
  %v279 = vld [vmem:[%s1 + $0x254] sm:$0xf]
  %v280 = vld [vmem:[%s1 + $0x258] sm:$0xf]
  %v281 = vld [vmem:[%s1 + $0x25c] sm:$0xf]
  %v282 = vld [vmem:[%s1 + $0x260] sm:$0xf]
  %v283 = vld [vmem:[%s1 + $0x264] sm:$0xf]
  %v284 = vld [vmem:[%s1 + $0x268] sm:$0xf]
  %v285 = vld [vmem:[%s1 + $0x26c] sm:$0xf]
  %v286 = vld [vmem:[%s1 + $0x270] sm:$0xf]
  %v287 = vld [vmem:[%s1 + $0x274] sm:$0xf]
  %v288 = vld [vmem:[%s1 + $0x278] sm:$0xf]
  %v289 = vld [vmem:[%s1 + $0x27c] sm:$0xf]
  %v290 = vld [vmem:[%s1 + $0x280] sm:$0xf]
  %v291 = vld [vmem:[%s1 + $0x284] sm:$0xf]
  %v292 = vld [vmem:[%s1 + $0x288] sm:$0xf]
  %v293 = vld [vmem:[%s1 + $0x28c] sm:$0xf]
  %v294 = vld [vmem:[%s1 + $0x290] sm:$0xf]
  %v295 = vld [vmem:[%s1 + $0x294] sm:$0xf]
  %v296 = vld [vmem:[%s1 + $0x298] sm:$0xf]
  %v297 = vld [vmem:[%s1 + $0x29c] sm:$0xf]
  %v298 = vld [vmem:[%s1 + $0x2a0] sm:$0xf]
  %v299 = vld [vmem:[%s1 + $0x2a4] sm:$0xf]
  %v300 = vld [vmem:[%s1 + $0x2a8] sm:$0xf]
  %v301 = vld [vmem:[%s1 + $0x2ac] sm:$0xf]
  %v302 = vld [vmem:[%s1 + $0x2b0] sm:$0xf]
  %v303 = vld [vmem:[%s1 + $0x2b4] sm:$0xf]
  %v304 = vld [vmem:[%s1 + $0x2b8] sm:$0xf]
  %v305 = vld [vmem:[%s1 + $0x2bc] sm:$0xf]
  %v306 = vld [vmem:[%s1 + $0x2c0] sm:$0xf]
  %v307 = vld [vmem:[%s1 + $0x2c4] sm:$0xf]
  %v308 = vld [vmem:[%s1 + $0x2c8] sm:$0xf]
  %v309 = vld [vmem:[%s1 + $0x2cc] sm:$0xf]
  %v310 = vld [vmem:[%s1 + $0x2d0] sm:$0xf]
  %v311 = vld [vmem:[%s1 + $0x2d4] sm:$0xf]
  %v312 = vld [vmem:[%s1 + $0x2d8] sm:$0xf]
  %v313 = vld [vmem:[%s1 + $0x2dc] sm:$0xf]
  %v314 = vld [vmem:[%s1 + $0x2e0] sm:$0xf]
  %v315 = vld [vmem:[%s1 + $0x2e4] sm:$0xf]
  %v316 = vld [vmem:[%s1 + $0x2e8] sm:$0xf]
  %v317 = vld [vmem:[%s1 + $0x2ec] sm:$0xf]
  %v318 = vld [vmem:[%s1 + $0x2f0] sm:$0xf]
  %v319 = vld [vmem:[%s1 + $0x2f4] sm:$0xf]
  %v320 = vld [vmem:[%s1 + $0x2f8] sm:$0xf]
  %v321 = vld [vmem:[%s1 + $0x2fc] sm:$0xf]
  %v322 = vld [vmem:[%s1 + $0x300] sm:$0xf]
  %v323 = vld [vmem:[%s1 + $0x304] sm:$0xf]
  %v324 = vld [vmem:[%s1 + $0x308] sm:$0xf]
  %v325 = vld [vmem:[%s1 + $0x30c] sm:$0xf]
  %v326 = vld [vmem:[%s1 + $0x310] sm:$0xf]
  %v327 = vld [vmem:[%s1 + $0x314] sm:$0xf]
  %v328 = vld [vmem:[%s1 + $0x318] sm:$0xf]
  %v329 = vld [vmem:[%s1 + $0x31c] sm:$0xf]
  %v330 = vld [vmem:[%s1 + $0x320] sm:$0xf]
  %v331 = vld [vmem:[%s1 + $0x324] sm:$0xf]
  %v332 = vld [vmem:[%s1 + $0x328] sm:$0xf]
  %v333 = vld [vmem:[%s1 + $0x32c] sm:$0xf]
  %v334 = vld [vmem:[%s1 + $0x330] sm:$0xf]
  %v335 = vld [vmem:[%s1 + $0x334] sm:$0xf]
  %v336 = vld [vmem:[%s1 + $0x338] sm:$0xf]
  %v337 = vld [vmem:[%s1 + $0x33c] sm:$0xf]
  %v338 = vld [vmem:[%s1 + $0x340] sm:$0xf]
  %v339 = vld [vmem:[%s1 + $0x344] sm:$0xf]
  %v340 = vld [vmem:[%s1 + $0x348] sm:$0xf]
  %v341 = vld [vmem:[%s1 + $0x34c] sm:$0xf]
  %v342 = vld [vmem:[%s1 + $0x350] sm:$0xf]
  %v343 = vld [vmem:[%s1 + $0x354] sm:$0xf]
  %v344 = vld [vmem:[%s1 + $0x358] sm:$0xf]
  %v345 = vld [vmem:[%s1 + $0x35c] sm:$0xf]
  %v346 = vld [vmem:[%s1 + $0x360] sm:$0xf]
  %v347 = vld [vmem:[%s1 + $0x364] sm:$0xf]
  %v348 = vld [vmem:[%s1 + $0x368] sm:$0xf]
  %v349 = vld [vmem:[%s1 + $0x36c] sm:$0xf]
  %v350 = vld [vmem:[%s1 + $0x370] sm:$0xf]
  %v351 = vld [vmem:[%s1 + $0x374] sm:$0xf]
  %v352 = vld [vmem:[%s1 + $0x378] sm:$0xf]
  %v353 = vld [vmem:[%s1 + $0x37c] sm:$0xf]
  %v354 = vld [vmem:[%s1 + $0x380] sm:$0xf]
  %v355 = vld [vmem:[%s1 + $0x384] sm:$0xf]
  %v356 = vld [vmem:[%s1 + $0x388] sm:$0xf]
  %v357 = vld [vmem:[%s1 + $0x38c] sm:$0xf]
  %v358 = vld [vmem:[%s1 + $0x390] sm:$0xf]
  %v359 = vld [vmem:[%s1 + $0x394] sm:$0xf]
  %v360 = vld [vmem:[%s1 + $0x398] sm:$0xf]
  %v361 = vld [vmem:[%s1 + $0x39c] sm:$0xf]
  %v362 = vld [vmem:[%s1 + $0x3a0] sm:$0xf]
  %v363 = vld [vmem:[%s1 + $0x3a4] sm:$0xf]
  %v364 = vld [vmem:[%s1 + $0x3a8] sm:$0xf]
  %v365 = vld [vmem:[%s1 + $0x3ac] sm:$0xf]
  %v366 = vld [vmem:[%s1 + $0x3b0] sm:$0xf]
  %v367 = vld [vmem:[%s1 + $0x3b4] sm:$0xf]
  %v368 = vld [vmem:[%s1 + $0x3b8] sm:$0xf]
  %v369 = vld [vmem:[%s1 + $0x3bc] sm:$0xf]
  %v370 = vld [vmem:[%s1 + $0x3c0] sm:$0xf]
  %v371 = vld [vmem:[%s1 + $0x3c4] sm:$0xf]
  %v372 = vld [vmem:[%s1 + $0x3c8] sm:$0xf]
  %v373 = vld [vmem:[%s1 + $0x3cc] sm:$0xf]
  %v374 = vld [vmem:[%s1 + $0x3d0] sm:$0xf]
  %v375 = vld [vmem:[%s1 + $0x3d4] sm:$0xf]
  %v376 = vld [vmem:[%s1 + $0x3d8] sm:$0xf]
  %v377 = vld [vmem:[%s1 + $0x3dc] sm:$0xf]
  %v378 = vld [vmem:[%s1 + $0x3e0] sm:$0xf]
  %v379 = vld [vmem:[%s1 + $0x3e4] sm:$0xf]
  %v380 = vld [vmem:[%s1 + $0x3e8] sm:$0xf]
  %v381 = vld [vmem:[%s1 + $0x3ec] sm:$0xf]
  %v382 = vld [vmem:[%s1 + $0x3f0] sm:$0xf]
  %v383 = vld [vmem:[%s1 + $0x3f4] sm:$0xf]
  %v384 = vld [vmem:[%s1 + $0x3f8] sm:$0xf]
  %v385 = vld [vmem:[%s1 + $0x3fc] sm:$0xf]
  %v498 = vunpack.c.l.b16 %v18
  %v499 = vunpack.c.h.b16 %v18
  %v500 = vunpack.c.l.b16 %v19
  %v501 = vunpack.c.h.b16 %v19
  %v502 = vunpack.c.l.b16 %v20
  %v503 = vunpack.c.h.b16 %v20
  %v504 = vunpack.c.l.b16 %v21
  %v505 = vunpack.c.h.b16 %v21
  %v506 = vunpack.c.l.b16 %v22
  %v507 = vunpack.c.h.b16 %v22
  %v508 = vunpack.c.l.b16 %v23
  %v509 = vunpack.c.h.b16 %v23
  %v510 = vunpack.c.l.b16 %v24
  %v511 = vunpack.c.h.b16 %v24
  %v512 = vunpack.c.l.b16 %v25
  %v513 = vunpack.c.h.b16 %v25
  %v514 = vunpack.c.l.b16 %v26
  %v515 = vunpack.c.h.b16 %v26
  %v516 = vunpack.c.l.b16 %v27
  %v517 = vunpack.c.h.b16 %v27
  %v518 = vunpack.c.l.b16 %v28
  %v519 = vunpack.c.h.b16 %v28
  %v520 = vunpack.c.l.b16 %v29
  %v521 = vunpack.c.h.b16 %v29
  %v522 = vunpack.c.l.b16 %v30
  %v523 = vunpack.c.h.b16 %v30
  %v524 = vunpack.c.l.b16 %v31
  %v525 = vunpack.c.h.b16 %v31
  %v526 = vunpack.c.l.b16 %v32
  %v527 = vunpack.c.h.b16 %v32
  %v528 = vunpack.c.l.b16 %v33
  %v529 = vunpack.c.h.b16 %v33
  %v530 = vunpack.c.l.b16 %v34
  %v531 = vunpack.c.h.b16 %v34
  %v532 = vunpack.c.l.b16 %v35
  %v533 = vunpack.c.h.b16 %v35
  %v534 = vunpack.c.l.b16 %v36
  %v535 = vunpack.c.h.b16 %v36
  %v536 = vunpack.c.l.b16 %v37
  %v537 = vunpack.c.h.b16 %v37
  %v538 = vunpack.c.l.b16 %v38
  %v539 = vunpack.c.h.b16 %v38
  %v540 = vunpack.c.l.b16 %v39
  %v541 = vunpack.c.h.b16 %v39
  %v542 = vunpack.c.l.b16 %v40
  %v543 = vunpack.c.h.b16 %v40
  %v544 = vunpack.c.l.b16 %v41
  %v545 = vunpack.c.h.b16 %v41
  %v546 = vunpack.c.l.b16 %v42
  %v547 = vunpack.c.h.b16 %v42
  %v548 = vunpack.c.l.b16 %v43
  %v549 = vunpack.c.h.b16 %v43
  %v550 = vunpack.c.l.b16 %v44
  %v551 = vunpack.c.h.b16 %v44
  %v552 = vunpack.c.l.b16 %v45
  %v553 = vunpack.c.h.b16 %v45
  %v554 = vunpack.c.l.b16 %v46
  %v555 = vunpack.c.h.b16 %v46
  %v556 = vunpack.c.l.b16 %v47
  %v557 = vunpack.c.h.b16 %v47
  %v558 = vunpack.c.l.b16 %v48
  %v559 = vunpack.c.h.b16 %v48
  %v560 = vunpack.c.l.b16 %v49
  %v561 = vunpack.c.h.b16 %v49
  %v562 = vunpack.c.l.b16 %v50
  %v563 = vunpack.c.h.b16 %v50
  %v564 = vunpack.c.l.b16 %v51
  %v565 = vunpack.c.h.b16 %v51
  %v566 = vunpack.c.l.b16 %v52
  %v567 = vunpack.c.h.b16 %v52
  %v568 = vunpack.c.l.b16 %v53
  %v569 = vunpack.c.h.b16 %v53
  %v570 = vunpack.c.l.b16 %v54
  %v571 = vunpack.c.h.b16 %v54
  %v572 = vunpack.c.l.b16 %v55
  %v573 = vunpack.c.h.b16 %v55
  %v574 = vunpack.c.l.b16 %v56
  %v575 = vunpack.c.h.b16 %v56
  %v576 = vunpack.c.l.b16 %v57
  %v577 = vunpack.c.h.b16 %v57
  %v578 = vunpack.c.l.b16 %v58
  %v579 = vunpack.c.h.b16 %v58
  %v580 = vunpack.c.l.b16 %v59
  %v581 = vunpack.c.h.b16 %v59
  %v582 = vunpack.c.l.b16 %v60
  %v583 = vunpack.c.h.b16 %v60
  %v584 = vunpack.c.l.b16 %v61
  %v585 = vunpack.c.h.b16 %v61
  %v586 = vunpack.c.l.b16 %v62
  %v587 = vunpack.c.h.b16 %v62
  %v588 = vunpack.c.l.b16 %v63
  %v589 = vunpack.c.h.b16 %v63
  %v590 = vunpack.c.l.b16 %v64
  %v591 = vunpack.c.h.b16 %v64
  %v592 = vunpack.c.l.b16 %v65
  %v593 = vunpack.c.h.b16 %v65
  %v594 = vunpack.c.l.b16 %v66
  %v595 = vunpack.c.h.b16 %v66
  %v596 = vunpack.c.l.b16 %v67
  %v597 = vunpack.c.h.b16 %v67
  %v598 = vunpack.c.l.b16 %v68
  %v599 = vunpack.c.h.b16 %v68
  %v600 = vunpack.c.l.b16 %v69
  %v601 = vunpack.c.h.b16 %v69
  %v602 = vunpack.c.l.b16 %v70
  %v603 = vunpack.c.h.b16 %v70
  %v604 = vunpack.c.l.b16 %v71
  %v605 = vunpack.c.h.b16 %v71
  %v606 = vunpack.c.l.b16 %v72
  %v607 = vunpack.c.h.b16 %v72
  %v608 = vunpack.c.l.b16 %v73
  %v609 = vunpack.c.h.b16 %v73
  %v610 = vunpack.c.l.b16 %v74
  %v611 = vunpack.c.h.b16 %v74
  %v612 = vunpack.c.l.b16 %v75
  %v613 = vunpack.c.h.b16 %v75
  %v614 = vunpack.c.l.b16 %v76
  %v615 = vunpack.c.h.b16 %v76
  %v616 = vunpack.c.l.b16 %v77
  %v617 = vunpack.c.h.b16 %v77
  %v618 = vunpack.c.l.b16 %v78
  %v619 = vunpack.c.h.b16 %v78
  %v620 = vunpack.c.l.b16 %v79
  %v621 = vunpack.c.h.b16 %v79
  %v622 = vunpack.c.l.b16 %v80
  %v623 = vunpack.c.h.b16 %v80
  %v624 = vunpack.c.l.b16 %v81
  %v625 = vunpack.c.h.b16 %v81
  %v626 = vunpack.c.l.b16 %v82
  %v627 = vunpack.c.h.b16 %v82
  %v628 = vunpack.c.l.b16 %v83
  %v629 = vunpack.c.h.b16 %v83
  %v630 = vunpack.c.l.b16 %v84
  %v631 = vunpack.c.h.b16 %v84
  %v632 = vunpack.c.l.b16 %v85
  %v633 = vunpack.c.h.b16 %v85
  %v634 = vunpack.c.l.b16 %v86
  %v635 = vunpack.c.h.b16 %v86
  %v636 = vunpack.c.l.b16 %v87
  %v637 = vunpack.c.h.b16 %v87
  %v638 = vunpack.c.l.b16 %v88
  %v639 = vunpack.c.h.b16 %v88
  %v640 = vunpack.c.l.b16 %v89
  %v641 = vunpack.c.h.b16 %v89
  %v642 = vunpack.c.l.b16 %v90
  %v643 = vunpack.c.h.b16 %v90
  %v644 = vunpack.c.l.b16 %v91
  %v645 = vunpack.c.h.b16 %v91
  %v646 = vunpack.c.l.b16 %v92
  %v647 = vunpack.c.h.b16 %v92
  %v648 = vunpack.c.l.b16 %v93
  %v649 = vunpack.c.h.b16 %v93
  %v650 = vunpack.c.l.b16 %v94
  %v651 = vunpack.c.h.b16 %v94
  %v652 = vunpack.c.l.b16 %v95
  %v653 = vunpack.c.h.b16 %v95
  %v654 = vunpack.c.l.b16 %v96
  %v655 = vunpack.c.h.b16 %v96
  %v656 = vunpack.c.l.b16 %v97
  %v657 = vunpack.c.h.b16 %v97
  %v658 = vunpack.c.l.b16 %v98
  %v659 = vunpack.c.h.b16 %v98
  %v660 = vunpack.c.l.b16 %v99
  %v661 = vunpack.c.h.b16 %v99
  %v662 = vunpack.c.l.b16 %v100
  %v663 = vunpack.c.h.b16 %v100
  %v664 = vunpack.c.l.b16 %v101
  %v665 = vunpack.c.h.b16 %v101
  %v666 = vunpack.c.l.b16 %v102
  %v667 = vunpack.c.h.b16 %v102
  %v668 = vunpack.c.l.b16 %v103
  %v669 = vunpack.c.h.b16 %v103
  %v670 = vunpack.c.l.b16 %v104
  %v671 = vunpack.c.h.b16 %v104
  %v672 = vunpack.c.l.b16 %v105
  %v673 = vunpack.c.h.b16 %v105
  %v674 = vunpack.c.l.b16 %v106
  %v675 = vunpack.c.h.b16 %v106
  %v676 = vunpack.c.l.b16 %v107
  %v677 = vunpack.c.h.b16 %v107
  %v678 = vunpack.c.l.b16 %v108
  %v679 = vunpack.c.h.b16 %v108
  %v680 = vunpack.c.l.b16 %v109
  %v681 = vunpack.c.h.b16 %v109
  %v682 = vunpack.c.l.b16 %v110
  %v683 = vunpack.c.h.b16 %v110
  %v684 = vunpack.c.l.b16 %v111
  %v685 = vunpack.c.h.b16 %v111
  %v686 = vunpack.c.l.b16 %v112
  %v687 = vunpack.c.h.b16 %v112
  %v688 = vunpack.c.l.b16 %v113
  %v689 = vunpack.c.h.b16 %v113
  %v690 = vunpack.c.l.b16 %v114
  %v691 = vunpack.c.h.b16 %v114
  %v692 = vunpack.c.l.b16 %v115
  %v693 = vunpack.c.h.b16 %v115
  %v694 = vunpack.c.l.b16 %v116
  %v695 = vunpack.c.h.b16 %v116
  %v696 = vunpack.c.l.b16 %v117
  %v697 = vunpack.c.h.b16 %v117
  %v698 = vunpack.c.l.b16 %v118
  %v699 = vunpack.c.h.b16 %v118
  %v700 = vunpack.c.l.b16 %v119
  %v701 = vunpack.c.h.b16 %v119
  %v702 = vunpack.c.l.b16 %v120
  %v703 = vunpack.c.h.b16 %v120
  %v704 = vunpack.c.l.b16 %v121
  %v705 = vunpack.c.h.b16 %v121
  %v706 = vunpack.c.l.b16 %v122
  %v707 = vunpack.c.h.b16 %v122
  %v708 = vunpack.c.l.b16 %v123
  %v709 = vunpack.c.h.b16 %v123
  %v710 = vunpack.c.l.b16 %v124
  %v711 = vunpack.c.h.b16 %v124
  %v712 = vunpack.c.l.b16 %v125
  %v713 = vunpack.c.h.b16 %v125
  %v714 = vunpack.c.l.b16 %v126
  %v715 = vunpack.c.h.b16 %v126
  %v716 = vunpack.c.l.b16 %v127
  %v717 = vunpack.c.h.b16 %v127
  %v718 = vunpack.c.l.b16 %v128
  %v719 = vunpack.c.h.b16 %v128
  %v720 = vunpack.c.l.b16 %v129
  %v721 = vunpack.c.h.b16 %v129
  %v722 = vpack.c.b16 %v514, %v498
  %v723 = vpack.c.b16 %v515, %v499
  %v724 = vpack.c.b16 %v516, %v500
  %v725 = vpack.c.b16 %v517, %v501
  %v726 = vpack.c.b16 %v518, %v502
  %v727 = vpack.c.b16 %v519, %v503
  %v728 = vpack.c.b16 %v520, %v504
  %v729 = vpack.c.b16 %v521, %v505
  %v730 = vpack.c.b16 %v522, %v506
  %v731 = vpack.c.b16 %v523, %v507
  %v732 = vpack.c.b16 %v524, %v508
  %v733 = vpack.c.b16 %v525, %v509
  %v734 = vpack.c.b16 %v526, %v510
  %v735 = vpack.c.b16 %v527, %v511
  %v736 = vpack.c.b16 %v528, %v512
  %v737 = vpack.c.b16 %v529, %v513
  %v738 = vpack.c.b16 %v546, %v530
  %v739 = vpack.c.b16 %v547, %v531
  %v740 = vpack.c.b16 %v548, %v532
  %v741 = vpack.c.b16 %v549, %v533
  %v742 = vpack.c.b16 %v550, %v534
  %v743 = vpack.c.b16 %v551, %v535
  %v744 = vpack.c.b16 %v552, %v536
  %v745 = vpack.c.b16 %v553, %v537
  %v746 = vpack.c.b16 %v554, %v538
  %v747 = vpack.c.b16 %v555, %v539
  %v748 = vpack.c.b16 %v556, %v540
  %v749 = vpack.c.b16 %v557, %v541
  %v750 = vpack.c.b16 %v558, %v542
  %v751 = vpack.c.b16 %v559, %v543
  %v752 = vpack.c.b16 %v560, %v544
  %v753 = vpack.c.b16 %v561, %v545
  %v754 = vpack.c.b16 %v578, %v562
  %v755 = vpack.c.b16 %v579, %v563
  %v756 = vpack.c.b16 %v580, %v564
  %v757 = vpack.c.b16 %v581, %v565
  %v758 = vpack.c.b16 %v582, %v566
  %v759 = vpack.c.b16 %v583, %v567
  %v760 = vpack.c.b16 %v584, %v568
  %v761 = vpack.c.b16 %v585, %v569
  %v762 = vpack.c.b16 %v586, %v570
  %v763 = vpack.c.b16 %v587, %v571
  %v764 = vpack.c.b16 %v588, %v572
  %v765 = vpack.c.b16 %v589, %v573
  %v766 = vpack.c.b16 %v590, %v574
  %v767 = vpack.c.b16 %v591, %v575
  %v768 = vpack.c.b16 %v592, %v576
  %v769 = vpack.c.b16 %v593, %v577
  %v770 = vpack.c.b16 %v610, %v594
  %v771 = vpack.c.b16 %v611, %v595
  %v772 = vpack.c.b16 %v612, %v596
  %v773 = vpack.c.b16 %v613, %v597
  %v774 = vpack.c.b16 %v614, %v598
  %v775 = vpack.c.b16 %v615, %v599
  %v776 = vpack.c.b16 %v616, %v600
  %v777 = vpack.c.b16 %v617, %v601
  %v778 = vpack.c.b16 %v618, %v602
  %v779 = vpack.c.b16 %v619, %v603
  %v780 = vpack.c.b16 %v620, %v604
  %v781 = vpack.c.b16 %v621, %v605
  %v782 = vpack.c.b16 %v622, %v606
  %v783 = vpack.c.b16 %v623, %v607
  %v784 = vpack.c.b16 %v624, %v608
  %v785 = vpack.c.b16 %v625, %v609
  %v786 = vpack.c.b16 %v642, %v626
  %v787 = vpack.c.b16 %v643, %v627
  %v788 = vpack.c.b16 %v644, %v628
  %v789 = vpack.c.b16 %v645, %v629
  %v790 = vpack.c.b16 %v646, %v630
  %v791 = vpack.c.b16 %v647, %v631
  %v792 = vpack.c.b16 %v648, %v632
  %v793 = vpack.c.b16 %v649, %v633
  %v794 = vpack.c.b16 %v650, %v634
  %v795 = vpack.c.b16 %v651, %v635
  %v796 = vpack.c.b16 %v652, %v636
  %v797 = vpack.c.b16 %v653, %v637
  %v798 = vpack.c.b16 %v654, %v638
  %v799 = vpack.c.b16 %v655, %v639
  %v800 = vpack.c.b16 %v656, %v640
  %v801 = vpack.c.b16 %v657, %v641
  %v802 = vpack.c.b16 %v674, %v658
  %v803 = vpack.c.b16 %v675, %v659
  %v804 = vpack.c.b16 %v676, %v660
  %v805 = vpack.c.b16 %v677, %v661
  %v806 = vpack.c.b16 %v678, %v662
  %v807 = vpack.c.b16 %v679, %v663
  %v808 = vpack.c.b16 %v680, %v664
  %v809 = vpack.c.b16 %v681, %v665
  %v810 = vpack.c.b16 %v682, %v666
  %v811 = vpack.c.b16 %v683, %v667
  %v812 = vpack.c.b16 %v684, %v668
  %v813 = vpack.c.b16 %v685, %v669
  %v814 = vpack.c.b16 %v686, %v670
  %v815 = vpack.c.b16 %v687, %v671
  %v816 = vpack.c.b16 %v688, %v672
  %v817 = vpack.c.b16 %v689, %v673
  %v818 = vpack.c.b16 %v706, %v690
  %v819 = vpack.c.b16 %v707, %v691
  %v820 = vpack.c.b16 %v708, %v692
  %v821 = vpack.c.b16 %v709, %v693
  %v822 = vpack.c.b16 %v710, %v694
  %v823 = vpack.c.b16 %v711, %v695
  %v824 = vpack.c.b16 %v712, %v696
  %v825 = vpack.c.b16 %v713, %v697
  %v826 = vpack.c.b16 %v714, %v698
  %v827 = vpack.c.b16 %v715, %v699
  %v828 = vpack.c.b16 %v716, %v700
  %v829 = vpack.c.b16 %v717, %v701
  %v830 = vpack.c.b16 %v718, %v702
  %v831 = vpack.c.b16 %v719, %v703
  %v832 = vpack.c.b16 %v720, %v704
  %v833 = vpack.c.b16 %v721, %v705
  %v1202 = vunpack.c.l.b16 %v130
  %v1203 = vunpack.c.l.b16 %v131
  %v1204 = vunpack.c.l.b16 %v132
  %v1205 = vunpack.c.l.b16 %v133
  %v1206 = vunpack.c.l.b16 %v134
  %v1207 = vunpack.c.l.b16 %v135
  %v1208 = vunpack.c.l.b16 %v136
  %v1209 = vunpack.c.l.b16 %v137
  %v1210 = vunpack.c.l.b16 %v138
  %v1211 = vunpack.c.l.b16 %v139
  %v1212 = vunpack.c.l.b16 %v140
  %v1213 = vunpack.c.l.b16 %v141
  %v1214 = vunpack.c.l.b16 %v142
  %v1215 = vunpack.c.l.b16 %v143
  %v1216 = vunpack.c.l.b16 %v144
  %v1217 = vunpack.c.l.b16 %v145
  %v1218 = vunpack.c.l.b16 %v146
  %v1219 = vunpack.c.l.b16 %v147
  %v1220 = vunpack.c.l.b16 %v148
  %v1221 = vunpack.c.l.b16 %v149
  %v1222 = vunpack.c.l.b16 %v150
  %v1223 = vunpack.c.l.b16 %v151
  %v1224 = vunpack.c.l.b16 %v152
  %v1225 = vunpack.c.l.b16 %v153
  %v1226 = vunpack.c.l.b16 %v154
  %v1227 = vunpack.c.l.b16 %v155
  %v1228 = vunpack.c.l.b16 %v156
  %v1229 = vunpack.c.l.b16 %v157
  %v1230 = vunpack.c.l.b16 %v158
  %v1231 = vunpack.c.l.b16 %v159
  %v1232 = vunpack.c.l.b16 %v160
  %v1233 = vunpack.c.l.b16 %v161
  %v1234 = vunpack.c.l.b16 %v162
  %v1235 = vunpack.c.l.b16 %v163
  %v1236 = vunpack.c.l.b16 %v164
  %v1237 = vunpack.c.l.b16 %v165
  %v1238 = vunpack.c.l.b16 %v166
  %v1239 = vunpack.c.l.b16 %v167
  %v1240 = vunpack.c.l.b16 %v168
  %v1241 = vunpack.c.l.b16 %v169
  %v1242 = vunpack.c.l.b16 %v170
  %v1243 = vunpack.c.l.b16 %v171
  %v1244 = vunpack.c.l.b16 %v172
  %v1245 = vunpack.c.l.b16 %v173
  %v1246 = vunpack.c.l.b16 %v174
  %v1247 = vunpack.c.l.b16 %v175
  %v1248 = vunpack.c.l.b16 %v176
  %v1249 = vunpack.c.l.b16 %v177
  %v1250 = vunpack.c.l.b16 %v178
  %v1251 = vunpack.c.l.b16 %v179
  %v1252 = vunpack.c.l.b16 %v180
  %v1253 = vunpack.c.l.b16 %v181
  %v1254 = vunpack.c.l.b16 %v182
  %v1255 = vunpack.c.l.b16 %v183
  %v1256 = vunpack.c.l.b16 %v184
  %v1257 = vunpack.c.l.b16 %v185
  %v1258 = vunpack.c.l.b16 %v186
  %v1259 = vunpack.c.l.b16 %v187
  %v1260 = vunpack.c.l.b16 %v188
  %v1261 = vunpack.c.l.b16 %v189
  %v1262 = vunpack.c.l.b16 %v190
  %v1263 = vunpack.c.l.b16 %v191
  %v1264 = vunpack.c.l.b16 %v192
  %v1265 = vunpack.c.l.b16 %v193
  %v1266 = vunpack.c.l.b16 %v194
  %v1267 = vunpack.c.l.b16 %v195
  %v1268 = vunpack.c.l.b16 %v196
  %v1269 = vunpack.c.l.b16 %v197
  %v1270 = vunpack.c.l.b16 %v198
  %v1271 = vunpack.c.l.b16 %v199
  %v1272 = vunpack.c.l.b16 %v200
  %v1273 = vunpack.c.l.b16 %v201
  %v1274 = vunpack.c.l.b16 %v202
  %v1275 = vunpack.c.l.b16 %v203
  %v1276 = vunpack.c.l.b16 %v204
  %v1277 = vunpack.c.l.b16 %v205
  %v1278 = vunpack.c.l.b16 %v206
  %v1279 = vunpack.c.l.b16 %v207
  %v1280 = vunpack.c.l.b16 %v208
  %v1281 = vunpack.c.l.b16 %v209
  %v1282 = vunpack.c.l.b16 %v210
  %v1283 = vunpack.c.l.b16 %v211
  %v1284 = vunpack.c.l.b16 %v212
  %v1285 = vunpack.c.l.b16 %v213
  %v1286 = vunpack.c.l.b16 %v214
  %v1287 = vunpack.c.l.b16 %v215
  %v1288 = vunpack.c.l.b16 %v216
  %v1289 = vunpack.c.l.b16 %v217
  %v1290 = vunpack.c.l.b16 %v218
  %v1291 = vunpack.c.l.b16 %v219
  %v1292 = vunpack.c.l.b16 %v220
  %v1293 = vunpack.c.l.b16 %v221
  %v1294 = vunpack.c.l.b16 %v222
  %v1295 = vunpack.c.l.b16 %v223
  %v1296 = vunpack.c.l.b16 %v224
  %v1297 = vunpack.c.l.b16 %v225
  %v1298 = vunpack.c.l.b16 %v226
  %v1299 = vunpack.c.l.b16 %v227
  %v1300 = vunpack.c.l.b16 %v228
  %v1301 = vunpack.c.l.b16 %v229
  %v1302 = vunpack.c.l.b16 %v230
  %v1303 = vunpack.c.l.b16 %v231
  %v1304 = vunpack.c.l.b16 %v232
  %v1305 = vunpack.c.l.b16 %v233
  %v1306 = vunpack.c.l.b16 %v234
  %v1307 = vunpack.c.l.b16 %v235
  %v1308 = vunpack.c.l.b16 %v236
  %v1309 = vunpack.c.l.b16 %v237
  %v1310 = vunpack.c.l.b16 %v238
  %v1311 = vunpack.c.l.b16 %v239
  %v1312 = vunpack.c.l.b16 %v240
  %v1313 = vunpack.c.l.b16 %v241
  %v1314 = vunpack.c.l.b16 %v242
  %v1315 = vunpack.c.l.b16 %v243
  %v1316 = vunpack.c.l.b16 %v244
  %v1317 = vunpack.c.l.b16 %v245
  %v1318 = vunpack.c.l.b16 %v246
  %v1319 = vunpack.c.l.b16 %v247
  %v1320 = vunpack.c.l.b16 %v248
  %v1321 = vunpack.c.l.b16 %v249
  %v1322 = vunpack.c.l.b16 %v250
  %v1323 = vunpack.c.l.b16 %v251
  %v1324 = vunpack.c.l.b16 %v252
  %v1325 = vunpack.c.l.b16 %v253
  %v1326 = vunpack.c.l.b16 %v254
  %v1327 = vunpack.c.l.b16 %v255
  %v1328 = vunpack.c.l.b16 %v256
  %v1329 = vunpack.c.l.b16 %v257
  %v1330 = vunpack.c.l.b16 %v258
  %v1331 = vunpack.c.l.b16 %v259
  %v1332 = vunpack.c.l.b16 %v260
  %v1333 = vunpack.c.l.b16 %v261
  %v1334 = vunpack.c.l.b16 %v262
  %v1335 = vunpack.c.l.b16 %v263
  %v1336 = vunpack.c.l.b16 %v264
  %v1337 = vunpack.c.l.b16 %v265
  %v1338 = vunpack.c.l.b16 %v266
  %v1339 = vunpack.c.l.b16 %v267
  %v1340 = vunpack.c.l.b16 %v268
  %v1341 = vunpack.c.l.b16 %v269
  %v1342 = vunpack.c.l.b16 %v270
  %v1343 = vunpack.c.l.b16 %v271
  %v1344 = vunpack.c.l.b16 %v272
  %v1345 = vunpack.c.l.b16 %v273
  %v1346 = vunpack.c.l.b16 %v274
  %v1347 = vunpack.c.l.b16 %v275
  %v1348 = vunpack.c.l.b16 %v276
  %v1349 = vunpack.c.l.b16 %v277
  %v1350 = vunpack.c.l.b16 %v278
  %v1351 = vunpack.c.l.b16 %v279
  %v1352 = vunpack.c.l.b16 %v280
  %v1353 = vunpack.c.l.b16 %v281
  %v1354 = vunpack.c.l.b16 %v282
  %v1355 = vunpack.c.l.b16 %v283
  %v1356 = vunpack.c.l.b16 %v284
  %v1357 = vunpack.c.l.b16 %v285
  %v1358 = vunpack.c.l.b16 %v286
  %v1359 = vunpack.c.l.b16 %v287
  %v1360 = vunpack.c.l.b16 %v288
  %v1361 = vunpack.c.l.b16 %v289
  %v1362 = vunpack.c.l.b16 %v290
  %v1363 = vunpack.c.l.b16 %v291
  %v1364 = vunpack.c.l.b16 %v292
  %v1365 = vunpack.c.l.b16 %v293
  %v1366 = vunpack.c.l.b16 %v294
  %v1367 = vunpack.c.l.b16 %v295
  %v1368 = vunpack.c.l.b16 %v296
  %v1369 = vunpack.c.l.b16 %v297
  %v1370 = vunpack.c.l.b16 %v298
  %v1371 = vunpack.c.l.b16 %v299
  %v1372 = vunpack.c.l.b16 %v300
  %v1373 = vunpack.c.l.b16 %v301
  %v1374 = vunpack.c.l.b16 %v302
  %v1375 = vunpack.c.l.b16 %v303
  %v1376 = vunpack.c.l.b16 %v304
  %v1377 = vunpack.c.l.b16 %v305
  %v1378 = vunpack.c.l.b16 %v306
  %v1379 = vunpack.c.l.b16 %v307
  %v1380 = vunpack.c.l.b16 %v308
  %v1381 = vunpack.c.l.b16 %v309
  %v1382 = vunpack.c.l.b16 %v310
  %v1383 = vunpack.c.l.b16 %v311
  %v1384 = vunpack.c.l.b16 %v312
  %v1385 = vunpack.c.l.b16 %v313
  %v1386 = vunpack.c.l.b16 %v314
  %v1387 = vunpack.c.l.b16 %v315
  %v1388 = vunpack.c.l.b16 %v316
  %v1389 = vunpack.c.l.b16 %v317
  %v1390 = vunpack.c.l.b16 %v318
  %v1391 = vunpack.c.l.b16 %v319
  %v1392 = vunpack.c.l.b16 %v320
  %v1393 = vunpack.c.l.b16 %v321
  %v1394 = vunpack.c.l.b16 %v322
  %v1395 = vunpack.c.l.b16 %v323
  %v1396 = vunpack.c.l.b16 %v324
  %v1397 = vunpack.c.l.b16 %v325
  %v1398 = vunpack.c.l.b16 %v326
  %v1399 = vunpack.c.l.b16 %v327
  %v1400 = vunpack.c.l.b16 %v328
  %v1401 = vunpack.c.l.b16 %v329
  %v1402 = vunpack.c.l.b16 %v330
  %v1403 = vunpack.c.l.b16 %v331
  %v1404 = vunpack.c.l.b16 %v332
  %v1405 = vunpack.c.l.b16 %v333
  %v1406 = vunpack.c.l.b16 %v334
  %v1407 = vunpack.c.l.b16 %v335
  %v1408 = vunpack.c.l.b16 %v336
  %v1409 = vunpack.c.l.b16 %v337
  %v1410 = vunpack.c.l.b16 %v338
  %v1411 = vunpack.c.l.b16 %v339
  %v1412 = vunpack.c.l.b16 %v340
  %v1413 = vunpack.c.l.b16 %v341
  %v1414 = vunpack.c.l.b16 %v342
  %v1415 = vunpack.c.l.b16 %v343
  %v1416 = vunpack.c.l.b16 %v344
  %v1417 = vunpack.c.l.b16 %v345
  %v1418 = vunpack.c.l.b16 %v346
  %v1419 = vunpack.c.l.b16 %v347
  %v1420 = vunpack.c.l.b16 %v348
  %v1421 = vunpack.c.l.b16 %v349
  %v1422 = vunpack.c.l.b16 %v350
  %v1423 = vunpack.c.l.b16 %v351
  %v1424 = vunpack.c.l.b16 %v352
  %v1425 = vunpack.c.l.b16 %v353
  %v1426 = vunpack.c.l.b16 %v354
  %v1427 = vunpack.c.l.b16 %v355
  %v1428 = vunpack.c.l.b16 %v356
  %v1429 = vunpack.c.l.b16 %v357
  %v1430 = vunpack.c.l.b16 %v358
  %v1431 = vunpack.c.l.b16 %v359
  %v1432 = vunpack.c.l.b16 %v360
  %v1433 = vunpack.c.l.b16 %v361
  %v1434 = vunpack.c.l.b16 %v362
  %v1435 = vunpack.c.l.b16 %v363
  %v1436 = vunpack.c.l.b16 %v364
  %v1437 = vunpack.c.l.b16 %v365
  %v1438 = vunpack.c.l.b16 %v366
  %v1439 = vunpack.c.l.b16 %v367
  %v1440 = vunpack.c.l.b16 %v368
  %v1441 = vunpack.c.l.b16 %v369
  %v1442 = vunpack.c.l.b16 %v370
  %v1443 = vunpack.c.l.b16 %v371
  %v1444 = vunpack.c.l.b16 %v372
  %v1445 = vunpack.c.l.b16 %v373
  %v1446 = vunpack.c.l.b16 %v374
  %v1447 = vunpack.c.l.b16 %v375
  %v1448 = vunpack.c.l.b16 %v376
  %v1449 = vunpack.c.l.b16 %v377
  %v1450 = vunpack.c.l.b16 %v378
  %v1451 = vunpack.c.l.b16 %v379
  %v1452 = vunpack.c.l.b16 %v380
  %v1453 = vunpack.c.l.b16 %v381
  %v1454 = vunpack.c.l.b16 %v382
  %v1455 = vunpack.c.l.b16 %v383
  %v1456 = vunpack.c.l.b16 %v384
  %v1457 = vunpack.c.l.b16 %v385
  %v1458 = vpack.c.b16 %v1203, %v1202
  %v1459 = vpack.c.b16 %v1205, %v1204
  %v1460 = vpack.c.b16 %v1207, %v1206
  %v1461 = vpack.c.b16 %v1209, %v1208
  %v1462 = vpack.c.b16 %v1211, %v1210
  %v1463 = vpack.c.b16 %v1213, %v1212
  %v1464 = vpack.c.b16 %v1215, %v1214
  %v1465 = vpack.c.b16 %v1217, %v1216
  %v1466 = vpack.c.b16 %v1219, %v1218
  %v1467 = vpack.c.b16 %v1221, %v1220
  %v1468 = vpack.c.b16 %v1223, %v1222
  %v1469 = vpack.c.b16 %v1225, %v1224
  %v1470 = vpack.c.b16 %v1227, %v1226
  %v1471 = vpack.c.b16 %v1229, %v1228
  %v1472 = vpack.c.b16 %v1231, %v1230
  %v1473 = vpack.c.b16 %v1233, %v1232
  %v1474 = vpack.c.b16 %v1235, %v1234
  %v1475 = vpack.c.b16 %v1237, %v1236
  %v1476 = vpack.c.b16 %v1239, %v1238
  %v1477 = vpack.c.b16 %v1241, %v1240
  %v1478 = vpack.c.b16 %v1243, %v1242
  %v1479 = vpack.c.b16 %v1245, %v1244
  %v1480 = vpack.c.b16 %v1247, %v1246
  %v1481 = vpack.c.b16 %v1249, %v1248
  %v1482 = vpack.c.b16 %v1251, %v1250
  %v1483 = vpack.c.b16 %v1253, %v1252
  %v1484 = vpack.c.b16 %v1255, %v1254
  %v1485 = vpack.c.b16 %v1257, %v1256
  %v1486 = vpack.c.b16 %v1259, %v1258
  %v1487 = vpack.c.b16 %v1261, %v1260
  %v1488 = vpack.c.b16 %v1263, %v1262
  %v1489 = vpack.c.b16 %v1265, %v1264
  %v1490 = vpack.c.b16 %v1267, %v1266
  %v1491 = vpack.c.b16 %v1269, %v1268
  %v1492 = vpack.c.b16 %v1271, %v1270
  %v1493 = vpack.c.b16 %v1273, %v1272
  %v1494 = vpack.c.b16 %v1275, %v1274
  %v1495 = vpack.c.b16 %v1277, %v1276
  %v1496 = vpack.c.b16 %v1279, %v1278
  %v1497 = vpack.c.b16 %v1281, %v1280
  %v1498 = vpack.c.b16 %v1283, %v1282
  %v1499 = vpack.c.b16 %v1285, %v1284
  %v1500 = vpack.c.b16 %v1287, %v1286
  %v1501 = vpack.c.b16 %v1289, %v1288
  %v1502 = vpack.c.b16 %v1291, %v1290
  %v1503 = vpack.c.b16 %v1293, %v1292
  %v1504 = vpack.c.b16 %v1295, %v1294
  %v1505 = vpack.c.b16 %v1297, %v1296
  %v1506 = vpack.c.b16 %v1299, %v1298
  %v1507 = vpack.c.b16 %v1301, %v1300
  %v1508 = vpack.c.b16 %v1303, %v1302
  %v1509 = vpack.c.b16 %v1305, %v1304
  %v1510 = vpack.c.b16 %v1307, %v1306
  %v1511 = vpack.c.b16 %v1309, %v1308
  %v1512 = vpack.c.b16 %v1311, %v1310
  %v1513 = vpack.c.b16 %v1313, %v1312
  %v1514 = vpack.c.b16 %v1315, %v1314
  %v1515 = vpack.c.b16 %v1317, %v1316
  %v1516 = vpack.c.b16 %v1319, %v1318
  %v1517 = vpack.c.b16 %v1321, %v1320
  %v1518 = vpack.c.b16 %v1323, %v1322
  %v1519 = vpack.c.b16 %v1325, %v1324
  %v1520 = vpack.c.b16 %v1327, %v1326
  %v1521 = vpack.c.b16 %v1329, %v1328
  %v1522 = vpack.c.b16 %v1331, %v1330
  %v1523 = vpack.c.b16 %v1333, %v1332
  %v1524 = vpack.c.b16 %v1335, %v1334
  %v1525 = vpack.c.b16 %v1337, %v1336
  %v1526 = vpack.c.b16 %v1339, %v1338
  %v1527 = vpack.c.b16 %v1341, %v1340
  %v1528 = vpack.c.b16 %v1343, %v1342
  %v1529 = vpack.c.b16 %v1345, %v1344
  %v1530 = vpack.c.b16 %v1347, %v1346
  %v1531 = vpack.c.b16 %v1349, %v1348
  %v1532 = vpack.c.b16 %v1351, %v1350
  %v1533 = vpack.c.b16 %v1353, %v1352
  %v1534 = vpack.c.b16 %v1355, %v1354
  %v1535 = vpack.c.b16 %v1357, %v1356
  %v1536 = vpack.c.b16 %v1359, %v1358
  %v1537 = vpack.c.b16 %v1361, %v1360
  %v1538 = vpack.c.b16 %v1363, %v1362
  %v1539 = vpack.c.b16 %v1365, %v1364
  %v1540 = vpack.c.b16 %v1367, %v1366
  %v1541 = vpack.c.b16 %v1369, %v1368
  %v1542 = vpack.c.b16 %v1371, %v1370
  %v1543 = vpack.c.b16 %v1373, %v1372
  %v1544 = vpack.c.b16 %v1375, %v1374
  %v1545 = vpack.c.b16 %v1377, %v1376
  %v1546 = vpack.c.b16 %v1379, %v1378
  %v1547 = vpack.c.b16 %v1381, %v1380
  %v1548 = vpack.c.b16 %v1383, %v1382
  %v1549 = vpack.c.b16 %v1385, %v1384
  %v1550 = vpack.c.b16 %v1387, %v1386
  %v1551 = vpack.c.b16 %v1389, %v1388
  %v1552 = vpack.c.b16 %v1391, %v1390
  %v1553 = vpack.c.b16 %v1393, %v1392
  %v1554 = vpack.c.b16 %v1395, %v1394
  %v1555 = vpack.c.b16 %v1397, %v1396
  %v1556 = vpack.c.b16 %v1399, %v1398
  %v1557 = vpack.c.b16 %v1401, %v1400
  %v1558 = vpack.c.b16 %v1403, %v1402
  %v1559 = vpack.c.b16 %v1405, %v1404
  %v1560 = vpack.c.b16 %v1407, %v1406
  %v1561 = vpack.c.b16 %v1409, %v1408
  %v1562 = vpack.c.b16 %v1411, %v1410
  %v1563 = vpack.c.b16 %v1413, %v1412
  %v1564 = vpack.c.b16 %v1415, %v1414
  %v1565 = vpack.c.b16 %v1417, %v1416
  %v1566 = vpack.c.b16 %v1419, %v1418
  %v1567 = vpack.c.b16 %v1421, %v1420
  %v1568 = vpack.c.b16 %v1423, %v1422
  %v1569 = vpack.c.b16 %v1425, %v1424
  %v1570 = vpack.c.b16 %v1427, %v1426
  %v1571 = vpack.c.b16 %v1429, %v1428
  %v1572 = vpack.c.b16 %v1431, %v1430
  %v1573 = vpack.c.b16 %v1433, %v1432
  %v1574 = vpack.c.b16 %v1435, %v1434
  %v1575 = vpack.c.b16 %v1437, %v1436
  %v1576 = vpack.c.b16 %v1439, %v1438
  %v1577 = vpack.c.b16 %v1441, %v1440
  %v1578 = vpack.c.b16 %v1443, %v1442
  %v1579 = vpack.c.b16 %v1445, %v1444
  %v1580 = vpack.c.b16 %v1447, %v1446
  %v1581 = vpack.c.b16 %v1449, %v1448
  %v1582 = vpack.c.b16 %v1451, %v1450
  %v1583 = vpack.c.b16 %v1453, %v1452
  %v1584 = vpack.c.b16 %v1455, %v1454
  %v1585 = vpack.c.b16 %v1457, %v1456
  %1714 = vmatprep.subr.bf16.mxu0 0
  %1715 = vmatpush1.bf16.msra.mxu0 %v1458
  %1716 = vmatprep.subr.bf16.mxu0 0
  %1717 = vmatpush1.bf16.msra.mxu0 %v1459
  %1718 = vmatprep.subr.bf16.mxu0 0
  %1719 = vmatpush1.bf16.msra.mxu0 %v1460
  %1720 = vmatprep.subr.bf16.mxu0 0
  %1721 = vmatpush1.bf16.msra.mxu0 %v1461
  %1722 = vmatprep.subr.bf16.mxu0 0
  %1723 = vmatpush1.bf16.msra.mxu0 %v1462
  %1724 = vmatprep.subr.bf16.mxu0 0
  %1725 = vmatpush1.bf16.msra.mxu0 %v1463
  %1726 = vmatprep.subr.bf16.mxu0 0
  %1727 = vmatpush1.bf16.msra.mxu0 %v1464
  %1728 = vmatprep.subr.bf16.mxu0 0
  %1729 = vmatpush1.bf16.msra.mxu0 %v1465
  %1730 = vmatprep.subr.bf16.mxu0 0
  %1731 = vmatpush1.bf16.msra.mxu0 %v1466
  %1732 = vmatprep.subr.bf16.mxu0 0
  %1733 = vmatpush1.bf16.msra.mxu0 %v1467
  %1734 = vmatprep.subr.bf16.mxu0 0
  %1735 = vmatpush1.bf16.msra.mxu0 %v1468
  %1736 = vmatprep.subr.bf16.mxu0 0
  %1737 = vmatpush1.bf16.msra.mxu0 %v1469
  %1738 = vmatprep.subr.bf16.mxu0 0
  %1739 = vmatpush1.bf16.msra.mxu0 %v1470
  %1740 = vmatprep.subr.bf16.mxu0 0
  %1741 = vmatpush1.bf16.msra.mxu0 %v1471
  %1742 = vmatprep.subr.bf16.mxu0 0
  %1743 = vmatpush1.bf16.msra.mxu0 %v1472
  %1744 = vmatprep.subr.bf16.mxu0 0
  %1745 = vmatpush1.bf16.msra.mxu0 %v1473
  %1746 = vmatprep.mubr.bf16.mxu0 %v723
  %1747 = vmatmul.mubr.bf16.gmra.mrb[0].mxu0 %v722
  %v1748 = vpop.f32.mrb[0].mxu0
  %v1749 = vadd.f32 0.0, %v1748
  %v1750 = vpop.f32.mrb[0].mxu0
  %v1751 = vpop.f32.mrb[0].mxu0
  %v1752 = vadd.f32 0.0, %v1751
  %v1753 = vpop.f32.mrb[0].mxu0
  %1754 = vmatprep.mubr.bf16.mxu0 %v739
  %1755 = vmatmul.mubr.bf16.gmra.mrb[0].mxu0 %v738
  %v1756 = vpop.f32.mrb[0].mxu0
  %v1757 = vadd.f32 0.0, %v1756
  %v1758 = vpop.f32.mrb[0].mxu0
  %v1759 = vpop.f32.mrb[0].mxu0
  %v1760 = vadd.f32 0.0, %v1759
  %v1761 = vpop.f32.mrb[0].mxu0
  %1762 = vmatprep.mubr.bf16.mxu0 %v755
  %1763 = vmatmul.mubr.bf16.gmra.mrb[0].mxu0 %v754
  %v1764 = vpop.f32.mrb[0].mxu0
  %v1765 = vadd.f32 0.0, %v1764
  %v1766 = vpop.f32.mrb[0].mxu0
  %v1767 = vpop.f32.mrb[0].mxu0
  %v1768 = vadd.f32 0.0, %v1767
  %v1769 = vpop.f32.mrb[0].mxu0
  %1770 = vmatprep.mubr.bf16.mxu0 %v771
  %1771 = vmatmul.mubr.bf16.gmra.mrb[0].mxu0 %v770
  %v1772 = vpop.f32.mrb[0].mxu0
  %v1773 = vadd.f32 0.0, %v1772
  %v1774 = vpop.f32.mrb[0].mxu0
  %v1775 = vpop.f32.mrb[0].mxu0
  %v1776 = vadd.f32 0.0, %v1775
  %v1777 = vpop.f32.mrb[0].mxu0
  %1778 = vmatprep.mubr.bf16.mxu0 %v787
  %1779 = vmatmul.mubr.bf16.gmra.mrb[0].mxu0 %v786
  %v1780 = vpop.f32.mrb[0].mxu0
  %v1781 = vadd.f32 0.0, %v1780
  %v1782 = vpop.f32.mrb[0].mxu0
  %v1783 = vpop.f32.mrb[0].mxu0
  %v1784 = vadd.f32 0.0, %v1783
  %v1785 = vpop.f32.mrb[0].mxu0
  %1786 = vmatprep.mubr.bf16.mxu0 %v803
  %1787 = vmatmul.mubr.bf16.gmra.mrb[0].mxu0 %v802
  %v1788 = vpop.f32.mrb[0].mxu0
  %v1789 = vadd.f32 0.0, %v1788
  %v1790 = vpop.f32.mrb[0].mxu0
  %v1791 = vpop.f32.mrb[0].mxu0
  %v1792 = vadd.f32 0.0, %v1791
  %v1793 = vpop.f32.mrb[0].mxu0
  %1794 = vmatprep.mubr.bf16.mxu0 %v819
  %1795 = vmatmul.mubr.bf16.gmra.mrb[0].mxu0 %v818
  %v1796 = vpop.f32.mrb[0].mxu0
  %v1797 = vadd.f32 0.0, %v1796
  %v1798 = vpop.f32.mrb[0].mxu0
  %v1799 = vpop.f32.mrb[0].mxu0
  %v1800 = vadd.f32 0.0, %v1799
  %v1801 = vpop.f32.mrb[0].mxu0
  %1802 = vdwg.mxu0
  %1803 = vmatprep.subr.bf16.mxu0 0
  %1804 = vmatpush1.bf16.msra.mxu0 %v1474
  %1805 = vmatprep.subr.bf16.mxu0 0
  %1806 = vmatpush1.bf16.msra.mxu0 %v1475
  %1807 = vmatprep.subr.bf16.mxu0 0
  %1808 = vmatpush1.bf16.msra.mxu0 %v1476
  %1809 = vmatprep.subr.bf16.mxu0 0
  %1810 = vmatpush1.bf16.msra.mxu0 %v1477
  %1811 = vmatprep.subr.bf16.mxu0 0
  %1812 = vmatpush1.bf16.msra.mxu0 %v1478
  %1813 = vmatprep.subr.bf16.mxu0 0
  %1814 = vmatpush1.bf16.msra.mxu0 %v1479
  %1815 = vmatprep.subr.bf16.mxu0 0
  %1816 = vmatpush1.bf16.msra.mxu0 %v1480
  %1817 = vmatprep.subr.bf16.mxu0 0
  %1818 = vmatpush1.bf16.msra.mxu0 %v1481
  %1819 = vmatprep.subr.bf16.mxu0 0
  %1820 = vmatpush1.bf16.msra.mxu0 %v1482
  %1821 = vmatprep.subr.bf16.mxu0 0
  %1822 = vmatpush1.bf16.msra.mxu0 %v1483
  %1823 = vmatprep.subr.bf16.mxu0 0
  %1824 = vmatpush1.bf16.msra.mxu0 %v1484
  %1825 = vmatprep.subr.bf16.mxu0 0
  %1826 = vmatpush1.bf16.msra.mxu0 %v1485
  %1827 = vmatprep.subr.bf16.mxu0 0
  %1828 = vmatpush1.bf16.msra.mxu0 %v1486
  %1829 = vmatprep.subr.bf16.mxu0 0
  %1830 = vmatpush1.bf16.msra.mxu0 %v1487
  %1831 = vmatprep.subr.bf16.mxu0 0
  %1832 = vmatpush1.bf16.msra.mxu0 %v1488
  %1833 = vmatprep.subr.bf16.mxu0 0
  %1834 = vmatpush1.bf16.msra.mxu0 %v1489
  %1835 = vmatprep.mubr.bf16.mxu0 %v725
  %1836 = vmatmul.mubr.bf16.gmra.mrb[0].mxu0 %v724
  %v1837 = vpop.f32.mrb[0].mxu0
  %v1838 = vadd.f32 %v1749, %v1837
  %v1839 = vpop.f32.mrb[0].mxu0
  %v1840 = vpop.f32.mrb[0].mxu0
  %v1841 = vadd.f32 %v1752, %v1840
  %v1842 = vpop.f32.mrb[0].mxu0
  %1843 = vmatprep.mubr.bf16.mxu0 %v741
  %1844 = vmatmul.mubr.bf16.gmra.mrb[0].mxu0 %v740
  %v1845 = vpop.f32.mrb[0].mxu0
  %v1846 = vadd.f32 %v1757, %v1845
  %v1847 = vpop.f32.mrb[0].mxu0
  %v1848 = vpop.f32.mrb[0].mxu0
  %v1849 = vadd.f32 %v1760, %v1848
  %v1850 = vpop.f32.mrb[0].mxu0
  %1851 = vmatprep.mubr.bf16.mxu0 %v757
  %1852 = vmatmul.mubr.bf16.gmra.mrb[0].mxu0 %v756
  %v1853 = vpop.f32.mrb[0].mxu0
  %v1854 = vadd.f32 %v1765, %v1853
  %v1855 = vpop.f32.mrb[0].mxu0
  %v1856 = vpop.f32.mrb[0].mxu0
  %v1857 = vadd.f32 %v1768, %v1856
  %v1858 = vpop.f32.mrb[0].mxu0
  %1859 = vmatprep.mubr.bf16.mxu0 %v773
  %1860 = vmatmul.mubr.bf16.gmra.mrb[0].mxu0 %v772
  %v1861 = vpop.f32.mrb[0].mxu0
  %v1862 = vadd.f32 %v1773, %v1861
  %v1863 = vpop.f32.mrb[0].mxu0
  %v1864 = vpop.f32.mrb[0].mxu0
  %v1865 = vadd.f32 %v1776, %v1864
  %v1866 = vpop.f32.mrb[0].mxu0
  %1867 = vmatprep.mubr.bf16.mxu0 %v789
  %1868 = vmatmul.mubr.bf16.gmra.mrb[0].mxu0 %v788
  %v1869 = vpop.f32.mrb[0].mxu0
  %v1870 = vadd.f32 %v1781, %v1869
  %v1871 = vpop.f32.mrb[0].mxu0
  %v1872 = vpop.f32.mrb[0].mxu0
  %v1873 = vadd.f32 %v1784, %v1872
  %v1874 = vpop.f32.mrb[0].mxu0
  %1875 = vmatprep.mubr.bf16.mxu0 %v805
  %1876 = vmatmul.mubr.bf16.gmra.mrb[0].mxu0 %v804
  %v1877 = vpop.f32.mrb[0].mxu0
  %v1878 = vadd.f32 %v1789, %v1877
  %v1879 = vpop.f32.mrb[0].mxu0
  %v1880 = vpop.f32.mrb[0].mxu0
  %v1881 = vadd.f32 %v1792, %v1880
  %v1882 = vpop.f32.mrb[0].mxu0
  %1883 = vmatprep.mubr.bf16.mxu0 %v821
  %1884 = vmatmul.mubr.bf16.gmra.mrb[0].mxu0 %v820
  %v1885 = vpop.f32.mrb[0].mxu0
  %v1886 = vadd.f32 %v1797, %v1885
  %v1887 = vpop.f32.mrb[0].mxu0
  %v1888 = vpop.f32.mrb[0].mxu0
  %v1889 = vadd.f32 %v1800, %v1888
  %v1890 = vpop.f32.mrb[0].mxu0
  %1891 = vdwg.mxu0
  %1892 = vmatprep.subr.bf16.mxu0 0
  %1893 = vmatpush1.bf16.msra.mxu0 %v1490
  %1894 = vmatprep.subr.bf16.mxu0 0
  %1895 = vmatpush1.bf16.msra.mxu0 %v1491
  %1896 = vmatprep.subr.bf16.mxu0 0
  %1897 = vmatpush1.bf16.msra.mxu0 %v1492
  %1898 = vmatprep.subr.bf16.mxu0 0
  %1899 = vmatpush1.bf16.msra.mxu0 %v1493
  %1900 = vmatprep.subr.bf16.mxu0 0
  %1901 = vmatpush1.bf16.msra.mxu0 %v1494
  %1902 = vmatprep.subr.bf16.mxu0 0
  %1903 = vmatpush1.bf16.msra.mxu0 %v1495
  %1904 = vmatprep.subr.bf16.mxu0 0
  %1905 = vmatpush1.bf16.msra.mxu0 %v1496
  %1906 = vmatprep.subr.bf16.mxu0 0
  %1907 = vmatpush1.bf16.msra.mxu0 %v1497
  %1908 = vmatprep.subr.bf16.mxu0 0
  %1909 = vmatpush1.bf16.msra.mxu0 %v1498
  %1910 = vmatprep.subr.bf16.mxu0 0
  %1911 = vmatpush1.bf16.msra.mxu0 %v1499
  %1912 = vmatprep.subr.bf16.mxu0 0
  %1913 = vmatpush1.bf16.msra.mxu0 %v1500
  %1914 = vmatprep.subr.bf16.mxu0 0
  %1915 = vmatpush1.bf16.msra.mxu0 %v1501
  %1916 = vmatprep.subr.bf16.mxu0 0
  %1917 = vmatpush1.bf16.msra.mxu0 %v1502
  %1918 = vmatprep.subr.bf16.mxu0 0
  %1919 = vmatpush1.bf16.msra.mxu0 %v1503
  %1920 = vmatprep.subr.bf16.mxu0 0
  %1921 = vmatpush1.bf16.msra.mxu0 %v1504
  %1922 = vmatprep.subr.bf16.mxu0 0
  %1923 = vmatpush1.bf16.msra.mxu0 %v1505
  %1924 = vmatprep.mubr.bf16.mxu0 %v727
  %1925 = vmatmul.mubr.bf16.gmra.mrb[0].mxu0 %v726
  %v1926 = vpop.f32.mrb[0].mxu0
  %v1927 = vadd.f32 %v1838, %v1926
  %v1928 = vpop.f32.mrb[0].mxu0
  %v1929 = vpop.f32.mrb[0].mxu0
  %v1930 = vadd.f32 %v1841, %v1929
  %v1931 = vpop.f32.mrb[0].mxu0
  %1932 = vmatprep.mubr.bf16.mxu0 %v743
  %1933 = vmatmul.mubr.bf16.gmra.mrb[0].mxu0 %v742
  %v1934 = vpop.f32.mrb[0].mxu0
  %v1935 = vadd.f32 %v1846, %v1934
  %v1936 = vpop.f32.mrb[0].mxu0
  %v1937 = vpop.f32.mrb[0].mxu0
  %v1938 = vadd.f32 %v1849, %v1937
  %v1939 = vpop.f32.mrb[0].mxu0
  %1940 = vmatprep.mubr.bf16.mxu0 %v759
  %1941 = vmatmul.mubr.bf16.gmra.mrb[0].mxu0 %v758
  %v1942 = vpop.f32.mrb[0].mxu0
  %v1943 = vadd.f32 %v1854, %v1942
  %v1944 = vpop.f32.mrb[0].mxu0
  %v1945 = vpop.f32.mrb[0].mxu0
  %v1946 = vadd.f32 %v1857, %v1945
  %v1947 = vpop.f32.mrb[0].mxu0
  %1948 = vmatprep.mubr.bf16.mxu0 %v775
  %1949 = vmatmul.mubr.bf16.gmra.mrb[0].mxu0 %v774
  %v1950 = vpop.f32.mrb[0].mxu0
  %v1951 = vadd.f32 %v1862, %v1950
  %v1952 = vpop.f32.mrb[0].mxu0
  %v1953 = vpop.f32.mrb[0].mxu0
  %v1954 = vadd.f32 %v1865, %v1953
  %v1955 = vpop.f32.mrb[0].mxu0
  %1956 = vmatprep.mubr.bf16.mxu0 %v791
  %1957 = vmatmul.mubr.bf16.gmra.mrb[0].mxu0 %v790
  %v1958 = vpop.f32.mrb[0].mxu0
  %v1959 = vadd.f32 %v1870, %v1958
  %v1960 = vpop.f32.mrb[0].mxu0
  %v1961 = vpop.f32.mrb[0].mxu0
  %v1962 = vadd.f32 %v1873, %v1961
  %v1963 = vpop.f32.mrb[0].mxu0
  %1964 = vmatprep.mubr.bf16.mxu0 %v807
  %1965 = vmatmul.mubr.bf16.gmra.mrb[0].mxu0 %v806
  %v1966 = vpop.f32.mrb[0].mxu0
  %v1967 = vadd.f32 %v1878, %v1966
  %v1968 = vpop.f32.mrb[0].mxu0
  %v1969 = vpop.f32.mrb[0].mxu0
  %v1970 = vadd.f32 %v1881, %v1969
  %v1971 = vpop.f32.mrb[0].mxu0
  %1972 = vmatprep.mubr.bf16.mxu0 %v823
  %1973 = vmatmul.mubr.bf16.gmra.mrb[0].mxu0 %v822
  %v1974 = vpop.f32.mrb[0].mxu0
  %v1975 = vadd.f32 %v1886, %v1974
  %v1976 = vpop.f32.mrb[0].mxu0
  %v1977 = vpop.f32.mrb[0].mxu0
  %v1978 = vadd.f32 %v1889, %v1977
  %v1979 = vpop.f32.mrb[0].mxu0
  %1980 = vdwg.mxu0
  %1981 = vmatprep.subr.bf16.mxu0 0
  %1982 = vmatpush1.bf16.msra.mxu0 %v1506
  %1983 = vmatprep.subr.bf16.mxu0 0
  %1984 = vmatpush1.bf16.msra.mxu0 %v1507
  %1985 = vmatprep.subr.bf16.mxu0 0
  %1986 = vmatpush1.bf16.msra.mxu0 %v1508
  %1987 = vmatprep.subr.bf16.mxu0 0
  %1988 = vmatpush1.bf16.msra.mxu0 %v1509
  %1989 = vmatprep.subr.bf16.mxu0 0
  %1990 = vmatpush1.bf16.msra.mxu0 %v1510
  %1991 = vmatprep.subr.bf16.mxu0 0
  %1992 = vmatpush1.bf16.msra.mxu0 %v1511
  %1993 = vmatprep.subr.bf16.mxu0 0
  %1994 = vmatpush1.bf16.msra.mxu0 %v1512
  %1995 = vmatprep.subr.bf16.mxu0 0
  %1996 = vmatpush1.bf16.msra.mxu0 %v1513
  %1997 = vmatprep.subr.bf16.mxu0 0
  %1998 = vmatpush1.bf16.msra.mxu0 %v1514
  %1999 = vmatprep.subr.bf16.mxu0 0
  %2000 = vmatpush1.bf16.msra.mxu0 %v1515
  %2001 = vmatprep.subr.bf16.mxu0 0
  %2002 = vmatpush1.bf16.msra.mxu0 %v1516
  %2003 = vmatprep.subr.bf16.mxu0 0
  %2004 = vmatpush1.bf16.msra.mxu0 %v1517
  %2005 = vmatprep.subr.bf16.mxu0 0
  %2006 = vmatpush1.bf16.msra.mxu0 %v1518
  %2007 = vmatprep.subr.bf16.mxu0 0
  %2008 = vmatpush1.bf16.msra.mxu0 %v1519
  %2009 = vmatprep.subr.bf16.mxu0 0
  %2010 = vmatpush1.bf16.msra.mxu0 %v1520
  %2011 = vmatprep.subr.bf16.mxu0 0
  %2012 = vmatpush1.bf16.msra.mxu0 %v1521
  %2013 = vmatprep.mubr.bf16.mxu0 %v729
  %2014 = vmatmul.mubr.bf16.gmra.mrb[0].mxu0 %v728
  %v2015 = vpop.f32.mrb[0].mxu0
  %v2016 = vadd.f32 %v1927, %v2015
  %v2017 = vpop.f32.mrb[0].mxu0
  %v2018 = vpop.f32.mrb[0].mxu0
  %v2019 = vadd.f32 %v1930, %v2018
  %v2020 = vpop.f32.mrb[0].mxu0
  %2021 = vmatprep.mubr.bf16.mxu0 %v745
  %2022 = vmatmul.mubr.bf16.gmra.mrb[0].mxu0 %v744
  %v2023 = vpop.f32.mrb[0].mxu0
  %v2024 = vadd.f32 %v1935, %v2023
  %v2025 = vpop.f32.mrb[0].mxu0
  %v2026 = vpop.f32.mrb[0].mxu0
  %v2027 = vadd.f32 %v1938, %v2026
  %v2028 = vpop.f32.mrb[0].mxu0
  %2029 = vmatprep.mubr.bf16.mxu0 %v761
  %2030 = vmatmul.mubr.bf16.gmra.mrb[0].mxu0 %v760
  %v2031 = vpop.f32.mrb[0].mxu0
  %v2032 = vadd.f32 %v1943, %v2031
  %v2033 = vpop.f32.mrb[0].mxu0
  %v2034 = vpop.f32.mrb[0].mxu0
  %v2035 = vadd.f32 %v1946, %v2034
  %v2036 = vpop.f32.mrb[0].mxu0
  %2037 = vmatprep.mubr.bf16.mxu0 %v777
  %2038 = vmatmul.mubr.bf16.gmra.mrb[0].mxu0 %v776
  %v2039 = vpop.f32.mrb[0].mxu0
  %v2040 = vadd.f32 %v1951, %v2039
  %v2041 = vpop.f32.mrb[0].mxu0
  %v2042 = vpop.f32.mrb[0].mxu0
  %v2043 = vadd.f32 %v1954, %v2042
  %v2044 = vpop.f32.mrb[0].mxu0
  %2045 = vmatprep.mubr.bf16.mxu0 %v793
  %2046 = vmatmul.mubr.bf16.gmra.mrb[0].mxu0 %v792
  %v2047 = vpop.f32.mrb[0].mxu0
  %v2048 = vadd.f32 %v1959, %v2047
  %v2049 = vpop.f32.mrb[0].mxu0
  %v2050 = vpop.f32.mrb[0].mxu0
  %v2051 = vadd.f32 %v1962, %v2050
  %v2052 = vpop.f32.mrb[0].mxu0
  %2053 = vmatprep.mubr.bf16.mxu0 %v809
  %2054 = vmatmul.mubr.bf16.gmra.mrb[0].mxu0 %v808
  %v2055 = vpop.f32.mrb[0].mxu0
  %v2056 = vadd.f32 %v1967, %v2055
  %v2057 = vpop.f32.mrb[0].mxu0
  %v2058 = vpop.f32.mrb[0].mxu0
  %v2059 = vadd.f32 %v1970, %v2058
  %v2060 = vpop.f32.mrb[0].mxu0
  %2061 = vmatprep.mubr.bf16.mxu0 %v825
  %2062 = vmatmul.mubr.bf16.gmra.mrb[0].mxu0 %v824
  %v2063 = vpop.f32.mrb[0].mxu0
  %v2064 = vadd.f32 %v1975, %v2063
  %v2065 = vpop.f32.mrb[0].mxu0
  %v2066 = vpop.f32.mrb[0].mxu0
  %v2067 = vadd.f32 %v1978, %v2066
  %v2068 = vpop.f32.mrb[0].mxu0
  %2069 = vdwg.mxu0
  %2070 = vmatprep.subr.bf16.mxu0 0
  %2071 = vmatpush1.bf16.msra.mxu0 %v1522
  %2072 = vmatprep.subr.bf16.mxu0 0
  %2073 = vmatpush1.bf16.msra.mxu0 %v1523
  %2074 = vmatprep.subr.bf16.mxu0 0
  %2075 = vmatpush1.bf16.msra.mxu0 %v1524
  %2076 = vmatprep.subr.bf16.mxu0 0
  %2077 = vmatpush1.bf16.msra.mxu0 %v1525
  %2078 = vmatprep.subr.bf16.mxu0 0
  %2079 = vmatpush1.bf16.msra.mxu0 %v1526
  %2080 = vmatprep.subr.bf16.mxu0 0
  %2081 = vmatpush1.bf16.msra.mxu0 %v1527
  %2082 = vmatprep.subr.bf16.mxu0 0
  %2083 = vmatpush1.bf16.msra.mxu0 %v1528
  %2084 = vmatprep.subr.bf16.mxu0 0
  %2085 = vmatpush1.bf16.msra.mxu0 %v1529
  %2086 = vmatprep.subr.bf16.mxu0 0
  %2087 = vmatpush1.bf16.msra.mxu0 %v1530
  %2088 = vmatprep.subr.bf16.mxu0 0
  %2089 = vmatpush1.bf16.msra.mxu0 %v1531
  %2090 = vmatprep.subr.bf16.mxu0 0
  %2091 = vmatpush1.bf16.msra.mxu0 %v1532
  %2092 = vmatprep.subr.bf16.mxu0 0
  %2093 = vmatpush1.bf16.msra.mxu0 %v1533
  %2094 = vmatprep.subr.bf16.mxu0 0
  %2095 = vmatpush1.bf16.msra.mxu0 %v1534
  %2096 = vmatprep.subr.bf16.mxu0 0
  %2097 = vmatpush1.bf16.msra.mxu0 %v1535
  %2098 = vmatprep.subr.bf16.mxu0 0
  %2099 = vmatpush1.bf16.msra.mxu0 %v1536
  %2100 = vmatprep.subr.bf16.mxu0 0
  %2101 = vmatpush1.bf16.msra.mxu0 %v1537
  %2102 = vmatprep.mubr.bf16.mxu0 %v731
  %2103 = vmatmul.mubr.bf16.gmra.mrb[0].mxu0 %v730
  %v2104 = vpop.f32.mrb[0].mxu0
  %v2105 = vadd.f32 %v2016, %v2104
  %v2106 = vpop.f32.mrb[0].mxu0
  %v2107 = vpop.f32.mrb[0].mxu0
  %v2108 = vadd.f32 %v2019, %v2107
  %v2109 = vpop.f32.mrb[0].mxu0
  %2110 = vmatprep.mubr.bf16.mxu0 %v747
  %2111 = vmatmul.mubr.bf16.gmra.mrb[0].mxu0 %v746
  %v2112 = vpop.f32.mrb[0].mxu0
  %v2113 = vadd.f32 %v2024, %v2112
  %v2114 = vpop.f32.mrb[0].mxu0
  %v2115 = vpop.f32.mrb[0].mxu0
  %v2116 = vadd.f32 %v2027, %v2115
  %v2117 = vpop.f32.mrb[0].mxu0
  %2118 = vmatprep.mubr.bf16.mxu0 %v763
  %2119 = vmatmul.mubr.bf16.gmra.mrb[0].mxu0 %v762
  %v2120 = vpop.f32.mrb[0].mxu0
  %v2121 = vadd.f32 %v2032, %v2120
  %v2122 = vpop.f32.mrb[0].mxu0
  %v2123 = vpop.f32.mrb[0].mxu0
  %v2124 = vadd.f32 %v2035, %v2123
  %v2125 = vpop.f32.mrb[0].mxu0
  %2126 = vmatprep.mubr.bf16.mxu0 %v779
  %2127 = vmatmul.mubr.bf16.gmra.mrb[0].mxu0 %v778
  %v2128 = vpop.f32.mrb[0].mxu0
  %v2129 = vadd.f32 %v2040, %v2128
  %v2130 = vpop.f32.mrb[0].mxu0
  %v2131 = vpop.f32.mrb[0].mxu0
  %v2132 = vadd.f32 %v2043, %v2131
  %v2133 = vpop.f32.mrb[0].mxu0
  %2134 = vmatprep.mubr.bf16.mxu0 %v795
  %2135 = vmatmul.mubr.bf16.gmra.mrb[0].mxu0 %v794
  %v2136 = vpop.f32.mrb[0].mxu0
  %v2137 = vadd.f32 %v2048, %v2136
  %v2138 = vpop.f32.mrb[0].mxu0
  %v2139 = vpop.f32.mrb[0].mxu0
  %v2140 = vadd.f32 %v2051, %v2139
  %v2141 = vpop.f32.mrb[0].mxu0
  %2142 = vmatprep.mubr.bf16.mxu0 %v811
  %2143 = vmatmul.mubr.bf16.gmra.mrb[0].mxu0 %v810
  %v2144 = vpop.f32.mrb[0].mxu0
  %v2145 = vadd.f32 %v2056, %v2144
  %v2146 = vpop.f32.mrb[0].mxu0
  %v2147 = vpop.f32.mrb[0].mxu0
  %v2148 = vadd.f32 %v2059, %v2147
  %v2149 = vpop.f32.mrb[0].mxu0
  %2150 = vmatprep.mubr.bf16.mxu0 %v827
  %2151 = vmatmul.mubr.bf16.gmra.mrb[0].mxu0 %v826
  %v2152 = vpop.f32.mrb[0].mxu0
  %v2153 = vadd.f32 %v2064, %v2152
  %v2154 = vpop.f32.mrb[0].mxu0
  %v2155 = vpop.f32.mrb[0].mxu0
  %v2156 = vadd.f32 %v2067, %v2155
  %v2157 = vpop.f32.mrb[0].mxu0
  %2158 = vdwg.mxu0
  %2159 = vmatprep.subr.bf16.mxu0 0
  %2160 = vmatpush1.bf16.msra.mxu0 %v1538
  %2161 = vmatprep.subr.bf16.mxu0 0
  %2162 = vmatpush1.bf16.msra.mxu0 %v1539
  %2163 = vmatprep.subr.bf16.mxu0 0
  %2164 = vmatpush1.bf16.msra.mxu0 %v1540
  %2165 = vmatprep.subr.bf16.mxu0 0
  %2166 = vmatpush1.bf16.msra.mxu0 %v1541
  %2167 = vmatprep.subr.bf16.mxu0 0
  %2168 = vmatpush1.bf16.msra.mxu0 %v1542
  %2169 = vmatprep.subr.bf16.mxu0 0
  %2170 = vmatpush1.bf16.msra.mxu0 %v1543
  %2171 = vmatprep.subr.bf16.mxu0 0
  %2172 = vmatpush1.bf16.msra.mxu0 %v1544
  %2173 = vmatprep.subr.bf16.mxu0 0
  %2174 = vmatpush1.bf16.msra.mxu0 %v1545
  %2175 = vmatprep.subr.bf16.mxu0 0
  %2176 = vmatpush1.bf16.msra.mxu0 %v1546
  %2177 = vmatprep.subr.bf16.mxu0 0
  %2178 = vmatpush1.bf16.msra.mxu0 %v1547
  %2179 = vmatprep.subr.bf16.mxu0 0
  %2180 = vmatpush1.bf16.msra.mxu0 %v1548
  %2181 = vmatprep.subr.bf16.mxu0 0
  %2182 = vmatpush1.bf16.msra.mxu0 %v1549
  %2183 = vmatprep.subr.bf16.mxu0 0
  %2184 = vmatpush1.bf16.msra.mxu0 %v1550
  %2185 = vmatprep.subr.bf16.mxu0 0
  %2186 = vmatpush1.bf16.msra.mxu0 %v1551
  %2187 = vmatprep.subr.bf16.mxu0 0
  %2188 = vmatpush1.bf16.msra.mxu0 %v1552
  %2189 = vmatprep.subr.bf16.mxu0 0
  %2190 = vmatpush1.bf16.msra.mxu0 %v1553
  %2191 = vmatprep.mubr.bf16.mxu0 %v733
  %2192 = vmatmul.mubr.bf16.gmra.mrb[0].mxu0 %v732
  %v2193 = vpop.f32.mrb[0].mxu0
  %v2194 = vadd.f32 %v2105, %v2193
  %v2195 = vpop.f32.mrb[0].mxu0
  %v2196 = vpop.f32.mrb[0].mxu0
  %v2197 = vadd.f32 %v2108, %v2196
  %v2198 = vpop.f32.mrb[0].mxu0
  %2199 = vmatprep.mubr.bf16.mxu0 %v749
  %2200 = vmatmul.mubr.bf16.gmra.mrb[0].mxu0 %v748
  %v2201 = vpop.f32.mrb[0].mxu0
  %v2202 = vadd.f32 %v2113, %v2201
  %v2203 = vpop.f32.mrb[0].mxu0
  %v2204 = vpop.f32.mrb[0].mxu0
  %v2205 = vadd.f32 %v2116, %v2204
  %v2206 = vpop.f32.mrb[0].mxu0
  %2207 = vmatprep.mubr.bf16.mxu0 %v765
  %2208 = vmatmul.mubr.bf16.gmra.mrb[0].mxu0 %v764
  %v2209 = vpop.f32.mrb[0].mxu0
  %v2210 = vadd.f32 %v2121, %v2209
  %v2211 = vpop.f32.mrb[0].mxu0
  %v2212 = vpop.f32.mrb[0].mxu0
  %v2213 = vadd.f32 %v2124, %v2212
  %v2214 = vpop.f32.mrb[0].mxu0
  %2215 = vmatprep.mubr.bf16.mxu0 %v781
  %2216 = vmatmul.mubr.bf16.gmra.mrb[0].mxu0 %v780
  %v2217 = vpop.f32.mrb[0].mxu0
  %v2218 = vadd.f32 %v2129, %v2217
  %v2219 = vpop.f32.mrb[0].mxu0
  %v2220 = vpop.f32.mrb[0].mxu0
  %v2221 = vadd.f32 %v2132, %v2220
  %v2222 = vpop.f32.mrb[0].mxu0
  %2223 = vmatprep.mubr.bf16.mxu0 %v797
  %2224 = vmatmul.mubr.bf16.gmra.mrb[0].mxu0 %v796
  %v2225 = vpop.f32.mrb[0].mxu0
  %v2226 = vadd.f32 %v2137, %v2225
  %v2227 = vpop.f32.mrb[0].mxu0
  %v2228 = vpop.f32.mrb[0].mxu0
  %v2229 = vadd.f32 %v2140, %v2228
  %v2230 = vpop.f32.mrb[0].mxu0
  %2231 = vmatprep.mubr.bf16.mxu0 %v813
  %2232 = vmatmul.mubr.bf16.gmra.mrb[0].mxu0 %v812
  %v2233 = vpop.f32.mrb[0].mxu0
  %v2234 = vadd.f32 %v2145, %v2233
  %v2235 = vpop.f32.mrb[0].mxu0
  %v2236 = vpop.f32.mrb[0].mxu0
  %v2237 = vadd.f32 %v2148, %v2236
  %v2238 = vpop.f32.mrb[0].mxu0
  %2239 = vmatprep.mubr.bf16.mxu0 %v829
  %2240 = vmatmul.mubr.bf16.gmra.mrb[0].mxu0 %v828
  %v2241 = vpop.f32.mrb[0].mxu0
  %v2242 = vadd.f32 %v2153, %v2241
  %v2243 = vpop.f32.mrb[0].mxu0
  %v2244 = vpop.f32.mrb[0].mxu0
  %v2245 = vadd.f32 %v2156, %v2244
  %v2246 = vpop.f32.mrb[0].mxu0
  %2247 = vdwg.mxu0
  %2248 = vmatprep.subr.bf16.mxu0 0
  %2249 = vmatpush1.bf16.msra.mxu0 %v1554
  %2250 = vmatprep.subr.bf16.mxu0 0
  %2251 = vmatpush1.bf16.msra.mxu0 %v1555
  %2252 = vmatprep.subr.bf16.mxu0 0
  %2253 = vmatpush1.bf16.msra.mxu0 %v1556
  %2254 = vmatprep.subr.bf16.mxu0 0
  %2255 = vmatpush1.bf16.msra.mxu0 %v1557
  %2256 = vmatprep.subr.bf16.mxu0 0
  %2257 = vmatpush1.bf16.msra.mxu0 %v1558
  %2258 = vmatprep.subr.bf16.mxu0 0
  %2259 = vmatpush1.bf16.msra.mxu0 %v1559
  %2260 = vmatprep.subr.bf16.mxu0 0
  %2261 = vmatpush1.bf16.msra.mxu0 %v1560
  %2262 = vmatprep.subr.bf16.mxu0 0
  %2263 = vmatpush1.bf16.msra.mxu0 %v1561
  %2264 = vmatprep.subr.bf16.mxu0 0
  %2265 = vmatpush1.bf16.msra.mxu0 %v1562
  %2266 = vmatprep.subr.bf16.mxu0 0
  %2267 = vmatpush1.bf16.msra.mxu0 %v1563
  %2268 = vmatprep.subr.bf16.mxu0 0
  %2269 = vmatpush1.bf16.msra.mxu0 %v1564
  %2270 = vmatprep.subr.bf16.mxu0 0
  %2271 = vmatpush1.bf16.msra.mxu0 %v1565
  %2272 = vmatprep.subr.bf16.mxu0 0
  %2273 = vmatpush1.bf16.msra.mxu0 %v1566
  %2274 = vmatprep.subr.bf16.mxu0 0
  %2275 = vmatpush1.bf16.msra.mxu0 %v1567
  %2276 = vmatprep.subr.bf16.mxu0 0
  %2277 = vmatpush1.bf16.msra.mxu0 %v1568
  %2278 = vmatprep.subr.bf16.mxu0 0
  %2279 = vmatpush1.bf16.msra.mxu0 %v1569
  %2280 = vmatprep.mubr.bf16.mxu0 %v735
  %2281 = vmatmul.mubr.bf16.gmra.mrb[0].mxu0 %v734
  %v2282 = vpop.f32.mrb[0].mxu0
  %v2283 = vadd.f32 %v2194, %v2282
  %v2284 = vpop.f32.mrb[0].mxu0
  %v2285 = vpop.f32.mrb[0].mxu0
  %v2286 = vadd.f32 %v2197, %v2285
  %v2287 = vpop.f32.mrb[0].mxu0
  %2288 = vmatprep.mubr.bf16.mxu0 %v751
  %2289 = vmatmul.mubr.bf16.gmra.mrb[0].mxu0 %v750
  %v2290 = vpop.f32.mrb[0].mxu0
  %v2291 = vadd.f32 %v2202, %v2290
  %v2292 = vpop.f32.mrb[0].mxu0
  %v2293 = vpop.f32.mrb[0].mxu0
  %v2294 = vadd.f32 %v2205, %v2293
  %v2295 = vpop.f32.mrb[0].mxu0
  %2296 = vmatprep.mubr.bf16.mxu0 %v767
  %2297 = vmatmul.mubr.bf16.gmra.mrb[0].mxu0 %v766
  %v2298 = vpop.f32.mrb[0].mxu0
  %v2299 = vadd.f32 %v2210, %v2298
  %v2300 = vpop.f32.mrb[0].mxu0
  %v2301 = vpop.f32.mrb[0].mxu0
  %v2302 = vadd.f32 %v2213, %v2301
  %v2303 = vpop.f32.mrb[0].mxu0
  %2304 = vmatprep.mubr.bf16.mxu0 %v783
  %2305 = vmatmul.mubr.bf16.gmra.mrb[0].mxu0 %v782
  %v2306 = vpop.f32.mrb[0].mxu0
  %v2307 = vadd.f32 %v2218, %v2306
  %v2308 = vpop.f32.mrb[0].mxu0
  %v2309 = vpop.f32.mrb[0].mxu0
  %v2310 = vadd.f32 %v2221, %v2309
  %v2311 = vpop.f32.mrb[0].mxu0
  %2312 = vmatprep.mubr.bf16.mxu0 %v799
  %2313 = vmatmul.mubr.bf16.gmra.mrb[0].mxu0 %v798
  %v2314 = vpop.f32.mrb[0].mxu0
  %v2315 = vadd.f32 %v2226, %v2314
  %v2316 = vpop.f32.mrb[0].mxu0
  %v2317 = vpop.f32.mrb[0].mxu0
  %v2318 = vadd.f32 %v2229, %v2317
  %v2319 = vpop.f32.mrb[0].mxu0
  %2320 = vmatprep.mubr.bf16.mxu0 %v815
  %2321 = vmatmul.mubr.bf16.gmra.mrb[0].mxu0 %v814
  %v2322 = vpop.f32.mrb[0].mxu0
  %v2323 = vadd.f32 %v2234, %v2322
  %v2324 = vpop.f32.mrb[0].mxu0
  %v2325 = vpop.f32.mrb[0].mxu0
  %v2326 = vadd.f32 %v2237, %v2325
  %v2327 = vpop.f32.mrb[0].mxu0
  %2328 = vmatprep.mubr.bf16.mxu0 %v831
  %2329 = vmatmul.mubr.bf16.gmra.mrb[0].mxu0 %v830
  %v2330 = vpop.f32.mrb[0].mxu0
  %v2331 = vadd.f32 %v2242, %v2330
  %v2332 = vpop.f32.mrb[0].mxu0
  %v2333 = vpop.f32.mrb[0].mxu0
  %v2334 = vadd.f32 %v2245, %v2333
  %v2335 = vpop.f32.mrb[0].mxu0
  %2336 = vdwg.mxu0
  %2337 = vmatprep.subr.bf16.mxu0 0
  %2338 = vmatpush1.bf16.msra.mxu0 %v1570
  %2339 = vmatprep.subr.bf16.mxu0 0
  %2340 = vmatpush1.bf16.msra.mxu0 %v1571
  %2341 = vmatprep.subr.bf16.mxu0 0
  %2342 = vmatpush1.bf16.msra.mxu0 %v1572
  %2343 = vmatprep.subr.bf16.mxu0 0
  %2344 = vmatpush1.bf16.msra.mxu0 %v1573
  %2345 = vmatprep.subr.bf16.mxu0 0
  %2346 = vmatpush1.bf16.msra.mxu0 %v1574
  %2347 = vmatprep.subr.bf16.mxu0 0
  %2348 = vmatpush1.bf16.msra.mxu0 %v1575
  %2349 = vmatprep.subr.bf16.mxu0 0
  %2350 = vmatpush1.bf16.msra.mxu0 %v1576
  %2351 = vmatprep.subr.bf16.mxu0 0
  %2352 = vmatpush1.bf16.msra.mxu0 %v1577
  %2353 = vmatprep.subr.bf16.mxu0 0
  %2354 = vmatpush1.bf16.msra.mxu0 %v1578
  %2355 = vmatprep.subr.bf16.mxu0 0
  %2356 = vmatpush1.bf16.msra.mxu0 %v1579
  %2357 = vmatprep.subr.bf16.mxu0 0
  %2358 = vmatpush1.bf16.msra.mxu0 %v1580
  %2359 = vmatprep.subr.bf16.mxu0 0
  %2360 = vmatpush1.bf16.msra.mxu0 %v1581
  %2361 = vmatprep.subr.bf16.mxu0 0
  %2362 = vmatpush1.bf16.msra.mxu0 %v1582
  %2363 = vmatprep.subr.bf16.mxu0 0
  %2364 = vmatpush1.bf16.msra.mxu0 %v1583
  %2365 = vmatprep.subr.bf16.mxu0 0
  %2366 = vmatpush1.bf16.msra.mxu0 %v1584
  %2367 = vmatprep.subr.bf16.mxu0 0
  %2368 = vmatpush1.bf16.msra.mxu0 %v1585
  %2369 = vmatprep.mubr.bf16.mxu0 %v737
  %2370 = vmatmul.mubr.bf16.gmra.mrb[0].mxu0 %v736
  %v2371 = vpop.f32.mrb[0].mxu0
  %v2372 = vadd.f32 %v2283, %v2371
  %v2373 = vpop.f32.mrb[0].mxu0
  %v2374 = vpop.f32.mrb[0].mxu0
  %v2375 = vadd.f32 %v2286, %v2374
  %v2376 = vpop.f32.mrb[0].mxu0
  %2377 = vmatprep.mubr.bf16.mxu0 %v753
  %2378 = vmatmul.mubr.bf16.gmra.mrb[0].mxu0 %v752
  %v2379 = vpop.f32.mrb[0].mxu0
  %v2380 = vadd.f32 %v2291, %v2379
  %v2381 = vpop.f32.mrb[0].mxu0
  %v2382 = vpop.f32.mrb[0].mxu0
  %v2383 = vadd.f32 %v2294, %v2382
  %v2384 = vpop.f32.mrb[0].mxu0
  %2385 = vmatprep.mubr.bf16.mxu0 %v769
  %2386 = vmatmul.mubr.bf16.gmra.mrb[0].mxu0 %v768
  %v2387 = vpop.f32.mrb[0].mxu0
  %v2388 = vadd.f32 %v2299, %v2387
  %v2389 = vpop.f32.mrb[0].mxu0
  %v2390 = vpop.f32.mrb[0].mxu0
  %v2391 = vadd.f32 %v2302, %v2390
  %v2392 = vpop.f32.mrb[0].mxu0
  %2393 = vmatprep.mubr.bf16.mxu0 %v785
  %2394 = vmatmul.mubr.bf16.gmra.mrb[0].mxu0 %v784
  %v2395 = vpop.f32.mrb[0].mxu0
  %v2396 = vadd.f32 %v2307, %v2395
  %v2397 = vpop.f32.mrb[0].mxu0
  %v2398 = vpop.f32.mrb[0].mxu0
  %v2399 = vadd.f32 %v2310, %v2398
  %v2400 = vpop.f32.mrb[0].mxu0
  %2401 = vmatprep.mubr.bf16.mxu0 %v801
  %2402 = vmatmul.mubr.bf16.gmra.mrb[0].mxu0 %v800
  %v2403 = vpop.f32.mrb[0].mxu0
  %v2404 = vadd.f32 %v2315, %v2403
  %v2405 = vpop.f32.mrb[0].mxu0
  %v2406 = vpop.f32.mrb[0].mxu0
  %v2407 = vadd.f32 %v2318, %v2406
  %v2408 = vpop.f32.mrb[0].mxu0
  %2409 = vmatprep.mubr.bf16.mxu0 %v817
  %2410 = vmatmul.mubr.bf16.gmra.mrb[0].mxu0 %v816
  %v2411 = vpop.f32.mrb[0].mxu0
  %v2412 = vadd.f32 %v2323, %v2411
  %v2413 = vpop.f32.mrb[0].mxu0
  %v2414 = vpop.f32.mrb[0].mxu0
  %v2415 = vadd.f32 %v2326, %v2414
  %v2416 = vpop.f32.mrb[0].mxu0
  %2417 = vmatprep.mubr.bf16.mxu0 %v833
  %2418 = vmatmul.mubr.bf16.gmra.mrb[0].mxu0 %v832
  %v2419 = vpop.f32.mrb[0].mxu0
  %v2420 = vadd.f32 %v2331, %v2419
  %v2421 = vpop.f32.mrb[0].mxu0
  %v2422 = vpop.f32.mrb[0].mxu0
  %v2423 = vadd.f32 %v2334, %v2422
  %v2424 = vpop.f32.mrb[0].mxu0
  %2425 = vdwg.mxu0
  %v2426 = vadd.f32 %v2372, %v2375
  %v2427 = vadd.f32 %v2426, %v2380
  %v2428 = vadd.f32 %v2427, %v2383
  %v2429 = vadd.f32 %v2428, %v2388
  %v2430 = vadd.f32 %v2429, %v2391
  %v2431 = vadd.f32 %v2430, %v2396
  %v2432 = vadd.f32 %v2431, %v2399
  %v2433 = vadd.f32 %v2432, %v2404
  %v2434 = vadd.f32 %v2433, %v2407
  %v2435 = vadd.f32 %v2434, %v2412
  %v2436 = vadd.f32 %v2435, %v2415
  %v2437 = vadd.f32 %v2436, %v2420
  %v2438 = vadd.f32 %v2437, %v2423
  %v2439 = vrot.slane %v2438, 4
  %v2440 = vadd.f32 %v2438, %v2439
  %v2441 = vrot.slane %v2440, 2
  %v2442 = vadd.f32 %v2440, %v2441
  %v2443 = vrot.slane %v2442, 1
  %v2444 = vadd.f32 %v2442, %v2443
  %v2445 = vmul.f32 %v2444, 0.010204081
  %v2446 = vmul.f32 %v2372, %v2372
  %v2447 = vmul.f32 %v2375, %v2375
  %v2448 = vmul.f32 %v2380, %v2380
  %v2449 = vmul.f32 %v2383, %v2383
  %v2450 = vmul.f32 %v2388, %v2388
  %v2451 = vmul.f32 %v2391, %v2391
  %v2452 = vmul.f32 %v2396, %v2396
  %v2453 = vmul.f32 %v2399, %v2399
  %v2454 = vmul.f32 %v2404, %v2404
  %v2455 = vmul.f32 %v2407, %v2407
  %v2456 = vmul.f32 %v2412, %v2412
  %v2457 = vmul.f32 %v2415, %v2415
  %v2458 = vmul.f32 %v2420, %v2420
  %v2459 = vmul.f32 %v2423, %v2423
  %v2460 = vadd.f32 %v2446, %v2447
  %v2461 = vadd.f32 %v2460, %v2448
  %v2462 = vadd.f32 %v2461, %v2449
  %v2463 = vadd.f32 %v2462, %v2450
  %v2464 = vadd.f32 %v2463, %v2451
  %v2465 = vadd.f32 %v2464, %v2452
  %v2466 = vadd.f32 %v2465, %v2453
  %v2467 = vadd.f32 %v2466, %v2454
  %v2468 = vadd.f32 %v2467, %v2455
  %v2469 = vadd.f32 %v2468, %v2456
  %v2470 = vadd.f32 %v2469, %v2457
  %v2471 = vadd.f32 %v2470, %v2458
  %v2472 = vadd.f32 %v2471, %v2459
  %v2473 = vrot.slane %v2472, 4
  %v2474 = vadd.f32 %v2472, %v2473
  %v2475 = vrot.slane %v2474, 2
  %v2476 = vadd.f32 %v2474, %v2475
  %v2477 = vrot.slane %v2476, 1
  %v2478 = vadd.f32 %v2476, %v2477
  %v2479 = vmul.f32 %v2478, 0.010204081
  %v2480 = vmul.f32 %v2445, %v2445
  %v2481 = vsub.f32 %v2479, %v2480
  %v2482 = vmax.f32 %v2481, 0.0
  %v2483 = vld [vmem:[%s2] sm:$0x1]
  %v2484 = vadd.f32 %v2482, 1e-05
  %v2485 = vrsqrt.pop %v2484
  %v2486 = vmul.f32 %v2483, %v2485
  %v2487 = vld [vmem:[%s3] sm:$0x1]
  %v2488 = vmul.f32 %v2445, %v2486
  %v2489 = vsub.f32 %v2487, %v2488
  %v2491 = vlaneseq
  %v2492 = vshrl.u32 %v2491, 7
  %v2493 = vsub.s32 0, %v2492
  %v2494 = vrot.slane %v2486, %v2493
  %v2496 = vmul.f32 %v2372, %v2494
  %v2497 = vmul.f32 %v2375, %v2494
  %v2498 = vmul.f32 %v2380, %v2494
  %v2499 = vmul.f32 %v2383, %v2494
  %v2500 = vmul.f32 %v2388, %v2494
  %v2501 = vmul.f32 %v2391, %v2494
  %v2502 = vmul.f32 %v2396, %v2494
  %v2503 = vmul.f32 %v2399, %v2494
  %v2504 = vmul.f32 %v2404, %v2494
  %v2505 = vmul.f32 %v2407, %v2494
  %v2506 = vmul.f32 %v2412, %v2494
  %v2507 = vmul.f32 %v2415, %v2494
  %v2508 = vmul.f32 %v2420, %v2494
  %v2509 = vmul.f32 %v2423, %v2494
  %v2511 = vlaneseq
  %v2512 = vshrl.u32 %v2511, 7
  %v2513 = vsub.s32 0, %v2512
  %v2514 = vrot.slane %v2489, %v2513
  %v2516 = vadd.f32 %v2496, %v2514
  %v2517 = vadd.f32 %v2497, %v2514
  %v2518 = vadd.f32 %v2498, %v2514
  %v2519 = vadd.f32 %v2499, %v2514
  %v2520 = vadd.f32 %v2500, %v2514
  %v2521 = vadd.f32 %v2501, %v2514
  %v2522 = vadd.f32 %v2502, %v2514
  %v2523 = vadd.f32 %v2503, %v2514
  %v2524 = vadd.f32 %v2504, %v2514
  %v2525 = vadd.f32 %v2505, %v2514
  %v2526 = vadd.f32 %v2506, %v2514
  %v2527 = vadd.f32 %v2507, %v2514
  %v2528 = vadd.f32 %v2508, %v2514
  %v2529 = vadd.f32 %v2509, %v2514
  %v2530 = vmax.f32 %v2516, 0.0
  %v2531 = vmax.f32 %v2517, 0.0
  %v2532 = vmax.f32 %v2518, 0.0
  %v2533 = vmax.f32 %v2519, 0.0
  %v2534 = vmax.f32 %v2520, 0.0
  %v2535 = vmax.f32 %v2521, 0.0
  %v2536 = vmax.f32 %v2522, 0.0
  %v2537 = vmax.f32 %v2523, 0.0
  %v2538 = vmax.f32 %v2524, 0.0
  %v2539 = vmax.f32 %v2525, 0.0
  %v2540 = vmax.f32 %v2526, 0.0
  %v2541 = vmax.f32 %v2527, 0.0
  %v2542 = vmax.f32 %v2528, 0.0
  %v2543 = vmax.f32 %v2529, 0.0
  %2544 = vst [vmem:[%s4] sm:$0xff] %v2530
  %2545 = vst [vmem:[%s4 + $0x8] sm:$0xff] %v2531
  %2546 = vst [vmem:[%s4 + $0x10] sm:$0xff] %v2532
  %2547 = vst [vmem:[%s4 + $0x18] sm:$0xff] %v2533
  %2548 = vst [vmem:[%s4 + $0x20] sm:$0xff] %v2534
  %2549 = vst [vmem:[%s4 + $0x28] sm:$0xff] %v2535
  %2550 = vst [vmem:[%s4 + $0x30] sm:$0xff] %v2536
  %2551 = vst [vmem:[%s4 + $0x38] sm:$0xff] %v2537
  %2552 = vst [vmem:[%s4 + $0x40] sm:$0xff] %v2538
  %2553 = vst [vmem:[%s4 + $0x48] sm:$0xff] %v2539
  %2554 = vst [vmem:[%s4 + $0x50] sm:$0xff] %v2540
  %2555 = vst [vmem:[%s4 + $0x58] sm:$0xff] %v2541
  %2556 = vst [vmem:[%s4 + $0x60] sm:$0xff] %v2542
  %2557 = vst [vmem:[%s4 + $0x68] sm:$0xff] %v2543
  // Predicated region
  $region18: #{conv_forward.13} parent=0 // pred_check
    _
  $region19: #{conv_forward.13} parent=0 // pred_check_branch
    %2559 = sbr.rel (0) target = $region21
  $region20: #{conv_forward.13} parent=0 // pred_region
    _
  $region21: #{conv_forward.13} parent=0 // pred_fallthru
    _
  // Predicated region
  $region22: #{conv_forward.13} parent=0 // pred_check
    _
  $region23: #{conv_forward.13} parent=0 // pred_check_branch
    %2561 = sbr.rel (0) target = $region25
  $region24: #{conv_forward.13} parent=0 // pred_region
    _
  $region25: #{conv_forward.13} parent=0 // pred_fallthru
    _

// kernel: conv_forward.14
$region0: #{conv_forward.14}
  #allocation0 [shape = 'u32[]', space=smem, size = 0x4, offset = 0x4, fixed_abs, tag = 'smem constant byte address 0x4 - core index']
  #allocation1 [shape = 'u32[144,128]{1,0:T(1,128)}', space=vmem, size = 0x12000, scoped, tag = 'internal scratch']
  %s0 = inlined_call_operand.vmem [shape: bf16[400,1024], index: 0, kind: input, shape index: {}]
  %s1 = inlined_call_operand.vmem [shape: bf16[1024,128], index: 1, kind: input, shape index: {}]
  %s2 = inlined_call_operand.vmem [shape: f32[1,128], index: 2, kind: input, shape index: {}]
  %s3 = inlined_call_operand.vmem [shape: f32[1,128], index: 3, kind: input, shape index: {}]
  %s4 = inlined_call_operand.vmem [shape: f32[400,128], index: 4, kind: output, shape index: {}]
  %s5 = sld [smem:[#allocation0]]
  $region26: #{conv_forward.14} parent=0
    _
  %s7 = ssub.s32 1, %s5
  %s8 = scalar_select 0, %s7, %s5
  // Predicated region
  $region2: #{conv_forward.14} parent=0 // pred_check
    _
  $region3: #{conv_forward.14} parent=0 // pred_check_branch
    %10 = sbr.rel (0) target = $region5
  $region4: #{conv_forward.14} parent=0 // pred_region
    _
  $region5: #{conv_forward.14} parent=0 // pred_fallthru
    _
  // Predicated region
  $region6: #{conv_forward.14} parent=0 // pred_check
    _
  $region7: #{conv_forward.14} parent=0 // pred_check_branch
    %12 = sbr.rel (0) target = $region9
  $region8: #{conv_forward.14} parent=0 // pred_region
    _
  $region9: #{conv_forward.14} parent=0 // pred_fallthru
    _
  // Predicated region
  $region10: #{conv_forward.14} parent=0 // pred_check
    _
  $region11: #{conv_forward.14} parent=0 // pred_check_branch
    %14 = sbr.rel (0) target = $region13
  $region12: #{conv_forward.14} parent=0 // pred_region
    _
  $region13: #{conv_forward.14} parent=0 // pred_fallthru
    _
  // Predicated region
  $region14: #{conv_forward.14} parent=0 // pred_check
    _
  $region15: #{conv_forward.14} parent=0 // pred_check_branch
    %16 = sbr.rel (0) target = $region17
  $region16: #{conv_forward.14} parent=0 // pred_region
    _
  $region17: #{conv_forward.14} parent=0 // pred_fallthru
    _
  %v18 = vld [vmem:[%s0] sm:$0xff]
  %v19 = vld [vmem:[%s0 + $0x8] sm:$0xff]
  %v20 = vld [vmem:[%s0 + $0x10] sm:$0xff]
  %v21 = vld [vmem:[%s0 + $0x18] sm:$0xff]
  %v22 = vld [vmem:[%s0 + $0x20] sm:$0xff]
  %v23 = vld [vmem:[%s0 + $0x28] sm:$0xff]
  %v24 = vld [vmem:[%s0 + $0x30] sm:$0xff]
  %v25 = vld [vmem:[%s0 + $0x38] sm:$0xff]
  %v26 = vld [vmem:[%s0 + $0x40] sm:$0xff]
  %v27 = vld [vmem:[%s0 + $0x48] sm:$0xff]
  %v28 = vld [vmem:[%s0 + $0x50] sm:$0xff]
  %v29 = vld [vmem:[%s0 + $0x58] sm:$0xff]
  %v30 = vld [vmem:[%s0 + $0x60] sm:$0xff]
  %v31 = vld [vmem:[%s0 + $0x68] sm:$0xff]
  %v32 = vld [vmem:[%s0 + $0x70] sm:$0xff]
  %v33 = vld [vmem:[%s0 + $0x78] sm:$0xff]
  %v34 = vld [vmem:[%s0 + $0x80] sm:$0xff]
  %v35 = vld [vmem:[%s0 + $0x88] sm:$0xff]
  %v36 = vld [vmem:[%s0 + $0x90] sm:$0xff]
  %v37 = vld [vmem:[%s0 + $0x98] sm:$0xff]
  %v38 = vld [vmem:[%s0 + $0xa0] sm:$0xff]
  %v39 = vld [vmem:[%s0 + $0xa8] sm:$0xff]
  %v40 = vld [vmem:[%s0 + $0xb0] sm:$0xff]
  %v41 = vld [vmem:[%s0 + $0xb8] sm:$0xff]
  %v42 = vld [vmem:[%s0 + $0xc0] sm:$0xff]
  %v43 = vld [vmem:[%s0 + $0xc8] sm:$0xff]
  %v44 = vld [vmem:[%s0 + $0xd0] sm:$0xff]
  %v45 = vld [vmem:[%s0 + $0xd8] sm:$0xff]
  %v46 = vld [vmem:[%s0 + $0xe0] sm:$0xff]
  %v47 = vld [vmem:[%s0 + $0xe8] sm:$0xff]
  %v48 = vld [vmem:[%s0 + $0xf0] sm:$0xff]
  %v49 = vld [vmem:[%s0 + $0xf8] sm:$0xff]
  %v50 = vld [vmem:[%s0 + $0x100] sm:$0xff]
  %v51 = vld [vmem:[%s0 + $0x108] sm:$0xff]
  %v52 = vld [vmem:[%s0 + $0x110] sm:$0xff]
  %v53 = vld [vmem:[%s0 + $0x118] sm:$0xff]
  %v54 = vld [vmem:[%s0 + $0x120] sm:$0xff]
  %v55 = vld [vmem:[%s0 + $0x128] sm:$0xff]
  %v56 = vld [vmem:[%s0 + $0x130] sm:$0xff]
  %v57 = vld [vmem:[%s0 + $0x138] sm:$0xff]
  %v58 = vld [vmem:[%s0 + $0x140] sm:$0xff]
  %v59 = vld [vmem:[%s0 + $0x148] sm:$0xff]
  %v60 = vld [vmem:[%s0 + $0x150] sm:$0xff]
  %v61 = vld [vmem:[%s0 + $0x158] sm:$0xff]
  %v62 = vld [vmem:[%s0 + $0x160] sm:$0xff]
  %v63 = vld [vmem:[%s0 + $0x168] sm:$0xff]
  %v64 = vld [vmem:[%s0 + $0x170] sm:$0xff]
  %v65 = vld [vmem:[%s0 + $0x178] sm:$0xff]
  %v66 = vld [vmem:[%s0 + $0x180] sm:$0xff]
  %v67 = vld [vmem:[%s0 + $0x188] sm:$0xff]
  %v68 = vld [vmem:[%s0 + $0x190] sm:$0xff]
  %v69 = vld [vmem:[%s0 + $0x198] sm:$0xff]
  %v70 = vld [vmem:[%s0 + $0x1a0] sm:$0xff]
  %v71 = vld [vmem:[%s0 + $0x1a8] sm:$0xff]
  %v72 = vld [vmem:[%s0 + $0x1b0] sm:$0xff]
  %v73 = vld [vmem:[%s0 + $0x1b8] sm:$0xff]
  %v74 = vld [vmem:[%s0 + $0x1c0] sm:$0xff]
  %v75 = vld [vmem:[%s0 + $0x1c8] sm:$0xff]
  %v76 = vld [vmem:[%s0 + $0x1d0] sm:$0xff]
  %v77 = vld [vmem:[%s0 + $0x1d8] sm:$0xff]
  %v78 = vld [vmem:[%s0 + $0x1e0] sm:$0xff]
  %v79 = vld [vmem:[%s0 + $0x1e8] sm:$0xff]
  %v80 = vld [vmem:[%s0 + $0x1f0] sm:$0xff]
  %v81 = vld [vmem:[%s0 + $0x1f8] sm:$0xff]
  %v82 = vld [vmem:[%s0 + $0x200] sm:$0xff]
  %v83 = vld [vmem:[%s0 + $0x208] sm:$0xff]
  %v84 = vld [vmem:[%s0 + $0x210] sm:$0xff]
  %v85 = vld [vmem:[%s0 + $0x218] sm:$0xff]
  %v86 = vld [vmem:[%s0 + $0x220] sm:$0xff]
  %v87 = vld [vmem:[%s0 + $0x228] sm:$0xff]
  %v88 = vld [vmem:[%s0 + $0x230] sm:$0xff]
  %v89 = vld [vmem:[%s0 + $0x238] sm:$0xff]
  %v90 = vld [vmem:[%s0 + $0x240] sm:$0xff]
  %v91 = vld [vmem:[%s0 + $0x248] sm:$0xff]
  %v92 = vld [vmem:[%s0 + $0x250] sm:$0xff]
  %v93 = vld [vmem:[%s0 + $0x258] sm:$0xff]
  %v94 = vld [vmem:[%s0 + $0x260] sm:$0xff]
  %v95 = vld [vmem:[%s0 + $0x268] sm:$0xff]
  %v96 = vld [vmem:[%s0 + $0x270] sm:$0xff]
  %v97 = vld [vmem:[%s0 + $0x278] sm:$0xff]
  %v98 = vld [vmem:[%s0 + $0x280] sm:$0xff]
  %v99 = vld [vmem:[%s0 + $0x288] sm:$0xff]
  %v100 = vld [vmem:[%s0 + $0x290] sm:$0xff]
  %v101 = vld [vmem:[%s0 + $0x298] sm:$0xff]
  %v102 = vld [vmem:[%s0 + $0x2a0] sm:$0xff]
  %v103 = vld [vmem:[%s0 + $0x2a8] sm:$0xff]
  %v104 = vld [vmem:[%s0 + $0x2b0] sm:$0xff]
  %v105 = vld [vmem:[%s0 + $0x2b8] sm:$0xff]
  %v106 = vld [vmem:[%s0 + $0x2c0] sm:$0xff]
  %v107 = vld [vmem:[%s0 + $0x2c8] sm:$0xff]
  %v108 = vld [vmem:[%s0 + $0x2d0] sm:$0xff]
  %v109 = vld [vmem:[%s0 + $0x2d8] sm:$0xff]
  %v110 = vld [vmem:[%s0 + $0x2e0] sm:$0xff]
  %v111 = vld [vmem:[%s0 + $0x2e8] sm:$0xff]
  %v112 = vld [vmem:[%s0 + $0x2f0] sm:$0xff]
  %v113 = vld [vmem:[%s0 + $0x2f8] sm:$0xff]
  %v114 = vld [vmem:[%s0 + $0x300] sm:$0xff]
  %v115 = vld [vmem:[%s0 + $0x308] sm:$0xff]
  %v116 = vld [vmem:[%s0 + $0x310] sm:$0xff]
  %v117 = vld [vmem:[%s0 + $0x318] sm:$0xff]
  %v118 = vld [vmem:[%s0 + $0x320] sm:$0xff]
  %v119 = vld [vmem:[%s0 + $0x328] sm:$0xff]
  %v120 = vld [vmem:[%s0 + $0x330] sm:$0xff]
  %v121 = vld [vmem:[%s0 + $0x338] sm:$0xff]
  %v122 = vld [vmem:[%s0 + $0x340] sm:$0xff]
  %v123 = vld [vmem:[%s0 + $0x348] sm:$0xff]
  %v124 = vld [vmem:[%s0 + $0x350] sm:$0xff]
  %v125 = vld [vmem:[%s0 + $0x358] sm:$0xff]
  %v126 = vld [vmem:[%s0 + $0x360] sm:$0xff]
  %v127 = vld [vmem:[%s0 + $0x368] sm:$0xff]
  %v128 = vld [vmem:[%s0 + $0x370] sm:$0xff]
  %v129 = vld [vmem:[%s0 + $0x378] sm:$0xff]
  %v130 = vld [vmem:[%s0 + $0x380] sm:$0xff]
  %v131 = vld [vmem:[%s0 + $0x388] sm:$0xff]
  %v132 = vld [vmem:[%s0 + $0x390] sm:$0xff]
  %v133 = vld [vmem:[%s0 + $0x398] sm:$0xff]
  %v134 = vld [vmem:[%s0 + $0x3a0] sm:$0xff]
  %v135 = vld [vmem:[%s0 + $0x3a8] sm:$0xff]
  %v136 = vld [vmem:[%s0 + $0x3b0] sm:$0xff]
  %v137 = vld [vmem:[%s0 + $0x3b8] sm:$0xff]
  %v138 = vld [vmem:[%s0 + $0x3c0] sm:$0xff]
  %v139 = vld [vmem:[%s0 + $0x3c8] sm:$0xff]
  %v140 = vld [vmem:[%s0 + $0x3d0] sm:$0xff]
  %v141 = vld [vmem:[%s0 + $0x3d8] sm:$0xff]
  %v142 = vld [vmem:[%s0 + $0x3e0] sm:$0xff]
  %v143 = vld [vmem:[%s0 + $0x3e8] sm:$0xff]
  %v144 = vld [vmem:[%s0 + $0x3f0] sm:$0xff]
  %v145 = vld [vmem:[%s0 + $0x3f8] sm:$0xff]
  %v146 = vld [vmem:[%s0 + $0x400] sm:$0xff]
  %v147 = vld [vmem:[%s0 + $0x408] sm:$0xff]
  %v148 = vld [vmem:[%s0 + $0x410] sm:$0xff]
  %v149 = vld [vmem:[%s0 + $0x418] sm:$0xff]
  %v150 = vld [vmem:[%s0 + $0x420] sm:$0xff]
  %v151 = vld [vmem:[%s0 + $0x428] sm:$0xff]
  %v152 = vld [vmem:[%s0 + $0x430] sm:$0xff]
  %v153 = vld [vmem:[%s0 + $0x438] sm:$0xff]
  %v154 = vld [vmem:[%s0 + $0x440] sm:$0xff]
  %v155 = vld [vmem:[%s0 + $0x448] sm:$0xff]
  %v156 = vld [vmem:[%s0 + $0x450] sm:$0xff]
  %v157 = vld [vmem:[%s0 + $0x458] sm:$0xff]
  %v158 = vld [vmem:[%s0 + $0x460] sm:$0xff]
  %v159 = vld [vmem:[%s0 + $0x468] sm:$0xff]
  %v160 = vld [vmem:[%s0 + $0x470] sm:$0xff]
  %v161 = vld [vmem:[%s0 + $0x478] sm:$0xff]
  %v162 = vld [vmem:[%s0 + $0x480] sm:$0xff]
  %v163 = vld [vmem:[%s0 + $0x488] sm:$0xff]
  %v164 = vld [vmem:[%s0 + $0x490] sm:$0xff]
  %v165 = vld [vmem:[%s0 + $0x498] sm:$0xff]
  %v166 = vld [vmem:[%s0 + $0x4a0] sm:$0xff]
  %v167 = vld [vmem:[%s0 + $0x4a8] sm:$0xff]
  %v168 = vld [vmem:[%s0 + $0x4b0] sm:$0xff]
  %v169 = vld [vmem:[%s0 + $0x4b8] sm:$0xff]
  %v170 = vld [vmem:[%s0 + $0x4c0] sm:$0xff]
  %v171 = vld [vmem:[%s0 + $0x4c8] sm:$0xff]
  %v172 = vld [vmem:[%s0 + $0x4d0] sm:$0xff]
  %v173 = vld [vmem:[%s0 + $0x4d8] sm:$0xff]
  %v174 = vld [vmem:[%s0 + $0x4e0] sm:$0xff]
  %v175 = vld [vmem:[%s0 + $0x4e8] sm:$0xff]
  %v176 = vld [vmem:[%s0 + $0x4f0] sm:$0xff]
  %v177 = vld [vmem:[%s0 + $0x4f8] sm:$0xff]
  %v178 = vld [vmem:[%s0 + $0x500] sm:$0xff]
  %v179 = vld [vmem:[%s0 + $0x508] sm:$0xff]
  %v180 = vld [vmem:[%s0 + $0x510] sm:$0xff]
  %v181 = vld [vmem:[%s0 + $0x518] sm:$0xff]
  %v182 = vld [vmem:[%s0 + $0x520] sm:$0xff]
  %v183 = vld [vmem:[%s0 + $0x528] sm:$0xff]
  %v184 = vld [vmem:[%s0 + $0x530] sm:$0xff]
  %v185 = vld [vmem:[%s0 + $0x538] sm:$0xff]
  %v186 = vld [vmem:[%s0 + $0x540] sm:$0xff]
  %v187 = vld [vmem:[%s0 + $0x548] sm:$0xff]
  %v188 = vld [vmem:[%s0 + $0x550] sm:$0xff]
  %v189 = vld [vmem:[%s0 + $0x558] sm:$0xff]
  %v190 = vld [vmem:[%s0 + $0x560] sm:$0xff]
  %v191 = vld [vmem:[%s0 + $0x568] sm:$0xff]
  %v192 = vld [vmem:[%s0 + $0x570] sm:$0xff]
  %v193 = vld [vmem:[%s0 + $0x578] sm:$0xff]
  %v194 = vld [vmem:[%s0 + $0x580] sm:$0xff]
  %v195 = vld [vmem:[%s0 + $0x588] sm:$0xff]
  %v196 = vld [vmem:[%s0 + $0x590] sm:$0xff]
  %v197 = vld [vmem:[%s0 + $0x598] sm:$0xff]
  %v198 = vld [vmem:[%s0 + $0x5a0] sm:$0xff]
  %v199 = vld [vmem:[%s0 + $0x5a8] sm:$0xff]
  %v200 = vld [vmem:[%s0 + $0x5b0] sm:$0xff]
  %v201 = vld [vmem:[%s0 + $0x5b8] sm:$0xff]
  %v202 = vld [vmem:[%s0 + $0x5c0] sm:$0xff]
  %v203 = vld [vmem:[%s0 + $0x5c8] sm:$0xff]
  %v204 = vld [vmem:[%s0 + $0x5d0] sm:$0xff]
  %v205 = vld [vmem:[%s0 + $0x5d8] sm:$0xff]
  %v206 = vld [vmem:[%s0 + $0x5e0] sm:$0xff]
  %v207 = vld [vmem:[%s0 + $0x5e8] sm:$0xff]
  %v208 = vld [vmem:[%s0 + $0x5f0] sm:$0xff]
  %v209 = vld [vmem:[%s0 + $0x5f8] sm:$0xff]
  %v210 = vld [vmem:[%s0 + $0x600] sm:$0xff]
  %v211 = vld [vmem:[%s0 + $0x608] sm:$0xff]
  %v212 = vld [vmem:[%s0 + $0x610] sm:$0xff]
  %v213 = vld [vmem:[%s0 + $0x618] sm:$0xff]
  %v214 = vld [vmem:[%s0 + $0x620] sm:$0xff]
  %v215 = vld [vmem:[%s0 + $0x628] sm:$0xff]
  %v216 = vld [vmem:[%s0 + $0x630] sm:$0xff]
  %v217 = vld [vmem:[%s0 + $0x638] sm:$0xff]
  %v218 = vld [vmem:[%s1] sm:$0xf]
  %v219 = vld [vmem:[%s1 + $0x4] sm:$0xf]
  %v220 = vld [vmem:[%s1 + $0x8] sm:$0xf]
  %v221 = vld [vmem:[%s1 + $0xc] sm:$0xf]
  %v222 = vld [vmem:[%s1 + $0x10] sm:$0xf]
  %v223 = vld [vmem:[%s1 + $0x14] sm:$0xf]
  %v224 = vld [vmem:[%s1 + $0x18] sm:$0xf]
  %v225 = vld [vmem:[%s1 + $0x1c] sm:$0xf]
  %v226 = vld [vmem:[%s1 + $0x20] sm:$0xf]
  %v227 = vld [vmem:[%s1 + $0x24] sm:$0xf]
  %v228 = vld [vmem:[%s1 + $0x28] sm:$0xf]
  %v229 = vld [vmem:[%s1 + $0x2c] sm:$0xf]
  %v230 = vld [vmem:[%s1 + $0x30] sm:$0xf]
  %v231 = vld [vmem:[%s1 + $0x34] sm:$0xf]
  %v232 = vld [vmem:[%s1 + $0x38] sm:$0xf]
  %v233 = vld [vmem:[%s1 + $0x3c] sm:$0xf]
  %v234 = vld [vmem:[%s1 + $0x40] sm:$0xf]
  %v235 = vld [vmem:[%s1 + $0x44] sm:$0xf]
  %v236 = vld [vmem:[%s1 + $0x48] sm:$0xf]
  %v237 = vld [vmem:[%s1 + $0x4c] sm:$0xf]
  %v238 = vld [vmem:[%s1 + $0x50] sm:$0xf]
  %v239 = vld [vmem:[%s1 + $0x54] sm:$0xf]
  %v240 = vld [vmem:[%s1 + $0x58] sm:$0xf]
  %v241 = vld [vmem:[%s1 + $0x5c] sm:$0xf]
  %v242 = vld [vmem:[%s1 + $0x60] sm:$0xf]
  %v243 = vld [vmem:[%s1 + $0x64] sm:$0xf]
  %v244 = vld [vmem:[%s1 + $0x68] sm:$0xf]
  %v245 = vld [vmem:[%s1 + $0x6c] sm:$0xf]
  %v246 = vld [vmem:[%s1 + $0x70] sm:$0xf]
  %v247 = vld [vmem:[%s1 + $0x74] sm:$0xf]
  %v248 = vld [vmem:[%s1 + $0x78] sm:$0xf]
  %v249 = vld [vmem:[%s1 + $0x7c] sm:$0xf]
  %v250 = vld [vmem:[%s1 + $0x80] sm:$0xf]
  %v251 = vld [vmem:[%s1 + $0x84] sm:$0xf]
  %v252 = vld [vmem:[%s1 + $0x88] sm:$0xf]
  %v253 = vld [vmem:[%s1 + $0x8c] sm:$0xf]
  %v254 = vld [vmem:[%s1 + $0x90] sm:$0xf]
  %v255 = vld [vmem:[%s1 + $0x94] sm:$0xf]
  %v256 = vld [vmem:[%s1 + $0x98] sm:$0xf]
  %v257 = vld [vmem:[%s1 + $0x9c] sm:$0xf]
  %v258 = vld [vmem:[%s1 + $0xa0] sm:$0xf]
  %v259 = vld [vmem:[%s1 + $0xa4] sm:$0xf]
  %v260 = vld [vmem:[%s1 + $0xa8] sm:$0xf]
  %v261 = vld [vmem:[%s1 + $0xac] sm:$0xf]
  %v262 = vld [vmem:[%s1 + $0xb0] sm:$0xf]
  %v263 = vld [vmem:[%s1 + $0xb4] sm:$0xf]
  %v264 = vld [vmem:[%s1 + $0xb8] sm:$0xf]
  %v265 = vld [vmem:[%s1 + $0xbc] sm:$0xf]
  %v266 = vld [vmem:[%s1 + $0xc0] sm:$0xf]
  %v267 = vld [vmem:[%s1 + $0xc4] sm:$0xf]
  %v268 = vld [vmem:[%s1 + $0xc8] sm:$0xf]
  %v269 = vld [vmem:[%s1 + $0xcc] sm:$0xf]
  %v270 = vld [vmem:[%s1 + $0xd0] sm:$0xf]
  %v271 = vld [vmem:[%s1 + $0xd4] sm:$0xf]
  %v272 = vld [vmem:[%s1 + $0xd8] sm:$0xf]
  %v273 = vld [vmem:[%s1 + $0xdc] sm:$0xf]
  %v274 = vld [vmem:[%s1 + $0xe0] sm:$0xf]
  %v275 = vld [vmem:[%s1 + $0xe4] sm:$0xf]
  %v276 = vld [vmem:[%s1 + $0xe8] sm:$0xf]
  %v277 = vld [vmem:[%s1 + $0xec] sm:$0xf]
  %v278 = vld [vmem:[%s1 + $0xf0] sm:$0xf]
  %v279 = vld [vmem:[%s1 + $0xf4] sm:$0xf]
  %v280 = vld [vmem:[%s1 + $0xf8] sm:$0xf]
  %v281 = vld [vmem:[%s1 + $0xfc] sm:$0xf]
  %v282 = vld [vmem:[%s1 + $0x100] sm:$0xf]
  %v283 = vld [vmem:[%s1 + $0x104] sm:$0xf]
  %v284 = vld [vmem:[%s1 + $0x108] sm:$0xf]
  %v285 = vld [vmem:[%s1 + $0x10c] sm:$0xf]
  %v286 = vld [vmem:[%s1 + $0x110] sm:$0xf]
  %v287 = vld [vmem:[%s1 + $0x114] sm:$0xf]
  %v288 = vld [vmem:[%s1 + $0x118] sm:$0xf]
  %v289 = vld [vmem:[%s1 + $0x11c] sm:$0xf]
  %v290 = vld [vmem:[%s1 + $0x120] sm:$0xf]
  %v291 = vld [vmem:[%s1 + $0x124] sm:$0xf]
  %v292 = vld [vmem:[%s1 + $0x128] sm:$0xf]
  %v293 = vld [vmem:[%s1 + $0x12c] sm:$0xf]
  %v294 = vld [vmem:[%s1 + $0x130] sm:$0xf]
  %v295 = vld [vmem:[%s1 + $0x134] sm:$0xf]
  %v296 = vld [vmem:[%s1 + $0x138] sm:$0xf]
  %v297 = vld [vmem:[%s1 + $0x13c] sm:$0xf]
  %v298 = vld [vmem:[%s1 + $0x140] sm:$0xf]
  %v299 = vld [vmem:[%s1 + $0x144] sm:$0xf]
  %v300 = vld [vmem:[%s1 + $0x148] sm:$0xf]
  %v301 = vld [vmem:[%s1 + $0x14c] sm:$0xf]
  %v302 = vld [vmem:[%s1 + $0x150] sm:$0xf]
  %v303 = vld [vmem:[%s1 + $0x154] sm:$0xf]
  %v304 = vld [vmem:[%s1 + $0x158] sm:$0xf]
  %v305 = vld [vmem:[%s1 + $0x15c] sm:$0xf]
  %v306 = vld [vmem:[%s1 + $0x160] sm:$0xf]
  %v307 = vld [vmem:[%s1 + $0x164] sm:$0xf]
  %v308 = vld [vmem:[%s1 + $0x168] sm:$0xf]
  %v309 = vld [vmem:[%s1 + $0x16c] sm:$0xf]
  %v310 = vld [vmem:[%s1 + $0x170] sm:$0xf]
  %v311 = vld [vmem:[%s1 + $0x174] sm:$0xf]
  %v312 = vld [vmem:[%s1 + $0x178] sm:$0xf]
  %v313 = vld [vmem:[%s1 + $0x17c] sm:$0xf]
  %v314 = vld [vmem:[%s1 + $0x180] sm:$0xf]
  %v315 = vld [vmem:[%s1 + $0x184] sm:$0xf]
  %v316 = vld [vmem:[%s1 + $0x188] sm:$0xf]
  %v317 = vld [vmem:[%s1 + $0x18c] sm:$0xf]
  %v318 = vld [vmem:[%s1 + $0x190] sm:$0xf]
  %v319 = vld [vmem:[%s1 + $0x194] sm:$0xf]
  %v320 = vld [vmem:[%s1 + $0x198] sm:$0xf]
  %v321 = vld [vmem:[%s1 + $0x19c] sm:$0xf]
  %v322 = vld [vmem:[%s1 + $0x1a0] sm:$0xf]
  %v323 = vld [vmem:[%s1 + $0x1a4] sm:$0xf]
  %v324 = vld [vmem:[%s1 + $0x1a8] sm:$0xf]
  %v325 = vld [vmem:[%s1 + $0x1ac] sm:$0xf]
  %v326 = vld [vmem:[%s1 + $0x1b0] sm:$0xf]
  %v327 = vld [vmem:[%s1 + $0x1b4] sm:$0xf]
  %v328 = vld [vmem:[%s1 + $0x1b8] sm:$0xf]
  %v329 = vld [vmem:[%s1 + $0x1bc] sm:$0xf]
  %v330 = vld [vmem:[%s1 + $0x1c0] sm:$0xf]
  %v331 = vld [vmem:[%s1 + $0x1c4] sm:$0xf]
  %v332 = vld [vmem:[%s1 + $0x1c8] sm:$0xf]
  %v333 = vld [vmem:[%s1 + $0x1cc] sm:$0xf]
  %v334 = vld [vmem:[%s1 + $0x1d0] sm:$0xf]
  %v335 = vld [vmem:[%s1 + $0x1d4] sm:$0xf]
  %v336 = vld [vmem:[%s1 + $0x1d8] sm:$0xf]
  %v337 = vld [vmem:[%s1 + $0x1dc] sm:$0xf]
  %v338 = vld [vmem:[%s1 + $0x1e0] sm:$0xf]
  %v339 = vld [vmem:[%s1 + $0x1e4] sm:$0xf]
  %v340 = vld [vmem:[%s1 + $0x1e8] sm:$0xf]
  %v341 = vld [vmem:[%s1 + $0x1ec] sm:$0xf]
  %v342 = vld [vmem:[%s1 + $0x1f0] sm:$0xf]
  %v343 = vld [vmem:[%s1 + $0x1f4] sm:$0xf]
  %v344 = vld [vmem:[%s1 + $0x1f8] sm:$0xf]
  %v345 = vld [vmem:[%s1 + $0x1fc] sm:$0xf]
  %v546 = vunpack.c.l.b16 %v18
  %v547 = vunpack.c.h.b16 %v18
  %v548 = vunpack.c.l.b16 %v19
  %v549 = vunpack.c.h.b16 %v19
  %v550 = vunpack.c.l.b16 %v20
  %v551 = vunpack.c.h.b16 %v20
  %v552 = vunpack.c.l.b16 %v21
  %v553 = vunpack.c.h.b16 %v21
  %v554 = vunpack.c.l.b16 %v22
  %v555 = vunpack.c.h.b16 %v22
  %v556 = vunpack.c.l.b16 %v23
  %v557 = vunpack.c.h.b16 %v23
  %v558 = vunpack.c.l.b16 %v24
  %v559 = vunpack.c.h.b16 %v24
  %v560 = vunpack.c.l.b16 %v25
  %v561 = vunpack.c.h.b16 %v25
  %v562 = vunpack.c.l.b16 %v26
  %v563 = vunpack.c.h.b16 %v26
  %v564 = vunpack.c.l.b16 %v27
  %v565 = vunpack.c.h.b16 %v27
  %v566 = vunpack.c.l.b16 %v28
  %v567 = vunpack.c.h.b16 %v28
  %v568 = vunpack.c.l.b16 %v29
  %v569 = vunpack.c.h.b16 %v29
  %v570 = vunpack.c.l.b16 %v30
  %v571 = vunpack.c.h.b16 %v30
  %v572 = vunpack.c.l.b16 %v31
  %v573 = vunpack.c.h.b16 %v31
  %v574 = vunpack.c.l.b16 %v32
  %v575 = vunpack.c.h.b16 %v32
  %v576 = vunpack.c.l.b16 %v33
  %v577 = vunpack.c.h.b16 %v33
  %v578 = vunpack.c.l.b16 %v34
  %v579 = vunpack.c.h.b16 %v34
  %v580 = vunpack.c.l.b16 %v35
  %v581 = vunpack.c.h.b16 %v35
  %v582 = vunpack.c.l.b16 %v36
  %v583 = vunpack.c.h.b16 %v36
  %v584 = vunpack.c.l.b16 %v37
  %v585 = vunpack.c.h.b16 %v37
  %v586 = vunpack.c.l.b16 %v38
  %v587 = vunpack.c.h.b16 %v38
  %v588 = vunpack.c.l.b16 %v39
  %v589 = vunpack.c.h.b16 %v39
  %v590 = vunpack.c.l.b16 %v40
  %v591 = vunpack.c.h.b16 %v40
  %v592 = vunpack.c.l.b16 %v41
  %v593 = vunpack.c.h.b16 %v41
  %v594 = vunpack.c.l.b16 %v42
  %v595 = vunpack.c.h.b16 %v42
  %v596 = vunpack.c.l.b16 %v43
  %v597 = vunpack.c.h.b16 %v43
  %v598 = vunpack.c.l.b16 %v44
  %v599 = vunpack.c.h.b16 %v44
  %v600 = vunpack.c.l.b16 %v45
  %v601 = vunpack.c.h.b16 %v45
  %v602 = vunpack.c.l.b16 %v46
  %v603 = vunpack.c.h.b16 %v46
  %v604 = vunpack.c.l.b16 %v47
  %v605 = vunpack.c.h.b16 %v47
  %v606 = vunpack.c.l.b16 %v48
  %v607 = vunpack.c.h.b16 %v48
  %v608 = vunpack.c.l.b16 %v49
  %v609 = vunpack.c.h.b16 %v49
  %v610 = vunpack.c.l.b16 %v50
  %v611 = vunpack.c.h.b16 %v50
  %v612 = vunpack.c.l.b16 %v51
  %v613 = vunpack.c.h.b16 %v51
  %v614 = vunpack.c.l.b16 %v52
  %v615 = vunpack.c.h.b16 %v52
  %v616 = vunpack.c.l.b16 %v53
  %v617 = vunpack.c.h.b16 %v53
  %v618 = vunpack.c.l.b16 %v54
  %v619 = vunpack.c.h.b16 %v54
  %v620 = vunpack.c.l.b16 %v55
  %v621 = vunpack.c.h.b16 %v55
  %v622 = vunpack.c.l.b16 %v56
  %v623 = vunpack.c.h.b16 %v56
  %v624 = vunpack.c.l.b16 %v57
  %v625 = vunpack.c.h.b16 %v57
  %v626 = vunpack.c.l.b16 %v58
  %v627 = vunpack.c.h.b16 %v58
  %v628 = vunpack.c.l.b16 %v59
  %v629 = vunpack.c.h.b16 %v59
  %v630 = vunpack.c.l.b16 %v60
  %v631 = vunpack.c.h.b16 %v60
  %v632 = vunpack.c.l.b16 %v61
  %v633 = vunpack.c.h.b16 %v61
  %v634 = vunpack.c.l.b16 %v62
  %v635 = vunpack.c.h.b16 %v62
  %v636 = vunpack.c.l.b16 %v63
  %v637 = vunpack.c.h.b16 %v63
  %v638 = vunpack.c.l.b16 %v64
  %v639 = vunpack.c.h.b16 %v64
  %v640 = vunpack.c.l.b16 %v65
  %v641 = vunpack.c.h.b16 %v65
  %v642 = vunpack.c.l.b16 %v66
  %v643 = vunpack.c.h.b16 %v66
  %v644 = vunpack.c.l.b16 %v67
  %v645 = vunpack.c.h.b16 %v67
  %v646 = vunpack.c.l.b16 %v68
  %v647 = vunpack.c.h.b16 %v68
  %v648 = vunpack.c.l.b16 %v69
  %v649 = vunpack.c.h.b16 %v69
  %v650 = vunpack.c.l.b16 %v70
  %v651 = vunpack.c.h.b16 %v70
  %v652 = vunpack.c.l.b16 %v71
  %v653 = vunpack.c.h.b16 %v71
  %v654 = vunpack.c.l.b16 %v72
  %v655 = vunpack.c.h.b16 %v72
  %v656 = vunpack.c.l.b16 %v73
  %v657 = vunpack.c.h.b16 %v73
  %v658 = vunpack.c.l.b16 %v74
  %v659 = vunpack.c.h.b16 %v74
  %v660 = vunpack.c.l.b16 %v75
  %v661 = vunpack.c.h.b16 %v75
  %v662 = vunpack.c.l.b16 %v76
  %v663 = vunpack.c.h.b16 %v76
  %v664 = vunpack.c.l.b16 %v77
  %v665 = vunpack.c.h.b16 %v77
  %v666 = vunpack.c.l.b16 %v78
  %v667 = vunpack.c.h.b16 %v78
  %v668 = vunpack.c.l.b16 %v79
  %v669 = vunpack.c.h.b16 %v79
  %v670 = vunpack.c.l.b16 %v80
  %v671 = vunpack.c.h.b16 %v80
  %v672 = vunpack.c.l.b16 %v81
  %v673 = vunpack.c.h.b16 %v81
  %v674 = vunpack.c.l.b16 %v82
  %v675 = vunpack.c.h.b16 %v82
  %v676 = vunpack.c.l.b16 %v83
  %v677 = vunpack.c.h.b16 %v83
  %v678 = vunpack.c.l.b16 %v84
  %v679 = vunpack.c.h.b16 %v84
  %v680 = vunpack.c.l.b16 %v85
  %v681 = vunpack.c.h.b16 %v85
  %v682 = vunpack.c.l.b16 %v86
  %v683 = vunpack.c.h.b16 %v86
  %v684 = vunpack.c.l.b16 %v87
  %v685 = vunpack.c.h.b16 %v87
  %v686 = vunpack.c.l.b16 %v88
  %v687 = vunpack.c.h.b16 %v88
  %v688 = vunpack.c.l.b16 %v89
  %v689 = vunpack.c.h.b16 %v89
  %v690 = vunpack.c.l.b16 %v90
  %v691 = vunpack.c.h.b16 %v90
  %v692 = vunpack.c.l.b16 %v91
  %v693 = vunpack.c.h.b16 %v91
  %v694 = vunpack.c.l.b16 %v92
  %v695 = vunpack.c.h.b16 %v92
  %v696 = vunpack.c.l.b16 %v93
  %v697 = vunpack.c.h.b16 %v93
  %v698 = vunpack.c.l.b16 %v94
  %v699 = vunpack.c.h.b16 %v94
  %v700 = vunpack.c.l.b16 %v95
  %v701 = vunpack.c.h.b16 %v95
  %v702 = vunpack.c.l.b16 %v96
  %v703 = vunpack.c.h.b16 %v96
  %v704 = vunpack.c.l.b16 %v97
  %v705 = vunpack.c.h.b16 %v97
  %v706 = vunpack.c.l.b16 %v98
  %v707 = vunpack.c.h.b16 %v98
  %v708 = vunpack.c.l.b16 %v99
  %v709 = vunpack.c.h.b16 %v99
  %v710 = vunpack.c.l.b16 %v100
  %v711 = vunpack.c.h.b16 %v100
  %v712 = vunpack.c.l.b16 %v101
  %v713 = vunpack.c.h.b16 %v101
  %v714 = vunpack.c.l.b16 %v102
  %v715 = vunpack.c.h.b16 %v102
  %v716 = vunpack.c.l.b16 %v103
  %v717 = vunpack.c.h.b16 %v103
  %v718 = vunpack.c.l.b16 %v104
  %v719 = vunpack.c.h.b16 %v104
  %v720 = vunpack.c.l.b16 %v105
  %v721 = vunpack.c.h.b16 %v105
  %v722 = vunpack.c.l.b16 %v106
  %v723 = vunpack.c.h.b16 %v106
  %v724 = vunpack.c.l.b16 %v107
  %v725 = vunpack.c.h.b16 %v107
  %v726 = vunpack.c.l.b16 %v108
  %v727 = vunpack.c.h.b16 %v108
  %v728 = vunpack.c.l.b16 %v109
  %v729 = vunpack.c.h.b16 %v109
  %v730 = vunpack.c.l.b16 %v110
  %v731 = vunpack.c.h.b16 %v110
  %v732 = vunpack.c.l.b16 %v111
  %v733 = vunpack.c.h.b16 %v111
  %v734 = vunpack.c.l.b16 %v112
  %v735 = vunpack.c.h.b16 %v112
  %v736 = vunpack.c.l.b16 %v113
  %v737 = vunpack.c.h.b16 %v113
  %v738 = vunpack.c.l.b16 %v114
  %v739 = vunpack.c.h.b16 %v114
  %v740 = vunpack.c.l.b16 %v115
  %v741 = vunpack.c.h.b16 %v115
  %v742 = vunpack.c.l.b16 %v116
  %v743 = vunpack.c.h.b16 %v116
  %v744 = vunpack.c.l.b16 %v117
  %v745 = vunpack.c.h.b16 %v117
  %v746 = vunpack.c.l.b16 %v118
  %v747 = vunpack.c.h.b16 %v118
  %v748 = vunpack.c.l.b16 %v119
  %v749 = vunpack.c.h.b16 %v119
  %v750 = vunpack.c.l.b16 %v120
  %v751 = vunpack.c.h.b16 %v120
  %v752 = vunpack.c.l.b16 %v121
  %v753 = vunpack.c.h.b16 %v121
  %v754 = vunpack.c.l.b16 %v122
  %v755 = vunpack.c.h.b16 %v122
  %v756 = vunpack.c.l.b16 %v123
  %v757 = vunpack.c.h.b16 %v123
  %v758 = vunpack.c.l.b16 %v124
  %v759 = vunpack.c.h.b16 %v124
  %v760 = vunpack.c.l.b16 %v125
  %v761 = vunpack.c.h.b16 %v125
  %v762 = vunpack.c.l.b16 %v126
  %v763 = vunpack.c.h.b16 %v126
  %v764 = vunpack.c.l.b16 %v127
  %v765 = vunpack.c.h.b16 %v127
  %v766 = vunpack.c.l.b16 %v128
  %v767 = vunpack.c.h.b16 %v128
  %v768 = vunpack.c.l.b16 %v129
  %v769 = vunpack.c.h.b16 %v129
  %v770 = vunpack.c.l.b16 %v130
  %v771 = vunpack.c.h.b16 %v130
  %v772 = vunpack.c.l.b16 %v131
  %v773 = vunpack.c.h.b16 %v131
  %v774 = vunpack.c.l.b16 %v132
  %v775 = vunpack.c.h.b16 %v132
  %v776 = vunpack.c.l.b16 %v133
  %v777 = vunpack.c.h.b16 %v133
  %v778 = vunpack.c.l.b16 %v134
  %v779 = vunpack.c.h.b16 %v134
  %v780 = vunpack.c.l.b16 %v135
  %v781 = vunpack.c.h.b16 %v135
  %v782 = vunpack.c.l.b16 %v136
  %v783 = vunpack.c.h.b16 %v136
  %v784 = vunpack.c.l.b16 %v137
  %v785 = vunpack.c.h.b16 %v137
  %v786 = vunpack.c.l.b16 %v138
  %v787 = vunpack.c.h.b16 %v138
  %v788 = vunpack.c.l.b16 %v139
  %v789 = vunpack.c.h.b16 %v139
  %v790 = vunpack.c.l.b16 %v140
  %v791 = vunpack.c.h.b16 %v140
  %v792 = vunpack.c.l.b16 %v141
  %v793 = vunpack.c.h.b16 %v141
  %v794 = vunpack.c.l.b16 %v142
  %v795 = vunpack.c.h.b16 %v142
  %v796 = vunpack.c.l.b16 %v143
  %v797 = vunpack.c.h.b16 %v143
  %v798 = vunpack.c.l.b16 %v144
  %v799 = vunpack.c.h.b16 %v144
  %v800 = vunpack.c.l.b16 %v145
  %v801 = vunpack.c.h.b16 %v145
  %v802 = vunpack.c.l.b16 %v146
  %v803 = vunpack.c.h.b16 %v146
  %v804 = vunpack.c.l.b16 %v147
  %v805 = vunpack.c.h.b16 %v147
  %v806 = vunpack.c.l.b16 %v148
  %v807 = vunpack.c.h.b16 %v148
  %v808 = vunpack.c.l.b16 %v149
  %v809 = vunpack.c.h.b16 %v149
  %v810 = vunpack.c.l.b16 %v150
  %v811 = vunpack.c.h.b16 %v150
  %v812 = vunpack.c.l.b16 %v151
  %v813 = vunpack.c.h.b16 %v151
  %v814 = vunpack.c.l.b16 %v152
  %v815 = vunpack.c.h.b16 %v152
  %v816 = vunpack.c.l.b16 %v153
  %v817 = vunpack.c.h.b16 %v153
  %v818 = vunpack.c.l.b16 %v154
  %v819 = vunpack.c.h.b16 %v154
  %v820 = vunpack.c.l.b16 %v155
  %v821 = vunpack.c.h.b16 %v155
  %v822 = vunpack.c.l.b16 %v156
  %v823 = vunpack.c.h.b16 %v156
  %v824 = vunpack.c.l.b16 %v157
  %v825 = vunpack.c.h.b16 %v157
  %v826 = vunpack.c.l.b16 %v158
  %v827 = vunpack.c.h.b16 %v158
  %v828 = vunpack.c.l.b16 %v159
  %v829 = vunpack.c.h.b16 %v159
  %v830 = vunpack.c.l.b16 %v160
  %v831 = vunpack.c.h.b16 %v160
  %v832 = vunpack.c.l.b16 %v161
  %v833 = vunpack.c.h.b16 %v161
  %v834 = vunpack.c.l.b16 %v162
  %v835 = vunpack.c.h.b16 %v162
  %v836 = vunpack.c.l.b16 %v163
  %v837 = vunpack.c.h.b16 %v163
  %v838 = vunpack.c.l.b16 %v164
  %v839 = vunpack.c.h.b16 %v164
  %v840 = vunpack.c.l.b16 %v165
  %v841 = vunpack.c.h.b16 %v165
  %v842 = vunpack.c.l.b16 %v166
  %v843 = vunpack.c.h.b16 %v166
  %v844 = vunpack.c.l.b16 %v167
  %v845 = vunpack.c.h.b16 %v167
  %v846 = vunpack.c.l.b16 %v168
  %v847 = vunpack.c.h.b16 %v168
  %v848 = vunpack.c.l.b16 %v169
  %v849 = vunpack.c.h.b16 %v169
  %v850 = vunpack.c.l.b16 %v170
  %v851 = vunpack.c.h.b16 %v170
  %v852 = vunpack.c.l.b16 %v171
  %v853 = vunpack.c.h.b16 %v171
  %v854 = vunpack.c.l.b16 %v172
  %v855 = vunpack.c.h.b16 %v172
  %v856 = vunpack.c.l.b16 %v173
  %v857 = vunpack.c.h.b16 %v173
  %v858 = vunpack.c.l.b16 %v174
  %v859 = vunpack.c.h.b16 %v174
  %v860 = vunpack.c.l.b16 %v175
  %v861 = vunpack.c.h.b16 %v175
  %v862 = vunpack.c.l.b16 %v176
  %v863 = vunpack.c.h.b16 %v176
  %v864 = vunpack.c.l.b16 %v177
  %v865 = vunpack.c.h.b16 %v177
  %v866 = vunpack.c.l.b16 %v178
  %v867 = vunpack.c.h.b16 %v178
  %v868 = vunpack.c.l.b16 %v179
  %v869 = vunpack.c.h.b16 %v179
  %v870 = vunpack.c.l.b16 %v180
  %v871 = vunpack.c.h.b16 %v180
  %v872 = vunpack.c.l.b16 %v181
  %v873 = vunpack.c.h.b16 %v181
  %v874 = vunpack.c.l.b16 %v182
  %v875 = vunpack.c.h.b16 %v182
  %v876 = vunpack.c.l.b16 %v183
  %v877 = vunpack.c.h.b16 %v183
  %v878 = vunpack.c.l.b16 %v184
  %v879 = vunpack.c.h.b16 %v184
  %v880 = vunpack.c.l.b16 %v185
  %v881 = vunpack.c.h.b16 %v185
  %v882 = vunpack.c.l.b16 %v186
  %v883 = vunpack.c.h.b16 %v186
  %v884 = vunpack.c.l.b16 %v187
  %v885 = vunpack.c.h.b16 %v187
  %v886 = vunpack.c.l.b16 %v188
  %v887 = vunpack.c.h.b16 %v188
  %v888 = vunpack.c.l.b16 %v189
  %v889 = vunpack.c.h.b16 %v189
  %v890 = vunpack.c.l.b16 %v190
  %v891 = vunpack.c.h.b16 %v190
  %v892 = vunpack.c.l.b16 %v191
  %v893 = vunpack.c.h.b16 %v191
  %v894 = vunpack.c.l.b16 %v192
  %v895 = vunpack.c.h.b16 %v192
  %v896 = vunpack.c.l.b16 %v193
  %v897 = vunpack.c.h.b16 %v193
  %v898 = vunpack.c.l.b16 %v194
  %v899 = vunpack.c.h.b16 %v194
  %v900 = vunpack.c.l.b16 %v195
  %v901 = vunpack.c.h.b16 %v195
  %v902 = vunpack.c.l.b16 %v196
  %v903 = vunpack.c.h.b16 %v196
  %v904 = vunpack.c.l.b16 %v197
  %v905 = vunpack.c.h.b16 %v197
  %v906 = vunpack.c.l.b16 %v198
  %v907 = vunpack.c.h.b16 %v198
  %v908 = vunpack.c.l.b16 %v199
  %v909 = vunpack.c.h.b16 %v199
  %v910 = vunpack.c.l.b16 %v200
  %v911 = vunpack.c.h.b16 %v200
  %v912 = vunpack.c.l.b16 %v201
  %v913 = vunpack.c.h.b16 %v201
  %v914 = vunpack.c.l.b16 %v202
  %v915 = vunpack.c.h.b16 %v202
  %v916 = vunpack.c.l.b16 %v203
  %v917 = vunpack.c.h.b16 %v203
  %v918 = vunpack.c.l.b16 %v204
  %v919 = vunpack.c.h.b16 %v204
  %v920 = vunpack.c.l.b16 %v205
  %v921 = vunpack.c.h.b16 %v205
  %v922 = vunpack.c.l.b16 %v206
  %v923 = vunpack.c.h.b16 %v206
  %v924 = vunpack.c.l.b16 %v207
  %v925 = vunpack.c.h.b16 %v207
  %v926 = vunpack.c.l.b16 %v208
  %v927 = vunpack.c.h.b16 %v208
  %v928 = vunpack.c.l.b16 %v209
  %v929 = vunpack.c.h.b16 %v209
  %v930 = vunpack.c.l.b16 %v210
  %v931 = vunpack.c.h.b16 %v210
  %v932 = vunpack.c.l.b16 %v211
  %v933 = vunpack.c.h.b16 %v211
  %v934 = vunpack.c.l.b16 %v212
  %v935 = vunpack.c.h.b16 %v212
  %v936 = vunpack.c.l.b16 %v213
  %v937 = vunpack.c.h.b16 %v213
  %v938 = vunpack.c.l.b16 %v214
  %v939 = vunpack.c.h.b16 %v214
  %v940 = vunpack.c.l.b16 %v215
  %v941 = vunpack.c.h.b16 %v215
  %v942 = vunpack.c.l.b16 %v216
  %v943 = vunpack.c.h.b16 %v216
  %v944 = vunpack.c.l.b16 %v217
  %v945 = vunpack.c.h.b16 %v217
  %v946 = vpack.c.b16 %v554, %v546
  %v947 = vpack.c.b16 %v555, %v547
  %v948 = vpack.c.b16 %v556, %v548
  %v949 = vpack.c.b16 %v557, %v549
  %v950 = vpack.c.b16 %v558, %v550
  %v951 = vpack.c.b16 %v559, %v551
  %v952 = vpack.c.b16 %v560, %v552
  %v953 = vpack.c.b16 %v561, %v553
  %v954 = vpack.c.b16 %v570, %v562
  %v955 = vpack.c.b16 %v571, %v563
  %v956 = vpack.c.b16 %v572, %v564
  %v957 = vpack.c.b16 %v573, %v565
  %v958 = vpack.c.b16 %v574, %v566
  %v959 = vpack.c.b16 %v575, %v567
  %v960 = vpack.c.b16 %v576, %v568
  %v961 = vpack.c.b16 %v577, %v569
  %v962 = vpack.c.b16 %v586, %v578
  %v963 = vpack.c.b16 %v587, %v579
  %v964 = vpack.c.b16 %v588, %v580
  %v965 = vpack.c.b16 %v589, %v581
  %v966 = vpack.c.b16 %v590, %v582
  %v967 = vpack.c.b16 %v591, %v583
  %v968 = vpack.c.b16 %v592, %v584
  %v969 = vpack.c.b16 %v593, %v585
  %v970 = vpack.c.b16 %v602, %v594
  %v971 = vpack.c.b16 %v603, %v595
  %v972 = vpack.c.b16 %v604, %v596
  %v973 = vpack.c.b16 %v605, %v597
  %v974 = vpack.c.b16 %v606, %v598
  %v975 = vpack.c.b16 %v607, %v599
  %v976 = vpack.c.b16 %v608, %v600
  %v977 = vpack.c.b16 %v609, %v601
  %v978 = vpack.c.b16 %v618, %v610
  %v979 = vpack.c.b16 %v619, %v611
  %v980 = vpack.c.b16 %v620, %v612
  %v981 = vpack.c.b16 %v621, %v613
  %v982 = vpack.c.b16 %v622, %v614
  %v983 = vpack.c.b16 %v623, %v615
  %v984 = vpack.c.b16 %v624, %v616
  %v985 = vpack.c.b16 %v625, %v617
  %v986 = vpack.c.b16 %v634, %v626
  %v987 = vpack.c.b16 %v635, %v627
  %v988 = vpack.c.b16 %v636, %v628
  %v989 = vpack.c.b16 %v637, %v629
  %v990 = vpack.c.b16 %v638, %v630
  %v991 = vpack.c.b16 %v639, %v631
  %v992 = vpack.c.b16 %v640, %v632
  %v993 = vpack.c.b16 %v641, %v633
  %v994 = vpack.c.b16 %v650, %v642
  %v995 = vpack.c.b16 %v651, %v643
  %v996 = vpack.c.b16 %v652, %v644
  %v997 = vpack.c.b16 %v653, %v645
  %v998 = vpack.c.b16 %v654, %v646
  %v999 = vpack.c.b16 %v655, %v647
  %v1000 = vpack.c.b16 %v656, %v648
  %v1001 = vpack.c.b16 %v657, %v649
  %v1002 = vpack.c.b16 %v666, %v658
  %v1003 = vpack.c.b16 %v667, %v659
  %v1004 = vpack.c.b16 %v668, %v660
  %v1005 = vpack.c.b16 %v669, %v661
  %v1006 = vpack.c.b16 %v670, %v662
  %v1007 = vpack.c.b16 %v671, %v663
  %v1008 = vpack.c.b16 %v672, %v664
  %v1009 = vpack.c.b16 %v673, %v665
  %v1010 = vpack.c.b16 %v682, %v674
  %v1011 = vpack.c.b16 %v683, %v675
  %v1012 = vpack.c.b16 %v684, %v676
  %v1013 = vpack.c.b16 %v685, %v677
  %v1014 = vpack.c.b16 %v686, %v678
  %v1015 = vpack.c.b16 %v687, %v679
  %v1016 = vpack.c.b16 %v688, %v680
  %v1017 = vpack.c.b16 %v689, %v681
  %v1018 = vpack.c.b16 %v698, %v690
  %v1019 = vpack.c.b16 %v699, %v691
  %v1020 = vpack.c.b16 %v700, %v692
  %v1021 = vpack.c.b16 %v701, %v693
  %v1022 = vpack.c.b16 %v702, %v694
  %v1023 = vpack.c.b16 %v703, %v695
  %v1024 = vpack.c.b16 %v704, %v696
  %v1025 = vpack.c.b16 %v705, %v697
  %v1026 = vpack.c.b16 %v714, %v706
  %v1027 = vpack.c.b16 %v715, %v707
  %v1028 = vpack.c.b16 %v716, %v708
  %v1029 = vpack.c.b16 %v717, %v709
  %v1030 = vpack.c.b16 %v718, %v710
  %v1031 = vpack.c.b16 %v719, %v711
  %v1032 = vpack.c.b16 %v720, %v712
  %v1033 = vpack.c.b16 %v721, %v713
  %v1034 = vpack.c.b16 %v730, %v722
  %v1035 = vpack.c.b16 %v731, %v723
  %v1036 = vpack.c.b16 %v732, %v724
  %v1037 = vpack.c.b16 %v733, %v725
  %v1038 = vpack.c.b16 %v734, %v726
  %v1039 = vpack.c.b16 %v735, %v727
  %v1040 = vpack.c.b16 %v736, %v728
  %v1041 = vpack.c.b16 %v737, %v729
  %v1042 = vpack.c.b16 %v746, %v738
  %v1043 = vpack.c.b16 %v747, %v739
  %v1044 = vpack.c.b16 %v748, %v740
  %v1045 = vpack.c.b16 %v749, %v741
  %v1046 = vpack.c.b16 %v750, %v742
  %v1047 = vpack.c.b16 %v751, %v743
  %v1048 = vpack.c.b16 %v752, %v744
  %v1049 = vpack.c.b16 %v753, %v745
  %v1050 = vpack.c.b16 %v762, %v754
  %v1051 = vpack.c.b16 %v763, %v755
  %v1052 = vpack.c.b16 %v764, %v756
  %v1053 = vpack.c.b16 %v765, %v757
  %v1054 = vpack.c.b16 %v766, %v758
  %v1055 = vpack.c.b16 %v767, %v759
  %v1056 = vpack.c.b16 %v768, %v760
  %v1057 = vpack.c.b16 %v769, %v761
  %v1058 = vpack.c.b16 %v778, %v770
  %v1059 = vpack.c.b16 %v779, %v771
  %v1060 = vpack.c.b16 %v780, %v772
  %v1061 = vpack.c.b16 %v781, %v773
  %v1062 = vpack.c.b16 %v782, %v774
  %v1063 = vpack.c.b16 %v783, %v775
  %v1064 = vpack.c.b16 %v784, %v776
  %v1065 = vpack.c.b16 %v785, %v777
  %v1066 = vpack.c.b16 %v794, %v786
  %v1067 = vpack.c.b16 %v795, %v787
  %v1068 = vpack.c.b16 %v796, %v788
  %v1069 = vpack.c.b16 %v797, %v789
  %v1070 = vpack.c.b16 %v798, %v790
  %v1071 = vpack.c.b16 %v799, %v791
  %v1072 = vpack.c.b16 %v800, %v792
  %v1073 = vpack.c.b16 %v801, %v793
  %v1074 = vpack.c.b16 %v810, %v802
  %v1075 = vpack.c.b16 %v811, %v803
  %v1076 = vpack.c.b16 %v812, %v804
  %v1077 = vpack.c.b16 %v813, %v805
  %v1078 = vpack.c.b16 %v814, %v806
  %v1079 = vpack.c.b16 %v815, %v807
  %v1080 = vpack.c.b16 %v816, %v808
  %v1081 = vpack.c.b16 %v817, %v809
  %v1082 = vpack.c.b16 %v826, %v818
  %v1083 = vpack.c.b16 %v827, %v819
  %v1084 = vpack.c.b16 %v828, %v820
  %v1085 = vpack.c.b16 %v829, %v821
  %v1086 = vpack.c.b16 %v830, %v822
  %v1087 = vpack.c.b16 %v831, %v823
  %v1088 = vpack.c.b16 %v832, %v824
  %v1089 = vpack.c.b16 %v833, %v825
  %v1090 = vpack.c.b16 %v842, %v834
  %v1091 = vpack.c.b16 %v843, %v835
  %v1092 = vpack.c.b16 %v844, %v836
  %v1093 = vpack.c.b16 %v845, %v837
  %v1094 = vpack.c.b16 %v846, %v838
  %v1095 = vpack.c.b16 %v847, %v839
  %v1096 = vpack.c.b16 %v848, %v840
  %v1097 = vpack.c.b16 %v849, %v841
  %v1098 = vpack.c.b16 %v858, %v850
  %v1099 = vpack.c.b16 %v859, %v851
  %v1100 = vpack.c.b16 %v860, %v852
  %v1101 = vpack.c.b16 %v861, %v853
  %v1102 = vpack.c.b16 %v862, %v854
  %v1103 = vpack.c.b16 %v863, %v855
  %v1104 = vpack.c.b16 %v864, %v856
  %v1105 = vpack.c.b16 %v865, %v857
  %v1106 = vpack.c.b16 %v874, %v866
  %v1107 = vpack.c.b16 %v875, %v867
  %v1108 = vpack.c.b16 %v876, %v868
  %v1109 = vpack.c.b16 %v877, %v869
  %v1110 = vpack.c.b16 %v878, %v870
  %v1111 = vpack.c.b16 %v879, %v871
  %v1112 = vpack.c.b16 %v880, %v872
  %v1113 = vpack.c.b16 %v881, %v873
  %v1114 = vpack.c.b16 %v890, %v882
  %v1115 = vpack.c.b16 %v891, %v883
  %v1116 = vpack.c.b16 %v892, %v884
  %v1117 = vpack.c.b16 %v893, %v885
  %v1118 = vpack.c.b16 %v894, %v886
  %v1119 = vpack.c.b16 %v895, %v887
  %v1120 = vpack.c.b16 %v896, %v888
  %v1121 = vpack.c.b16 %v897, %v889
  %v1122 = vpack.c.b16 %v906, %v898
  %v1123 = vpack.c.b16 %v907, %v899
  %v1124 = vpack.c.b16 %v908, %v900
  %v1125 = vpack.c.b16 %v909, %v901
  %v1126 = vpack.c.b16 %v910, %v902
  %v1127 = vpack.c.b16 %v911, %v903
  %v1128 = vpack.c.b16 %v912, %v904
  %v1129 = vpack.c.b16 %v913, %v905
  %v1130 = vpack.c.b16 %v922, %v914
  %v1131 = vpack.c.b16 %v923, %v915
  %v1132 = vpack.c.b16 %v924, %v916
  %v1133 = vpack.c.b16 %v925, %v917
  %v1134 = vpack.c.b16 %v926, %v918
  %v1135 = vpack.c.b16 %v927, %v919
  %v1136 = vpack.c.b16 %v928, %v920
  %v1137 = vpack.c.b16 %v929, %v921
  %v1138 = vpack.c.b16 %v938, %v930
  %v1139 = vpack.c.b16 %v939, %v931
  %v1140 = vpack.c.b16 %v940, %v932
  %v1141 = vpack.c.b16 %v941, %v933
  %v1142 = vpack.c.b16 %v942, %v934
  %v1143 = vpack.c.b16 %v943, %v935
  %v1144 = vpack.c.b16 %v944, %v936
  %v1145 = vpack.c.b16 %v945, %v937
  %v1474 = vunpack.c.l.b16 %v218
  %v1475 = vunpack.c.l.b16 %v219
  %v1476 = vunpack.c.l.b16 %v220
  %v1477 = vunpack.c.l.b16 %v221
  %v1478 = vunpack.c.l.b16 %v222
  %v1479 = vunpack.c.l.b16 %v223
  %v1480 = vunpack.c.l.b16 %v224
  %v1481 = vunpack.c.l.b16 %v225
  %v1482 = vunpack.c.l.b16 %v226
  %v1483 = vunpack.c.l.b16 %v227
  %v1484 = vunpack.c.l.b16 %v228
  %v1485 = vunpack.c.l.b16 %v229
  %v1486 = vunpack.c.l.b16 %v230
  %v1487 = vunpack.c.l.b16 %v231
  %v1488 = vunpack.c.l.b16 %v232
  %v1489 = vunpack.c.l.b16 %v233
  %v1490 = vunpack.c.l.b16 %v234
  %v1491 = vunpack.c.l.b16 %v235
  %v1492 = vunpack.c.l.b16 %v236
  %v1493 = vunpack.c.l.b16 %v237
  %v1494 = vunpack.c.l.b16 %v238
  %v1495 = vunpack.c.l.b16 %v239
  %v1496 = vunpack.c.l.b16 %v240
  %v1497 = vunpack.c.l.b16 %v241
  %v1498 = vunpack.c.l.b16 %v242
  %v1499 = vunpack.c.l.b16 %v243
  %v1500 = vunpack.c.l.b16 %v244
  %v1501 = vunpack.c.l.b16 %v245
  %v1502 = vunpack.c.l.b16 %v246
  %v1503 = vunpack.c.l.b16 %v247
  %v1504 = vunpack.c.l.b16 %v248
  %v1505 = vunpack.c.l.b16 %v249
  %v1506 = vunpack.c.l.b16 %v250
  %v1507 = vunpack.c.l.b16 %v251
  %v1508 = vunpack.c.l.b16 %v252
  %v1509 = vunpack.c.l.b16 %v253
  %v1510 = vunpack.c.l.b16 %v254
  %v1511 = vunpack.c.l.b16 %v255
  %v1512 = vunpack.c.l.b16 %v256
  %v1513 = vunpack.c.l.b16 %v257
  %v1514 = vunpack.c.l.b16 %v258
  %v1515 = vunpack.c.l.b16 %v259
  %v1516 = vunpack.c.l.b16 %v260
  %v1517 = vunpack.c.l.b16 %v261
  %v1518 = vunpack.c.l.b16 %v262
  %v1519 = vunpack.c.l.b16 %v263
  %v1520 = vunpack.c.l.b16 %v264
  %v1521 = vunpack.c.l.b16 %v265
  %v1522 = vunpack.c.l.b16 %v266
  %v1523 = vunpack.c.l.b16 %v267
  %v1524 = vunpack.c.l.b16 %v268
  %v1525 = vunpack.c.l.b16 %v269
  %v1526 = vunpack.c.l.b16 %v270
  %v1527 = vunpack.c.l.b16 %v271
  %v1528 = vunpack.c.l.b16 %v272
  %v1529 = vunpack.c.l.b16 %v273
  %v1530 = vunpack.c.l.b16 %v274
  %v1531 = vunpack.c.l.b16 %v275
  %v1532 = vunpack.c.l.b16 %v276
  %v1533 = vunpack.c.l.b16 %v277
  %v1534 = vunpack.c.l.b16 %v278
  %v1535 = vunpack.c.l.b16 %v279
  %v1536 = vunpack.c.l.b16 %v280
  %v1537 = vunpack.c.l.b16 %v281
  %v1538 = vunpack.c.l.b16 %v282
  %v1539 = vunpack.c.l.b16 %v283
  %v1540 = vunpack.c.l.b16 %v284
  %v1541 = vunpack.c.l.b16 %v285
  %v1542 = vunpack.c.l.b16 %v286
  %v1543 = vunpack.c.l.b16 %v287
  %v1544 = vunpack.c.l.b16 %v288
  %v1545 = vunpack.c.l.b16 %v289
  %v1546 = vunpack.c.l.b16 %v290
  %v1547 = vunpack.c.l.b16 %v291
  %v1548 = vunpack.c.l.b16 %v292
  %v1549 = vunpack.c.l.b16 %v293
  %v1550 = vunpack.c.l.b16 %v294
  %v1551 = vunpack.c.l.b16 %v295
  %v1552 = vunpack.c.l.b16 %v296
  %v1553 = vunpack.c.l.b16 %v297
  %v1554 = vunpack.c.l.b16 %v298
  %v1555 = vunpack.c.l.b16 %v299
  %v1556 = vunpack.c.l.b16 %v300
  %v1557 = vunpack.c.l.b16 %v301
  %v1558 = vunpack.c.l.b16 %v302
  %v1559 = vunpack.c.l.b16 %v303
  %v1560 = vunpack.c.l.b16 %v304
  %v1561 = vunpack.c.l.b16 %v305
  %v1562 = vunpack.c.l.b16 %v306
  %v1563 = vunpack.c.l.b16 %v307
  %v1564 = vunpack.c.l.b16 %v308
  %v1565 = vunpack.c.l.b16 %v309
  %v1566 = vunpack.c.l.b16 %v310
  %v1567 = vunpack.c.l.b16 %v311
  %v1568 = vunpack.c.l.b16 %v312
  %v1569 = vunpack.c.l.b16 %v313
  %v1570 = vunpack.c.l.b16 %v314
  %v1571 = vunpack.c.l.b16 %v315
  %v1572 = vunpack.c.l.b16 %v316
  %v1573 = vunpack.c.l.b16 %v317
  %v1574 = vunpack.c.l.b16 %v318
  %v1575 = vunpack.c.l.b16 %v319
  %v1576 = vunpack.c.l.b16 %v320
  %v1577 = vunpack.c.l.b16 %v321
  %v1578 = vunpack.c.l.b16 %v322
  %v1579 = vunpack.c.l.b16 %v323
  %v1580 = vunpack.c.l.b16 %v324
  %v1581 = vunpack.c.l.b16 %v325
  %v1582 = vunpack.c.l.b16 %v326
  %v1583 = vunpack.c.l.b16 %v327
  %v1584 = vunpack.c.l.b16 %v328
  %v1585 = vunpack.c.l.b16 %v329
  %v1586 = vunpack.c.l.b16 %v330
  %v1587 = vunpack.c.l.b16 %v331
  %v1588 = vunpack.c.l.b16 %v332
  %v1589 = vunpack.c.l.b16 %v333
  %v1590 = vunpack.c.l.b16 %v334
  %v1591 = vunpack.c.l.b16 %v335
  %v1592 = vunpack.c.l.b16 %v336
  %v1593 = vunpack.c.l.b16 %v337
  %v1594 = vunpack.c.l.b16 %v338
  %v1595 = vunpack.c.l.b16 %v339
  %v1596 = vunpack.c.l.b16 %v340
  %v1597 = vunpack.c.l.b16 %v341
  %v1598 = vunpack.c.l.b16 %v342
  %v1599 = vunpack.c.l.b16 %v343
  %v1600 = vunpack.c.l.b16 %v344
  %v1601 = vunpack.c.l.b16 %v345
  %v1602 = vpack.c.b16 %v1475, %v1474
  %v1603 = vpack.c.b16 %v1477, %v1476
  %v1604 = vpack.c.b16 %v1479, %v1478
  %v1605 = vpack.c.b16 %v1481, %v1480
  %v1606 = vpack.c.b16 %v1483, %v1482
  %v1607 = vpack.c.b16 %v1485, %v1484
  %v1608 = vpack.c.b16 %v1487, %v1486
  %v1609 = vpack.c.b16 %v1489, %v1488
  %v1610 = vpack.c.b16 %v1491, %v1490
  %v1611 = vpack.c.b16 %v1493, %v1492
  %v1612 = vpack.c.b16 %v1495, %v1494
  %v1613 = vpack.c.b16 %v1497, %v1496
  %v1614 = vpack.c.b16 %v1499, %v1498
  %v1615 = vpack.c.b16 %v1501, %v1500
  %v1616 = vpack.c.b16 %v1503, %v1502
  %v1617 = vpack.c.b16 %v1505, %v1504
  %v1618 = vpack.c.b16 %v1507, %v1506
  %v1619 = vpack.c.b16 %v1509, %v1508
  %v1620 = vpack.c.b16 %v1511, %v1510
  %v1621 = vpack.c.b16 %v1513, %v1512
  %v1622 = vpack.c.b16 %v1515, %v1514
  %v1623 = vpack.c.b16 %v1517, %v1516
  %v1624 = vpack.c.b16 %v1519, %v1518
  %v1625 = vpack.c.b16 %v1521, %v1520
  %v1626 = vpack.c.b16 %v1523, %v1522
  %v1627 = vpack.c.b16 %v1525, %v1524
  %v1628 = vpack.c.b16 %v1527, %v1526
  %v1629 = vpack.c.b16 %v1529, %v1528
  %v1630 = vpack.c.b16 %v1531, %v1530
  %v1631 = vpack.c.b16 %v1533, %v1532
  %v1632 = vpack.c.b16 %v1535, %v1534
  %v1633 = vpack.c.b16 %v1537, %v1536
  %v1634 = vpack.c.b16 %v1539, %v1538
  %v1635 = vpack.c.b16 %v1541, %v1540
  %v1636 = vpack.c.b16 %v1543, %v1542
  %v1637 = vpack.c.b16 %v1545, %v1544
  %v1638 = vpack.c.b16 %v1547, %v1546
  %v1639 = vpack.c.b16 %v1549, %v1548
  %v1640 = vpack.c.b16 %v1551, %v1550
  %v1641 = vpack.c.b16 %v1553, %v1552
  %v1642 = vpack.c.b16 %v1555, %v1554
  %v1643 = vpack.c.b16 %v1557, %v1556
  %v1644 = vpack.c.b16 %v1559, %v1558
  %v1645 = vpack.c.b16 %v1561, %v1560
  %v1646 = vpack.c.b16 %v1563, %v1562
  %v1647 = vpack.c.b16 %v1565, %v1564
  %v1648 = vpack.c.b16 %v1567, %v1566
  %v1649 = vpack.c.b16 %v1569, %v1568
  %v1650 = vpack.c.b16 %v1571, %v1570
  %v1651 = vpack.c.b16 %v1573, %v1572
  %v1652 = vpack.c.b16 %v1575, %v1574
  %v1653 = vpack.c.b16 %v1577, %v1576
  %v1654 = vpack.c.b16 %v1579, %v1578
  %v1655 = vpack.c.b16 %v1581, %v1580
  %v1656 = vpack.c.b16 %v1583, %v1582
  %v1657 = vpack.c.b16 %v1585, %v1584
  %v1658 = vpack.c.b16 %v1587, %v1586
  %v1659 = vpack.c.b16 %v1589, %v1588
  %v1660 = vpack.c.b16 %v1591, %v1590
  %v1661 = vpack.c.b16 %v1593, %v1592
  %v1662 = vpack.c.b16 %v1595, %v1594
  %v1663 = vpack.c.b16 %v1597, %v1596
  %v1664 = vpack.c.b16 %v1599, %v1598
  %v1665 = vpack.c.b16 %v1601, %v1600
  %1730 = vmatprep.subr.bf16.mxu0 0
  %1731 = vmatpush1.bf16.msra.mxu0 %v1602
  %1732 = vmatprep.subr.bf16.mxu0 0
  %1733 = vmatpush1.bf16.msra.mxu0 %v1603
  %1734 = vmatprep.subr.bf16.mxu0 0
  %1735 = vmatpush1.bf16.msra.mxu0 %v1604
  %1736 = vmatprep.subr.bf16.mxu0 0
  %1737 = vmatpush1.bf16.msra.mxu0 %v1605
  %1738 = vmatprep.subr.bf16.mxu0 0
  %1739 = vmatpush1.bf16.msra.mxu0 %v1606
  %1740 = vmatprep.subr.bf16.mxu0 0
  %1741 = vmatpush1.bf16.msra.mxu0 %v1607
  %1742 = vmatprep.subr.bf16.mxu0 0
  %1743 = vmatpush1.bf16.msra.mxu0 %v1608
  %1744 = vmatprep.subr.bf16.mxu0 0
  %1745 = vmatpush1.bf16.msra.mxu0 %v1609
  %1746 = vmatprep.subr.bf16.mxu0 0
  %1747 = vmatpush1.bf16.msra.mxu0 %v1610
  %1748 = vmatprep.subr.bf16.mxu0 0
  %1749 = vmatpush1.bf16.msra.mxu0 %v1611
  %1750 = vmatprep.subr.bf16.mxu0 0
  %1751 = vmatpush1.bf16.msra.mxu0 %v1612
  %1752 = vmatprep.subr.bf16.mxu0 0
  %1753 = vmatpush1.bf16.msra.mxu0 %v1613
  %1754 = vmatprep.subr.bf16.mxu0 0
  %1755 = vmatpush1.bf16.msra.mxu0 %v1614
  %1756 = vmatprep.subr.bf16.mxu0 0
  %1757 = vmatpush1.bf16.msra.mxu0 %v1615
  %1758 = vmatprep.subr.bf16.mxu0 0
  %1759 = vmatpush1.bf16.msra.mxu0 %v1616
  %1760 = vmatprep.subr.bf16.mxu0 0
  %1761 = vmatpush1.bf16.msra.mxu0 %v1617
  %1762 = vmatprep.mubr.bf16.mxu0 %v947
  %1763 = vmatmul.mubr.bf16.gmra.mrb[0].mxu0 %v946
  %v1764 = vpop.f32.mrb[0].mxu0
  %v1765 = vadd.f32 0.0, %v1764
  %v1766 = vpop.f32.mrb[0].mxu0
  %v1767 = vpop.f32.mrb[0].mxu0
  %v1768 = vadd.f32 0.0, %v1767
  %v1769 = vpop.f32.mrb[0].mxu0
  %1770 = vmatprep.mubr.bf16.mxu0 %v955
  %1771 = vmatmul.mubr.bf16.gmra.mrb[0].mxu0 %v954
  %v1772 = vpop.f32.mrb[0].mxu0
  %v1773 = vadd.f32 0.0, %v1772
  %v1774 = vpop.f32.mrb[0].mxu0
  %v1775 = vpop.f32.mrb[0].mxu0
  %v1776 = vadd.f32 0.0, %v1775
  %v1777 = vpop.f32.mrb[0].mxu0
  %1778 = vmatprep.mubr.bf16.mxu0 %v963
  %1779 = vmatmul.mubr.bf16.gmra.mrb[0].mxu0 %v962
  %v1780 = vpop.f32.mrb[0].mxu0
  %v1781 = vadd.f32 0.0, %v1780
  %v1782 = vpop.f32.mrb[0].mxu0
  %v1783 = vpop.f32.mrb[0].mxu0
  %v1784 = vadd.f32 0.0, %v1783
  %v1785 = vpop.f32.mrb[0].mxu0
  %1786 = vmatprep.mubr.bf16.mxu0 %v971
  %1787 = vmatmul.mubr.bf16.gmra.mrb[0].mxu0 %v970
  %v1788 = vpop.f32.mrb[0].mxu0
  %v1789 = vadd.f32 0.0, %v1788
  %v1790 = vpop.f32.mrb[0].mxu0
  %v1791 = vpop.f32.mrb[0].mxu0
  %v1792 = vadd.f32 0.0, %v1791
  %v1793 = vpop.f32.mrb[0].mxu0
  %1794 = vmatprep.mubr.bf16.mxu0 %v979
  %1795 = vmatmul.mubr.bf16.gmra.mrb[0].mxu0 %v978
  %v1796 = vpop.f32.mrb[0].mxu0
  %v1797 = vadd.f32 0.0, %v1796
  %v1798 = vpop.f32.mrb[0].mxu0
  %v1799 = vpop.f32.mrb[0].mxu0
  %v1800 = vadd.f32 0.0, %v1799
  %v1801 = vpop.f32.mrb[0].mxu0
  %1802 = vmatprep.mubr.bf16.mxu0 %v987
  %1803 = vmatmul.mubr.bf16.gmra.mrb[0].mxu0 %v986
  %v1804 = vpop.f32.mrb[0].mxu0
  %v1805 = vadd.f32 0.0, %v1804
  %v1806 = vpop.f32.mrb[0].mxu0
  %v1807 = vpop.f32.mrb[0].mxu0
  %v1808 = vadd.f32 0.0, %v1807
  %v1809 = vpop.f32.mrb[0].mxu0
  %1810 = vmatprep.mubr.bf16.mxu0 %v995
  %1811 = vmatmul.mubr.bf16.gmra.mrb[0].mxu0 %v994
  %v1812 = vpop.f32.mrb[0].mxu0
  %v1813 = vadd.f32 0.0, %v1812
  %v1814 = vpop.f32.mrb[0].mxu0
  %v1815 = vpop.f32.mrb[0].mxu0
  %v1816 = vadd.f32 0.0, %v1815
  %v1817 = vpop.f32.mrb[0].mxu0
  %1818 = vmatprep.mubr.bf16.mxu0 %v1003
  %1819 = vmatmul.mubr.bf16.gmra.mrb[0].mxu0 %v1002
  %v1820 = vpop.f32.mrb[0].mxu0
  %v1821 = vadd.f32 0.0, %v1820
  %v1822 = vpop.f32.mrb[0].mxu0
  %v1823 = vpop.f32.mrb[0].mxu0
  %v1824 = vadd.f32 0.0, %v1823
  %v1825 = vpop.f32.mrb[0].mxu0
  %1826 = vmatprep.mubr.bf16.mxu0 %v1011
  %1827 = vmatmul.mubr.bf16.gmra.mrb[0].mxu0 %v1010
  %v1828 = vpop.f32.mrb[0].mxu0
  %v1829 = vadd.f32 0.0, %v1828
  %v1830 = vpop.f32.mrb[0].mxu0
  %v1831 = vpop.f32.mrb[0].mxu0
  %v1832 = vadd.f32 0.0, %v1831
  %v1833 = vpop.f32.mrb[0].mxu0
  %1834 = vmatprep.mubr.bf16.mxu0 %v1019
  %1835 = vmatmul.mubr.bf16.gmra.mrb[0].mxu0 %v1018
  %v1836 = vpop.f32.mrb[0].mxu0
  %v1837 = vadd.f32 0.0, %v1836
  %v1838 = vpop.f32.mrb[0].mxu0
  %v1839 = vpop.f32.mrb[0].mxu0
  %v1840 = vadd.f32 0.0, %v1839
  %v1841 = vpop.f32.mrb[0].mxu0
  %1842 = vmatprep.mubr.bf16.mxu0 %v1027
  %1843 = vmatmul.mubr.bf16.gmra.mrb[0].mxu0 %v1026
  %v1844 = vpop.f32.mrb[0].mxu0
  %v1845 = vadd.f32 0.0, %v1844
  %v1846 = vpop.f32.mrb[0].mxu0
  %v1847 = vpop.f32.mrb[0].mxu0
  %v1848 = vadd.f32 0.0, %v1847
  %v1849 = vpop.f32.mrb[0].mxu0
  %1850 = vmatprep.mubr.bf16.mxu0 %v1035
  %1851 = vmatmul.mubr.bf16.gmra.mrb[0].mxu0 %v1034
  %v1852 = vpop.f32.mrb[0].mxu0
  %v1853 = vadd.f32 0.0, %v1852
  %v1854 = vpop.f32.mrb[0].mxu0
  %v1855 = vpop.f32.mrb[0].mxu0
  %v1856 = vadd.f32 0.0, %v1855
  %v1857 = vpop.f32.mrb[0].mxu0
  %1858 = vmatprep.mubr.bf16.mxu0 %v1043
  %1859 = vmatmul.mubr.bf16.gmra.mrb[0].mxu0 %v1042
  %v1860 = vpop.f32.mrb[0].mxu0
  %v1861 = vadd.f32 0.0, %v1860
  %v1862 = vpop.f32.mrb[0].mxu0
  %v1863 = vpop.f32.mrb[0].mxu0
  %v1864 = vadd.f32 0.0, %v1863
  %v1865 = vpop.f32.mrb[0].mxu0
  %1866 = vmatprep.mubr.bf16.mxu0 %v1051
  %1867 = vmatmul.mubr.bf16.gmra.mrb[0].mxu0 %v1050
  %v1868 = vpop.f32.mrb[0].mxu0
  %v1869 = vadd.f32 0.0, %v1868
  %v1870 = vpop.f32.mrb[0].mxu0
  %v1871 = vpop.f32.mrb[0].mxu0
  %v1872 = vadd.f32 0.0, %v1871
  %v1873 = vpop.f32.mrb[0].mxu0
  %1874 = vmatprep.mubr.bf16.mxu0 %v1059
  %1875 = vmatmul.mubr.bf16.gmra.mrb[0].mxu0 %v1058
  %v1876 = vpop.f32.mrb[0].mxu0
  %v1877 = vadd.f32 0.0, %v1876
  %v1878 = vpop.f32.mrb[0].mxu0
  %v1879 = vpop.f32.mrb[0].mxu0
  %v1880 = vadd.f32 0.0, %v1879
  %v1881 = vpop.f32.mrb[0].mxu0
  %1882 = vmatprep.mubr.bf16.mxu0 %v1067
  %1883 = vmatmul.mubr.bf16.gmra.mrb[0].mxu0 %v1066
  %v1884 = vpop.f32.mrb[0].mxu0
  %v1885 = vadd.f32 0.0, %v1884
  %v1886 = vpop.f32.mrb[0].mxu0
  %v1887 = vpop.f32.mrb[0].mxu0
  %v1888 = vadd.f32 0.0, %v1887
  %v1889 = vpop.f32.mrb[0].mxu0
  %1890 = vmatprep.mubr.bf16.mxu0 %v1075
  %1891 = vmatmul.mubr.bf16.gmra.mrb[0].mxu0 %v1074
  %v1892 = vpop.f32.mrb[0].mxu0
  %v1893 = vadd.f32 0.0, %v1892
  %v1894 = vpop.f32.mrb[0].mxu0
  %v1895 = vpop.f32.mrb[0].mxu0
  %v1896 = vadd.f32 0.0, %v1895
  %v1897 = vpop.f32.mrb[0].mxu0
  %1898 = vmatprep.mubr.bf16.mxu0 %v1083
  %1899 = vmatmul.mubr.bf16.gmra.mrb[0].mxu0 %v1082
  %v1900 = vpop.f32.mrb[0].mxu0
  %v1901 = vadd.f32 0.0, %v1900
  %v1902 = vpop.f32.mrb[0].mxu0
  %v1903 = vpop.f32.mrb[0].mxu0
  %v1904 = vadd.f32 0.0, %v1903
  %v1905 = vpop.f32.mrb[0].mxu0
  %1906 = vmatprep.mubr.bf16.mxu0 %v1091
  %1907 = vmatmul.mubr.bf16.gmra.mrb[0].mxu0 %v1090
  %v1908 = vpop.f32.mrb[0].mxu0
  %v1909 = vadd.f32 0.0, %v1908
  %v1910 = vpop.f32.mrb[0].mxu0
  %v1911 = vpop.f32.mrb[0].mxu0
  %v1912 = vadd.f32 0.0, %v1911
  %v1913 = vpop.f32.mrb[0].mxu0
  %1914 = vmatprep.mubr.bf16.mxu0 %v1099
  %1915 = vmatmul.mubr.bf16.gmra.mrb[0].mxu0 %v1098
  %v1916 = vpop.f32.mrb[0].mxu0
  %v1917 = vadd.f32 0.0, %v1916
  %v1918 = vpop.f32.mrb[0].mxu0
  %v1919 = vpop.f32.mrb[0].mxu0
  %v1920 = vadd.f32 0.0, %v1919
  %v1921 = vpop.f32.mrb[0].mxu0
  %1922 = vmatprep.mubr.bf16.mxu0 %v1107
  %1923 = vmatmul.mubr.bf16.gmra.mrb[0].mxu0 %v1106
  %v1924 = vpop.f32.mrb[0].mxu0
  %v1925 = vadd.f32 0.0, %v1924
  %v1926 = vpop.f32.mrb[0].mxu0
  %v1927 = vpop.f32.mrb[0].mxu0
  %v1928 = vadd.f32 0.0, %v1927
  %v1929 = vpop.f32.mrb[0].mxu0
  %1930 = vmatprep.mubr.bf16.mxu0 %v1115
  %1931 = vmatmul.mubr.bf16.gmra.mrb[0].mxu0 %v1114
  %v1932 = vpop.f32.mrb[0].mxu0
  %v1933 = vadd.f32 0.0, %v1932
  %v1934 = vpop.f32.mrb[0].mxu0
  %v1935 = vpop.f32.mrb[0].mxu0
  %v1936 = vadd.f32 0.0, %v1935
  %v1937 = vpop.f32.mrb[0].mxu0
  %1938 = vmatprep.mubr.bf16.mxu0 %v1123
  %1939 = vmatmul.mubr.bf16.gmra.mrb[0].mxu0 %v1122
  %v1940 = vpop.f32.mrb[0].mxu0
  %v1941 = vadd.f32 0.0, %v1940
  %v1942 = vpop.f32.mrb[0].mxu0
  %v1943 = vpop.f32.mrb[0].mxu0
  %v1944 = vadd.f32 0.0, %v1943
  %v1945 = vpop.f32.mrb[0].mxu0
  %1946 = vmatprep.mubr.bf16.mxu0 %v1131
  %1947 = vmatmul.mubr.bf16.gmra.mrb[0].mxu0 %v1130
  %v1948 = vpop.f32.mrb[0].mxu0
  %v1949 = vadd.f32 0.0, %v1948
  %v1950 = vpop.f32.mrb[0].mxu0
  %v1951 = vpop.f32.mrb[0].mxu0
  %v1952 = vadd.f32 0.0, %v1951
  %v1953 = vpop.f32.mrb[0].mxu0
  %1954 = vmatprep.mubr.bf16.mxu0 %v1139
  %1955 = vmatmul.mubr.bf16.gmra.mrb[0].mxu0 %v1138
  %v1956 = vpop.f32.mrb[0].mxu0
  %v1957 = vadd.f32 0.0, %v1956
  %v1958 = vpop.f32.mrb[0].mxu0
  %v1959 = vpop.f32.mrb[0].mxu0
  %v1960 = vadd.f32 0.0, %v1959
  %v1961 = vpop.f32.mrb[0].mxu0
  %1962 = vdwg.mxu0
  %1963 = vmatprep.subr.bf16.mxu0 0
  %1964 = vmatpush1.bf16.msra.mxu0 %v1618
  %1965 = vmatprep.subr.bf16.mxu0 0
  %1966 = vmatpush1.bf16.msra.mxu0 %v1619
  %1967 = vmatprep.subr.bf16.mxu0 0
  %1968 = vmatpush1.bf16.msra.mxu0 %v1620
  %1969 = vmatprep.subr.bf16.mxu0 0
  %1970 = vmatpush1.bf16.msra.mxu0 %v1621
  %1971 = vmatprep.subr.bf16.mxu0 0
  %1972 = vmatpush1.bf16.msra.mxu0 %v1622
  %1973 = vmatprep.subr.bf16.mxu0 0
  %1974 = vmatpush1.bf16.msra.mxu0 %v1623
  %1975 = vmatprep.subr.bf16.mxu0 0
  %1976 = vmatpush1.bf16.msra.mxu0 %v1624
  %1977 = vmatprep.subr.bf16.mxu0 0
  %1978 = vmatpush1.bf16.msra.mxu0 %v1625
  %1979 = vmatprep.subr.bf16.mxu0 0
  %1980 = vmatpush1.bf16.msra.mxu0 %v1626
  %1981 = vmatprep.subr.bf16.mxu0 0
  %1982 = vmatpush1.bf16.msra.mxu0 %v1627
  %1983 = vmatprep.subr.bf16.mxu0 0
  %1984 = vmatpush1.bf16.msra.mxu0 %v1628
  %1985 = vmatprep.subr.bf16.mxu0 0
  %1986 = vmatpush1.bf16.msra.mxu0 %v1629
  %1987 = vmatprep.subr.bf16.mxu0 0
  %1988 = vmatpush1.bf16.msra.mxu0 %v1630
  %1989 = vmatprep.subr.bf16.mxu0 0
  %1990 = vmatpush1.bf16.msra.mxu0 %v1631
  %1991 = vmatprep.subr.bf16.mxu0 0
  %1992 = vmatpush1.bf16.msra.mxu0 %v1632
  %1993 = vmatprep.subr.bf16.mxu0 0
  %1994 = vmatpush1.bf16.msra.mxu0 %v1633
  %1995 = vmatprep.mubr.bf16.mxu0 %v949
  %1996 = vmatmul.mubr.bf16.gmra.mrb[0].mxu0 %v948
  %v1997 = vpop.f32.mrb[0].mxu0
  %v1998 = vadd.f32 %v1765, %v1997
  %v1999 = vpop.f32.mrb[0].mxu0
  %v2000 = vpop.f32.mrb[0].mxu0
  %v2001 = vadd.f32 %v1768, %v2000
  %v2002 = vpop.f32.mrb[0].mxu0
  %2003 = vmatprep.mubr.bf16.mxu0 %v957
  %2004 = vmatmul.mubr.bf16.gmra.mrb[0].mxu0 %v956
  %v2005 = vpop.f32.mrb[0].mxu0
  %v2006 = vadd.f32 %v1773, %v2005
  %v2007 = vpop.f32.mrb[0].mxu0
  %v2008 = vpop.f32.mrb[0].mxu0
  %v2009 = vadd.f32 %v1776, %v2008
  %v2010 = vpop.f32.mrb[0].mxu0
  %2011 = vmatprep.mubr.bf16.mxu0 %v965
  %2012 = vmatmul.mubr.bf16.gmra.mrb[0].mxu0 %v964
  %v2013 = vpop.f32.mrb[0].mxu0
  %v2014 = vadd.f32 %v1781, %v2013
  %v2015 = vpop.f32.mrb[0].mxu0
  %v2016 = vpop.f32.mrb[0].mxu0
  %v2017 = vadd.f32 %v1784, %v2016
  %v2018 = vpop.f32.mrb[0].mxu0
  %2019 = vmatprep.mubr.bf16.mxu0 %v973
  %2020 = vmatmul.mubr.bf16.gmra.mrb[0].mxu0 %v972
  %v2021 = vpop.f32.mrb[0].mxu0
  %v2022 = vadd.f32 %v1789, %v2021
  %v2023 = vpop.f32.mrb[0].mxu0
  %v2024 = vpop.f32.mrb[0].mxu0
  %v2025 = vadd.f32 %v1792, %v2024
  %v2026 = vpop.f32.mrb[0].mxu0
  %2027 = vmatprep.mubr.bf16.mxu0 %v981
  %2028 = vmatmul.mubr.bf16.gmra.mrb[0].mxu0 %v980
  %v2029 = vpop.f32.mrb[0].mxu0
  %v2030 = vadd.f32 %v1797, %v2029
  %v2031 = vpop.f32.mrb[0].mxu0
  %v2032 = vpop.f32.mrb[0].mxu0
  %v2033 = vadd.f32 %v1800, %v2032
  %v2034 = vpop.f32.mrb[0].mxu0
  %2035 = vmatprep.mubr.bf16.mxu0 %v989
  %2036 = vmatmul.mubr.bf16.gmra.mrb[0].mxu0 %v988
  %v2037 = vpop.f32.mrb[0].mxu0
  %v2038 = vadd.f32 %v1805, %v2037
  %v2039 = vpop.f32.mrb[0].mxu0
  %v2040 = vpop.f32.mrb[0].mxu0
  %v2041 = vadd.f32 %v1808, %v2040
  %v2042 = vpop.f32.mrb[0].mxu0
  %2043 = vmatprep.mubr.bf16.mxu0 %v997
  %2044 = vmatmul.mubr.bf16.gmra.mrb[0].mxu0 %v996
  %v2045 = vpop.f32.mrb[0].mxu0
  %v2046 = vadd.f32 %v1813, %v2045
  %v2047 = vpop.f32.mrb[0].mxu0
  %v2048 = vpop.f32.mrb[0].mxu0
  %v2049 = vadd.f32 %v1816, %v2048
  %v2050 = vpop.f32.mrb[0].mxu0
  %2051 = vmatprep.mubr.bf16.mxu0 %v1005
  %2052 = vmatmul.mubr.bf16.gmra.mrb[0].mxu0 %v1004
  %v2053 = vpop.f32.mrb[0].mxu0
  %v2054 = vadd.f32 %v1821, %v2053
  %v2055 = vpop.f32.mrb[0].mxu0
  %v2056 = vpop.f32.mrb[0].mxu0
  %v2057 = vadd.f32 %v1824, %v2056
  %v2058 = vpop.f32.mrb[0].mxu0
  %2059 = vmatprep.mubr.bf16.mxu0 %v1013
  %2060 = vmatmul.mubr.bf16.gmra.mrb[0].mxu0 %v1012
  %v2061 = vpop.f32.mrb[0].mxu0
  %v2062 = vadd.f32 %v1829, %v2061
  %v2063 = vpop.f32.mrb[0].mxu0
  %v2064 = vpop.f32.mrb[0].mxu0
  %v2065 = vadd.f32 %v1832, %v2064
  %v2066 = vpop.f32.mrb[0].mxu0
  %2067 = vmatprep.mubr.bf16.mxu0 %v1021
  %2068 = vmatmul.mubr.bf16.gmra.mrb[0].mxu0 %v1020
  %v2069 = vpop.f32.mrb[0].mxu0
  %v2070 = vadd.f32 %v1837, %v2069
  %v2071 = vpop.f32.mrb[0].mxu0
  %v2072 = vpop.f32.mrb[0].mxu0
  %v2073 = vadd.f32 %v1840, %v2072
  %v2074 = vpop.f32.mrb[0].mxu0
  %2075 = vmatprep.mubr.bf16.mxu0 %v1029
  %2076 = vmatmul.mubr.bf16.gmra.mrb[0].mxu0 %v1028
  %v2077 = vpop.f32.mrb[0].mxu0
  %v2078 = vadd.f32 %v1845, %v2077
  %v2079 = vpop.f32.mrb[0].mxu0
  %v2080 = vpop.f32.mrb[0].mxu0
  %v2081 = vadd.f32 %v1848, %v2080
  %v2082 = vpop.f32.mrb[0].mxu0
  %2083 = vmatprep.mubr.bf16.mxu0 %v1037
  %2084 = vmatmul.mubr.bf16.gmra.mrb[0].mxu0 %v1036
  %v2085 = vpop.f32.mrb[0].mxu0
  %v2086 = vadd.f32 %v1853, %v2085
  %v2087 = vpop.f32.mrb[0].mxu0
  %v2088 = vpop.f32.mrb[0].mxu0
  %v2089 = vadd.f32 %v1856, %v2088
  %v2090 = vpop.f32.mrb[0].mxu0
  %2091 = vmatprep.mubr.bf16.mxu0 %v1045
  %2092 = vmatmul.mubr.bf16.gmra.mrb[0].mxu0 %v1044
  %v2093 = vpop.f32.mrb[0].mxu0
  %v2094 = vadd.f32 %v1861, %v2093
  %v2095 = vpop.f32.mrb[0].mxu0
  %v2096 = vpop.f32.mrb[0].mxu0
  %v2097 = vadd.f32 %v1864, %v2096
  %v2098 = vpop.f32.mrb[0].mxu0
  %2099 = vmatprep.mubr.bf16.mxu0 %v1053
  %2100 = vmatmul.mubr.bf16.gmra.mrb[0].mxu0 %v1052
  %v2101 = vpop.f32.mrb[0].mxu0
  %v2102 = vadd.f32 %v1869, %v2101
  %v2103 = vpop.f32.mrb[0].mxu0
  %v2104 = vpop.f32.mrb[0].mxu0
  %v2105 = vadd.f32 %v1872, %v2104
  %v2106 = vpop.f32.mrb[0].mxu0
  %2107 = vmatprep.mubr.bf16.mxu0 %v1061
  %2108 = vmatmul.mubr.bf16.gmra.mrb[0].mxu0 %v1060
  %v2109 = vpop.f32.mrb[0].mxu0
  %v2110 = vadd.f32 %v1877, %v2109
  %v2111 = vpop.f32.mrb[0].mxu0
  %v2112 = vpop.f32.mrb[0].mxu0
  %v2113 = vadd.f32 %v1880, %v2112
  %v2114 = vpop.f32.mrb[0].mxu0
  %2115 = vmatprep.mubr.bf16.mxu0 %v1069
  %2116 = vmatmul.mubr.bf16.gmra.mrb[0].mxu0 %v1068
  %v2117 = vpop.f32.mrb[0].mxu0
  %v2118 = vadd.f32 %v1885, %v2117
  %v2119 = vpop.f32.mrb[0].mxu0
  %v2120 = vpop.f32.mrb[0].mxu0
  %v2121 = vadd.f32 %v1888, %v2120
  %v2122 = vpop.f32.mrb[0].mxu0
  %2123 = vmatprep.mubr.bf16.mxu0 %v1077
  %2124 = vmatmul.mubr.bf16.gmra.mrb[0].mxu0 %v1076
  %v2125 = vpop.f32.mrb[0].mxu0
  %v2126 = vadd.f32 %v1893, %v2125
  %v2127 = vpop.f32.mrb[0].mxu0
  %v2128 = vpop.f32.mrb[0].mxu0
  %v2129 = vadd.f32 %v1896, %v2128
  %v2130 = vpop.f32.mrb[0].mxu0
  %2131 = vmatprep.mubr.bf16.mxu0 %v1085
  %2132 = vmatmul.mubr.bf16.gmra.mrb[0].mxu0 %v1084
  %v2133 = vpop.f32.mrb[0].mxu0
  %v2134 = vadd.f32 %v1901, %v2133
  %v2135 = vpop.f32.mrb[0].mxu0
  %v2136 = vpop.f32.mrb[0].mxu0
  %v2137 = vadd.f32 %v1904, %v2136
  %v2138 = vpop.f32.mrb[0].mxu0
  %2139 = vmatprep.mubr.bf16.mxu0 %v1093
  %2140 = vmatmul.mubr.bf16.gmra.mrb[0].mxu0 %v1092
  %v2141 = vpop.f32.mrb[0].mxu0
  %v2142 = vadd.f32 %v1909, %v2141
  %v2143 = vpop.f32.mrb[0].mxu0
  %v2144 = vpop.f32.mrb[0].mxu0
  %v2145 = vadd.f32 %v1912, %v2144
  %v2146 = vpop.f32.mrb[0].mxu0
  %2147 = vmatprep.mubr.bf16.mxu0 %v1101
  %2148 = vmatmul.mubr.bf16.gmra.mrb[0].mxu0 %v1100
  %v2149 = vpop.f32.mrb[0].mxu0
  %v2150 = vadd.f32 %v1917, %v2149
  %v2151 = vpop.f32.mrb[0].mxu0
  %v2152 = vpop.f32.mrb[0].mxu0
  %v2153 = vadd.f32 %v1920, %v2152
  %v2154 = vpop.f32.mrb[0].mxu0
  %2155 = vmatprep.mubr.bf16.mxu0 %v1109
  %2156 = vmatmul.mubr.bf16.gmra.mrb[0].mxu0 %v1108
  %v2157 = vpop.f32.mrb[0].mxu0
  %v2158 = vadd.f32 %v1925, %v2157
  %v2159 = vpop.f32.mrb[0].mxu0
  %v2160 = vpop.f32.mrb[0].mxu0
  %v2161 = vadd.f32 %v1928, %v2160
  %v2162 = vpop.f32.mrb[0].mxu0
  %2163 = vmatprep.mubr.bf16.mxu0 %v1117
  %2164 = vmatmul.mubr.bf16.gmra.mrb[0].mxu0 %v1116
  %v2165 = vpop.f32.mrb[0].mxu0
  %v2166 = vadd.f32 %v1933, %v2165
  %v2167 = vpop.f32.mrb[0].mxu0
  %v2168 = vpop.f32.mrb[0].mxu0
  %v2169 = vadd.f32 %v1936, %v2168
  %v2170 = vpop.f32.mrb[0].mxu0
  %2171 = vmatprep.mubr.bf16.mxu0 %v1125
  %2172 = vmatmul.mubr.bf16.gmra.mrb[0].mxu0 %v1124
  %v2173 = vpop.f32.mrb[0].mxu0
  %v2174 = vadd.f32 %v1941, %v2173
  %v2175 = vpop.f32.mrb[0].mxu0
  %v2176 = vpop.f32.mrb[0].mxu0
  %v2177 = vadd.f32 %v1944, %v2176
  %v2178 = vpop.f32.mrb[0].mxu0
  %2179 = vmatprep.mubr.bf16.mxu0 %v1133
  %2180 = vmatmul.mubr.bf16.gmra.mrb[0].mxu0 %v1132
  %v2181 = vpop.f32.mrb[0].mxu0
  %v2182 = vadd.f32 %v1949, %v2181
  %v2183 = vpop.f32.mrb[0].mxu0
  %v2184 = vpop.f32.mrb[0].mxu0
  %v2185 = vadd.f32 %v1952, %v2184
  %v2186 = vpop.f32.mrb[0].mxu0
  %2187 = vmatprep.mubr.bf16.mxu0 %v1141
  %2188 = vmatmul.mubr.bf16.gmra.mrb[0].mxu0 %v1140
  %v2189 = vpop.f32.mrb[0].mxu0
  %v2190 = vadd.f32 %v1957, %v2189
  %v2191 = vpop.f32.mrb[0].mxu0
  %v2192 = vpop.f32.mrb[0].mxu0
  %v2193 = vadd.f32 %v1960, %v2192
  %v2194 = vpop.f32.mrb[0].mxu0
  %2195 = vdwg.mxu0
  %2196 = vmatprep.subr.bf16.mxu0 0
  %2197 = vmatpush1.bf16.msra.mxu0 %v1634
  %2198 = vmatprep.subr.bf16.mxu0 0
  %2199 = vmatpush1.bf16.msra.mxu0 %v1635
  %2200 = vmatprep.subr.bf16.mxu0 0
  %2201 = vmatpush1.bf16.msra.mxu0 %v1636
  %2202 = vmatprep.subr.bf16.mxu0 0
  %2203 = vmatpush1.bf16.msra.mxu0 %v1637
  %2204 = vmatprep.subr.bf16.mxu0 0
  %2205 = vmatpush1.bf16.msra.mxu0 %v1638
  %2206 = vmatprep.subr.bf16.mxu0 0
  %2207 = vmatpush1.bf16.msra.mxu0 %v1639
  %2208 = vmatprep.subr.bf16.mxu0 0
  %2209 = vmatpush1.bf16.msra.mxu0 %v1640
  %2210 = vmatprep.subr.bf16.mxu0 0
  %2211 = vmatpush1.bf16.msra.mxu0 %v1641
  %2212 = vmatprep.subr.bf16.mxu0 0
  %2213 = vmatpush1.bf16.msra.mxu0 %v1642
  %2214 = vmatprep.subr.bf16.mxu0 0
  %2215 = vmatpush1.bf16.msra.mxu0 %v1643
  %2216 = vmatprep.subr.bf16.mxu0 0
  %2217 = vmatpush1.bf16.msra.mxu0 %v1644
  %2218 = vmatprep.subr.bf16.mxu0 0
  %2219 = vmatpush1.bf16.msra.mxu0 %v1645
  %2220 = vmatprep.subr.bf16.mxu0 0
  %2221 = vmatpush1.bf16.msra.mxu0 %v1646
  %2222 = vmatprep.subr.bf16.mxu0 0
  %2223 = vmatpush1.bf16.msra.mxu0 %v1647
  %2224 = vmatprep.subr.bf16.mxu0 0
  %2225 = vmatpush1.bf16.msra.mxu0 %v1648
  %2226 = vmatprep.subr.bf16.mxu0 0
  %2227 = vmatpush1.bf16.msra.mxu0 %v1649
  %2228 = vmatprep.mubr.bf16.mxu0 %v951
  %2229 = vmatmul.mubr.bf16.gmra.mrb[0].mxu0 %v950
  %v2230 = vpop.f32.mrb[0].mxu0
  %v2231 = vadd.f32 %v1998, %v2230
  %v2232 = vpop.f32.mrb[0].mxu0
  %v2233 = vpop.f32.mrb[0].mxu0
  %v2234 = vadd.f32 %v2001, %v2233
  %v2235 = vpop.f32.mrb[0].mxu0
  %2236 = vmatprep.mubr.bf16.mxu0 %v959
  %2237 = vmatmul.mubr.bf16.gmra.mrb[0].mxu0 %v958
  %v2238 = vpop.f32.mrb[0].mxu0
  %v2239 = vadd.f32 %v2006, %v2238
  %v2240 = vpop.f32.mrb[0].mxu0
  %v2241 = vpop.f32.mrb[0].mxu0
  %v2242 = vadd.f32 %v2009, %v2241
  %v2243 = vpop.f32.mrb[0].mxu0
  %2244 = vmatprep.mubr.bf16.mxu0 %v967
  %2245 = vmatmul.mubr.bf16.gmra.mrb[0].mxu0 %v966
  %v2246 = vpop.f32.mrb[0].mxu0
  %v2247 = vadd.f32 %v2014, %v2246
  %v2248 = vpop.f32.mrb[0].mxu0
  %v2249 = vpop.f32.mrb[0].mxu0
  %v2250 = vadd.f32 %v2017, %v2249
  %v2251 = vpop.f32.mrb[0].mxu0
  %2252 = vmatprep.mubr.bf16.mxu0 %v975
  %2253 = vmatmul.mubr.bf16.gmra.mrb[0].mxu0 %v974
  %v2254 = vpop.f32.mrb[0].mxu0
  %v2255 = vadd.f32 %v2022, %v2254
  %v2256 = vpop.f32.mrb[0].mxu0
  %v2257 = vpop.f32.mrb[0].mxu0
  %v2258 = vadd.f32 %v2025, %v2257
  %v2259 = vpop.f32.mrb[0].mxu0
  %2260 = vmatprep.mubr.bf16.mxu0 %v983
  %2261 = vmatmul.mubr.bf16.gmra.mrb[0].mxu0 %v982
  %v2262 = vpop.f32.mrb[0].mxu0
  %v2263 = vadd.f32 %v2030, %v2262
  %v2264 = vpop.f32.mrb[0].mxu0
  %v2265 = vpop.f32.mrb[0].mxu0
  %v2266 = vadd.f32 %v2033, %v2265
  %v2267 = vpop.f32.mrb[0].mxu0
  %2268 = vmatprep.mubr.bf16.mxu0 %v991
  %2269 = vmatmul.mubr.bf16.gmra.mrb[0].mxu0 %v990
  %v2270 = vpop.f32.mrb[0].mxu0
  %v2271 = vadd.f32 %v2038, %v2270
  %v2272 = vpop.f32.mrb[0].mxu0
  %v2273 = vpop.f32.mrb[0].mxu0
  %v2274 = vadd.f32 %v2041, %v2273
  %v2275 = vpop.f32.mrb[0].mxu0
  %2276 = vmatprep.mubr.bf16.mxu0 %v999
  %2277 = vmatmul.mubr.bf16.gmra.mrb[0].mxu0 %v998
  %v2278 = vpop.f32.mrb[0].mxu0
  %v2279 = vadd.f32 %v2046, %v2278
  %v2280 = vpop.f32.mrb[0].mxu0
  %v2281 = vpop.f32.mrb[0].mxu0
  %v2282 = vadd.f32 %v2049, %v2281
  %v2283 = vpop.f32.mrb[0].mxu0
  %2284 = vmatprep.mubr.bf16.mxu0 %v1007
  %2285 = vmatmul.mubr.bf16.gmra.mrb[0].mxu0 %v1006
  %v2286 = vpop.f32.mrb[0].mxu0
  %v2287 = vadd.f32 %v2054, %v2286
  %v2288 = vpop.f32.mrb[0].mxu0
  %v2289 = vpop.f32.mrb[0].mxu0
  %v2290 = vadd.f32 %v2057, %v2289
  %v2291 = vpop.f32.mrb[0].mxu0
  %2292 = vmatprep.mubr.bf16.mxu0 %v1015
  %2293 = vmatmul.mubr.bf16.gmra.mrb[0].mxu0 %v1014
  %v2294 = vpop.f32.mrb[0].mxu0
  %v2295 = vadd.f32 %v2062, %v2294
  %v2296 = vpop.f32.mrb[0].mxu0
  %v2297 = vpop.f32.mrb[0].mxu0
  %v2298 = vadd.f32 %v2065, %v2297
  %v2299 = vpop.f32.mrb[0].mxu0
  %2300 = vmatprep.mubr.bf16.mxu0 %v1023
  %2301 = vmatmul.mubr.bf16.gmra.mrb[0].mxu0 %v1022
  %v2302 = vpop.f32.mrb[0].mxu0
  %v2303 = vadd.f32 %v2070, %v2302
  %v2304 = vpop.f32.mrb[0].mxu0
  %v2305 = vpop.f32.mrb[0].mxu0
  %v2306 = vadd.f32 %v2073, %v2305
  %v2307 = vpop.f32.mrb[0].mxu0
  %2308 = vmatprep.mubr.bf16.mxu0 %v1031
  %2309 = vmatmul.mubr.bf16.gmra.mrb[0].mxu0 %v1030
  %v2310 = vpop.f32.mrb[0].mxu0
  %v2311 = vadd.f32 %v2078, %v2310
  %v2312 = vpop.f32.mrb[0].mxu0
  %v2313 = vpop.f32.mrb[0].mxu0
  %v2314 = vadd.f32 %v2081, %v2313
  %v2315 = vpop.f32.mrb[0].mxu0
  %2316 = vmatprep.mubr.bf16.mxu0 %v1039
  %2317 = vmatmul.mubr.bf16.gmra.mrb[0].mxu0 %v1038
  %v2318 = vpop.f32.mrb[0].mxu0
  %v2319 = vadd.f32 %v2086, %v2318
  %v2320 = vpop.f32.mrb[0].mxu0
  %v2321 = vpop.f32.mrb[0].mxu0
  %v2322 = vadd.f32 %v2089, %v2321
  %v2323 = vpop.f32.mrb[0].mxu0
  %2324 = vmatprep.mubr.bf16.mxu0 %v1047
  %2325 = vmatmul.mubr.bf16.gmra.mrb[0].mxu0 %v1046
  %v2326 = vpop.f32.mrb[0].mxu0
  %v2327 = vadd.f32 %v2094, %v2326
  %v2328 = vpop.f32.mrb[0].mxu0
  %v2329 = vpop.f32.mrb[0].mxu0
  %v2330 = vadd.f32 %v2097, %v2329
  %v2331 = vpop.f32.mrb[0].mxu0
  %2332 = vmatprep.mubr.bf16.mxu0 %v1055
  %2333 = vmatmul.mubr.bf16.gmra.mrb[0].mxu0 %v1054
  %v2334 = vpop.f32.mrb[0].mxu0
  %v2335 = vadd.f32 %v2102, %v2334
  %v2336 = vpop.f32.mrb[0].mxu0
  %v2337 = vpop.f32.mrb[0].mxu0
  %v2338 = vadd.f32 %v2105, %v2337
  %v2339 = vpop.f32.mrb[0].mxu0
  %2340 = vmatprep.mubr.bf16.mxu0 %v1063
  %2341 = vmatmul.mubr.bf16.gmra.mrb[0].mxu0 %v1062
  %v2342 = vpop.f32.mrb[0].mxu0
  %v2343 = vadd.f32 %v2110, %v2342
  %v2344 = vpop.f32.mrb[0].mxu0
  %v2345 = vpop.f32.mrb[0].mxu0
  %v2346 = vadd.f32 %v2113, %v2345
  %v2347 = vpop.f32.mrb[0].mxu0
  %2348 = vmatprep.mubr.bf16.mxu0 %v1071
  %2349 = vmatmul.mubr.bf16.gmra.mrb[0].mxu0 %v1070
  %v2350 = vpop.f32.mrb[0].mxu0
  %v2351 = vadd.f32 %v2118, %v2350
  %v2352 = vpop.f32.mrb[0].mxu0
  %v2353 = vpop.f32.mrb[0].mxu0
  %v2354 = vadd.f32 %v2121, %v2353
  %v2355 = vpop.f32.mrb[0].mxu0
  %2356 = vmatprep.mubr.bf16.mxu0 %v1079
  %2357 = vmatmul.mubr.bf16.gmra.mrb[0].mxu0 %v1078
  %v2358 = vpop.f32.mrb[0].mxu0
  %v2359 = vadd.f32 %v2126, %v2358
  %v2360 = vpop.f32.mrb[0].mxu0
  %v2361 = vpop.f32.mrb[0].mxu0
  %v2362 = vadd.f32 %v2129, %v2361
  %v2363 = vpop.f32.mrb[0].mxu0
  %2364 = vmatprep.mubr.bf16.mxu0 %v1087
  %2365 = vmatmul.mubr.bf16.gmra.mrb[0].mxu0 %v1086
  %v2366 = vpop.f32.mrb[0].mxu0
  %v2367 = vadd.f32 %v2134, %v2366
  %v2368 = vpop.f32.mrb[0].mxu0
  %v2369 = vpop.f32.mrb[0].mxu0
  %v2370 = vadd.f32 %v2137, %v2369
  %v2371 = vpop.f32.mrb[0].mxu0
  %2372 = vmatprep.mubr.bf16.mxu0 %v1095
  %2373 = vmatmul.mubr.bf16.gmra.mrb[0].mxu0 %v1094
  %v2374 = vpop.f32.mrb[0].mxu0
  %v2375 = vadd.f32 %v2142, %v2374
  %v2376 = vpop.f32.mrb[0].mxu0
  %v2377 = vpop.f32.mrb[0].mxu0
  %v2378 = vadd.f32 %v2145, %v2377
  %v2379 = vpop.f32.mrb[0].mxu0
  %2380 = vmatprep.mubr.bf16.mxu0 %v1103
  %2381 = vmatmul.mubr.bf16.gmra.mrb[0].mxu0 %v1102
  %v2382 = vpop.f32.mrb[0].mxu0
  %v2383 = vadd.f32 %v2150, %v2382
  %v2384 = vpop.f32.mrb[0].mxu0
  %v2385 = vpop.f32.mrb[0].mxu0
  %v2386 = vadd.f32 %v2153, %v2385
  %v2387 = vpop.f32.mrb[0].mxu0
  %2388 = vmatprep.mubr.bf16.mxu0 %v1111
  %2389 = vmatmul.mubr.bf16.gmra.mrb[0].mxu0 %v1110
  %v2390 = vpop.f32.mrb[0].mxu0
  %v2391 = vadd.f32 %v2158, %v2390
  %v2392 = vpop.f32.mrb[0].mxu0
  %v2393 = vpop.f32.mrb[0].mxu0
  %v2394 = vadd.f32 %v2161, %v2393
  %v2395 = vpop.f32.mrb[0].mxu0
  %2396 = vmatprep.mubr.bf16.mxu0 %v1119
  %2397 = vmatmul.mubr.bf16.gmra.mrb[0].mxu0 %v1118
  %v2398 = vpop.f32.mrb[0].mxu0
  %v2399 = vadd.f32 %v2166, %v2398
  %v2400 = vpop.f32.mrb[0].mxu0
  %v2401 = vpop.f32.mrb[0].mxu0
  %v2402 = vadd.f32 %v2169, %v2401
  %v2403 = vpop.f32.mrb[0].mxu0
  %2404 = vmatprep.mubr.bf16.mxu0 %v1127
  %2405 = vmatmul.mubr.bf16.gmra.mrb[0].mxu0 %v1126
  %v2406 = vpop.f32.mrb[0].mxu0
  %v2407 = vadd.f32 %v2174, %v2406
  %v2408 = vpop.f32.mrb[0].mxu0
  %v2409 = vpop.f32.mrb[0].mxu0
  %v2410 = vadd.f32 %v2177, %v2409
  %v2411 = vpop.f32.mrb[0].mxu0
  %2412 = vmatprep.mubr.bf16.mxu0 %v1135
  %2413 = vmatmul.mubr.bf16.gmra.mrb[0].mxu0 %v1134
  %v2414 = vpop.f32.mrb[0].mxu0
  %v2415 = vadd.f32 %v2182, %v2414
  %v2416 = vpop.f32.mrb[0].mxu0
  %v2417 = vpop.f32.mrb[0].mxu0
  %v2418 = vadd.f32 %v2185, %v2417
  %v2419 = vpop.f32.mrb[0].mxu0
  %2420 = vmatprep.mubr.bf16.mxu0 %v1143
  %2421 = vmatmul.mubr.bf16.gmra.mrb[0].mxu0 %v1142
  %v2422 = vpop.f32.mrb[0].mxu0
  %v2423 = vadd.f32 %v2190, %v2422
  %v2424 = vpop.f32.mrb[0].mxu0
  %v2425 = vpop.f32.mrb[0].mxu0
  %v2426 = vadd.f32 %v2193, %v2425
  %v2427 = vpop.f32.mrb[0].mxu0
  %2428 = vdwg.mxu0
  %2429 = vmatprep.subr.bf16.mxu0 0
  %2430 = vmatpush1.bf16.msra.mxu0 %v1650
  %2431 = vmatprep.subr.bf16.mxu0 0
  %2432 = vmatpush1.bf16.msra.mxu0 %v1651
  %2433 = vmatprep.subr.bf16.mxu0 0
  %2434 = vmatpush1.bf16.msra.mxu0 %v1652
  %2435 = vmatprep.subr.bf16.mxu0 0
  %2436 = vmatpush1.bf16.msra.mxu0 %v1653
  %2437 = vmatprep.subr.bf16.mxu0 0
  %2438 = vmatpush1.bf16.msra.mxu0 %v1654
  %2439 = vmatprep.subr.bf16.mxu0 0
  %2440 = vmatpush1.bf16.msra.mxu0 %v1655
  %2441 = vmatprep.subr.bf16.mxu0 0
  %2442 = vmatpush1.bf16.msra.mxu0 %v1656
  %2443 = vmatprep.subr.bf16.mxu0 0
  %2444 = vmatpush1.bf16.msra.mxu0 %v1657
  %2445 = vmatprep.subr.bf16.mxu0 0
  %2446 = vmatpush1.bf16.msra.mxu0 %v1658
  %2447 = vmatprep.subr.bf16.mxu0 0
  %2448 = vmatpush1.bf16.msra.mxu0 %v1659
  %2449 = vmatprep.subr.bf16.mxu0 0
  %2450 = vmatpush1.bf16.msra.mxu0 %v1660
  %2451 = vmatprep.subr.bf16.mxu0 0
  %2452 = vmatpush1.bf16.msra.mxu0 %v1661
  %2453 = vmatprep.subr.bf16.mxu0 0
  %2454 = vmatpush1.bf16.msra.mxu0 %v1662
  %2455 = vmatprep.subr.bf16.mxu0 0
  %2456 = vmatpush1.bf16.msra.mxu0 %v1663
  %2457 = vmatprep.subr.bf16.mxu0 0
  %2458 = vmatpush1.bf16.msra.mxu0 %v1664
  %2459 = vmatprep.subr.bf16.mxu0 0
  %2460 = vmatpush1.bf16.msra.mxu0 %v1665
  %2461 = vmatprep.mubr.bf16.mxu0 %v953
  %2462 = vmatmul.mubr.bf16.gmra.mrb[0].mxu0 %v952
  %v2463 = vpop.f32.mrb[0].mxu0
  %v2464 = vadd.f32 %v2231, %v2463
  %v2465 = vpop.f32.mrb[0].mxu0
  %v2466 = vpop.f32.mrb[0].mxu0
  %v2467 = vadd.f32 %v2234, %v2466
  %v2468 = vpop.f32.mrb[0].mxu0
  %2469 = vmatprep.mubr.bf16.mxu0 %v961
  %2470 = vmatmul.mubr.bf16.gmra.mrb[0].mxu0 %v960
  %v2471 = vpop.f32.mrb[0].mxu0
  %v2472 = vadd.f32 %v2239, %v2471
  %v2473 = vpop.f32.mrb[0].mxu0
  %v2474 = vpop.f32.mrb[0].mxu0
  %v2475 = vadd.f32 %v2242, %v2474
  %v2476 = vpop.f32.mrb[0].mxu0
  %2477 = vmatprep.mubr.bf16.mxu0 %v969
  %2478 = vmatmul.mubr.bf16.gmra.mrb[0].mxu0 %v968
  %v2479 = vpop.f32.mrb[0].mxu0
  %v2480 = vadd.f32 %v2247, %v2479
  %v2481 = vpop.f32.mrb[0].mxu0
  %v2482 = vpop.f32.mrb[0].mxu0
  %v2483 = vadd.f32 %v2250, %v2482
  %v2484 = vpop.f32.mrb[0].mxu0
  %2485 = vmatprep.mubr.bf16.mxu0 %v977
  %2486 = vmatmul.mubr.bf16.gmra.mrb[0].mxu0 %v976
  %v2487 = vpop.f32.mrb[0].mxu0
  %v2488 = vadd.f32 %v2255, %v2487
  %v2489 = vpop.f32.mrb[0].mxu0
  %v2490 = vpop.f32.mrb[0].mxu0
  %v2491 = vadd.f32 %v2258, %v2490
  %v2492 = vpop.f32.mrb[0].mxu0
  %2493 = vmatprep.mubr.bf16.mxu0 %v985
  %2494 = vmatmul.mubr.bf16.gmra.mrb[0].mxu0 %v984
  %v2495 = vpop.f32.mrb[0].mxu0
  %v2496 = vadd.f32 %v2263, %v2495
  %v2497 = vpop.f32.mrb[0].mxu0
  %v2498 = vpop.f32.mrb[0].mxu0
  %v2499 = vadd.f32 %v2266, %v2498
  %v2500 = vpop.f32.mrb[0].mxu0
  %2501 = vmatprep.mubr.bf16.mxu0 %v993
  %2502 = vmatmul.mubr.bf16.gmra.mrb[0].mxu0 %v992
  %v2503 = vpop.f32.mrb[0].mxu0
  %v2504 = vadd.f32 %v2271, %v2503
  %v2505 = vpop.f32.mrb[0].mxu0
  %v2506 = vpop.f32.mrb[0].mxu0
  %v2507 = vadd.f32 %v2274, %v2506
  %v2508 = vpop.f32.mrb[0].mxu0
  %2509 = vmatprep.mubr.bf16.mxu0 %v1001
  %2510 = vmatmul.mubr.bf16.gmra.mrb[0].mxu0 %v1000
  %v2511 = vpop.f32.mrb[0].mxu0
  %v2512 = vadd.f32 %v2279, %v2511
  %v2513 = vpop.f32.mrb[0].mxu0
  %v2514 = vpop.f32.mrb[0].mxu0
  %v2515 = vadd.f32 %v2282, %v2514
  %v2516 = vpop.f32.mrb[0].mxu0
  %2517 = vmatprep.mubr.bf16.mxu0 %v1009
  %2518 = vmatmul.mubr.bf16.gmra.mrb[0].mxu0 %v1008
  %v2519 = vpop.f32.mrb[0].mxu0
  %v2520 = vadd.f32 %v2287, %v2519
  %v2521 = vpop.f32.mrb[0].mxu0
  %v2522 = vpop.f32.mrb[0].mxu0
  %v2523 = vadd.f32 %v2290, %v2522
  %v2524 = vpop.f32.mrb[0].mxu0
  %2525 = vmatprep.mubr.bf16.mxu0 %v1017
  %2526 = vmatmul.mubr.bf16.gmra.mrb[0].mxu0 %v1016
  %v2527 = vpop.f32.mrb[0].mxu0
  %v2528 = vadd.f32 %v2295, %v2527
  %v2529 = vpop.f32.mrb[0].mxu0
  %v2530 = vpop.f32.mrb[0].mxu0
  %v2531 = vadd.f32 %v2298, %v2530
  %v2532 = vpop.f32.mrb[0].mxu0
  %2533 = vmatprep.mubr.bf16.mxu0 %v1025
  %2534 = vmatmul.mubr.bf16.gmra.mrb[0].mxu0 %v1024
  %v2535 = vpop.f32.mrb[0].mxu0
  %v2536 = vadd.f32 %v2303, %v2535
  %v2537 = vpop.f32.mrb[0].mxu0
  %v2538 = vpop.f32.mrb[0].mxu0
  %v2539 = vadd.f32 %v2306, %v2538
  %v2540 = vpop.f32.mrb[0].mxu0
  %2541 = vmatprep.mubr.bf16.mxu0 %v1033
  %2542 = vmatmul.mubr.bf16.gmra.mrb[0].mxu0 %v1032
  %v2543 = vpop.f32.mrb[0].mxu0
  %v2544 = vadd.f32 %v2311, %v2543
  %v2545 = vpop.f32.mrb[0].mxu0
  %v2546 = vpop.f32.mrb[0].mxu0
  %v2547 = vadd.f32 %v2314, %v2546
  %v2548 = vpop.f32.mrb[0].mxu0
  %2549 = vmatprep.mubr.bf16.mxu0 %v1041
  %2550 = vmatmul.mubr.bf16.gmra.mrb[0].mxu0 %v1040
  %v2551 = vpop.f32.mrb[0].mxu0
  %v2552 = vadd.f32 %v2319, %v2551
  %v2553 = vpop.f32.mrb[0].mxu0
  %v2554 = vpop.f32.mrb[0].mxu0
  %v2555 = vadd.f32 %v2322, %v2554
  %v2556 = vpop.f32.mrb[0].mxu0
  %2557 = vmatprep.mubr.bf16.mxu0 %v1049
  %2558 = vmatmul.mubr.bf16.gmra.mrb[0].mxu0 %v1048
  %v2559 = vpop.f32.mrb[0].mxu0
  %v2560 = vadd.f32 %v2327, %v2559
  %v2561 = vpop.f32.mrb[0].mxu0
  %v2562 = vpop.f32.mrb[0].mxu0
  %v2563 = vadd.f32 %v2330, %v2562
  %v2564 = vpop.f32.mrb[0].mxu0
  %2565 = vmatprep.mubr.bf16.mxu0 %v1057
  %2566 = vmatmul.mubr.bf16.gmra.mrb[0].mxu0 %v1056
  %v2567 = vpop.f32.mrb[0].mxu0
  %v2568 = vadd.f32 %v2335, %v2567
  %v2569 = vpop.f32.mrb[0].mxu0
  %v2570 = vpop.f32.mrb[0].mxu0
  %v2571 = vadd.f32 %v2338, %v2570
  %v2572 = vpop.f32.mrb[0].mxu0
  %2573 = vmatprep.mubr.bf16.mxu0 %v1065
  %2574 = vmatmul.mubr.bf16.gmra.mrb[0].mxu0 %v1064
  %v2575 = vpop.f32.mrb[0].mxu0
  %v2576 = vadd.f32 %v2343, %v2575
  %v2577 = vpop.f32.mrb[0].mxu0
  %v2578 = vpop.f32.mrb[0].mxu0
  %v2579 = vadd.f32 %v2346, %v2578
  %v2580 = vpop.f32.mrb[0].mxu0
  %2581 = vmatprep.mubr.bf16.mxu0 %v1073
  %2582 = vmatmul.mubr.bf16.gmra.mrb[0].mxu0 %v1072
  %v2583 = vpop.f32.mrb[0].mxu0
  %v2584 = vadd.f32 %v2351, %v2583
  %v2585 = vpop.f32.mrb[0].mxu0
  %v2586 = vpop.f32.mrb[0].mxu0
  %v2587 = vadd.f32 %v2354, %v2586
  %v2588 = vpop.f32.mrb[0].mxu0
  %2589 = vmatprep.mubr.bf16.mxu0 %v1081
  %2590 = vmatmul.mubr.bf16.gmra.mrb[0].mxu0 %v1080
  %v2591 = vpop.f32.mrb[0].mxu0
  %v2592 = vadd.f32 %v2359, %v2591
  %v2593 = vpop.f32.mrb[0].mxu0
  %v2594 = vpop.f32.mrb[0].mxu0
  %v2595 = vadd.f32 %v2362, %v2594
  %v2596 = vpop.f32.mrb[0].mxu0
  %2597 = vmatprep.mubr.bf16.mxu0 %v1089
  %2598 = vmatmul.mubr.bf16.gmra.mrb[0].mxu0 %v1088
  %v2599 = vpop.f32.mrb[0].mxu0
  %v2600 = vadd.f32 %v2367, %v2599
  %v2601 = vpop.f32.mrb[0].mxu0
  %v2602 = vpop.f32.mrb[0].mxu0
  %v2603 = vadd.f32 %v2370, %v2602
  %v2604 = vpop.f32.mrb[0].mxu0
  %2605 = vmatprep.mubr.bf16.mxu0 %v1097
  %2606 = vmatmul.mubr.bf16.gmra.mrb[0].mxu0 %v1096
  %v2607 = vpop.f32.mrb[0].mxu0
  %v2608 = vadd.f32 %v2375, %v2607
  %v2609 = vpop.f32.mrb[0].mxu0
  %v2610 = vpop.f32.mrb[0].mxu0
  %v2611 = vadd.f32 %v2378, %v2610
  %v2612 = vpop.f32.mrb[0].mxu0
  %2613 = vmatprep.mubr.bf16.mxu0 %v1105
  %2614 = vmatmul.mubr.bf16.gmra.mrb[0].mxu0 %v1104
  %v2615 = vpop.f32.mrb[0].mxu0
  %v2616 = vadd.f32 %v2383, %v2615
  %v2617 = vpop.f32.mrb[0].mxu0
  %v2618 = vpop.f32.mrb[0].mxu0
  %v2619 = vadd.f32 %v2386, %v2618
  %v2620 = vpop.f32.mrb[0].mxu0
  %2621 = vmatprep.mubr.bf16.mxu0 %v1113
  %2622 = vmatmul.mubr.bf16.gmra.mrb[0].mxu0 %v1112
  %v2623 = vpop.f32.mrb[0].mxu0
  %v2624 = vadd.f32 %v2391, %v2623
  %v2625 = vpop.f32.mrb[0].mxu0
  %v2626 = vpop.f32.mrb[0].mxu0
  %v2627 = vadd.f32 %v2394, %v2626
  %v2628 = vpop.f32.mrb[0].mxu0
  %2629 = vmatprep.mubr.bf16.mxu0 %v1121
  %2630 = vmatmul.mubr.bf16.gmra.mrb[0].mxu0 %v1120
  %v2631 = vpop.f32.mrb[0].mxu0
  %v2632 = vadd.f32 %v2399, %v2631
  %v2633 = vpop.f32.mrb[0].mxu0
  %v2634 = vpop.f32.mrb[0].mxu0
  %v2635 = vadd.f32 %v2402, %v2634
  %v2636 = vpop.f32.mrb[0].mxu0
  %2637 = vmatprep.mubr.bf16.mxu0 %v1129
  %2638 = vmatmul.mubr.bf16.gmra.mrb[0].mxu0 %v1128
  %v2639 = vpop.f32.mrb[0].mxu0
  %v2640 = vadd.f32 %v2407, %v2639
  %v2641 = vpop.f32.mrb[0].mxu0
  %v2642 = vpop.f32.mrb[0].mxu0
  %v2643 = vadd.f32 %v2410, %v2642
  %v2644 = vpop.f32.mrb[0].mxu0
  %2645 = vmatprep.mubr.bf16.mxu0 %v1137
  %2646 = vmatmul.mubr.bf16.gmra.mrb[0].mxu0 %v1136
  %v2647 = vpop.f32.mrb[0].mxu0
  %v2648 = vadd.f32 %v2415, %v2647
  %v2649 = vpop.f32.mrb[0].mxu0
  %v2650 = vpop.f32.mrb[0].mxu0
  %v2651 = vadd.f32 %v2418, %v2650
  %v2652 = vpop.f32.mrb[0].mxu0
  %2653 = vmatprep.mubr.bf16.mxu0 %v1145
  %2654 = vmatmul.mubr.bf16.gmra.mrb[0].mxu0 %v1144
  %v2655 = vpop.f32.mrb[0].mxu0
  %v2656 = vadd.f32 %v2423, %v2655
  %v2657 = vpop.f32.mrb[0].mxu0
  %v2658 = vpop.f32.mrb[0].mxu0
  %v2659 = vadd.f32 %v2426, %v2658
  %v2660 = vpop.f32.mrb[0].mxu0
  %2661 = vdwg.mxu0
  %v2662 = vadd.f32 %v2464, %v2467
  %v2663 = vadd.f32 %v2662, %v2472
  %v2664 = vadd.f32 %v2663, %v2475
  %v2665 = vadd.f32 %v2664, %v2480
  %v2666 = vadd.f32 %v2665, %v2483
  %v2667 = vadd.f32 %v2666, %v2488
  %v2668 = vadd.f32 %v2667, %v2491
  %v2669 = vadd.f32 %v2668, %v2496
  %v2670 = vadd.f32 %v2669, %v2499
  %v2671 = vadd.f32 %v2670, %v2504
  %v2672 = vadd.f32 %v2671, %v2507
  %v2673 = vadd.f32 %v2672, %v2512
  %v2674 = vadd.f32 %v2673, %v2515
  %v2675 = vadd.f32 %v2674, %v2520
  %v2676 = vadd.f32 %v2675, %v2523
  %v2677 = vadd.f32 %v2676, %v2528
  %v2678 = vadd.f32 %v2677, %v2531
  %v2679 = vadd.f32 %v2678, %v2536
  %v2680 = vadd.f32 %v2679, %v2539
  %v2681 = vadd.f32 %v2680, %v2544
  %v2682 = vadd.f32 %v2681, %v2547
  %v2683 = vadd.f32 %v2682, %v2552
  %v2684 = vadd.f32 %v2683, %v2555
  %v2685 = vadd.f32 %v2684, %v2560
  %v2686 = vadd.f32 %v2685, %v2563
  %v2687 = vadd.f32 %v2686, %v2568
  %v2688 = vadd.f32 %v2687, %v2571
  %v2689 = vadd.f32 %v2688, %v2576
  %v2690 = vadd.f32 %v2689, %v2579
  %v2691 = vadd.f32 %v2690, %v2584
  %v2692 = vadd.f32 %v2691, %v2587
  %v2693 = vadd.f32 %v2692, %v2592
  %v2694 = vadd.f32 %v2693, %v2595
  %v2695 = vadd.f32 %v2694, %v2600
  %v2696 = vadd.f32 %v2695, %v2603
  %v2697 = vadd.f32 %v2696, %v2608
  %v2698 = vadd.f32 %v2697, %v2611
  %v2699 = vadd.f32 %v2698, %v2616
  %v2700 = vadd.f32 %v2699, %v2619
  %v2701 = vadd.f32 %v2700, %v2624
  %v2702 = vadd.f32 %v2701, %v2627
  %v2703 = vadd.f32 %v2702, %v2632
  %v2704 = vadd.f32 %v2703, %v2635
  %v2705 = vadd.f32 %v2704, %v2640
  %v2706 = vadd.f32 %v2705, %v2643
  %v2707 = vadd.f32 %v2706, %v2648
  %v2708 = vadd.f32 %v2707, %v2651
  %v2709 = vadd.f32 %v2708, %v2656
  %v2710 = vadd.f32 %v2709, %v2659
  %v2711 = vrot.slane %v2710, 4
  %v2712 = vadd.f32 %v2710, %v2711
  %v2713 = vrot.slane %v2712, 2
  %v2714 = vadd.f32 %v2712, %v2713
  %v2715 = vrot.slane %v2714, 1
  %v2716 = vadd.f32 %v2714, %v2715
  %v2717 = vmul.f32 %v2716, 0.0025510204
  %v2718 = vmul.f32 %v2464, %v2464
  %v2719 = vmul.f32 %v2467, %v2467
  %v2720 = vmul.f32 %v2472, %v2472
  %v2721 = vmul.f32 %v2475, %v2475
  %v2722 = vmul.f32 %v2480, %v2480
  %v2723 = vmul.f32 %v2483, %v2483
  %v2724 = vmul.f32 %v2488, %v2488
  %v2725 = vmul.f32 %v2491, %v2491
  %v2726 = vmul.f32 %v2496, %v2496
  %v2727 = vmul.f32 %v2499, %v2499
  %v2728 = vmul.f32 %v2504, %v2504
  %v2729 = vmul.f32 %v2507, %v2507
  %v2730 = vmul.f32 %v2512, %v2512
  %v2731 = vmul.f32 %v2515, %v2515
  %v2732 = vmul.f32 %v2520, %v2520
  %v2733 = vmul.f32 %v2523, %v2523
  %v2734 = vmul.f32 %v2528, %v2528
  %v2735 = vmul.f32 %v2531, %v2531
  %v2736 = vmul.f32 %v2536, %v2536
  %v2737 = vmul.f32 %v2539, %v2539
  %v2738 = vmul.f32 %v2544, %v2544
  %v2739 = vmul.f32 %v2547, %v2547
  %v2740 = vmul.f32 %v2552, %v2552
  %v2741 = vmul.f32 %v2555, %v2555
  %v2742 = vmul.f32 %v2560, %v2560
  %v2743 = vmul.f32 %v2563, %v2563
  %v2744 = vmul.f32 %v2568, %v2568
  %v2745 = vmul.f32 %v2571, %v2571
  %v2746 = vmul.f32 %v2576, %v2576
  %v2747 = vmul.f32 %v2579, %v2579
  %v2748 = vmul.f32 %v2584, %v2584
  %v2749 = vmul.f32 %v2587, %v2587
  %v2750 = vmul.f32 %v2592, %v2592
  %v2751 = vmul.f32 %v2595, %v2595
  %v2752 = vmul.f32 %v2600, %v2600
  %v2753 = vmul.f32 %v2603, %v2603
  %v2754 = vmul.f32 %v2608, %v2608
  %v2755 = vmul.f32 %v2611, %v2611
  %v2756 = vmul.f32 %v2616, %v2616
  %v2757 = vmul.f32 %v2619, %v2619
  %v2758 = vmul.f32 %v2624, %v2624
  %v2759 = vmul.f32 %v2627, %v2627
  %v2760 = vmul.f32 %v2632, %v2632
  %v2761 = vmul.f32 %v2635, %v2635
  %v2762 = vmul.f32 %v2640, %v2640
  %v2763 = vmul.f32 %v2643, %v2643
  %v2764 = vmul.f32 %v2648, %v2648
  %v2765 = vmul.f32 %v2651, %v2651
  %v2766 = vmul.f32 %v2656, %v2656
  %v2767 = vmul.f32 %v2659, %v2659
  %v2768 = vadd.f32 %v2718, %v2719
  %v2769 = vadd.f32 %v2768, %v2720
  %v2770 = vadd.f32 %v2769, %v2721
  %v2771 = vadd.f32 %v2770, %v2722
  %v2772 = vadd.f32 %v2771, %v2723
  %v2773 = vadd.f32 %v2772, %v2724
  %v2774 = vadd.f32 %v2773, %v2725
  %v2775 = vadd.f32 %v2774, %v2726
  %v2776 = vadd.f32 %v2775, %v2727
  %v2777 = vadd.f32 %v2776, %v2728
  %v2778 = vadd.f32 %v2777, %v2729
  %v2779 = vadd.f32 %v2778, %v2730
  %v2780 = vadd.f32 %v2779, %v2731
  %v2781 = vadd.f32 %v2780, %v2732
  %v2782 = vadd.f32 %v2781, %v2733
  %v2783 = vadd.f32 %v2782, %v2734
  %v2784 = vadd.f32 %v2783, %v2735
  %v2785 = vadd.f32 %v2784, %v2736
  %v2786 = vadd.f32 %v2785, %v2737
  %v2787 = vadd.f32 %v2786, %v2738
  %v2788 = vadd.f32 %v2787, %v2739
  %v2789 = vadd.f32 %v2788, %v2740
  %v2790 = vadd.f32 %v2789, %v2741
  %v2791 = vadd.f32 %v2790, %v2742
  %v2792 = vadd.f32 %v2791, %v2743
  %v2793 = vadd.f32 %v2792, %v2744
  %v2794 = vadd.f32 %v2793, %v2745
  %v2795 = vadd.f32 %v2794, %v2746
  %v2796 = vadd.f32 %v2795, %v2747
  %v2797 = vadd.f32 %v2796, %v2748
  %v2798 = vadd.f32 %v2797, %v2749
  %v2799 = vadd.f32 %v2798, %v2750
  %v2800 = vadd.f32 %v2799, %v2751
  %v2801 = vadd.f32 %v2800, %v2752
  %v2802 = vadd.f32 %v2801, %v2753
  %v2803 = vadd.f32 %v2802, %v2754
  %v2804 = vadd.f32 %v2803, %v2755
  %v2805 = vadd.f32 %v2804, %v2756
  %v2806 = vadd.f32 %v2805, %v2757
  %v2807 = vadd.f32 %v2806, %v2758
  %v2808 = vadd.f32 %v2807, %v2759
  %v2809 = vadd.f32 %v2808, %v2760
  %v2810 = vadd.f32 %v2809, %v2761
  %v2811 = vadd.f32 %v2810, %v2762
  %v2812 = vadd.f32 %v2811, %v2763
  %v2813 = vadd.f32 %v2812, %v2764
  %v2814 = vadd.f32 %v2813, %v2765
  %v2815 = vadd.f32 %v2814, %v2766
  %v2816 = vadd.f32 %v2815, %v2767
  %v2817 = vrot.slane %v2816, 4
  %v2818 = vadd.f32 %v2816, %v2817
  %v2819 = vrot.slane %v2818, 2
  %v2820 = vadd.f32 %v2818, %v2819
  %v2821 = vrot.slane %v2820, 1
  %v2822 = vadd.f32 %v2820, %v2821
  %v2823 = vmul.f32 %v2822, 0.0025510204
  %v2824 = vmul.f32 %v2717, %v2717
  %v2825 = vsub.f32 %v2823, %v2824
  %v2826 = vmax.f32 %v2825, 0.0
  %v2827 = vld [vmem:[%s2] sm:$0x1]
  %v2828 = vadd.f32 %v2826, 1e-05
  %v2829 = vrsqrt.pop %v2828
  %v2830 = vmul.f32 %v2827, %v2829
  %v2831 = vld [vmem:[%s3] sm:$0x1]
  %v2832 = vmul.f32 %v2717, %v2830
  %v2833 = vsub.f32 %v2831, %v2832
  %v2835 = vlaneseq
  %v2836 = vshrl.u32 %v2835, 7
  %v2837 = vsub.s32 0, %v2836
  %v2838 = vrot.slane %v2830, %v2837
  %v2840 = vmul.f32 %v2464, %v2838
  %v2841 = vmul.f32 %v2467, %v2838
  %v2842 = vmul.f32 %v2472, %v2838
  %v2843 = vmul.f32 %v2475, %v2838
  %v2844 = vmul.f32 %v2480, %v2838
  %v2845 = vmul.f32 %v2483, %v2838
  %v2846 = vmul.f32 %v2488, %v2838
  %v2847 = vmul.f32 %v2491, %v2838
  %v2848 = vmul.f32 %v2496, %v2838
  %v2849 = vmul.f32 %v2499, %v2838
  %v2850 = vmul.f32 %v2504, %v2838
  %v2851 = vmul.f32 %v2507, %v2838
  %v2852 = vmul.f32 %v2512, %v2838
  %v2853 = vmul.f32 %v2515, %v2838
  %v2854 = vmul.f32 %v2520, %v2838
  %v2855 = vmul.f32 %v2523, %v2838
  %v2856 = vmul.f32 %v2528, %v2838
  %v2857 = vmul.f32 %v2531, %v2838
  %v2858 = vmul.f32 %v2536, %v2838
  %v2859 = vmul.f32 %v2539, %v2838
  %v2860 = vmul.f32 %v2544, %v2838
  %v2861 = vmul.f32 %v2547, %v2838
  %v2862 = vmul.f32 %v2552, %v2838
  %v2863 = vmul.f32 %v2555, %v2838
  %v2864 = vmul.f32 %v2560, %v2838
  %v2865 = vmul.f32 %v2563, %v2838
  %v2866 = vmul.f32 %v2568, %v2838
  %v2867 = vmul.f32 %v2571, %v2838
  %v2868 = vmul.f32 %v2576, %v2838
  %v2869 = vmul.f32 %v2579, %v2838
  %v2870 = vmul.f32 %v2584, %v2838
  %v2871 = vmul.f32 %v2587, %v2838
  %v2872 = vmul.f32 %v2592, %v2838
  %v2873 = vmul.f32 %v2595, %v2838
  %v2874 = vmul.f32 %v2600, %v2838
  %v2875 = vmul.f32 %v2603, %v2838
  %v2876 = vmul.f32 %v2608, %v2838
  %v2877 = vmul.f32 %v2611, %v2838
  %v2878 = vmul.f32 %v2616, %v2838
  %v2879 = vmul.f32 %v2619, %v2838
  %v2880 = vmul.f32 %v2624, %v2838
  %v2881 = vmul.f32 %v2627, %v2838
  %v2882 = vmul.f32 %v2632, %v2838
  %v2883 = vmul.f32 %v2635, %v2838
  %v2884 = vmul.f32 %v2640, %v2838
  %v2885 = vmul.f32 %v2643, %v2838
  %v2886 = vmul.f32 %v2648, %v2838
  %v2887 = vmul.f32 %v2651, %v2838
  %v2888 = vmul.f32 %v2656, %v2838
  %v2889 = vmul.f32 %v2659, %v2838
  %v2891 = vlaneseq
  %v2892 = vshrl.u32 %v2891, 7
  %v2893 = vsub.s32 0, %v2892
  %v2894 = vrot.slane %v2833, %v2893
  %v2896 = vadd.f32 %v2840, %v2894
  %v2897 = vadd.f32 %v2841, %v2894
  %v2898 = vadd.f32 %v2842, %v2894
  %v2899 = vadd.f32 %v2843, %v2894
  %v2900 = vadd.f32 %v2844, %v2894
  %v2901 = vadd.f32 %v2845, %v2894
  %v2902 = vadd.f32 %v2846, %v2894
  %v2903 = vadd.f32 %v2847, %v2894
  %v2904 = vadd.f32 %v2848, %v2894
  %v2905 = vadd.f32 %v2849, %v2894
  %v2906 = vadd.f32 %v2850, %v2894
  %v2907 = vadd.f32 %v2851, %v2894
  %v2908 = vadd.f32 %v2852, %v2894
  %v2909 = vadd.f32 %v2853, %v2894
  %v2910 = vadd.f32 %v2854, %v2894
  %v2911 = vadd.f32 %v2855, %v2894
  %v2912 = vadd.f32 %v2856, %v2894
  %v2913 = vadd.f32 %v2857, %v2894
  %v2914 = vadd.f32 %v2858, %v2894
  %v2915 = vadd.f32 %v2859, %v2894
  %v2916 = vadd.f32 %v2860, %v2894
  %v2917 = vadd.f32 %v2861, %v2894
  %v2918 = vadd.f32 %v2862, %v2894
  %v2919 = vadd.f32 %v2863, %v2894
  %v2920 = vadd.f32 %v2864, %v2894
  %v2921 = vadd.f32 %v2865, %v2894
  %v2922 = vadd.f32 %v2866, %v2894
  %v2923 = vadd.f32 %v2867, %v2894
  %v2924 = vadd.f32 %v2868, %v2894
  %v2925 = vadd.f32 %v2869, %v2894
  %v2926 = vadd.f32 %v2870, %v2894
  %v2927 = vadd.f32 %v2871, %v2894
  %v2928 = vadd.f32 %v2872, %v2894
  %v2929 = vadd.f32 %v2873, %v2894
  %v2930 = vadd.f32 %v2874, %v2894
  %v2931 = vadd.f32 %v2875, %v2894
  %v2932 = vadd.f32 %v2876, %v2894
  %v2933 = vadd.f32 %v2877, %v2894
  %v2934 = vadd.f32 %v2878, %v2894
  %v2935 = vadd.f32 %v2879, %v2894
  %v2936 = vadd.f32 %v2880, %v2894
  %v2937 = vadd.f32 %v2881, %v2894
  %v2938 = vadd.f32 %v2882, %v2894
  %v2939 = vadd.f32 %v2883, %v2894
  %v2940 = vadd.f32 %v2884, %v2894
  %v2941 = vadd.f32 %v2885, %v2894
  %v2942 = vadd.f32 %v2886, %v2894
  %v2943 = vadd.f32 %v2887, %v2894
  %v2944 = vadd.f32 %v2888, %v2894
  %v2945 = vadd.f32 %v2889, %v2894
  %v2946 = vmax.f32 %v2896, 0.0
  %v2947 = vmax.f32 %v2897, 0.0
  %v2948 = vmax.f32 %v2898, 0.0
  %v2949 = vmax.f32 %v2899, 0.0
  %v2950 = vmax.f32 %v2900, 0.0
  %v2951 = vmax.f32 %v2901, 0.0
  %v2952 = vmax.f32 %v2902, 0.0
  %v2953 = vmax.f32 %v2903, 0.0
  %v2954 = vmax.f32 %v2904, 0.0
  %v2955 = vmax.f32 %v2905, 0.0
  %v2956 = vmax.f32 %v2906, 0.0
  %v2957 = vmax.f32 %v2907, 0.0
  %v2958 = vmax.f32 %v2908, 0.0
  %v2959 = vmax.f32 %v2909, 0.0
  %v2960 = vmax.f32 %v2910, 0.0
  %v2961 = vmax.f32 %v2911, 0.0
  %v2962 = vmax.f32 %v2912, 0.0
  %v2963 = vmax.f32 %v2913, 0.0
  %v2964 = vmax.f32 %v2914, 0.0
  %v2965 = vmax.f32 %v2915, 0.0
  %v2966 = vmax.f32 %v2916, 0.0
  %v2967 = vmax.f32 %v2917, 0.0
  %v2968 = vmax.f32 %v2918, 0.0
  %v2969 = vmax.f32 %v2919, 0.0
  %v2970 = vmax.f32 %v2920, 0.0
  %v2971 = vmax.f32 %v2921, 0.0
  %v2972 = vmax.f32 %v2922, 0.0
  %v2973 = vmax.f32 %v2923, 0.0
  %v2974 = vmax.f32 %v2924, 0.0
  %v2975 = vmax.f32 %v2925, 0.0
  %v2976 = vmax.f32 %v2926, 0.0
  %v2977 = vmax.f32 %v2927, 0.0
  %v2978 = vmax.f32 %v2928, 0.0
  %v2979 = vmax.f32 %v2929, 0.0
  %v2980 = vmax.f32 %v2930, 0.0
  %v2981 = vmax.f32 %v2931, 0.0
  %v2982 = vmax.f32 %v2932, 0.0
  %v2983 = vmax.f32 %v2933, 0.0
  %v2984 = vmax.f32 %v2934, 0.0
  %v2985 = vmax.f32 %v2935, 0.0
  %v2986 = vmax.f32 %v2936, 0.0
  %v2987 = vmax.f32 %v2937, 0.0
  %v2988 = vmax.f32 %v2938, 0.0
  %v2989 = vmax.f32 %v2939, 0.0
  %v2990 = vmax.f32 %v2940, 0.0
  %v2991 = vmax.f32 %v2941, 0.0
  %v2992 = vmax.f32 %v2942, 0.0
  %v2993 = vmax.f32 %v2943, 0.0
  %v2994 = vmax.f32 %v2944, 0.0
  %v2995 = vmax.f32 %v2945, 0.0
  %2996 = vst [vmem:[%s4] sm:$0xff] %v2946
  %2997 = vst [vmem:[%s4 + $0x8] sm:$0xff] %v2947
  %2998 = vst [vmem:[%s4 + $0x10] sm:$0xff] %v2948
  %2999 = vst [vmem:[%s4 + $0x18] sm:$0xff] %v2949
  %3000 = vst [vmem:[%s4 + $0x20] sm:$0xff] %v2950
  %3001 = vst [vmem:[%s4 + $0x28] sm:$0xff] %v2951
  %3002 = vst [vmem:[%s4 + $0x30] sm:$0xff] %v2952
  %3003 = vst [vmem:[%s4 + $0x38] sm:$0xff] %v2953
  %3004 = vst [vmem:[%s4 + $0x40] sm:$0xff] %v2954
  %3005 = vst [vmem:[%s4 + $0x48] sm:$0xff] %v2955
  %3006 = vst [vmem:[%s4 + $0x50] sm:$0xff] %v2956
  %3007 = vst [vmem:[%s4 + $0x58] sm:$0xff] %v2957
  %3008 = vst [vmem:[%s4 + $0x60] sm:$0xff] %v2958
  %3009 = vst [vmem:[%s4 + $0x68] sm:$0xff] %v2959
  %3010 = vst [vmem:[%s4 + $0x70] sm:$0xff] %v2960
  %3011 = vst [vmem:[%s4 + $0x78] sm:$0xff] %v2961
  %3012 = vst [vmem:[%s4 + $0x80] sm:$0xff] %v2962
  %3013 = vst [vmem:[%s4 + $0x88] sm:$0xff] %v2963
  %3014 = vst [vmem:[%s4 + $0x90] sm:$0xff] %v2964
  %3015 = vst [vmem:[%s4 + $0x98] sm:$0xff] %v2965
  %3016 = vst [vmem:[%s4 + $0xa0] sm:$0xff] %v2966
  %3017 = vst [vmem:[%s4 + $0xa8] sm:$0xff] %v2967
  %3018 = vst [vmem:[%s4 + $0xb0] sm:$0xff] %v2968
  %3019 = vst [vmem:[%s4 + $0xb8] sm:$0xff] %v2969
  %3020 = vst [vmem:[%s4 + $0xc0] sm:$0xff] %v2970
  %3021 = vst [vmem:[%s4 + $0xc8] sm:$0xff] %v2971
  %3022 = vst [vmem:[%s4 + $0xd0] sm:$0xff] %v2972
  %3023 = vst [vmem:[%s4 + $0xd8] sm:$0xff] %v2973
  %3024 = vst [vmem:[%s4 + $0xe0] sm:$0xff] %v2974
  %3025 = vst [vmem:[%s4 + $0xe8] sm:$0xff] %v2975
  %3026 = vst [vmem:[%s4 + $0xf0] sm:$0xff] %v2976
  %3027 = vst [vmem:[%s4 + $0xf8] sm:$0xff] %v2977
  %3028 = vst [vmem:[%s4 + $0x100] sm:$0xff] %v2978
  %3029 = vst [vmem:[%s4 + $0x108] sm:$0xff] %v2979
  %3030 = vst [vmem:[%s4 + $0x110] sm:$0xff] %v2980
  %3031 = vst [vmem:[%s4 + $0x118] sm:$0xff] %v2981
  %3032 = vst [vmem:[%s4 + $0x120] sm:$0xff] %v2982
  %3033 = vst [vmem:[%s4 + $0x128] sm:$0xff] %v2983
  %3034 = vst [vmem:[%s4 + $0x130] sm:$0xff] %v2984
  %3035 = vst [vmem:[%s4 + $0x138] sm:$0xff] %v2985
  %3036 = vst [vmem:[%s4 + $0x140] sm:$0xff] %v2986
  %3037 = vst [vmem:[%s4 + $0x148] sm:$0xff] %v2987
  %3038 = vst [vmem:[%s4 + $0x150] sm:$0xff] %v2988
  %3039 = vst [vmem:[%s4 + $0x158] sm:$0xff] %v2989
  %3040 = vst [vmem:[%s4 + $0x160] sm:$0xff] %v2990
  %3041 = vst [vmem:[%s4 + $0x168] sm:$0xff] %v2991
  %3042 = vst [vmem:[%s4 + $0x170] sm:$0xff] %v2992
  %3043 = vst [vmem:[%s4 + $0x178] sm:$0xff] %v2993
  %3044 = vst [vmem:[%s4 + $0x180] sm:$0xff] %v2994
  %3045 = vst [vmem:[%s4 + $0x188] sm:$0xff] %v2995
  // Predicated region
  $region18: #{conv_forward.14} parent=0 // pred_check
    _
  $region19: #{conv_forward.14} parent=0 // pred_check_branch
    %3047 = sbr.rel (0) target = $region21
  $region20: #{conv_forward.14} parent=0 // pred_region
    _
  $region21: #{conv_forward.14} parent=0 // pred_fallthru
    _
  // Predicated region
  $region22: #{conv_forward.14} parent=0 // pred_check
    _
  $region23: #{conv_forward.14} parent=0 // pred_check_branch
    %3049 = sbr.rel (0) target = $region25
  $region24: #{conv_forward.14} parent=0 // pred_region
    _
  $region25: #{conv_forward.14} parent=0 // pred_fallthru
    _

// kernel: conv_forward.15
$region0: #{conv_forward.15}
  #allocation0 [shape = 'u32[]', space=smem, size = 0x4, offset = 0x4, fixed_abs, tag = 'smem constant byte address 0x4 - core index']
  #allocation1 [shape = 'u32[144,128]{1,0:T(1,128)}', space=vmem, size = 0x12000, scoped, tag = 'internal scratch']
  %s0 = inlined_call_operand.vmem [shape: bf16[1600,512], index: 0, kind: input, shape index: {}]
  %s1 = inlined_call_operand.vmem [shape: bf16[512,128], index: 1, kind: input, shape index: {}]
  %s2 = inlined_call_operand.vmem [shape: f32[1600,128], index: 2, kind: output, shape index: {}]
  %s3 = sld [smem:[#allocation0]]
  $region41: #{conv_forward.15} parent=0
    _
  %s5 = ssub.s32 1, %s3
  %s6 = scalar_select 0, %s5, %s3
  loop: start=0, step=1, limit=6
  $region2: #{conv_forward.15} parent=0 // loop_pre_header
    _
  $region3: #{conv_forward.15} parent=0 // loop_header
    %s8 = sphi 0, %s12
    %p9 = scmp.ge.s32.totalorder %s8, 6
    %s18 = sphi 0, %s20
    %s21 = sphi 0, %s18
    %s22 = sphi 0, %s21
    %s38 = sphi 0, %s22
    %s42 = sphi 0, %s42
    %s44 = sphi 0, %s42
    %s45 = sphi 0, %s44
    %s59 = sphi 0, %s45
    %s65 = sphi 0, %s67
    %s68 = sphi 0, %s65
    %s69 = sphi 0, %s68
    %s85 = sphi 0, %s69
  $region4: #{conv_forward.15} parent=0 // loop_header_branch
    %11 = sbr.rel (%p9) target = $region8
  $region5: #{conv_forward.15} parent=0 // loop_body
    %s13 = ssub.s32 %s8, 1
    %s14 = ssub.s32 %s8, 2
    %s15 = sadd.s32 %s8, 1
    %s16 = ssub.s32 %s8, %s15
    %p17 = scmp.eq.s32.totalorder %s16, 0
    %s19 = sadd.s32 %s18, 1
    %s20 = scalar_select %p17, %s18, %s19
    %p23 = pneg %p17
    %p24 = scmp.eq.s32.totalorder %s8, 3
    %p25 = por %p23, %p24
    %p26 = scmp.ne.s32.totalorder %s18, %s21
    %p27 = scmp.eq.s32.totalorder %s8, 0
    %p28 = por %p26, %p27
    %p29 = scmp.ne.s32.totalorder %s18, %s21
    %p30 = scmp.eq.s32.totalorder %s13, 3
    %p31 = por %p29, %p30
    %p32 = scmp.ne.s32.totalorder %s21, %s22
    %p33 = scmp.eq.s32.totalorder %s13, 0
    %p34 = por %p32, %p33
    %p35 = scmp.ne.s32.totalorder %s21, %s22
    %p36 = scmp.eq.s32.totalorder %s14, 3
    %p37 = por %p35, %p36
    %p39 = scmp.ne.s32.totalorder %s22, %s38
    %p40 = scmp.eq.s32.totalorder %s14, 0
    %p41 = por %p39, %p40
    %s43 = sadd.s32 %s42, 1
    %p46 = scmp.eq.s32.totalorder %s8, 3
    %p47 = scmp.ne.s32.totalorder %s42, %s44
    %p48 = scmp.eq.s32.totalorder %s8, 0
    %p49 = por %p47, %p48
    %p50 = scmp.ne.s32.totalorder %s42, %s44
    %p51 = scmp.eq.s32.totalorder %s13, 3
    %p52 = por %p50, %p51
    %p53 = scmp.ne.s32.totalorder %s44, %s45
    %p54 = scmp.eq.s32.totalorder %s13, 0
    %p55 = por %p53, %p54
    %p56 = scmp.ne.s32.totalorder %s44, %s45
    %p57 = scmp.eq.s32.totalorder %s14, 3
    %p58 = por %p56, %p57
    %p60 = scmp.ne.s32.totalorder %s45, %s59
    %p61 = scmp.eq.s32.totalorder %s14, 0
    %p62 = por %p60, %p61
    %s63 = ssub.s32 %s8, %s15
    %p64 = scmp.eq.s32.totalorder %s63, 0
    %s66 = sadd.s32 %s65, 1
    %s67 = scalar_select %p64, %s65, %s66
    %p70 = pneg %p64
    %p71 = scmp.eq.s32.totalorder %s8, 3
    %p72 = por %p70, %p71
    %p73 = scmp.ne.s32.totalorder %s65, %s68
    %p74 = scmp.eq.s32.totalorder %s8, 0
    %p75 = por %p73, %p74
    %p76 = scmp.ne.s32.totalorder %s65, %s68
    %p77 = scmp.eq.s32.totalorder %s13, 3
    %p78 = por %p76, %p77
    %p79 = scmp.ne.s32.totalorder %s68, %s69
    %p80 = scmp.eq.s32.totalorder %s13, 0
    %p81 = por %p79, %p80
    %p82 = scmp.ne.s32.totalorder %s68, %s69
    %p83 = scmp.eq.s32.totalorder %s14, 3
    %p84 = por %p82, %p83
    %p86 = scmp.ne.s32.totalorder %s69, %s85
    %p87 = scmp.eq.s32.totalorder %s14, 0
    %p88 = por %p86, %p87
    %p89 = scmp.le.s32.totalorder 1, %s8
    %p90 = scmp.lt.s32.totalorder %s8, 5
    %p91 = pnand %p89, %p90
    %p92 = pneg %p91
    // Predicated region
    $region9: #{conv_forward.15} parent=5 // pred_check
      _
    $region10: #{conv_forward.15} parent=5 // pred_check_branch
      %94 = sbr.rel (%p91) target = $region12
    $region11: #{conv_forward.15} parent=5 // pred_region
      %s95 = ssub.s32 %s8, 1
      // Predicated region
      $region13: #{conv_forward.15} parent=11 // pred_check
        %p96 = pneg %p55
      $region14: #{conv_forward.15} parent=11 // pred_check_branch
        %98 = sbr.rel (%p96) target = $region16
      $region15: #{conv_forward.15} parent=11 // pred_region
        _
      $region16: #{conv_forward.15} parent=11 // pred_fallthru
        _
    $region12: #{conv_forward.15} parent=5 // pred_fallthru
      _
    %p99 = scmp.lt.s32.totalorder %s8, 4
    // Predicated region
    $region17: #{conv_forward.15} parent=5 // pred_check
      %p100 = pneg %p99
    $region18: #{conv_forward.15} parent=5 // pred_check_branch
      %102 = sbr.rel (%p100) target = $region20
    $region19: #{conv_forward.15} parent=5 // pred_region
      // Predicated region
      $region21: #{conv_forward.15} parent=19 // pred_check
        %p103 = pneg %p28
      $region22: #{conv_forward.15} parent=19 // pred_check_branch
        %105 = sbr.rel (%p103) target = $region24
      $region23: #{conv_forward.15} parent=19 // pred_region
        %s106 = smul.u32 50, %s8
        %p107 = scmp.lt.s32.totalorder %s106, 199
        %s108 = scalar_select %p107, %s106, 199
        %s109 = smul.addr %s108, 4
        %s110 = smul.addr %s109, 4
        %s111 = scalar_lea.vmem %s0, %s110
        %s112 = smul.u32 50, %s8
      $region24: #{conv_forward.15} parent=19 // pred_fallthru
        _
    $region20: #{conv_forward.15} parent=5 // pred_fallthru
      _
    %p113 = scmp.le.s32.totalorder 1, %s8
    %p114 = scmp.lt.s32.totalorder %s8, 5
    %p115 = pnand %p113, %p114
    %p116 = pneg %p115
    // Predicated region
    $region25: #{conv_forward.15} parent=5 // pred_check
      _
    $region26: #{conv_forward.15} parent=5 // pred_check_branch
      %118 = sbr.rel (%p115) target = $region28
    $region27: #{conv_forward.15} parent=5 // pred_region
      %s119 = ssub.s32 %s8, 1
      %s120 = smul.u32 50, %s13
      %p121 = scmp.lt.s32.totalorder %s120, 199
      %s122 = scalar_select %p121, %s120, 199
      %s123 = smul.addr %s122, 4
      %s124 = smul.addr %s123, 4
      %s125 = scalar_lea.vmem %s0, %s124
      %p126 = pneg %p34
      %p127 = pneg %p31
      %p128 = pneg %p55
      %p129 = pneg %p52
      %p130 = pneg %p81
      %p131 = pneg %p78
      %s132 = smul.u32 50, %s13
      %p133 = scmp.lt.s32.totalorder %s132, 199
      %s134 = scalar_select %p133, %s132, 199
      %s135 = smul.addr %s134, 8
      %s136 = scalar_lea.vmem %s2, %s135
      %s137 = smul.u32 50, %s13
      %p138 = scmp.lt.s32.totalorder %s137, 199
      %s139 = scalar_select %p138, %s137, 199
      %s140 = smul.addr %s139, 4
      %s141 = smul.addr %s140, 4
      %s142 = scalar_lea.vmem %s0, %s141
      %s143 = smul.u32 50, %s13
      %s144 = smul.u32 50, %s13
      %p145 = scmp.lt.s32.totalorder %s144, 199
      %s146 = scalar_select %p145, %s144, 199
      %s147 = smul.addr %s146, 8
      %s148 = scalar_lea.vmem %s2, %s147
      %s149 = smul.u32 50, %s13
      %v151 = vld [vmem:[%s142] sm:$0xff]
      %v152 = vld [vmem:[%s142 + $0x8] sm:$0xff]
      %v153 = vld [vmem:[%s142 + $0x10] sm:$0xff]
      %v154 = vld [vmem:[%s142 + $0x18] sm:$0xff]
      %v155 = vld [vmem:[%s142 + $0x20] sm:$0xff]
      %v156 = vld [vmem:[%s142 + $0x28] sm:$0xff]
      %v157 = vld [vmem:[%s142 + $0x30] sm:$0xff]
      %v158 = vld [vmem:[%s142 + $0x38] sm:$0xff]
      %v159 = vld [vmem:[%s142 + $0x40] sm:$0xff]
      %v160 = vld [vmem:[%s142 + $0x48] sm:$0xff]
      %v161 = vld [vmem:[%s142 + $0x50] sm:$0xff]
      %v162 = vld [vmem:[%s142 + $0x58] sm:$0xff]
      %v163 = vld [vmem:[%s142 + $0x60] sm:$0xff]
      %v164 = vld [vmem:[%s142 + $0x68] sm:$0xff]
      %v165 = vld [vmem:[%s142 + $0x70] sm:$0xff]
      %v166 = vld [vmem:[%s142 + $0x78] sm:$0xff]
      %v167 = vld [vmem:[%s142 + $0x80] sm:$0xff]
      %v168 = vld [vmem:[%s142 + $0x88] sm:$0xff]
      %v169 = vld [vmem:[%s142 + $0x90] sm:$0xff]
      %v170 = vld [vmem:[%s142 + $0x98] sm:$0xff]
      %v171 = vld [vmem:[%s142 + $0xa0] sm:$0xff]
      %v172 = vld [vmem:[%s142 + $0xa8] sm:$0xff]
      %v173 = vld [vmem:[%s142 + $0xb0] sm:$0xff]
      %v174 = vld [vmem:[%s142 + $0xb8] sm:$0xff]
      %v175 = vld [vmem:[%s142 + $0xc0] sm:$0xff]
      %v176 = vld [vmem:[%s142 + $0xc8] sm:$0xff]
      %v177 = vld [vmem:[%s142 + $0xd0] sm:$0xff]
      %v178 = vld [vmem:[%s142 + $0xd8] sm:$0xff]
      %v179 = vld [vmem:[%s142 + $0xe0] sm:$0xff]
      %v180 = vld [vmem:[%s142 + $0xe8] sm:$0xff]
      %v181 = vld [vmem:[%s142 + $0xf0] sm:$0xff]
      %v182 = vld [vmem:[%s142 + $0xf8] sm:$0xff]
      %v183 = vld [vmem:[%s142 + $0x100] sm:$0xff]
      %v184 = vld [vmem:[%s142 + $0x108] sm:$0xff]
      %v185 = vld [vmem:[%s142 + $0x110] sm:$0xff]
      %v186 = vld [vmem:[%s142 + $0x118] sm:$0xff]
      %v187 = vld [vmem:[%s142 + $0x120] sm:$0xff]
      %v188 = vld [vmem:[%s142 + $0x128] sm:$0xff]
      %v189 = vld [vmem:[%s142 + $0x130] sm:$0xff]
      %v190 = vld [vmem:[%s142 + $0x138] sm:$0xff]
      %v191 = vld [vmem:[%s142 + $0x140] sm:$0xff]
      %v192 = vld [vmem:[%s142 + $0x148] sm:$0xff]
      %v193 = vld [vmem:[%s142 + $0x150] sm:$0xff]
      %v194 = vld [vmem:[%s142 + $0x158] sm:$0xff]
      %v195 = vld [vmem:[%s142 + $0x160] sm:$0xff]
      %v196 = vld [vmem:[%s142 + $0x168] sm:$0xff]
      %v197 = vld [vmem:[%s142 + $0x170] sm:$0xff]
      %v198 = vld [vmem:[%s142 + $0x178] sm:$0xff]
      %v199 = vld [vmem:[%s142 + $0x180] sm:$0xff]
      %v200 = vld [vmem:[%s142 + $0x188] sm:$0xff]
      %v201 = vld [vmem:[%s142 + $0x190] sm:$0xff]
      %v202 = vld [vmem:[%s142 + $0x198] sm:$0xff]
      %v203 = vld [vmem:[%s142 + $0x1a0] sm:$0xff]
      %v204 = vld [vmem:[%s142 + $0x1a8] sm:$0xff]
      %v205 = vld [vmem:[%s142 + $0x1b0] sm:$0xff]
      %v206 = vld [vmem:[%s142 + $0x1b8] sm:$0xff]
      %v207 = vld [vmem:[%s142 + $0x1c0] sm:$0xff]
      %v208 = vld [vmem:[%s142 + $0x1c8] sm:$0xff]
      %v209 = vld [vmem:[%s142 + $0x1d0] sm:$0xff]
      %v210 = vld [vmem:[%s142 + $0x1d8] sm:$0xff]
      %v211 = vld [vmem:[%s142 + $0x1e0] sm:$0xff]
      %v212 = vld [vmem:[%s142 + $0x1e8] sm:$0xff]
      %v213 = vld [vmem:[%s142 + $0x1f0] sm:$0xff]
      %v214 = vld [vmem:[%s142 + $0x1f8] sm:$0xff]
      %v215 = vld [vmem:[%s142 + $0x200] sm:$0xff]
      %v216 = vld [vmem:[%s142 + $0x208] sm:$0xff]
      %v217 = vld [vmem:[%s142 + $0x210] sm:$0xff]
      %v218 = vld [vmem:[%s142 + $0x218] sm:$0xff]
      %v219 = vld [vmem:[%s142 + $0x220] sm:$0xff]
      %v220 = vld [vmem:[%s142 + $0x228] sm:$0xff]
      %v221 = vld [vmem:[%s142 + $0x230] sm:$0xff]
      %v222 = vld [vmem:[%s142 + $0x238] sm:$0xff]
      %v223 = vld [vmem:[%s142 + $0x240] sm:$0xff]
      %v224 = vld [vmem:[%s142 + $0x248] sm:$0xff]
      %v225 = vld [vmem:[%s142 + $0x250] sm:$0xff]
      %v226 = vld [vmem:[%s142 + $0x258] sm:$0xff]
      %v227 = vld [vmem:[%s142 + $0x260] sm:$0xff]
      %v228 = vld [vmem:[%s142 + $0x268] sm:$0xff]
      %v229 = vld [vmem:[%s142 + $0x270] sm:$0xff]
      %v230 = vld [vmem:[%s142 + $0x278] sm:$0xff]
      %v231 = vld [vmem:[%s142 + $0x280] sm:$0xff]
      %v232 = vld [vmem:[%s142 + $0x288] sm:$0xff]
      %v233 = vld [vmem:[%s142 + $0x290] sm:$0xff]
      %v234 = vld [vmem:[%s142 + $0x298] sm:$0xff]
      %v235 = vld [vmem:[%s142 + $0x2a0] sm:$0xff]
      %v236 = vld [vmem:[%s142 + $0x2a8] sm:$0xff]
      %v237 = vld [vmem:[%s142 + $0x2b0] sm:$0xff]
      %v238 = vld [vmem:[%s142 + $0x2b8] sm:$0xff]
      %v239 = vld [vmem:[%s142 + $0x2c0] sm:$0xff]
      %v240 = vld [vmem:[%s142 + $0x2c8] sm:$0xff]
      %v241 = vld [vmem:[%s142 + $0x2d0] sm:$0xff]
      %v242 = vld [vmem:[%s142 + $0x2d8] sm:$0xff]
      %v243 = vld [vmem:[%s142 + $0x2e0] sm:$0xff]
      %v244 = vld [vmem:[%s142 + $0x2e8] sm:$0xff]
      %v245 = vld [vmem:[%s142 + $0x2f0] sm:$0xff]
      %v246 = vld [vmem:[%s142 + $0x2f8] sm:$0xff]
      %v247 = vld [vmem:[%s142 + $0x300] sm:$0xff]
      %v248 = vld [vmem:[%s142 + $0x308] sm:$0xff]
      %v249 = vld [vmem:[%s142 + $0x310] sm:$0xff]
      %v250 = vld [vmem:[%s142 + $0x318] sm:$0xff]
      %v251 = vld [vmem:[%s1] sm:$0xf]
      %v252 = vld [vmem:[%s1 + $0x4] sm:$0xf]
      %v253 = vld [vmem:[%s1 + $0x8] sm:$0xf]
      %v254 = vld [vmem:[%s1 + $0xc] sm:$0xf]
      %v255 = vld [vmem:[%s1 + $0x10] sm:$0xf]
      %v256 = vld [vmem:[%s1 + $0x14] sm:$0xf]
      %v257 = vld [vmem:[%s1 + $0x18] sm:$0xf]
      %v258 = vld [vmem:[%s1 + $0x1c] sm:$0xf]
      %v259 = vld [vmem:[%s1 + $0x20] sm:$0xf]
      %v260 = vld [vmem:[%s1 + $0x24] sm:$0xf]
      %v261 = vld [vmem:[%s1 + $0x28] sm:$0xf]
      %v262 = vld [vmem:[%s1 + $0x2c] sm:$0xf]
      %v263 = vld [vmem:[%s1 + $0x30] sm:$0xf]
      %v264 = vld [vmem:[%s1 + $0x34] sm:$0xf]
      %v265 = vld [vmem:[%s1 + $0x38] sm:$0xf]
      %v266 = vld [vmem:[%s1 + $0x3c] sm:$0xf]
      %v267 = vld [vmem:[%s1 + $0x40] sm:$0xf]
      %v268 = vld [vmem:[%s1 + $0x44] sm:$0xf]
      %v269 = vld [vmem:[%s1 + $0x48] sm:$0xf]
      %v270 = vld [vmem:[%s1 + $0x4c] sm:$0xf]
      %v271 = vld [vmem:[%s1 + $0x50] sm:$0xf]
      %v272 = vld [vmem:[%s1 + $0x54] sm:$0xf]
      %v273 = vld [vmem:[%s1 + $0x58] sm:$0xf]
      %v274 = vld [vmem:[%s1 + $0x5c] sm:$0xf]
      %v275 = vld [vmem:[%s1 + $0x60] sm:$0xf]
      %v276 = vld [vmem:[%s1 + $0x64] sm:$0xf]
      %v277 = vld [vmem:[%s1 + $0x68] sm:$0xf]
      %v278 = vld [vmem:[%s1 + $0x6c] sm:$0xf]
      %v279 = vld [vmem:[%s1 + $0x70] sm:$0xf]
      %v280 = vld [vmem:[%s1 + $0x74] sm:$0xf]
      %v281 = vld [vmem:[%s1 + $0x78] sm:$0xf]
      %v282 = vld [vmem:[%s1 + $0x7c] sm:$0xf]
      %v283 = vld [vmem:[%s1 + $0x80] sm:$0xf]
      %v284 = vld [vmem:[%s1 + $0x84] sm:$0xf]
      %v285 = vld [vmem:[%s1 + $0x88] sm:$0xf]
      %v286 = vld [vmem:[%s1 + $0x8c] sm:$0xf]
      %v287 = vld [vmem:[%s1 + $0x90] sm:$0xf]
      %v288 = vld [vmem:[%s1 + $0x94] sm:$0xf]
      %v289 = vld [vmem:[%s1 + $0x98] sm:$0xf]
      %v290 = vld [vmem:[%s1 + $0x9c] sm:$0xf]
      %v291 = vld [vmem:[%s1 + $0xa0] sm:$0xf]
      %v292 = vld [vmem:[%s1 + $0xa4] sm:$0xf]
      %v293 = vld [vmem:[%s1 + $0xa8] sm:$0xf]
      %v294 = vld [vmem:[%s1 + $0xac] sm:$0xf]
      %v295 = vld [vmem:[%s1 + $0xb0] sm:$0xf]
      %v296 = vld [vmem:[%s1 + $0xb4] sm:$0xf]
      %v297 = vld [vmem:[%s1 + $0xb8] sm:$0xf]
      %v298 = vld [vmem:[%s1 + $0xbc] sm:$0xf]
      %v299 = vld [vmem:[%s1 + $0xc0] sm:$0xf]
      %v300 = vld [vmem:[%s1 + $0xc4] sm:$0xf]
      %v301 = vld [vmem:[%s1 + $0xc8] sm:$0xf]
      %v302 = vld [vmem:[%s1 + $0xcc] sm:$0xf]
      %v303 = vld [vmem:[%s1 + $0xd0] sm:$0xf]
      %v304 = vld [vmem:[%s1 + $0xd4] sm:$0xf]
      %v305 = vld [vmem:[%s1 + $0xd8] sm:$0xf]
      %v306 = vld [vmem:[%s1 + $0xdc] sm:$0xf]
      %v307 = vld [vmem:[%s1 + $0xe0] sm:$0xf]
      %v308 = vld [vmem:[%s1 + $0xe4] sm:$0xf]
      %v309 = vld [vmem:[%s1 + $0xe8] sm:$0xf]
      %v310 = vld [vmem:[%s1 + $0xec] sm:$0xf]
      %v311 = vld [vmem:[%s1 + $0xf0] sm:$0xf]
      %v312 = vld [vmem:[%s1 + $0xf4] sm:$0xf]
      %v313 = vld [vmem:[%s1 + $0xf8] sm:$0xf]
      %v314 = vld [vmem:[%s1 + $0xfc] sm:$0xf]
      %v415 = vunpack.c.l.b16 %v151
      %v416 = vunpack.c.h.b16 %v151
      %v417 = vunpack.c.l.b16 %v152
      %v418 = vunpack.c.h.b16 %v152
      %v419 = vunpack.c.l.b16 %v153
      %v420 = vunpack.c.h.b16 %v153
      %v421 = vunpack.c.l.b16 %v154
      %v422 = vunpack.c.h.b16 %v154
      %v423 = vunpack.c.l.b16 %v155
      %v424 = vunpack.c.h.b16 %v155
      %v425 = vunpack.c.l.b16 %v156
      %v426 = vunpack.c.h.b16 %v156
      %v427 = vunpack.c.l.b16 %v157
      %v428 = vunpack.c.h.b16 %v157
      %v429 = vunpack.c.l.b16 %v158
      %v430 = vunpack.c.h.b16 %v158
      %v431 = vunpack.c.l.b16 %v159
      %v432 = vunpack.c.h.b16 %v159
      %v433 = vunpack.c.l.b16 %v160
      %v434 = vunpack.c.h.b16 %v160
      %v435 = vunpack.c.l.b16 %v161
      %v436 = vunpack.c.h.b16 %v161
      %v437 = vunpack.c.l.b16 %v162
      %v438 = vunpack.c.h.b16 %v162
      %v439 = vunpack.c.l.b16 %v163
      %v440 = vunpack.c.h.b16 %v163
      %v441 = vunpack.c.l.b16 %v164
      %v442 = vunpack.c.h.b16 %v164
      %v443 = vunpack.c.l.b16 %v165
      %v444 = vunpack.c.h.b16 %v165
      %v445 = vunpack.c.l.b16 %v166
      %v446 = vunpack.c.h.b16 %v166
      %v447 = vunpack.c.l.b16 %v167
      %v448 = vunpack.c.h.b16 %v167
      %v449 = vunpack.c.l.b16 %v168
      %v450 = vunpack.c.h.b16 %v168
      %v451 = vunpack.c.l.b16 %v169
      %v452 = vunpack.c.h.b16 %v169
      %v453 = vunpack.c.l.b16 %v170
      %v454 = vunpack.c.h.b16 %v170
      %v455 = vunpack.c.l.b16 %v171
      %v456 = vunpack.c.h.b16 %v171
      %v457 = vunpack.c.l.b16 %v172
      %v458 = vunpack.c.h.b16 %v172
      %v459 = vunpack.c.l.b16 %v173
      %v460 = vunpack.c.h.b16 %v173
      %v461 = vunpack.c.l.b16 %v174
      %v462 = vunpack.c.h.b16 %v174
      %v463 = vunpack.c.l.b16 %v175
      %v464 = vunpack.c.h.b16 %v175
      %v465 = vunpack.c.l.b16 %v176
      %v466 = vunpack.c.h.b16 %v176
      %v467 = vunpack.c.l.b16 %v177
      %v468 = vunpack.c.h.b16 %v177
      %v469 = vunpack.c.l.b16 %v178
      %v470 = vunpack.c.h.b16 %v178
      %v471 = vunpack.c.l.b16 %v179
      %v472 = vunpack.c.h.b16 %v179
      %v473 = vunpack.c.l.b16 %v180
      %v474 = vunpack.c.h.b16 %v180
      %v475 = vunpack.c.l.b16 %v181
      %v476 = vunpack.c.h.b16 %v181
      %v477 = vunpack.c.l.b16 %v182
      %v478 = vunpack.c.h.b16 %v182
      %v479 = vunpack.c.l.b16 %v183
      %v480 = vunpack.c.h.b16 %v183
      %v481 = vunpack.c.l.b16 %v184
      %v482 = vunpack.c.h.b16 %v184
      %v483 = vunpack.c.l.b16 %v185
      %v484 = vunpack.c.h.b16 %v185
      %v485 = vunpack.c.l.b16 %v186
      %v486 = vunpack.c.h.b16 %v186
      %v487 = vunpack.c.l.b16 %v187
      %v488 = vunpack.c.h.b16 %v187
      %v489 = vunpack.c.l.b16 %v188
      %v490 = vunpack.c.h.b16 %v188
      %v491 = vunpack.c.l.b16 %v189
      %v492 = vunpack.c.h.b16 %v189
      %v493 = vunpack.c.l.b16 %v190
      %v494 = vunpack.c.h.b16 %v190
      %v495 = vunpack.c.l.b16 %v191
      %v496 = vunpack.c.h.b16 %v191
      %v497 = vunpack.c.l.b16 %v192
      %v498 = vunpack.c.h.b16 %v192
      %v499 = vunpack.c.l.b16 %v193
      %v500 = vunpack.c.h.b16 %v193
      %v501 = vunpack.c.l.b16 %v194
      %v502 = vunpack.c.h.b16 %v194
      %v503 = vunpack.c.l.b16 %v195
      %v504 = vunpack.c.h.b16 %v195
      %v505 = vunpack.c.l.b16 %v196
      %v506 = vunpack.c.h.b16 %v196
      %v507 = vunpack.c.l.b16 %v197
      %v508 = vunpack.c.h.b16 %v197
      %v509 = vunpack.c.l.b16 %v198
      %v510 = vunpack.c.h.b16 %v198
      %v511 = vunpack.c.l.b16 %v199
      %v512 = vunpack.c.h.b16 %v199
      %v513 = vunpack.c.l.b16 %v200
      %v514 = vunpack.c.h.b16 %v200
      %v515 = vunpack.c.l.b16 %v201
      %v516 = vunpack.c.h.b16 %v201
      %v517 = vunpack.c.l.b16 %v202
      %v518 = vunpack.c.h.b16 %v202
      %v519 = vunpack.c.l.b16 %v203
      %v520 = vunpack.c.h.b16 %v203
      %v521 = vunpack.c.l.b16 %v204
      %v522 = vunpack.c.h.b16 %v204
      %v523 = vunpack.c.l.b16 %v205
      %v524 = vunpack.c.h.b16 %v205
      %v525 = vunpack.c.l.b16 %v206
      %v526 = vunpack.c.h.b16 %v206
      %v527 = vunpack.c.l.b16 %v207
      %v528 = vunpack.c.h.b16 %v207
      %v529 = vunpack.c.l.b16 %v208
      %v530 = vunpack.c.h.b16 %v208
      %v531 = vunpack.c.l.b16 %v209
      %v532 = vunpack.c.h.b16 %v209
      %v533 = vunpack.c.l.b16 %v210
      %v534 = vunpack.c.h.b16 %v210
      %v535 = vunpack.c.l.b16 %v211
      %v536 = vunpack.c.h.b16 %v211
      %v537 = vunpack.c.l.b16 %v212
      %v538 = vunpack.c.h.b16 %v212
      %v539 = vunpack.c.l.b16 %v213
      %v540 = vunpack.c.h.b16 %v213
      %v541 = vunpack.c.l.b16 %v214
      %v542 = vunpack.c.h.b16 %v214
      %v543 = vunpack.c.l.b16 %v215
      %v544 = vunpack.c.h.b16 %v215
      %v545 = vunpack.c.l.b16 %v216
      %v546 = vunpack.c.h.b16 %v216
      %v547 = vunpack.c.l.b16 %v217
      %v548 = vunpack.c.h.b16 %v217
      %v549 = vunpack.c.l.b16 %v218
      %v550 = vunpack.c.h.b16 %v218
      %v551 = vunpack.c.l.b16 %v219
      %v552 = vunpack.c.h.b16 %v219
      %v553 = vunpack.c.l.b16 %v220
      %v554 = vunpack.c.h.b16 %v220
      %v555 = vunpack.c.l.b16 %v221
      %v556 = vunpack.c.h.b16 %v221
      %v557 = vunpack.c.l.b16 %v222
      %v558 = vunpack.c.h.b16 %v222
      %v559 = vunpack.c.l.b16 %v223
      %v560 = vunpack.c.h.b16 %v223
      %v561 = vunpack.c.l.b16 %v224
      %v562 = vunpack.c.h.b16 %v224
      %v563 = vunpack.c.l.b16 %v225
      %v564 = vunpack.c.h.b16 %v225
      %v565 = vunpack.c.l.b16 %v226
      %v566 = vunpack.c.h.b16 %v226
      %v567 = vunpack.c.l.b16 %v227
      %v568 = vunpack.c.h.b16 %v227
      %v569 = vunpack.c.l.b16 %v228
      %v570 = vunpack.c.h.b16 %v228
      %v571 = vunpack.c.l.b16 %v229
      %v572 = vunpack.c.h.b16 %v229
      %v573 = vunpack.c.l.b16 %v230
      %v574 = vunpack.c.h.b16 %v230
      %v575 = vunpack.c.l.b16 %v231
      %v576 = vunpack.c.h.b16 %v231
      %v577 = vunpack.c.l.b16 %v232
      %v578 = vunpack.c.h.b16 %v232
      %v579 = vunpack.c.l.b16 %v233
      %v580 = vunpack.c.h.b16 %v233
      %v581 = vunpack.c.l.b16 %v234
      %v582 = vunpack.c.h.b16 %v234
      %v583 = vunpack.c.l.b16 %v235
      %v584 = vunpack.c.h.b16 %v235
      %v585 = vunpack.c.l.b16 %v236
      %v586 = vunpack.c.h.b16 %v236
      %v587 = vunpack.c.l.b16 %v237
      %v588 = vunpack.c.h.b16 %v237
      %v589 = vunpack.c.l.b16 %v238
      %v590 = vunpack.c.h.b16 %v238
      %v591 = vunpack.c.l.b16 %v239
      %v592 = vunpack.c.h.b16 %v239
      %v593 = vunpack.c.l.b16 %v240
      %v594 = vunpack.c.h.b16 %v240
      %v595 = vunpack.c.l.b16 %v241
      %v596 = vunpack.c.h.b16 %v241
      %v597 = vunpack.c.l.b16 %v242
      %v598 = vunpack.c.h.b16 %v242
      %v599 = vunpack.c.l.b16 %v243
      %v600 = vunpack.c.h.b16 %v243
      %v601 = vunpack.c.l.b16 %v244
      %v602 = vunpack.c.h.b16 %v244
      %v603 = vunpack.c.l.b16 %v245
      %v604 = vunpack.c.h.b16 %v245
      %v605 = vunpack.c.l.b16 %v246
      %v606 = vunpack.c.h.b16 %v246
      %v607 = vunpack.c.l.b16 %v247
      %v608 = vunpack.c.h.b16 %v247
      %v609 = vunpack.c.l.b16 %v248
      %v610 = vunpack.c.h.b16 %v248
      %v611 = vunpack.c.l.b16 %v249
      %v612 = vunpack.c.h.b16 %v249
      %v613 = vunpack.c.l.b16 %v250
      %v614 = vunpack.c.h.b16 %v250
      %v615 = vpack.c.b16 %v419, %v415
      %v616 = vpack.c.b16 %v420, %v416
      %v617 = vpack.c.b16 %v421, %v417
      %v618 = vpack.c.b16 %v422, %v418
      %v619 = vpack.c.b16 %v427, %v423
      %v620 = vpack.c.b16 %v428, %v424
      %v621 = vpack.c.b16 %v429, %v425
      %v622 = vpack.c.b16 %v430, %v426
      %v623 = vpack.c.b16 %v435, %v431
      %v624 = vpack.c.b16 %v436, %v432
      %v625 = vpack.c.b16 %v437, %v433
      %v626 = vpack.c.b16 %v438, %v434
      %v627 = vpack.c.b16 %v443, %v439
      %v628 = vpack.c.b16 %v444, %v440
      %v629 = vpack.c.b16 %v445, %v441
      %v630 = vpack.c.b16 %v446, %v442
      %v631 = vpack.c.b16 %v451, %v447
      %v632 = vpack.c.b16 %v452, %v448
      %v633 = vpack.c.b16 %v453, %v449
      %v634 = vpack.c.b16 %v454, %v450
      %v635 = vpack.c.b16 %v459, %v455
      %v636 = vpack.c.b16 %v460, %v456
      %v637 = vpack.c.b16 %v461, %v457
      %v638 = vpack.c.b16 %v462, %v458
      %v639 = vpack.c.b16 %v467, %v463
      %v640 = vpack.c.b16 %v468, %v464
      %v641 = vpack.c.b16 %v469, %v465
      %v642 = vpack.c.b16 %v470, %v466
      %v643 = vpack.c.b16 %v475, %v471
      %v644 = vpack.c.b16 %v476, %v472
      %v645 = vpack.c.b16 %v477, %v473
      %v646 = vpack.c.b16 %v478, %v474
      %v647 = vpack.c.b16 %v483, %v479
      %v648 = vpack.c.b16 %v484, %v480
      %v649 = vpack.c.b16 %v485, %v481
      %v650 = vpack.c.b16 %v486, %v482
      %v651 = vpack.c.b16 %v491, %v487
      %v652 = vpack.c.b16 %v492, %v488
      %v653 = vpack.c.b16 %v493, %v489
      %v654 = vpack.c.b16 %v494, %v490
      %v655 = vpack.c.b16 %v499, %v495
      %v656 = vpack.c.b16 %v500, %v496
      %v657 = vpack.c.b16 %v501, %v497
      %v658 = vpack.c.b16 %v502, %v498
      %v659 = vpack.c.b16 %v507, %v503
      %v660 = vpack.c.b16 %v508, %v504
      %v661 = vpack.c.b16 %v509, %v505
      %v662 = vpack.c.b16 %v510, %v506
      %v663 = vpack.c.b16 %v515, %v511
      %v664 = vpack.c.b16 %v516, %v512
      %v665 = vpack.c.b16 %v517, %v513
      %v666 = vpack.c.b16 %v518, %v514
      %v667 = vpack.c.b16 %v523, %v519
      %v668 = vpack.c.b16 %v524, %v520
      %v669 = vpack.c.b16 %v525, %v521
      %v670 = vpack.c.b16 %v526, %v522
      %v671 = vpack.c.b16 %v531, %v527
      %v672 = vpack.c.b16 %v532, %v528
      %v673 = vpack.c.b16 %v533, %v529
      %v674 = vpack.c.b16 %v534, %v530
      %v675 = vpack.c.b16 %v539, %v535
      %v676 = vpack.c.b16 %v540, %v536
      %v677 = vpack.c.b16 %v541, %v537
      %v678 = vpack.c.b16 %v542, %v538
      %v679 = vpack.c.b16 %v547, %v543
      %v680 = vpack.c.b16 %v548, %v544
      %v681 = vpack.c.b16 %v549, %v545
      %v682 = vpack.c.b16 %v550, %v546
      %v683 = vpack.c.b16 %v555, %v551
      %v684 = vpack.c.b16 %v556, %v552
      %v685 = vpack.c.b16 %v557, %v553
      %v686 = vpack.c.b16 %v558, %v554
      %v687 = vpack.c.b16 %v563, %v559
      %v688 = vpack.c.b16 %v564, %v560
      %v689 = vpack.c.b16 %v565, %v561
      %v690 = vpack.c.b16 %v566, %v562
      %v691 = vpack.c.b16 %v571, %v567
      %v692 = vpack.c.b16 %v572, %v568
      %v693 = vpack.c.b16 %v573, %v569
      %v694 = vpack.c.b16 %v574, %v570
      %v695 = vpack.c.b16 %v579, %v575
      %v696 = vpack.c.b16 %v580, %v576
      %v697 = vpack.c.b16 %v581, %v577
      %v698 = vpack.c.b16 %v582, %v578
      %v699 = vpack.c.b16 %v587, %v583
      %v700 = vpack.c.b16 %v588, %v584
      %v701 = vpack.c.b16 %v589, %v585
      %v702 = vpack.c.b16 %v590, %v586
      %v703 = vpack.c.b16 %v595, %v591
      %v704 = vpack.c.b16 %v596, %v592
      %v705 = vpack.c.b16 %v597, %v593
      %v706 = vpack.c.b16 %v598, %v594
      %v707 = vpack.c.b16 %v603, %v599
      %v708 = vpack.c.b16 %v604, %v600
      %v709 = vpack.c.b16 %v605, %v601
      %v710 = vpack.c.b16 %v606, %v602
      %v711 = vpack.c.b16 %v611, %v607
      %v712 = vpack.c.b16 %v612, %v608
      %v713 = vpack.c.b16 %v613, %v609
      %v714 = vpack.c.b16 %v614, %v610
      %v879 = vunpack.c.l.b16 %v251
      %v880 = vunpack.c.l.b16 %v252
      %v881 = vunpack.c.l.b16 %v253
      %v882 = vunpack.c.l.b16 %v254
      %v883 = vunpack.c.l.b16 %v255
      %v884 = vunpack.c.l.b16 %v256
      %v885 = vunpack.c.l.b16 %v257
      %v886 = vunpack.c.l.b16 %v258
      %v887 = vunpack.c.l.b16 %v259
      %v888 = vunpack.c.l.b16 %v260
      %v889 = vunpack.c.l.b16 %v261
      %v890 = vunpack.c.l.b16 %v262
      %v891 = vunpack.c.l.b16 %v263
      %v892 = vunpack.c.l.b16 %v264
      %v893 = vunpack.c.l.b16 %v265
      %v894 = vunpack.c.l.b16 %v266
      %v895 = vunpack.c.l.b16 %v267
      %v896 = vunpack.c.l.b16 %v268
      %v897 = vunpack.c.l.b16 %v269
      %v898 = vunpack.c.l.b16 %v270
      %v899 = vunpack.c.l.b16 %v271
      %v900 = vunpack.c.l.b16 %v272
      %v901 = vunpack.c.l.b16 %v273
      %v902 = vunpack.c.l.b16 %v274
      %v903 = vunpack.c.l.b16 %v275
      %v904 = vunpack.c.l.b16 %v276
      %v905 = vunpack.c.l.b16 %v277
      %v906 = vunpack.c.l.b16 %v278
      %v907 = vunpack.c.l.b16 %v279
      %v908 = vunpack.c.l.b16 %v280
      %v909 = vunpack.c.l.b16 %v281
      %v910 = vunpack.c.l.b16 %v282
      %v911 = vunpack.c.l.b16 %v283
      %v912 = vunpack.c.l.b16 %v284
      %v913 = vunpack.c.l.b16 %v285
      %v914 = vunpack.c.l.b16 %v286
      %v915 = vunpack.c.l.b16 %v287
      %v916 = vunpack.c.l.b16 %v288
      %v917 = vunpack.c.l.b16 %v289
      %v918 = vunpack.c.l.b16 %v290
      %v919 = vunpack.c.l.b16 %v291
      %v920 = vunpack.c.l.b16 %v292
      %v921 = vunpack.c.l.b16 %v293
      %v922 = vunpack.c.l.b16 %v294
      %v923 = vunpack.c.l.b16 %v295
      %v924 = vunpack.c.l.b16 %v296
      %v925 = vunpack.c.l.b16 %v297
      %v926 = vunpack.c.l.b16 %v298
      %v927 = vunpack.c.l.b16 %v299
      %v928 = vunpack.c.l.b16 %v300
      %v929 = vunpack.c.l.b16 %v301
      %v930 = vunpack.c.l.b16 %v302
      %v931 = vunpack.c.l.b16 %v303
      %v932 = vunpack.c.l.b16 %v304
      %v933 = vunpack.c.l.b16 %v305
      %v934 = vunpack.c.l.b16 %v306
      %v935 = vunpack.c.l.b16 %v307
      %v936 = vunpack.c.l.b16 %v308
      %v937 = vunpack.c.l.b16 %v309
      %v938 = vunpack.c.l.b16 %v310
      %v939 = vunpack.c.l.b16 %v311
      %v940 = vunpack.c.l.b16 %v312
      %v941 = vunpack.c.l.b16 %v313
      %v942 = vunpack.c.l.b16 %v314
      %v943 = vpack.c.b16 %v880, %v879
      %v944 = vpack.c.b16 %v882, %v881
      %v945 = vpack.c.b16 %v884, %v883
      %v946 = vpack.c.b16 %v886, %v885
      %v947 = vpack.c.b16 %v888, %v887
      %v948 = vpack.c.b16 %v890, %v889
      %v949 = vpack.c.b16 %v892, %v891
      %v950 = vpack.c.b16 %v894, %v893
      %v951 = vpack.c.b16 %v896, %v895
      %v952 = vpack.c.b16 %v898, %v897
      %v953 = vpack.c.b16 %v900, %v899
      %v954 = vpack.c.b16 %v902, %v901
      %v955 = vpack.c.b16 %v904, %v903
      %v956 = vpack.c.b16 %v906, %v905
      %v957 = vpack.c.b16 %v908, %v907
      %v958 = vpack.c.b16 %v910, %v909
      %v959 = vpack.c.b16 %v912, %v911
      %v960 = vpack.c.b16 %v914, %v913
      %v961 = vpack.c.b16 %v916, %v915
      %v962 = vpack.c.b16 %v918, %v917
      %v963 = vpack.c.b16 %v920, %v919
      %v964 = vpack.c.b16 %v922, %v921
      %v965 = vpack.c.b16 %v924, %v923
      %v966 = vpack.c.b16 %v926, %v925
      %v967 = vpack.c.b16 %v928, %v927
      %v968 = vpack.c.b16 %v930, %v929
      %v969 = vpack.c.b16 %v932, %v931
      %v970 = vpack.c.b16 %v934, %v933
      %v971 = vpack.c.b16 %v936, %v935
      %v972 = vpack.c.b16 %v938, %v937
      %v973 = vpack.c.b16 %v940, %v939
      %v974 = vpack.c.b16 %v942, %v941
      %1007 = vmatprep.subr.bf16.mxu0 0
      %1008 = vmatpush1.bf16.msra.mxu0 %v943
      %1009 = vmatprep.subr.bf16.mxu0 0
      %1010 = vmatpush1.bf16.msra.mxu0 %v944
      %1011 = vmatprep.subr.bf16.mxu0 0
      %1012 = vmatpush1.bf16.msra.mxu0 %v945
      %1013 = vmatprep.subr.bf16.mxu0 0
      %1014 = vmatpush1.bf16.msra.mxu0 %v946
      %1015 = vmatprep.subr.bf16.mxu0 0
      %1016 = vmatpush1.bf16.msra.mxu0 %v947
      %1017 = vmatprep.subr.bf16.mxu0 0
      %1018 = vmatpush1.bf16.msra.mxu0 %v948
      %1019 = vmatprep.subr.bf16.mxu0 0
      %1020 = vmatpush1.bf16.msra.mxu0 %v949
      %1021 = vmatprep.subr.bf16.mxu0 0
      %1022 = vmatpush1.bf16.msra.mxu0 %v950
      %1023 = vmatprep.subr.bf16.mxu0 0
      %1024 = vmatpush1.bf16.msra.mxu0 %v951
      %1025 = vmatprep.subr.bf16.mxu0 0
      %1026 = vmatpush1.bf16.msra.mxu0 %v952
      %1027 = vmatprep.subr.bf16.mxu0 0
      %1028 = vmatpush1.bf16.msra.mxu0 %v953
      %1029 = vmatprep.subr.bf16.mxu0 0
      %1030 = vmatpush1.bf16.msra.mxu0 %v954
      %1031 = vmatprep.subr.bf16.mxu0 0
      %1032 = vmatpush1.bf16.msra.mxu0 %v955
      %1033 = vmatprep.subr.bf16.mxu0 0
      %1034 = vmatpush1.bf16.msra.mxu0 %v956
      %1035 = vmatprep.subr.bf16.mxu0 0
      %1036 = vmatpush1.bf16.msra.mxu0 %v957
      %1037 = vmatprep.subr.bf16.mxu0 0
      %1038 = vmatpush1.bf16.msra.mxu0 %v958
      %1039 = vmatprep.mubr.bf16.mxu0 %v616
      %1040 = vmatmul.mubr.bf16.gmra.mrb[0].mxu0 %v615
      %v1041 = vpop.f32.mrb[0].mxu0
      %v1042 = vadd.f32 0.0, %v1041
      %v1043 = vpop.f32.mrb[0].mxu0
      %v1044 = vpop.f32.mrb[0].mxu0
      %v1045 = vadd.f32 0.0, %v1044
      %v1046 = vpop.f32.mrb[0].mxu0
      %1047 = vmatprep.mubr.bf16.mxu0 %v620
      %1048 = vmatmul.mubr.bf16.gmra.mrb[0].mxu0 %v619
      %v1049 = vpop.f32.mrb[0].mxu0
      %v1050 = vadd.f32 0.0, %v1049
      %v1051 = vpop.f32.mrb[0].mxu0
      %v1052 = vpop.f32.mrb[0].mxu0
      %v1053 = vadd.f32 0.0, %v1052
      %v1054 = vpop.f32.mrb[0].mxu0
      %1055 = vmatprep.mubr.bf16.mxu0 %v624
      %1056 = vmatmul.mubr.bf16.gmra.mrb[0].mxu0 %v623
      %v1057 = vpop.f32.mrb[0].mxu0
      %v1058 = vadd.f32 0.0, %v1057
      %v1059 = vpop.f32.mrb[0].mxu0
      %v1060 = vpop.f32.mrb[0].mxu0
      %v1061 = vadd.f32 0.0, %v1060
      %v1062 = vpop.f32.mrb[0].mxu0
      %1063 = vmatprep.mubr.bf16.mxu0 %v628
      %1064 = vmatmul.mubr.bf16.gmra.mrb[0].mxu0 %v627
      %v1065 = vpop.f32.mrb[0].mxu0
      %v1066 = vadd.f32 0.0, %v1065
      %v1067 = vpop.f32.mrb[0].mxu0
      %v1068 = vpop.f32.mrb[0].mxu0
      %v1069 = vadd.f32 0.0, %v1068
      %v1070 = vpop.f32.mrb[0].mxu0
      %1071 = vmatprep.mubr.bf16.mxu0 %v632
      %1072 = vmatmul.mubr.bf16.gmra.mrb[0].mxu0 %v631
      %v1073 = vpop.f32.mrb[0].mxu0
      %v1074 = vadd.f32 0.0, %v1073
      %v1075 = vpop.f32.mrb[0].mxu0
      %v1076 = vpop.f32.mrb[0].mxu0
      %v1077 = vadd.f32 0.0, %v1076
      %v1078 = vpop.f32.mrb[0].mxu0
      %1079 = vmatprep.mubr.bf16.mxu0 %v636
      %1080 = vmatmul.mubr.bf16.gmra.mrb[0].mxu0 %v635
      %v1081 = vpop.f32.mrb[0].mxu0
      %v1082 = vadd.f32 0.0, %v1081
      %v1083 = vpop.f32.mrb[0].mxu0
      %v1084 = vpop.f32.mrb[0].mxu0
      %v1085 = vadd.f32 0.0, %v1084
      %v1086 = vpop.f32.mrb[0].mxu0
      %1087 = vmatprep.mubr.bf16.mxu0 %v640
      %1088 = vmatmul.mubr.bf16.gmra.mrb[0].mxu0 %v639
      %v1089 = vpop.f32.mrb[0].mxu0
      %v1090 = vadd.f32 0.0, %v1089
      %v1091 = vpop.f32.mrb[0].mxu0
      %v1092 = vpop.f32.mrb[0].mxu0
      %v1093 = vadd.f32 0.0, %v1092
      %v1094 = vpop.f32.mrb[0].mxu0
      %1095 = vmatprep.mubr.bf16.mxu0 %v644
      %1096 = vmatmul.mubr.bf16.gmra.mrb[0].mxu0 %v643
      %v1097 = vpop.f32.mrb[0].mxu0
      %v1098 = vadd.f32 0.0, %v1097
      %v1099 = vpop.f32.mrb[0].mxu0
      %v1100 = vpop.f32.mrb[0].mxu0
      %v1101 = vadd.f32 0.0, %v1100
      %v1102 = vpop.f32.mrb[0].mxu0
      %1103 = vmatprep.mubr.bf16.mxu0 %v648
      %1104 = vmatmul.mubr.bf16.gmra.mrb[0].mxu0 %v647
      %v1105 = vpop.f32.mrb[0].mxu0
      %v1106 = vadd.f32 0.0, %v1105
      %v1107 = vpop.f32.mrb[0].mxu0
      %v1108 = vpop.f32.mrb[0].mxu0
      %v1109 = vadd.f32 0.0, %v1108
      %v1110 = vpop.f32.mrb[0].mxu0
      %1111 = vmatprep.mubr.bf16.mxu0 %v652
      %1112 = vmatmul.mubr.bf16.gmra.mrb[0].mxu0 %v651
      %v1113 = vpop.f32.mrb[0].mxu0
      %v1114 = vadd.f32 0.0, %v1113
      %v1115 = vpop.f32.mrb[0].mxu0
      %v1116 = vpop.f32.mrb[0].mxu0
      %v1117 = vadd.f32 0.0, %v1116
      %v1118 = vpop.f32.mrb[0].mxu0
      %1119 = vmatprep.mubr.bf16.mxu0 %v656
      %1120 = vmatmul.mubr.bf16.gmra.mrb[0].mxu0 %v655
      %v1121 = vpop.f32.mrb[0].mxu0
      %v1122 = vadd.f32 0.0, %v1121
      %v1123 = vpop.f32.mrb[0].mxu0
      %v1124 = vpop.f32.mrb[0].mxu0
      %v1125 = vadd.f32 0.0, %v1124
      %v1126 = vpop.f32.mrb[0].mxu0
      %1127 = vmatprep.mubr.bf16.mxu0 %v660
      %1128 = vmatmul.mubr.bf16.gmra.mrb[0].mxu0 %v659
      %v1129 = vpop.f32.mrb[0].mxu0
      %v1130 = vadd.f32 0.0, %v1129
      %v1131 = vpop.f32.mrb[0].mxu0
      %v1132 = vpop.f32.mrb[0].mxu0
      %v1133 = vadd.f32 0.0, %v1132
      %v1134 = vpop.f32.mrb[0].mxu0
      %1135 = vmatprep.mubr.bf16.mxu0 %v664
      %1136 = vmatmul.mubr.bf16.gmra.mrb[0].mxu0 %v663
      %v1137 = vpop.f32.mrb[0].mxu0
      %v1138 = vadd.f32 0.0, %v1137
      %v1139 = vpop.f32.mrb[0].mxu0
      %v1140 = vpop.f32.mrb[0].mxu0
      %v1141 = vadd.f32 0.0, %v1140
      %v1142 = vpop.f32.mrb[0].mxu0
      %1143 = vmatprep.mubr.bf16.mxu0 %v668
      %1144 = vmatmul.mubr.bf16.gmra.mrb[0].mxu0 %v667
      %v1145 = vpop.f32.mrb[0].mxu0
      %v1146 = vadd.f32 0.0, %v1145
      %v1147 = vpop.f32.mrb[0].mxu0
      %v1148 = vpop.f32.mrb[0].mxu0
      %v1149 = vadd.f32 0.0, %v1148
      %v1150 = vpop.f32.mrb[0].mxu0
      %1151 = vmatprep.mubr.bf16.mxu0 %v672
      %1152 = vmatmul.mubr.bf16.gmra.mrb[0].mxu0 %v671
      %v1153 = vpop.f32.mrb[0].mxu0
      %v1154 = vadd.f32 0.0, %v1153
      %v1155 = vpop.f32.mrb[0].mxu0
      %v1156 = vpop.f32.mrb[0].mxu0
      %v1157 = vadd.f32 0.0, %v1156
      %v1158 = vpop.f32.mrb[0].mxu0
      %1159 = vmatprep.mubr.bf16.mxu0 %v676
      %1160 = vmatmul.mubr.bf16.gmra.mrb[0].mxu0 %v675
      %v1161 = vpop.f32.mrb[0].mxu0
      %v1162 = vadd.f32 0.0, %v1161
      %v1163 = vpop.f32.mrb[0].mxu0
      %v1164 = vpop.f32.mrb[0].mxu0
      %v1165 = vadd.f32 0.0, %v1164
      %v1166 = vpop.f32.mrb[0].mxu0
      %1167 = vmatprep.mubr.bf16.mxu0 %v680
      %1168 = vmatmul.mubr.bf16.gmra.mrb[0].mxu0 %v679
      %v1169 = vpop.f32.mrb[0].mxu0
      %v1170 = vadd.f32 0.0, %v1169
      %v1171 = vpop.f32.mrb[0].mxu0
      %v1172 = vpop.f32.mrb[0].mxu0
      %v1173 = vadd.f32 0.0, %v1172
      %v1174 = vpop.f32.mrb[0].mxu0
      %1175 = vmatprep.mubr.bf16.mxu0 %v684
      %1176 = vmatmul.mubr.bf16.gmra.mrb[0].mxu0 %v683
      %v1177 = vpop.f32.mrb[0].mxu0
      %v1178 = vadd.f32 0.0, %v1177
      %v1179 = vpop.f32.mrb[0].mxu0
      %v1180 = vpop.f32.mrb[0].mxu0
      %v1181 = vadd.f32 0.0, %v1180
      %v1182 = vpop.f32.mrb[0].mxu0
      %1183 = vmatprep.mubr.bf16.mxu0 %v688
      %1184 = vmatmul.mubr.bf16.gmra.mrb[0].mxu0 %v687
      %v1185 = vpop.f32.mrb[0].mxu0
      %v1186 = vadd.f32 0.0, %v1185
      %v1187 = vpop.f32.mrb[0].mxu0
      %v1188 = vpop.f32.mrb[0].mxu0
      %v1189 = vadd.f32 0.0, %v1188
      %v1190 = vpop.f32.mrb[0].mxu0
      %1191 = vmatprep.mubr.bf16.mxu0 %v692
      %1192 = vmatmul.mubr.bf16.gmra.mrb[0].mxu0 %v691
      %v1193 = vpop.f32.mrb[0].mxu0
      %v1194 = vadd.f32 0.0, %v1193
      %v1195 = vpop.f32.mrb[0].mxu0
      %v1196 = vpop.f32.mrb[0].mxu0
      %v1197 = vadd.f32 0.0, %v1196
      %v1198 = vpop.f32.mrb[0].mxu0
      %1199 = vmatprep.mubr.bf16.mxu0 %v696
      %1200 = vmatmul.mubr.bf16.gmra.mrb[0].mxu0 %v695
      %v1201 = vpop.f32.mrb[0].mxu0
      %v1202 = vadd.f32 0.0, %v1201
      %v1203 = vpop.f32.mrb[0].mxu0
      %v1204 = vpop.f32.mrb[0].mxu0
      %v1205 = vadd.f32 0.0, %v1204
      %v1206 = vpop.f32.mrb[0].mxu0
      %1207 = vmatprep.mubr.bf16.mxu0 %v700
      %1208 = vmatmul.mubr.bf16.gmra.mrb[0].mxu0 %v699
      %v1209 = vpop.f32.mrb[0].mxu0
      %v1210 = vadd.f32 0.0, %v1209
      %v1211 = vpop.f32.mrb[0].mxu0
      %v1212 = vpop.f32.mrb[0].mxu0
      %v1213 = vadd.f32 0.0, %v1212
      %v1214 = vpop.f32.mrb[0].mxu0
      %1215 = vmatprep.mubr.bf16.mxu0 %v704
      %1216 = vmatmul.mubr.bf16.gmra.mrb[0].mxu0 %v703
      %v1217 = vpop.f32.mrb[0].mxu0
      %v1218 = vadd.f32 0.0, %v1217
      %v1219 = vpop.f32.mrb[0].mxu0
      %v1220 = vpop.f32.mrb[0].mxu0
      %v1221 = vadd.f32 0.0, %v1220
      %v1222 = vpop.f32.mrb[0].mxu0
      %1223 = vmatprep.mubr.bf16.mxu0 %v708
      %1224 = vmatmul.mubr.bf16.gmra.mrb[0].mxu0 %v707
      %v1225 = vpop.f32.mrb[0].mxu0
      %v1226 = vadd.f32 0.0, %v1225
      %v1227 = vpop.f32.mrb[0].mxu0
      %v1228 = vpop.f32.mrb[0].mxu0
      %v1229 = vadd.f32 0.0, %v1228
      %v1230 = vpop.f32.mrb[0].mxu0
      %1231 = vmatprep.mubr.bf16.mxu0 %v712
      %1232 = vmatmul.mubr.bf16.gmra.mrb[0].mxu0 %v711
      %v1233 = vpop.f32.mrb[0].mxu0
      %v1234 = vadd.f32 0.0, %v1233
      %v1235 = vpop.f32.mrb[0].mxu0
      %v1236 = vpop.f32.mrb[0].mxu0
      %v1237 = vadd.f32 0.0, %v1236
      %v1238 = vpop.f32.mrb[0].mxu0
      %1239 = vdwg.mxu0
      %1240 = vmatprep.subr.bf16.mxu0 0
      %1241 = vmatpush1.bf16.msra.mxu0 %v959
      %1242 = vmatprep.subr.bf16.mxu0 0
      %1243 = vmatpush1.bf16.msra.mxu0 %v960
      %1244 = vmatprep.subr.bf16.mxu0 0
      %1245 = vmatpush1.bf16.msra.mxu0 %v961
      %1246 = vmatprep.subr.bf16.mxu0 0
      %1247 = vmatpush1.bf16.msra.mxu0 %v962
      %1248 = vmatprep.subr.bf16.mxu0 0
      %1249 = vmatpush1.bf16.msra.mxu0 %v963
      %1250 = vmatprep.subr.bf16.mxu0 0
      %1251 = vmatpush1.bf16.msra.mxu0 %v964
      %1252 = vmatprep.subr.bf16.mxu0 0
      %1253 = vmatpush1.bf16.msra.mxu0 %v965
      %1254 = vmatprep.subr.bf16.mxu0 0
      %1255 = vmatpush1.bf16.msra.mxu0 %v966
      %1256 = vmatprep.subr.bf16.mxu0 0
      %1257 = vmatpush1.bf16.msra.mxu0 %v967
      %1258 = vmatprep.subr.bf16.mxu0 0
      %1259 = vmatpush1.bf16.msra.mxu0 %v968
      %1260 = vmatprep.subr.bf16.mxu0 0
      %1261 = vmatpush1.bf16.msra.mxu0 %v969
      %1262 = vmatprep.subr.bf16.mxu0 0
      %1263 = vmatpush1.bf16.msra.mxu0 %v970
      %1264 = vmatprep.subr.bf16.mxu0 0
      %1265 = vmatpush1.bf16.msra.mxu0 %v971
      %1266 = vmatprep.subr.bf16.mxu0 0
      %1267 = vmatpush1.bf16.msra.mxu0 %v972
      %1268 = vmatprep.subr.bf16.mxu0 0
      %1269 = vmatpush1.bf16.msra.mxu0 %v973
      %1270 = vmatprep.subr.bf16.mxu0 0
      %1271 = vmatpush1.bf16.msra.mxu0 %v974
      %1272 = vmatprep.mubr.bf16.mxu0 %v618
      %1273 = vmatmul.mubr.bf16.gmra.mrb[0].mxu0 %v617
      %v1274 = vpop.f32.mrb[0].mxu0
      %v1275 = vadd.f32 %v1042, %v1274
      %v1276 = vpop.f32.mrb[0].mxu0
      %v1277 = vpop.f32.mrb[0].mxu0
      %v1278 = vadd.f32 %v1045, %v1277
      %v1279 = vpop.f32.mrb[0].mxu0
      %1280 = vmatprep.mubr.bf16.mxu0 %v622
      %1281 = vmatmul.mubr.bf16.gmra.mrb[0].mxu0 %v621
      %v1282 = vpop.f32.mrb[0].mxu0
      %v1283 = vadd.f32 %v1050, %v1282
      %v1284 = vpop.f32.mrb[0].mxu0
      %v1285 = vpop.f32.mrb[0].mxu0
      %v1286 = vadd.f32 %v1053, %v1285
      %v1287 = vpop.f32.mrb[0].mxu0
      %1288 = vmatprep.mubr.bf16.mxu0 %v626
      %1289 = vmatmul.mubr.bf16.gmra.mrb[0].mxu0 %v625
      %v1290 = vpop.f32.mrb[0].mxu0
      %v1291 = vadd.f32 %v1058, %v1290
      %v1292 = vpop.f32.mrb[0].mxu0
      %v1293 = vpop.f32.mrb[0].mxu0
      %v1294 = vadd.f32 %v1061, %v1293
      %v1295 = vpop.f32.mrb[0].mxu0
      %1296 = vmatprep.mubr.bf16.mxu0 %v630
      %1297 = vmatmul.mubr.bf16.gmra.mrb[0].mxu0 %v629
      %v1298 = vpop.f32.mrb[0].mxu0
      %v1299 = vadd.f32 %v1066, %v1298
      %v1300 = vpop.f32.mrb[0].mxu0
      %v1301 = vpop.f32.mrb[0].mxu0
      %v1302 = vadd.f32 %v1069, %v1301
      %v1303 = vpop.f32.mrb[0].mxu0
      %1304 = vmatprep.mubr.bf16.mxu0 %v634
      %1305 = vmatmul.mubr.bf16.gmra.mrb[0].mxu0 %v633
      %v1306 = vpop.f32.mrb[0].mxu0
      %v1307 = vadd.f32 %v1074, %v1306
      %v1308 = vpop.f32.mrb[0].mxu0
      %v1309 = vpop.f32.mrb[0].mxu0
      %v1310 = vadd.f32 %v1077, %v1309
      %v1311 = vpop.f32.mrb[0].mxu0
      %1312 = vmatprep.mubr.bf16.mxu0 %v638
      %1313 = vmatmul.mubr.bf16.gmra.mrb[0].mxu0 %v637
      %v1314 = vpop.f32.mrb[0].mxu0
      %v1315 = vadd.f32 %v1082, %v1314
      %v1316 = vpop.f32.mrb[0].mxu0
      %v1317 = vpop.f32.mrb[0].mxu0
      %v1318 = vadd.f32 %v1085, %v1317
      %v1319 = vpop.f32.mrb[0].mxu0
      %1320 = vmatprep.mubr.bf16.mxu0 %v642
      %1321 = vmatmul.mubr.bf16.gmra.mrb[0].mxu0 %v641
      %v1322 = vpop.f32.mrb[0].mxu0
      %v1323 = vadd.f32 %v1090, %v1322
      %v1324 = vpop.f32.mrb[0].mxu0
      %v1325 = vpop.f32.mrb[0].mxu0
      %v1326 = vadd.f32 %v1093, %v1325
      %v1327 = vpop.f32.mrb[0].mxu0
      %1328 = vmatprep.mubr.bf16.mxu0 %v646
      %1329 = vmatmul.mubr.bf16.gmra.mrb[0].mxu0 %v645
      %v1330 = vpop.f32.mrb[0].mxu0
      %v1331 = vadd.f32 %v1098, %v1330
      %v1332 = vpop.f32.mrb[0].mxu0
      %v1333 = vpop.f32.mrb[0].mxu0
      %v1334 = vadd.f32 %v1101, %v1333
      %v1335 = vpop.f32.mrb[0].mxu0
      %1336 = vmatprep.mubr.bf16.mxu0 %v650
      %1337 = vmatmul.mubr.bf16.gmra.mrb[0].mxu0 %v649
      %v1338 = vpop.f32.mrb[0].mxu0
      %v1339 = vadd.f32 %v1106, %v1338
      %v1340 = vpop.f32.mrb[0].mxu0
      %v1341 = vpop.f32.mrb[0].mxu0
      %v1342 = vadd.f32 %v1109, %v1341
      %v1343 = vpop.f32.mrb[0].mxu0
      %1344 = vmatprep.mubr.bf16.mxu0 %v654
      %1345 = vmatmul.mubr.bf16.gmra.mrb[0].mxu0 %v653
      %v1346 = vpop.f32.mrb[0].mxu0
      %v1347 = vadd.f32 %v1114, %v1346
      %v1348 = vpop.f32.mrb[0].mxu0
      %v1349 = vpop.f32.mrb[0].mxu0
      %v1350 = vadd.f32 %v1117, %v1349
      %v1351 = vpop.f32.mrb[0].mxu0
      %1352 = vmatprep.mubr.bf16.mxu0 %v658
      %1353 = vmatmul.mubr.bf16.gmra.mrb[0].mxu0 %v657
      %v1354 = vpop.f32.mrb[0].mxu0
      %v1355 = vadd.f32 %v1122, %v1354
      %v1356 = vpop.f32.mrb[0].mxu0
      %v1357 = vpop.f32.mrb[0].mxu0
      %v1358 = vadd.f32 %v1125, %v1357
      %v1359 = vpop.f32.mrb[0].mxu0
      %1360 = vmatprep.mubr.bf16.mxu0 %v662
      %1361 = vmatmul.mubr.bf16.gmra.mrb[0].mxu0 %v661
      %v1362 = vpop.f32.mrb[0].mxu0
      %v1363 = vadd.f32 %v1130, %v1362
      %v1364 = vpop.f32.mrb[0].mxu0
      %v1365 = vpop.f32.mrb[0].mxu0
      %v1366 = vadd.f32 %v1133, %v1365
      %v1367 = vpop.f32.mrb[0].mxu0
      %1368 = vmatprep.mubr.bf16.mxu0 %v666
      %1369 = vmatmul.mubr.bf16.gmra.mrb[0].mxu0 %v665
      %v1370 = vpop.f32.mrb[0].mxu0
      %v1371 = vadd.f32 %v1138, %v1370
      %v1372 = vpop.f32.mrb[0].mxu0
      %v1373 = vpop.f32.mrb[0].mxu0
      %v1374 = vadd.f32 %v1141, %v1373
      %v1375 = vpop.f32.mrb[0].mxu0
      %1376 = vmatprep.mubr.bf16.mxu0 %v670
      %1377 = vmatmul.mubr.bf16.gmra.mrb[0].mxu0 %v669
      %v1378 = vpop.f32.mrb[0].mxu0
      %v1379 = vadd.f32 %v1146, %v1378
      %v1380 = vpop.f32.mrb[0].mxu0
      %v1381 = vpop.f32.mrb[0].mxu0
      %v1382 = vadd.f32 %v1149, %v1381
      %v1383 = vpop.f32.mrb[0].mxu0
      %1384 = vmatprep.mubr.bf16.mxu0 %v674
      %1385 = vmatmul.mubr.bf16.gmra.mrb[0].mxu0 %v673
      %v1386 = vpop.f32.mrb[0].mxu0
      %v1387 = vadd.f32 %v1154, %v1386
      %v1388 = vpop.f32.mrb[0].mxu0
      %v1389 = vpop.f32.mrb[0].mxu0
      %v1390 = vadd.f32 %v1157, %v1389
      %v1391 = vpop.f32.mrb[0].mxu0
      %1392 = vmatprep.mubr.bf16.mxu0 %v678
      %1393 = vmatmul.mubr.bf16.gmra.mrb[0].mxu0 %v677
      %v1394 = vpop.f32.mrb[0].mxu0
      %v1395 = vadd.f32 %v1162, %v1394
      %v1396 = vpop.f32.mrb[0].mxu0
      %v1397 = vpop.f32.mrb[0].mxu0
      %v1398 = vadd.f32 %v1165, %v1397
      %v1399 = vpop.f32.mrb[0].mxu0
      %1400 = vmatprep.mubr.bf16.mxu0 %v682
      %1401 = vmatmul.mubr.bf16.gmra.mrb[0].mxu0 %v681
      %v1402 = vpop.f32.mrb[0].mxu0
      %v1403 = vadd.f32 %v1170, %v1402
      %v1404 = vpop.f32.mrb[0].mxu0
      %v1405 = vpop.f32.mrb[0].mxu0
      %v1406 = vadd.f32 %v1173, %v1405
      %v1407 = vpop.f32.mrb[0].mxu0
      %1408 = vmatprep.mubr.bf16.mxu0 %v686
      %1409 = vmatmul.mubr.bf16.gmra.mrb[0].mxu0 %v685
      %v1410 = vpop.f32.mrb[0].mxu0
      %v1411 = vadd.f32 %v1178, %v1410
      %v1412 = vpop.f32.mrb[0].mxu0
      %v1413 = vpop.f32.mrb[0].mxu0
      %v1414 = vadd.f32 %v1181, %v1413
      %v1415 = vpop.f32.mrb[0].mxu0
      %1416 = vmatprep.mubr.bf16.mxu0 %v690
      %1417 = vmatmul.mubr.bf16.gmra.mrb[0].mxu0 %v689
      %v1418 = vpop.f32.mrb[0].mxu0
      %v1419 = vadd.f32 %v1186, %v1418
      %v1420 = vpop.f32.mrb[0].mxu0
      %v1421 = vpop.f32.mrb[0].mxu0
      %v1422 = vadd.f32 %v1189, %v1421
      %v1423 = vpop.f32.mrb[0].mxu0
      %1424 = vmatprep.mubr.bf16.mxu0 %v694
      %1425 = vmatmul.mubr.bf16.gmra.mrb[0].mxu0 %v693
      %v1426 = vpop.f32.mrb[0].mxu0
      %v1427 = vadd.f32 %v1194, %v1426
      %v1428 = vpop.f32.mrb[0].mxu0
      %v1429 = vpop.f32.mrb[0].mxu0
      %v1430 = vadd.f32 %v1197, %v1429
      %v1431 = vpop.f32.mrb[0].mxu0
      %1432 = vmatprep.mubr.bf16.mxu0 %v698
      %1433 = vmatmul.mubr.bf16.gmra.mrb[0].mxu0 %v697
      %v1434 = vpop.f32.mrb[0].mxu0
      %v1435 = vadd.f32 %v1202, %v1434
      %v1436 = vpop.f32.mrb[0].mxu0
      %v1437 = vpop.f32.mrb[0].mxu0
      %v1438 = vadd.f32 %v1205, %v1437
      %v1439 = vpop.f32.mrb[0].mxu0
      %1440 = vmatprep.mubr.bf16.mxu0 %v702
      %1441 = vmatmul.mubr.bf16.gmra.mrb[0].mxu0 %v701
      %v1442 = vpop.f32.mrb[0].mxu0
      %v1443 = vadd.f32 %v1210, %v1442
      %v1444 = vpop.f32.mrb[0].mxu0
      %v1445 = vpop.f32.mrb[0].mxu0
      %v1446 = vadd.f32 %v1213, %v1445
      %v1447 = vpop.f32.mrb[0].mxu0
      %1448 = vmatprep.mubr.bf16.mxu0 %v706
      %1449 = vmatmul.mubr.bf16.gmra.mrb[0].mxu0 %v705
      %v1450 = vpop.f32.mrb[0].mxu0
      %v1451 = vadd.f32 %v1218, %v1450
      %v1452 = vpop.f32.mrb[0].mxu0
      %v1453 = vpop.f32.mrb[0].mxu0
      %v1454 = vadd.f32 %v1221, %v1453
      %v1455 = vpop.f32.mrb[0].mxu0
      %1456 = vmatprep.mubr.bf16.mxu0 %v710
      %1457 = vmatmul.mubr.bf16.gmra.mrb[0].mxu0 %v709
      %v1458 = vpop.f32.mrb[0].mxu0
      %v1459 = vadd.f32 %v1226, %v1458
      %v1460 = vpop.f32.mrb[0].mxu0
      %v1461 = vpop.f32.mrb[0].mxu0
      %v1462 = vadd.f32 %v1229, %v1461
      %v1463 = vpop.f32.mrb[0].mxu0
      %1464 = vmatprep.mubr.bf16.mxu0 %v714
      %1465 = vmatmul.mubr.bf16.gmra.mrb[0].mxu0 %v713
      %v1466 = vpop.f32.mrb[0].mxu0
      %v1467 = vadd.f32 %v1234, %v1466
      %v1468 = vpop.f32.mrb[0].mxu0
      %v1469 = vpop.f32.mrb[0].mxu0
      %v1470 = vadd.f32 %v1237, %v1469
      %v1471 = vpop.f32.mrb[0].mxu0
      %1472 = vdwg.mxu0
      %v1473 = vtanh.pop %v1275
      %v1474 = vtanh.pop %v1278
      %v1475 = vtanh.pop %v1283
      %v1476 = vtanh.pop %v1286
      %v1477 = vtanh.pop %v1291
      %v1478 = vtanh.pop %v1294
      %v1479 = vtanh.pop %v1299
      %v1480 = vtanh.pop %v1302
      %v1481 = vtanh.pop %v1307
      %v1482 = vtanh.pop %v1310
      %v1483 = vtanh.pop %v1315
      %v1484 = vtanh.pop %v1318
      %v1485 = vtanh.pop %v1323
      %v1486 = vtanh.pop %v1326
      %v1487 = vtanh.pop %v1331
      %v1488 = vtanh.pop %v1334
      %v1489 = vtanh.pop %v1339
      %v1490 = vtanh.pop %v1342
      %v1491 = vtanh.pop %v1347
      %v1492 = vtanh.pop %v1350
      %v1493 = vtanh.pop %v1355
      %v1494 = vtanh.pop %v1358
      %v1495 = vtanh.pop %v1363
      %v1496 = vtanh.pop %v1366
      %v1497 = vtanh.pop %v1371
      %v1498 = vtanh.pop %v1374
      %v1499 = vtanh.pop %v1379
      %v1500 = vtanh.pop %v1382
      %v1501 = vtanh.pop %v1387
      %v1502 = vtanh.pop %v1390
      %v1503 = vtanh.pop %v1395
      %v1504 = vtanh.pop %v1398
      %v1505 = vtanh.pop %v1403
      %v1506 = vtanh.pop %v1406
      %v1507 = vtanh.pop %v1411
      %v1508 = vtanh.pop %v1414
      %v1509 = vtanh.pop %v1419
      %v1510 = vtanh.pop %v1422
      %v1511 = vtanh.pop %v1427
      %v1512 = vtanh.pop %v1430
      %v1513 = vtanh.pop %v1435
      %v1514 = vtanh.pop %v1438
      %v1515 = vtanh.pop %v1443
      %v1516 = vtanh.pop %v1446
      %v1517 = vtanh.pop %v1451
      %v1518 = vtanh.pop %v1454
      %v1519 = vtanh.pop %v1459
      %v1520 = vtanh.pop %v1462
      %v1521 = vtanh.pop %v1467
      %v1522 = vtanh.pop %v1470
      %1523 = vst [vmem:[%s148] sm:$0xff] %v1473
      %1524 = vst [vmem:[%s148 + $0x8] sm:$0xff] %v1474
      %1525 = vst [vmem:[%s148 + $0x10] sm:$0xff] %v1475
      %1526 = vst [vmem:[%s148 + $0x18] sm:$0xff] %v1476
      %1527 = vst [vmem:[%s148 + $0x20] sm:$0xff] %v1477
      %1528 = vst [vmem:[%s148 + $0x28] sm:$0xff] %v1478
      %1529 = vst [vmem:[%s148 + $0x30] sm:$0xff] %v1479
      %1530 = vst [vmem:[%s148 + $0x38] sm:$0xff] %v1480
      %1531 = vst [vmem:[%s148 + $0x40] sm:$0xff] %v1481
      %1532 = vst [vmem:[%s148 + $0x48] sm:$0xff] %v1482
      %1533 = vst [vmem:[%s148 + $0x50] sm:$0xff] %v1483
      %1534 = vst [vmem:[%s148 + $0x58] sm:$0xff] %v1484
      %1535 = vst [vmem:[%s148 + $0x60] sm:$0xff] %v1485
      %1536 = vst [vmem:[%s148 + $0x68] sm:$0xff] %v1486
      %1537 = vst [vmem:[%s148 + $0x70] sm:$0xff] %v1487
      %1538 = vst [vmem:[%s148 + $0x78] sm:$0xff] %v1488
      %1539 = vst [vmem:[%s148 + $0x80] sm:$0xff] %v1489
      %1540 = vst [vmem:[%s148 + $0x88] sm:$0xff] %v1490
      %1541 = vst [vmem:[%s148 + $0x90] sm:$0xff] %v1491
      %1542 = vst [vmem:[%s148 + $0x98] sm:$0xff] %v1492
      %1543 = vst [vmem:[%s148 + $0xa0] sm:$0xff] %v1493
      %1544 = vst [vmem:[%s148 + $0xa8] sm:$0xff] %v1494
      %1545 = vst [vmem:[%s148 + $0xb0] sm:$0xff] %v1495
      %1546 = vst [vmem:[%s148 + $0xb8] sm:$0xff] %v1496
      %1547 = vst [vmem:[%s148 + $0xc0] sm:$0xff] %v1497
      %1548 = vst [vmem:[%s148 + $0xc8] sm:$0xff] %v1498
      %1549 = vst [vmem:[%s148 + $0xd0] sm:$0xff] %v1499
      %1550 = vst [vmem:[%s148 + $0xd8] sm:$0xff] %v1500
      %1551 = vst [vmem:[%s148 + $0xe0] sm:$0xff] %v1501
      %1552 = vst [vmem:[%s148 + $0xe8] sm:$0xff] %v1502
      %1553 = vst [vmem:[%s148 + $0xf0] sm:$0xff] %v1503
      %1554 = vst [vmem:[%s148 + $0xf8] sm:$0xff] %v1504
      %1555 = vst [vmem:[%s148 + $0x100] sm:$0xff] %v1505
      %1556 = vst [vmem:[%s148 + $0x108] sm:$0xff] %v1506
      %1557 = vst [vmem:[%s148 + $0x110] sm:$0xff] %v1507
      %1558 = vst [vmem:[%s148 + $0x118] sm:$0xff] %v1508
      %1559 = vst [vmem:[%s148 + $0x120] sm:$0xff] %v1509
      %1560 = vst [vmem:[%s148 + $0x128] sm:$0xff] %v1510
      %1561 = vst [vmem:[%s148 + $0x130] sm:$0xff] %v1511
      %1562 = vst [vmem:[%s148 + $0x138] sm:$0xff] %v1512
      %1563 = vst [vmem:[%s148 + $0x140] sm:$0xff] %v1513
      %1564 = vst [vmem:[%s148 + $0x148] sm:$0xff] %v1514
      %1565 = vst [vmem:[%s148 + $0x150] sm:$0xff] %v1515
      %1566 = vst [vmem:[%s148 + $0x158] sm:$0xff] %v1516
      %1567 = vst [vmem:[%s148 + $0x160] sm:$0xff] %v1517
      %1568 = vst [vmem:[%s148 + $0x168] sm:$0xff] %v1518
      %1569 = vst [vmem:[%s148 + $0x170] sm:$0xff] %v1519
      %1570 = vst [vmem:[%s148 + $0x178] sm:$0xff] %v1520
      %1571 = vst [vmem:[%s148 + $0x180] sm:$0xff] %v1521
      %1572 = vst [vmem:[%s148 + $0x188] sm:$0xff] %v1522
      %s1573 = smul.u32 50, %s13
      %p1574 = scmp.lt.s32.totalorder %s1573, 199
      %s1575 = scalar_select %p1574, %s1573, 199
      %s1576 = smul.addr %s1575, 8
      %s1577 = scalar_lea.vmem %s2, %s1576
      // Predicated region
      $region29: #{conv_forward.15} parent=27 // pred_check
        %p1578 = pneg %p78
      $region30: #{conv_forward.15} parent=27 // pred_check_branch
        %1580 = sbr.rel (%p1578) target = $region32
      $region31: #{conv_forward.15} parent=27 // pred_region
        %s1581 = smul.u32 50, %s13
      $region32: #{conv_forward.15} parent=27 // pred_fallthru
        _
    $region28: #{conv_forward.15} parent=5 // pred_fallthru
      _
    %p1582 = scmp.le.s32.totalorder 2, %s8
    // Predicated region
    $region33: #{conv_forward.15} parent=5 // pred_check
      %p1583 = pneg %p1582
    $region34: #{conv_forward.15} parent=5 // pred_check_branch
      %1585 = sbr.rel (%p1583) target = $region36
    $region35: #{conv_forward.15} parent=5 // pred_region
      %s1586 = ssub.s32 %s8, 2
      // Predicated region
      $region37: #{conv_forward.15} parent=35 // pred_check
        %p1587 = pneg %p84
      $region38: #{conv_forward.15} parent=35 // pred_check_branch
        %1589 = sbr.rel (%p1587) target = $region40
      $region39: #{conv_forward.15} parent=35 // pred_region
        %s1590 = smul.u32 50, %s14
        %p1591 = scmp.lt.s32.totalorder %s1590, 199
        %s1592 = scalar_select %p1591, %s1590, 199
        %s1593 = smul.addr %s1592, 8
        %s1594 = scalar_lea.vmem %s2, %s1593
      $region40: #{conv_forward.15} parent=35 // pred_fallthru
        _
    $region36: #{conv_forward.15} parent=5 // pred_fallthru
      _
  $region6: #{conv_forward.15} parent=0 // loop_footer
    %s12 = sadd.s32 1, %s8
  $region7: #{conv_forward.15} parent=0 // loop_footer_branch
    %7 = sbr.rel target = $region3
  $region8: #{conv_forward.15} parent=0 // loop_exit
    _

</llo_original>
